<compile_context>
chip_gen: v7x
topology: tpu7x:2x2x1
jax: 0.10.0
libtpu: 0.0.40
codegen_flags: <defaults>
</compile_context>

<pallas_src>
import functools

import jax
import jax.numpy as jnp
from jax import lax
from jax.experimental import pallas as pl
from jax.experimental.pallas import tpu as pltpu


def _round_up(n, m):
    return ((n + m - 1) // m) * m


def _basic_block_kernel(x_ref, w1_ref, w2_ref, s1_ref, b1_ref, s2_ref, b2_ref,
                        mask_ref, o_ref, y1e_ref, *, tap_starts, pp, rl):
    """One grid step = one batch element; runs BOTH convs of the BasicBlock.

    x_ref:     (C, Pe)     bf16  zero-padded volume, spatial dims flattened to the lane
                                 axis and extended with a zero lane halo so every tap slice
                                 and the residual slice are static in-bounds windows
    w1_ref:    (27, C, C)  bf16  conv1 weights, tap-major (kd, kh, kw), then (cout, cin)
    w2_ref:    (27, C, C)  bf16  conv2 weights
    s*/b*_ref: (C, 1)      f32   folded BatchNorm scale / bias
    mask_ref:  (1, Pp)     f32   1.0 at interior padded-flat lanes, 0.0 at border/tail
    o_ref:     (C, Pp)     f32   output in padded-flat layout (border lanes = garbage)
    y1e_ref:   (C, Pe)     bf16  VMEM scratch: conv1 output re-padded into the extended
                                 lane layout (becomes conv2's input)
    """
    cin = y1e_ref.shape[0]
    pe = y1e_ref.shape[1]

    def conv3x3x3(src, w_ref):
        # Direct conv: 27 accumulating MXU dots; RHS = lane-offset slice of the source ref
        # (load-path shift, no im2col panel materialized in VMEM).  f32 accumulation.
        acc = jnp.dot(w_ref[0], src[:, tap_starts[0]:tap_starts[0] + pp],
                      preferred_element_type=jnp.float32)
        for t in range(1, len(tap_starts)):
            s = tap_starts[t]
            acc = acc + jnp.dot(w_ref[t], src[:, s:s + pp],
                                preferred_element_type=jnp.float32)
        return acc                                              # (C, Pp) f32

    # conv1 -> bn1 -> relu; the mask zeroes padded-border + lane-tail garbage so y1 can be
    # used directly as conv2's zero-padded input (required for the fused form).
    y1 = jnp.maximum(conv3x3x3(x_ref, w1_ref) * s1_ref[...] + b1_ref[...], 0.0)
    y1 = y1 * mask_ref[...]

    # Re-pad y1 into the extended lane layout in VMEM (all lane offsets are 128-aligned).
    y1e_ref[:, :rl] = jnp.zeros((cin, rl), jnp.bfloat16)
    y1e_ref[:, rl:rl + pp] = y1.astype(jnp.bfloat16)
    y1e_ref[:, rl + pp:] = jnp.zeros((cin, pe - rl - pp), jnp.bfloat16)

    # conv2 -> bn2 -> +residual -> relu.  Residual = the resident x_ext block at the static
    # lane offset rl (no separate residual array in HBM).
    y2 = conv3x3x3(y1e_ref, w2_ref) * s2_ref[...] + b2_ref[...]
    y2 = y2 + x_ref[:, rl:rl + pp].astype(jnp.float32)
    o_ref[...] = jnp.maximum(y2, 0.0).astype(o_ref.dtype)


def _weights_to_taps(w_oidhw):
    """PyTorch conv weight (Cout, Cin, 3, 3, 3) -> (27, Cout, Cin) bf16, tap-major."""
    cout, cin = w_oidhw.shape[:2]
    return jnp.transpose(w_oidhw, (2, 3, 4, 0, 1)).reshape(27, cout, cin).astype(jnp.bfloat16)


def basic_block_forward(x_ncdhw, params):
    """BasicBlock.forward (stride=1, downsample=None, inplanes == planes).  NCDHW f32."""
    B, C, D, H, W = x_ncdhw.shape
    S1 = W + 2
    S2 = (H + 2) * S1
    P = (D + 2) * S2                      # padded volume flattened onto one lane axis
    R = S2 + S1 + 1                       # max |tap offset| in the padded-flat index space
    Pp = _round_up(P, 128)                # lane-dense output width
    Rl = _round_up(R, 128)                # left lane halo, 128-aligned
    Pe = _round_up(Rl + R + Pp, 128)      # extended lane width (max tap slice end)

    # Plain-JAX glue (~1x data): zero-pad, flatten spatial dims to lanes, add the lane halo,
    # cast to bf16 ONCE (the kernel consumes bf16 activations end-to-end).
    xp = jnp.pad(x_ncdhw, ((0, 0), (0, 0), (1, 1), (1, 1), (1, 1)))
    x_ext = jnp.pad(xp.reshape(B, C, P),
                    ((0, 0), (0, 0), (Rl, Pe - Rl - P))).astype(jnp.bfloat16)

    # Tap (kd,kh,kw): output padded-flat lane q reads lane q + (kd-1)*S2 + (kh-1)*S1 + (kw-1);
    # with the left halo Rl that is the static slice [Rl - R + kd*S2 + kh*S1 + kw, ... + Pp).
    tap_starts = tuple(Rl - R + kd * S2 + kh * S1 + kw
                       for kd in range(3) for kh in range(3) for kw in range(3))

    # Interior-lane mask: 1.0 where the padded-flat lane is a real (non-border) voxel and
    # lane < P, else 0.0.  Needed because conv1's output feeds conv2 inside the same kernel.
    q = jnp.arange(Pp, dtype=jnp.int32)
    d_i, h_i, w_i = q // S2, (q // S1) % (H + 2), q % S1
    mask = (((q < P) & (d_i >= 1) & (d_i <= D) & (h_i >= 1) & (h_i <= H)
             & (w_i >= 1) & (w_i <= W)).astype(jnp.float32).reshape(1, Pp))

    w1 = _weights_to_taps(params["w1"])
    w2 = _weights_to_taps(params["w2"])
    s1 = params["s1"].reshape(C, 1).astype(jnp.float32)
    b1 = params["b1"].reshape(C, 1).astype(jnp.float32)
    s2 = params["s2"].reshape(C, 1).astype(jnp.float32)
    b2 = params["b2"].reshape(C, 1).astype(jnp.float32)

    kernel = functools.partial(_basic_block_kernel, tap_starts=tap_starts, pp=Pp, rl=Rl)

    # TODO(synk): for real 3D-ResNet sizes, tile the flat spatial axis (with an R-lane halo)
    # so per-block VMEM stays within ~1/3 of v7x's 64 MiB, and switch to a big-K panel
    # matmul once Cin >= 64.  Whole-volume-per-batch blocks are sized for small inputs only.
    out = pl.pallas_call(
        kernel,
        out_shape=jax.ShapeDtypeStruct((B, C, Pp), jnp.float32),
        grid_spec=pltpu.PrefetchScalarGridSpec(
            num_scalar_prefetch=0,
            grid=(B,),
            in_specs=[
                pl.BlockSpec((None, C, Pe), lambda b: (b, 0, 0)),   # x_ext (per batch)
                pl.BlockSpec((27, C, C), lambda b: (0, 0, 0)),      # conv1 weights
                pl.BlockSpec((27, C, C), lambda b: (0, 0, 0)),      # conv2 weights
                pl.BlockSpec((C, 1), lambda b: (0, 0)),             # bn1 scale
                pl.BlockSpec((C, 1), lambda b: (0, 0)),             # bn1 bias
                pl.BlockSpec((C, 1), lambda b: (0, 0)),             # bn2 scale
                pl.BlockSpec((C, 1), lambda b: (0, 0)),             # bn2 bias
                pl.BlockSpec((1, Pp), lambda b: (0, 0)),            # interior mask
            ],
            out_specs=pl.BlockSpec((None, C, Pp), lambda b: (b, 0, 0)),
            scratch_shapes=[pltpu.VMEM((C, Pe), jnp.bfloat16)],
        ),
        # < 1 MiB of VMEM used: do NOT request a vmem limit (v7x only has 64 MiB physical).
        # Two "parallel" grid steps keep both v7x TensorCores busy.
        compiler_params=pltpu.CompilerParams(dimension_semantics=("parallel",)),
    )(x_ext, w1, w2, s1, b1, s2, b2, mask)

    # Drop the lane tail and the padded-border lanes (garbage) -> (B, C, D, H, W).
    # TODO(synk): downsample branch / stride>1 not implemented (downsample=None, stride=1).
    return out[:, :, :P].reshape(B, C, D + 2, H + 2, W + 2)[:, :, 1:-1, 1:-1, 1:-1]


def _reference_forward(x, params):
    """Pure-JAX NCDHW reference (eval-mode BN folded to scale/bias), f32 / HIGHEST precision."""
    dn = lax.conv_dimension_numbers(x.shape, params["w1"].shape,
                                    ("NCDHW", "OIDHW", "NCDHW"))

    def conv(a, w):
        return lax.conv_general_dilated(a, w, (1, 1, 1), "SAME",
                                        dimension_numbers=dn,
                                        precision=lax.Precision.HIGHEST)

    def bn(a, s, b):
        return a * s.reshape(1, -1, 1, 1, 1) + b.reshape(1, -1, 1, 1, 1)

    y = jnp.maximum(bn(conv(x, params["w1"]), params["s1"], params["b1"]), 0.0)
    z = bn(conv(y, params["w2"]), params["s2"], params["b2"]) + x
    return jnp.maximum(z, 0.0)


def make_params(key, inplanes, planes, eps=1e-5):
    ks = jax.random.split(key, 10)

    def fold_bn(kg, kb, km, kv, c):
        gamma = 1.0 + 0.1 * jax.random.normal(kg, (c,), jnp.float32)
        beta = 0.1 * jax.random.normal(kb, (c,), jnp.float32)
        mean = 0.1 * jax.random.normal(km, (c,), jnp.float32)
        var = jax.random.uniform(kv, (c,), jnp.float32, 0.5, 1.5)
        scale = gamma / jnp.sqrt(var + eps)
        bias = beta - mean * scale
        return scale, bias

    # PyTorch conv weight layout: (Cout, Cin, kd, kh, kw).
    w1 = 0.1 * jax.random.normal(ks[0], (planes, inplanes, 3, 3, 3), jnp.float32)
    w2 = 0.1 * jax.random.normal(ks[1], (planes, planes, 3, 3, 3), jnp.float32)
    s1, b1 = fold_bn(ks[2], ks[3], ks[4], ks[5], planes)
    s2, b2 = fold_bn(ks[6], ks[7], ks[8], ks[9], planes)
    # TODO(synk): training-mode BatchNorm (batch statistics) not implemented; eval-mode
    # running statistics are folded into per-channel scale/bias.
    return {"w1": w1, "w2": w2, "s1": s1, "b1": b1, "s2": s2, "b2": b2}


if __name__ == "__main__":
    key = jax.random.PRNGKey(0)
    k_x, k_p = jax.random.split(key)

    B, C, D, H, W = 2, 8, 4, 8, 8          # NCDHW, inplanes == planes == 8, stride=1
    x = jax.random.normal(k_x, (B, C, D, H, W), jnp.float32)
    params = make_params(k_p, inplanes=C, planes=C)

    out = jax.block_until_ready(jax.jit(basic_block_forward)(x, params))

    ref = _reference_forward(x, params)
    assert out.shape == ref.shape == (B, C, D, H, W)
    # bf16 activations/weights with f32 accumulation vs an f32/HIGHEST reference.
    max_err = float(jnp.max(jnp.abs(out - ref)))
    assert max_err < 1e-1, f"mismatch vs reference: {max_err}"

    print("KERNEL_OK")
</pallas_src>

<mosaic_0001>
module attributes {stable_mosaic.version = 11 : i64} {
  func.func @_basic_block_kernel(%arg0: i32, %arg1: memref<1x8x896xbf16, #tpu.memory_space<vmem>>, %arg2: memref<27x8x8xbf16, #tpu.memory_space<vmem>>, %arg3: memref<27x8x8xbf16, #tpu.memory_space<vmem>>, %arg4: memref<8x1xf32, #tpu.memory_space<vmem>>, %arg5: memref<8x1xf32, #tpu.memory_space<vmem>>, %arg6: memref<8x1xf32, #tpu.memory_space<vmem>>, %arg7: memref<8x1xf32, #tpu.memory_space<vmem>>, %arg8: memref<1x640xf32, #tpu.memory_space<vmem>>, %arg9: memref<1x8x640xf32, #tpu.memory_space<vmem>>, %arg10: memref<8x896xbf16, #tpu.memory_space<vmem>>) attributes {dimension_semantics = [#tpu.dimension_semantics<parallel>], iteration_bounds = array<i64: 2>, scalar_prefetch = 0 : i64, scratch_operands = 1 : i64, tpu.core_type = #tpu.core_type<tc>, window_params = [{transform_indices = @transform_0, window_bounds = array<i64: 1, 8, 896>}, {pipeline_mode = #tpu.pipeline_mode<synchronous>, transform_indices = @transform_1, window_bounds = array<i64: 27, 8, 8>}, {pipeline_mode = #tpu.pipeline_mode<synchronous>, transform_indices = @transform_2, window_bounds = array<i64: 27, 8, 8>}, {pipeline_mode = #tpu.pipeline_mode<synchronous>, transform_indices = @transform_3, window_bounds = array<i64: 8, 1>}, {pipeline_mode = #tpu.pipeline_mode<synchronous>, transform_indices = @transform_4, window_bounds = array<i64: 8, 1>}, {pipeline_mode = #tpu.pipeline_mode<synchronous>, transform_indices = @transform_5, window_bounds = array<i64: 8, 1>}, {pipeline_mode = #tpu.pipeline_mode<synchronous>, transform_indices = @transform_6, window_bounds = array<i64: 8, 1>}, {pipeline_mode = #tpu.pipeline_mode<synchronous>, transform_indices = @transform_7, window_bounds = array<i64: 1, 640>}, {transform_indices = @transform_8, window_bounds = array<i64: 1, 8, 640>}]} {
    %c0 = arith.constant 0 : index
    %c0_0 = arith.constant 0 : index
    %c0_1 = arith.constant 0 : index
    %0 = vector.load %arg2[%c0, %c0_0, %c0_1] : memref<27x8x8xbf16, #tpu.memory_space<vmem>>, vector<1x8x8xbf16>
    %1 = vector.shape_cast %0 : vector<1x8x8xbf16> to vector<8x8xbf16>
    %c0_2 = arith.constant 0 : index
    %c0_3 = arith.constant 0 : index
    %c17 = arith.constant 17 : index
    %2 = vector.load %arg1[%c0_2, %c0_3, %c17] : memref<1x8x896xbf16, #tpu.memory_space<vmem>>, vector<1x8x640xbf16>
    %3 = vector.shape_cast %2 : vector<1x8x640xbf16> to vector<8x640xbf16>
    %cst = arith.constant dense<0.000000e+00> : vector<8x640xf32>
    %4 = tpu.matmul %1, %3, %cst {dimension_numbers = #tpu.dot_dimension_numbers<[1], [0], [0], [1], [0, 0, 1, 1], [], []>} : vector<8x8xbf16>, vector<8x640xbf16>, vector<8x640xf32> -> vector<8x640xf32>
    %c1 = arith.constant 1 : index
    %c0_4 = arith.constant 0 : index
    %c0_5 = arith.constant 0 : index
    %5 = vector.load %arg2[%c1, %c0_4, %c0_5] : memref<27x8x8xbf16, #tpu.memory_space<vmem>>, vector<1x8x8xbf16>
    %6 = vector.shape_cast %5 : vector<1x8x8xbf16> to vector<8x8xbf16>
    %c0_6 = arith.constant 0 : index
    %c0_7 = arith.constant 0 : index
    %c18 = arith.constant 18 : index
    %7 = vector.load %arg1[%c0_6, %c0_7, %c18] : memref<1x8x896xbf16, #tpu.memory_space<vmem>>, vector<1x8x640xbf16>
    %8 = vector.shape_cast %7 : vector<1x8x640xbf16> to vector<8x640xbf16>
    %cst_8 = arith.constant dense<0.000000e+00> : vector<8x640xf32>
    %9 = tpu.matmul %6, %8, %cst_8 {dimension_numbers = #tpu.dot_dimension_numbers<[1], [0], [0], [1], [0, 0, 1, 1], [], []>} : vector<8x8xbf16>, vector<8x640xbf16>, vector<8x640xf32> -> vector<8x640xf32>
    %10 = arith.addf %4, %9 : vector<8x640xf32>
    %c2 = arith.constant 2 : index
    %c0_9 = arith.constant 0 : index
    %c0_10 = arith.constant 0 : index
    %11 = vector.load %arg2[%c2, %c0_9, %c0_10] : memref<27x8x8xbf16, #tpu.memory_space<vmem>>, vector<1x8x8xbf16>
    %12 = vector.shape_cast %11 : vector<1x8x8xbf16> to vector<8x8xbf16>
    %c0_11 = arith.constant 0 : index
    %c0_12 = arith.constant 0 : index
    %c19 = arith.constant 19 : index
    %13 = vector.load %arg1[%c0_11, %c0_12, %c19] : memref<1x8x896xbf16, #tpu.memory_space<vmem>>, vector<1x8x640xbf16>
    %14 = vector.shape_cast %13 : vector<1x8x640xbf16> to vector<8x640xbf16>
    %cst_13 = arith.constant dense<0.000000e+00> : vector<8x640xf32>
    %15 = tpu.matmul %12, %14, %cst_13 {dimension_numbers = #tpu.dot_dimension_numbers<[1], [0], [0], [1], [0, 0, 1, 1], [], []>} : vector<8x8xbf16>, vector<8x640xbf16>, vector<8x640xf32> -> vector<8x640xf32>
    %16 = arith.addf %10, %15 : vector<8x640xf32>
    %c3 = arith.constant 3 : index
    %c0_14 = arith.constant 0 : index
    %c0_15 = arith.constant 0 : index
    %17 = vector.load %arg2[%c3, %c0_14, %c0_15] : memref<27x8x8xbf16, #tpu.memory_space<vmem>>, vector<1x8x8xbf16>
    %18 = vector.shape_cast %17 : vector<1x8x8xbf16> to vector<8x8xbf16>
    %c0_16 = arith.constant 0 : index
    %c0_17 = arith.constant 0 : index
    %c27 = arith.constant 27 : index
    %19 = vector.load %arg1[%c0_16, %c0_17, %c27] : memref<1x8x896xbf16, #tpu.memory_space<vmem>>, vector<1x8x640xbf16>
    %20 = vector.shape_cast %19 : vector<1x8x640xbf16> to vector<8x640xbf16>
    %cst_18 = arith.constant dense<0.000000e+00> : vector<8x640xf32>
    %21 = tpu.matmul %18, %20, %cst_18 {dimension_numbers = #tpu.dot_dimension_numbers<[1], [0], [0], [1], [0, 0, 1, 1], [], []>} : vector<8x8xbf16>, vector<8x640xbf16>, vector<8x640xf32> -> vector<8x640xf32>
    %22 = arith.addf %16, %21 : vector<8x640xf32>
    %c4 = arith.constant 4 : index
    %c0_19 = arith.constant 0 : index
    %c0_20 = arith.constant 0 : index
    %23 = vector.load %arg2[%c4, %c0_19, %c0_20] : memref<27x8x8xbf16, #tpu.memory_space<vmem>>, vector<1x8x8xbf16>
    %24 = vector.shape_cast %23 : vector<1x8x8xbf16> to vector<8x8xbf16>
    %c0_21 = arith.constant 0 : index
    %c0_22 = arith.constant 0 : index
    %c28 = arith.constant 28 : index
    %25 = vector.load %arg1[%c0_21, %c0_22, %c28] : memref<1x8x896xbf16, #tpu.memory_space<vmem>>, vector<1x8x640xbf16>
    %26 = vector.shape_cast %25 : vector<1x8x640xbf16> to vector<8x640xbf16>
    %cst_23 = arith.constant dense<0.000000e+00> : vector<8x640xf32>
    %27 = tpu.matmul %24, %26, %cst_23 {dimension_numbers = #tpu.dot_dimension_numbers<[1], [0], [0], [1], [0, 0, 1, 1], [], []>} : vector<8x8xbf16>, vector<8x640xbf16>, vector<8x640xf32> -> vector<8x640xf32>
    %28 = arith.addf %22, %27 : vector<8x640xf32>
    %c5 = arith.constant 5 : index
    %c0_24 = arith.constant 0 : index
    %c0_25 = arith.constant 0 : index
    %29 = vector.load %arg2[%c5, %c0_24, %c0_25] : memref<27x8x8xbf16, #tpu.memory_space<vmem>>, vector<1x8x8xbf16>
    %30 = vector.shape_cast %29 : vector<1x8x8xbf16> to vector<8x8xbf16>
    %c0_26 = arith.constant 0 : index
    %c0_27 = arith.constant 0 : index
    %c29 = arith.constant 29 : index
    %31 = vector.load %arg1[%c0_26, %c0_27, %c29] : memref<1x8x896xbf16, #tpu.memory_space<vmem>>, vector<1x8x640xbf16>
    %32 = vector.shape_cast %31 : vector<1x8x640xbf16> to vector<8x640xbf16>
    %cst_28 = arith.constant dense<0.000000e+00> : vector<8x640xf32>
    %33 = tpu.matmul %30, %32, %cst_28 {dimension_numbers = #tpu.dot_dimension_numbers<[1], [0], [0], [1], [0, 0, 1, 1], [], []>} : vector<8x8xbf16>, vector<8x640xbf16>, vector<8x640xf32> -> vector<8x640xf32>
    %34 = arith.addf %28, %33 : vector<8x640xf32>
    %c6 = arith.constant 6 : index
    %c0_29 = arith.constant 0 : index
    %c0_30 = arith.constant 0 : index
    %35 = vector.load %arg2[%c6, %c0_29, %c0_30] : memref<27x8x8xbf16, #tpu.memory_space<vmem>>, vector<1x8x8xbf16>
    %36 = vector.shape_cast %35 : vector<1x8x8xbf16> to vector<8x8xbf16>
    %c0_31 = arith.constant 0 : index
    %c0_32 = arith.constant 0 : index
    %c37 = arith.constant 37 : index
    %37 = vector.load %arg1[%c0_31, %c0_32, %c37] : memref<1x8x896xbf16, #tpu.memory_space<vmem>>, vector<1x8x640xbf16>
    %38 = vector.shape_cast %37 : vector<1x8x640xbf16> to vector<8x640xbf16>
    %cst_33 = arith.constant dense<0.000000e+00> : vector<8x640xf32>
    %39 = tpu.matmul %36, %38, %cst_33 {dimension_numbers = #tpu.dot_dimension_numbers<[1], [0], [0], [1], [0, 0, 1, 1], [], []>} : vector<8x8xbf16>, vector<8x640xbf16>, vector<8x640xf32> -> vector<8x640xf32>
    %40 = arith.addf %34, %39 : vector<8x640xf32>
    %c7 = arith.constant 7 : index
    %c0_34 = arith.constant 0 : index
    %c0_35 = arith.constant 0 : index
    %41 = vector.load %arg2[%c7, %c0_34, %c0_35] : memref<27x8x8xbf16, #tpu.memory_space<vmem>>, vector<1x8x8xbf16>
    %42 = vector.shape_cast %41 : vector<1x8x8xbf16> to vector<8x8xbf16>
    %c0_36 = arith.constant 0 : index
    %c0_37 = arith.constant 0 : index
    %c38 = arith.constant 38 : index
    %43 = vector.load %arg1[%c0_36, %c0_37, %c38] : memref<1x8x896xbf16, #tpu.memory_space<vmem>>, vector<1x8x640xbf16>
    %44 = vector.shape_cast %43 : vector<1x8x640xbf16> to vector<8x640xbf16>
    %cst_38 = arith.constant dense<0.000000e+00> : vector<8x640xf32>
    %45 = tpu.matmul %42, %44, %cst_38 {dimension_numbers = #tpu.dot_dimension_numbers<[1], [0], [0], [1], [0, 0, 1, 1], [], []>} : vector<8x8xbf16>, vector<8x640xbf16>, vector<8x640xf32> -> vector<8x640xf32>
    %46 = arith.addf %40, %45 : vector<8x640xf32>
    %c8 = arith.constant 8 : index
    %c0_39 = arith.constant 0 : index
    %c0_40 = arith.constant 0 : index
    %47 = vector.load %arg2[%c8, %c0_39, %c0_40] : memref<27x8x8xbf16, #tpu.memory_space<vmem>>, vector<1x8x8xbf16>
    %48 = vector.shape_cast %47 : vector<1x8x8xbf16> to vector<8x8xbf16>
    %c0_41 = arith.constant 0 : index
    %c0_42 = arith.constant 0 : index
    %c39 = arith.constant 39 : index
    %49 = vector.load %arg1[%c0_41, %c0_42, %c39] : memref<1x8x896xbf16, #tpu.memory_space<vmem>>, vector<1x8x640xbf16>
    %50 = vector.shape_cast %49 : vector<1x8x640xbf16> to vector<8x640xbf16>
    %cst_43 = arith.constant dense<0.000000e+00> : vector<8x640xf32>
    %51 = tpu.matmul %48, %50, %cst_43 {dimension_numbers = #tpu.dot_dimension_numbers<[1], [0], [0], [1], [0, 0, 1, 1], [], []>} : vector<8x8xbf16>, vector<8x640xbf16>, vector<8x640xf32> -> vector<8x640xf32>
    %52 = arith.addf %46, %51 : vector<8x640xf32>
    %c9 = arith.constant 9 : index
    %c0_44 = arith.constant 0 : index
    %c0_45 = arith.constant 0 : index
    %53 = vector.load %arg2[%c9, %c0_44, %c0_45] : memref<27x8x8xbf16, #tpu.memory_space<vmem>>, vector<1x8x8xbf16>
    %54 = vector.shape_cast %53 : vector<1x8x8xbf16> to vector<8x8xbf16>
    %c0_46 = arith.constant 0 : index
    %c0_47 = arith.constant 0 : index
    %c117 = arith.constant 117 : index
    %55 = vector.load %arg1[%c0_46, %c0_47, %c117] : memref<1x8x896xbf16, #tpu.memory_space<vmem>>, vector<1x8x640xbf16>
    %56 = vector.shape_cast %55 : vector<1x8x640xbf16> to vector<8x640xbf16>
    %cst_48 = arith.constant dense<0.000000e+00> : vector<8x640xf32>
    %57 = tpu.matmul %54, %56, %cst_48 {dimension_numbers = #tpu.dot_dimension_numbers<[1], [0], [0], [1], [0, 0, 1, 1], [], []>} : vector<8x8xbf16>, vector<8x640xbf16>, vector<8x640xf32> -> vector<8x640xf32>
    %58 = arith.addf %52, %57 : vector<8x640xf32>
    %c10 = arith.constant 10 : index
    %c0_49 = arith.constant 0 : index
    %c0_50 = arith.constant 0 : index
    %59 = vector.load %arg2[%c10, %c0_49, %c0_50] : memref<27x8x8xbf16, #tpu.memory_space<vmem>>, vector<1x8x8xbf16>
    %60 = vector.shape_cast %59 : vector<1x8x8xbf16> to vector<8x8xbf16>
    %c0_51 = arith.constant 0 : index
    %c0_52 = arith.constant 0 : index
    %c118 = arith.constant 118 : index
    %61 = vector.load %arg1[%c0_51, %c0_52, %c118] : memref<1x8x896xbf16, #tpu.memory_space<vmem>>, vector<1x8x640xbf16>
    %62 = vector.shape_cast %61 : vector<1x8x640xbf16> to vector<8x640xbf16>
    %cst_53 = arith.constant dense<0.000000e+00> : vector<8x640xf32>
    %63 = tpu.matmul %60, %62, %cst_53 {dimension_numbers = #tpu.dot_dimension_numbers<[1], [0], [0], [1], [0, 0, 1, 1], [], []>} : vector<8x8xbf16>, vector<8x640xbf16>, vector<8x640xf32> -> vector<8x640xf32>
    %64 = arith.addf %58, %63 : vector<8x640xf32>
    %c11 = arith.constant 11 : index
    %c0_54 = arith.constant 0 : index
    %c0_55 = arith.constant 0 : index
    %65 = vector.load %arg2[%c11, %c0_54, %c0_55] : memref<27x8x8xbf16, #tpu.memory_space<vmem>>, vector<1x8x8xbf16>
    %66 = vector.shape_cast %65 : vector<1x8x8xbf16> to vector<8x8xbf16>
    %c0_56 = arith.constant 0 : index
    %c0_57 = arith.constant 0 : index
    %c119 = arith.constant 119 : index
    %67 = vector.load %arg1[%c0_56, %c0_57, %c119] : memref<1x8x896xbf16, #tpu.memory_space<vmem>>, vector<1x8x640xbf16>
    %68 = vector.shape_cast %67 : vector<1x8x640xbf16> to vector<8x640xbf16>
    %cst_58 = arith.constant dense<0.000000e+00> : vector<8x640xf32>
    %69 = tpu.matmul %66, %68, %cst_58 {dimension_numbers = #tpu.dot_dimension_numbers<[1], [0], [0], [1], [0, 0, 1, 1], [], []>} : vector<8x8xbf16>, vector<8x640xbf16>, vector<8x640xf32> -> vector<8x640xf32>
    %70 = arith.addf %64, %69 : vector<8x640xf32>
    %c12 = arith.constant 12 : index
    %c0_59 = arith.constant 0 : index
    %c0_60 = arith.constant 0 : index
    %71 = vector.load %arg2[%c12, %c0_59, %c0_60] : memref<27x8x8xbf16, #tpu.memory_space<vmem>>, vector<1x8x8xbf16>
    %72 = vector.shape_cast %71 : vector<1x8x8xbf16> to vector<8x8xbf16>
    %c0_61 = arith.constant 0 : index
    %c0_62 = arith.constant 0 : index
    %c127 = arith.constant 127 : index
    %73 = vector.load %arg1[%c0_61, %c0_62, %c127] : memref<1x8x896xbf16, #tpu.memory_space<vmem>>, vector<1x8x640xbf16>
    %74 = vector.shape_cast %73 : vector<1x8x640xbf16> to vector<8x640xbf16>
    %cst_63 = arith.constant dense<0.000000e+00> : vector<8x640xf32>
    %75 = tpu.matmul %72, %74, %cst_63 {dimension_numbers = #tpu.dot_dimension_numbers<[1], [0], [0], [1], [0, 0, 1, 1], [], []>} : vector<8x8xbf16>, vector<8x640xbf16>, vector<8x640xf32> -> vector<8x640xf32>
    %76 = arith.addf %70, %75 : vector<8x640xf32>
    %c13 = arith.constant 13 : index
    %c0_64 = arith.constant 0 : index
    %c0_65 = arith.constant 0 : index
    %77 = vector.load %arg2[%c13, %c0_64, %c0_65] : memref<27x8x8xbf16, #tpu.memory_space<vmem>>, vector<1x8x8xbf16>
    %78 = vector.shape_cast %77 : vector<1x8x8xbf16> to vector<8x8xbf16>
    %c0_66 = arith.constant 0 : index
    %c0_67 = arith.constant 0 : index
    %c128 = arith.constant 128 : index
    %79 = vector.load %arg1[%c0_66, %c0_67, %c128] : memref<1x8x896xbf16, #tpu.memory_space<vmem>>, vector<1x8x640xbf16>
    %80 = vector.shape_cast %79 : vector<1x8x640xbf16> to vector<8x640xbf16>
    %cst_68 = arith.constant dense<0.000000e+00> : vector<8x640xf32>
    %81 = tpu.matmul %78, %80, %cst_68 {dimension_numbers = #tpu.dot_dimension_numbers<[1], [0], [0], [1], [0, 0, 1, 1], [], []>} : vector<8x8xbf16>, vector<8x640xbf16>, vector<8x640xf32> -> vector<8x640xf32>
    %82 = arith.addf %76, %81 : vector<8x640xf32>
    %c14 = arith.constant 14 : index
    %c0_69 = arith.constant 0 : index
    %c0_70 = arith.constant 0 : index
    %83 = vector.load %arg2[%c14, %c0_69, %c0_70] : memref<27x8x8xbf16, #tpu.memory_space<vmem>>, vector<1x8x8xbf16>
    %84 = vector.shape_cast %83 : vector<1x8x8xbf16> to vector<8x8xbf16>
    %c0_71 = arith.constant 0 : index
    %c0_72 = arith.constant 0 : index
    %c129 = arith.constant 129 : index
    %85 = vector.load %arg1[%c0_71, %c0_72, %c129] : memref<1x8x896xbf16, #tpu.memory_space<vmem>>, vector<1x8x640xbf16>
    %86 = vector.shape_cast %85 : vector<1x8x640xbf16> to vector<8x640xbf16>
    %cst_73 = arith.constant dense<0.000000e+00> : vector<8x640xf32>
    %87 = tpu.matmul %84, %86, %cst_73 {dimension_numbers = #tpu.dot_dimension_numbers<[1], [0], [0], [1], [0, 0, 1, 1], [], []>} : vector<8x8xbf16>, vector<8x640xbf16>, vector<8x640xf32> -> vector<8x640xf32>
    %88 = arith.addf %82, %87 : vector<8x640xf32>
    %c15 = arith.constant 15 : index
    %c0_74 = arith.constant 0 : index
    %c0_75 = arith.constant 0 : index
    %89 = vector.load %arg2[%c15, %c0_74, %c0_75] : memref<27x8x8xbf16, #tpu.memory_space<vmem>>, vector<1x8x8xbf16>
    %90 = vector.shape_cast %89 : vector<1x8x8xbf16> to vector<8x8xbf16>
    %c0_76 = arith.constant 0 : index
    %c0_77 = arith.constant 0 : index
    %c137 = arith.constant 137 : index
    %91 = vector.load %arg1[%c0_76, %c0_77, %c137] : memref<1x8x896xbf16, #tpu.memory_space<vmem>>, vector<1x8x640xbf16>
    %92 = vector.shape_cast %91 : vector<1x8x640xbf16> to vector<8x640xbf16>
    %cst_78 = arith.constant dense<0.000000e+00> : vector<8x640xf32>
    %93 = tpu.matmul %90, %92, %cst_78 {dimension_numbers = #tpu.dot_dimension_numbers<[1], [0], [0], [1], [0, 0, 1, 1], [], []>} : vector<8x8xbf16>, vector<8x640xbf16>, vector<8x640xf32> -> vector<8x640xf32>
    %94 = arith.addf %88, %93 : vector<8x640xf32>
    %c16 = arith.constant 16 : index
    %c0_79 = arith.constant 0 : index
    %c0_80 = arith.constant 0 : index
    %95 = vector.load %arg2[%c16, %c0_79, %c0_80] : memref<27x8x8xbf16, #tpu.memory_space<vmem>>, vector<1x8x8xbf16>
    %96 = vector.shape_cast %95 : vector<1x8x8xbf16> to vector<8x8xbf16>
    %c0_81 = arith.constant 0 : index
    %c0_82 = arith.constant 0 : index
    %c138 = arith.constant 138 : index
    %97 = vector.load %arg1[%c0_81, %c0_82, %c138] : memref<1x8x896xbf16, #tpu.memory_space<vmem>>, vector<1x8x640xbf16>
    %98 = vector.shape_cast %97 : vector<1x8x640xbf16> to vector<8x640xbf16>
    %cst_83 = arith.constant dense<0.000000e+00> : vector<8x640xf32>
    %99 = tpu.matmul %96, %98, %cst_83 {dimension_numbers = #tpu.dot_dimension_numbers<[1], [0], [0], [1], [0, 0, 1, 1], [], []>} : vector<8x8xbf16>, vector<8x640xbf16>, vector<8x640xf32> -> vector<8x640xf32>
    %100 = arith.addf %94, %99 : vector<8x640xf32>
    %c17_84 = arith.constant 17 : index
    %c0_85 = arith.constant 0 : index
    %c0_86 = arith.constant 0 : index
    %101 = vector.load %arg2[%c17_84, %c0_85, %c0_86] : memref<27x8x8xbf16, #tpu.memory_space<vmem>>, vector<1x8x8xbf16>
    %102 = vector.shape_cast %101 : vector<1x8x8xbf16> to vector<8x8xbf16>
    %c0_87 = arith.constant 0 : index
    %c0_88 = arith.constant 0 : index
    %c139 = arith.constant 139 : index
    %103 = vector.load %arg1[%c0_87, %c0_88, %c139] : memref<1x8x896xbf16, #tpu.memory_space<vmem>>, vector<1x8x640xbf16>
    %104 = vector.shape_cast %103 : vector<1x8x640xbf16> to vector<8x640xbf16>
    %cst_89 = arith.constant dense<0.000000e+00> : vector<8x640xf32>
    %105 = tpu.matmul %102, %104, %cst_89 {dimension_numbers = #tpu.dot_dimension_numbers<[1], [0], [0], [1], [0, 0, 1, 1], [], []>} : vector<8x8xbf16>, vector<8x640xbf16>, vector<8x640xf32> -> vector<8x640xf32>
    %106 = arith.addf %100, %105 : vector<8x640xf32>
    %c18_90 = arith.constant 18 : index
    %c0_91 = arith.constant 0 : index
    %c0_92 = arith.constant 0 : index
    %107 = vector.load %arg2[%c18_90, %c0_91, %c0_92] : memref<27x8x8xbf16, #tpu.memory_space<vmem>>, vector<1x8x8xbf16>
    %108 = vector.shape_cast %107 : vector<1x8x8xbf16> to vector<8x8xbf16>
    %c0_93 = arith.constant 0 : index
    %c0_94 = arith.constant 0 : index
    %c217 = arith.constant 217 : index
    %109 = vector.load %arg1[%c0_93, %c0_94, %c217] : memref<1x8x896xbf16, #tpu.memory_space<vmem>>, vector<1x8x640xbf16>
    %110 = vector.shape_cast %109 : vector<1x8x640xbf16> to vector<8x640xbf16>
    %cst_95 = arith.constant dense<0.000000e+00> : vector<8x640xf32>
    %111 = tpu.matmul %108, %110, %cst_95 {dimension_numbers = #tpu.dot_dimension_numbers<[1], [0], [0], [1], [0, 0, 1, 1], [], []>} : vector<8x8xbf16>, vector<8x640xbf16>, vector<8x640xf32> -> vector<8x640xf32>
    %112 = arith.addf %106, %111 : vector<8x640xf32>
    %c19_96 = arith.constant 19 : index
    %c0_97 = arith.constant 0 : index
    %c0_98 = arith.constant 0 : index
    %113 = vector.load %arg2[%c19_96, %c0_97, %c0_98] : memref<27x8x8xbf16, #tpu.memory_space<vmem>>, vector<1x8x8xbf16>
    %114 = vector.shape_cast %113 : vector<1x8x8xbf16> to vector<8x8xbf16>
    %c0_99 = arith.constant 0 : index
    %c0_100 = arith.constant 0 : index
    %c218 = arith.constant 218 : index
    %115 = vector.load %arg1[%c0_99, %c0_100, %c218] : memref<1x8x896xbf16, #tpu.memory_space<vmem>>, vector<1x8x640xbf16>
    %116 = vector.shape_cast %115 : vector<1x8x640xbf16> to vector<8x640xbf16>
    %cst_101 = arith.constant dense<0.000000e+00> : vector<8x640xf32>
    %117 = tpu.matmul %114, %116, %cst_101 {dimension_numbers = #tpu.dot_dimension_numbers<[1], [0], [0], [1], [0, 0, 1, 1], [], []>} : vector<8x8xbf16>, vector<8x640xbf16>, vector<8x640xf32> -> vector<8x640xf32>
    %118 = arith.addf %112, %117 : vector<8x640xf32>
    %c20 = arith.constant 20 : index
    %c0_102 = arith.constant 0 : index
    %c0_103 = arith.constant 0 : index
    %119 = vector.load %arg2[%c20, %c0_102, %c0_103] : memref<27x8x8xbf16, #tpu.memory_space<vmem>>, vector<1x8x8xbf16>
    %120 = vector.shape_cast %119 : vector<1x8x8xbf16> to vector<8x8xbf16>
    %c0_104 = arith.constant 0 : index
    %c0_105 = arith.constant 0 : index
    %c219 = arith.constant 219 : index
    %121 = vector.load %arg1[%c0_104, %c0_105, %c219] : memref<1x8x896xbf16, #tpu.memory_space<vmem>>, vector<1x8x640xbf16>
    %122 = vector.shape_cast %121 : vector<1x8x640xbf16> to vector<8x640xbf16>
    %cst_106 = arith.constant dense<0.000000e+00> : vector<8x640xf32>
    %123 = tpu.matmul %120, %122, %cst_106 {dimension_numbers = #tpu.dot_dimension_numbers<[1], [0], [0], [1], [0, 0, 1, 1], [], []>} : vector<8x8xbf16>, vector<8x640xbf16>, vector<8x640xf32> -> vector<8x640xf32>
    %124 = arith.addf %118, %123 : vector<8x640xf32>
    %c21 = arith.constant 21 : index
    %c0_107 = arith.constant 0 : index
    %c0_108 = arith.constant 0 : index
    %125 = vector.load %arg2[%c21, %c0_107, %c0_108] : memref<27x8x8xbf16, #tpu.memory_space<vmem>>, vector<1x8x8xbf16>
    %126 = vector.shape_cast %125 : vector<1x8x8xbf16> to vector<8x8xbf16>
    %c0_109 = arith.constant 0 : index
    %c0_110 = arith.constant 0 : index
    %c227 = arith.constant 227 : index
    %127 = vector.load %arg1[%c0_109, %c0_110, %c227] : memref<1x8x896xbf16, #tpu.memory_space<vmem>>, vector<1x8x640xbf16>
    %128 = vector.shape_cast %127 : vector<1x8x640xbf16> to vector<8x640xbf16>
    %cst_111 = arith.constant dense<0.000000e+00> : vector<8x640xf32>
    %129 = tpu.matmul %126, %128, %cst_111 {dimension_numbers = #tpu.dot_dimension_numbers<[1], [0], [0], [1], [0, 0, 1, 1], [], []>} : vector<8x8xbf16>, vector<8x640xbf16>, vector<8x640xf32> -> vector<8x640xf32>
    %130 = arith.addf %124, %129 : vector<8x640xf32>
    %c22 = arith.constant 22 : index
    %c0_112 = arith.constant 0 : index
    %c0_113 = arith.constant 0 : index
    %131 = vector.load %arg2[%c22, %c0_112, %c0_113] : memref<27x8x8xbf16, #tpu.memory_space<vmem>>, vector<1x8x8xbf16>
    %132 = vector.shape_cast %131 : vector<1x8x8xbf16> to vector<8x8xbf16>
    %c0_114 = arith.constant 0 : index
    %c0_115 = arith.constant 0 : index
    %c228 = arith.constant 228 : index
    %133 = vector.load %arg1[%c0_114, %c0_115, %c228] : memref<1x8x896xbf16, #tpu.memory_space<vmem>>, vector<1x8x640xbf16>
    %134 = vector.shape_cast %133 : vector<1x8x640xbf16> to vector<8x640xbf16>
    %cst_116 = arith.constant dense<0.000000e+00> : vector<8x640xf32>
    %135 = tpu.matmul %132, %134, %cst_116 {dimension_numbers = #tpu.dot_dimension_numbers<[1], [0], [0], [1], [0, 0, 1, 1], [], []>} : vector<8x8xbf16>, vector<8x640xbf16>, vector<8x640xf32> -> vector<8x640xf32>
    %136 = arith.addf %130, %135 : vector<8x640xf32>
    %c23 = arith.constant 23 : index
    %c0_117 = arith.constant 0 : index
    %c0_118 = arith.constant 0 : index
    %137 = vector.load %arg2[%c23, %c0_117, %c0_118] : memref<27x8x8xbf16, #tpu.memory_space<vmem>>, vector<1x8x8xbf16>
    %138 = vector.shape_cast %137 : vector<1x8x8xbf16> to vector<8x8xbf16>
    %c0_119 = arith.constant 0 : index
    %c0_120 = arith.constant 0 : index
    %c229 = arith.constant 229 : index
    %139 = vector.load %arg1[%c0_119, %c0_120, %c229] : memref<1x8x896xbf16, #tpu.memory_space<vmem>>, vector<1x8x640xbf16>
    %140 = vector.shape_cast %139 : vector<1x8x640xbf16> to vector<8x640xbf16>
    %cst_121 = arith.constant dense<0.000000e+00> : vector<8x640xf32>
    %141 = tpu.matmul %138, %140, %cst_121 {dimension_numbers = #tpu.dot_dimension_numbers<[1], [0], [0], [1], [0, 0, 1, 1], [], []>} : vector<8x8xbf16>, vector<8x640xbf16>, vector<8x640xf32> -> vector<8x640xf32>
    %142 = arith.addf %136, %141 : vector<8x640xf32>
    %c24 = arith.constant 24 : index
    %c0_122 = arith.constant 0 : index
    %c0_123 = arith.constant 0 : index
    %143 = vector.load %arg2[%c24, %c0_122, %c0_123] : memref<27x8x8xbf16, #tpu.memory_space<vmem>>, vector<1x8x8xbf16>
    %144 = vector.shape_cast %143 : vector<1x8x8xbf16> to vector<8x8xbf16>
    %c0_124 = arith.constant 0 : index
    %c0_125 = arith.constant 0 : index
    %c237 = arith.constant 237 : index
    %145 = vector.load %arg1[%c0_124, %c0_125, %c237] : memref<1x8x896xbf16, #tpu.memory_space<vmem>>, vector<1x8x640xbf16>
    %146 = vector.shape_cast %145 : vector<1x8x640xbf16> to vector<8x640xbf16>
    %cst_126 = arith.constant dense<0.000000e+00> : vector<8x640xf32>
    %147 = tpu.matmul %144, %146, %cst_126 {dimension_numbers = #tpu.dot_dimension_numbers<[1], [0], [0], [1], [0, 0, 1, 1], [], []>} : vector<8x8xbf16>, vector<8x640xbf16>, vector<8x640xf32> -> vector<8x640xf32>
    %148 = arith.addf %142, %147 : vector<8x640xf32>
    %c25 = arith.constant 25 : index
    %c0_127 = arith.constant 0 : index
    %c0_128 = arith.constant 0 : index
    %149 = vector.load %arg2[%c25, %c0_127, %c0_128] : memref<27x8x8xbf16, #tpu.memory_space<vmem>>, vector<1x8x8xbf16>
    %150 = vector.shape_cast %149 : vector<1x8x8xbf16> to vector<8x8xbf16>
    %c0_129 = arith.constant 0 : index
    %c0_130 = arith.constant 0 : index
    %c238 = arith.constant 238 : index
    %151 = vector.load %arg1[%c0_129, %c0_130, %c238] : memref<1x8x896xbf16, #tpu.memory_space<vmem>>, vector<1x8x640xbf16>
    %152 = vector.shape_cast %151 : vector<1x8x640xbf16> to vector<8x640xbf16>
    %cst_131 = arith.constant dense<0.000000e+00> : vector<8x640xf32>
    %153 = tpu.matmul %150, %152, %cst_131 {dimension_numbers = #tpu.dot_dimension_numbers<[1], [0], [0], [1], [0, 0, 1, 1], [], []>} : vector<8x8xbf16>, vector<8x640xbf16>, vector<8x640xf32> -> vector<8x640xf32>
    %154 = arith.addf %148, %153 : vector<8x640xf32>
    %c26 = arith.constant 26 : index
    %c0_132 = arith.constant 0 : index
    %c0_133 = arith.constant 0 : index
    %155 = vector.load %arg2[%c26, %c0_132, %c0_133] : memref<27x8x8xbf16, #tpu.memory_space<vmem>>, vector<1x8x8xbf16>
    %156 = vector.shape_cast %155 : vector<1x8x8xbf16> to vector<8x8xbf16>
    %c0_134 = arith.constant 0 : index
    %c0_135 = arith.constant 0 : index
    %c239 = arith.constant 239 : index
    %157 = vector.load %arg1[%c0_134, %c0_135, %c239] : memref<1x8x896xbf16, #tpu.memory_space<vmem>>, vector<1x8x640xbf16>
    %158 = vector.shape_cast %157 : vector<1x8x640xbf16> to vector<8x640xbf16>
    %cst_136 = arith.constant dense<0.000000e+00> : vector<8x640xf32>
    %159 = tpu.matmul %156, %158, %cst_136 {dimension_numbers = #tpu.dot_dimension_numbers<[1], [0], [0], [1], [0, 0, 1, 1], [], []>} : vector<8x8xbf16>, vector<8x640xbf16>, vector<8x640xf32> -> vector<8x640xf32>
    %160 = arith.addf %154, %159 : vector<8x640xf32>
    %c0_137 = arith.constant 0 : index
    %c0_138 = arith.constant 0 : index
    %161 = vector.load %arg4[%c0_137, %c0_138] : memref<8x1xf32, #tpu.memory_space<vmem>>, vector<8x1xf32>
    %162 = vector.broadcast %161 : vector<8x1xf32> to vector<8x640xf32>
    %163 = arith.mulf %160, %162 : vector<8x640xf32>
    %c0_139 = arith.constant 0 : index
    %c0_140 = arith.constant 0 : index
    %164 = vector.load %arg5[%c0_139, %c0_140] : memref<8x1xf32, #tpu.memory_space<vmem>>, vector<8x1xf32>
    %165 = vector.broadcast %164 : vector<8x1xf32> to vector<8x640xf32>
    %166 = arith.addf %163, %165 : vector<8x640xf32>
    %cst_141 = arith.constant 0.000000e+00 : f32
    %167 = vector.broadcast %cst_141 : f32 to vector<8x640xf32>
    %168 = arith.maximumf %166, %167 : vector<8x640xf32>
    %c0_142 = arith.constant 0 : index
    %c0_143 = arith.constant 0 : index
    %169 = vector.load %arg8[%c0_142, %c0_143] : memref<1x640xf32, #tpu.memory_space<vmem>>, vector<1x640xf32>
    %170 = vector.broadcast %169 : vector<1x640xf32> to vector<8x640xf32>
    %171 = arith.mulf %168, %170 : vector<8x640xf32>
    %cst_144 = arith.constant 0.000000e+00 : bf16
    %172 = vector.broadcast %cst_144 : bf16 to vector<8x128xbf16>
    %c0_145 = arith.constant 0 : index
    %c0_146 = arith.constant 0 : index
    %173 = vector.load %arg10[%c0_145, %c0_146] : memref<8x896xbf16, #tpu.memory_space<vmem>>, vector<8x128xbf16>
    tpu.vector_store %arg10[%c0_145, %c0_146], %172 {strides = array<i32>} : memref<8x896xbf16, #tpu.memory_space<vmem>>, vector<8x128xbf16>,
    %174 = arith.truncf %171 : vector<8x640xf32> to vector<8x640xbf16>
    %c0_147 = arith.constant 0 : index
    %c128_148 = arith.constant 128 : index
    %175 = vector.load %arg10[%c0_147, %c128_148] : memref<8x896xbf16, #tpu.memory_space<vmem>>, vector<8x640xbf16>
    tpu.vector_store %arg10[%c0_147, %c128_148], %174 {strides = array<i32>} : memref<8x896xbf16, #tpu.memory_space<vmem>>, vector<8x640xbf16>,
    %cst_149 = arith.constant 0.000000e+00 : bf16
    %176 = vector.broadcast %cst_149 : bf16 to vector<8x128xbf16>
    %c0_150 = arith.constant 0 : index
    %c768 = arith.constant 768 : index
    %177 = vector.load %arg10[%c0_150, %c768] : memref<8x896xbf16, #tpu.memory_space<vmem>>, vector<8x128xbf16>
    tpu.vector_store %arg10[%c0_150, %c768], %176 {strides = array<i32>} : memref<8x896xbf16, #tpu.memory_space<vmem>>, vector<8x128xbf16>,
    %c0_151 = arith.constant 0 : index
    %c0_152 = arith.constant 0 : index
    %c0_153 = arith.constant 0 : index
    %178 = vector.load %arg3[%c0_151, %c0_152, %c0_153] : memref<27x8x8xbf16, #tpu.memory_space<vmem>>, vector<1x8x8xbf16>
    %179 = vector.shape_cast %178 : vector<1x8x8xbf16> to vector<8x8xbf16>
    %c0_154 = arith.constant 0 : index
    %c17_155 = arith.constant 17 : index
    %180 = vector.load %arg10[%c0_154, %c17_155] : memref<8x896xbf16, #tpu.memory_space<vmem>>, vector<8x640xbf16>
    %cst_156 = arith.constant dense<0.000000e+00> : vector<8x640xf32>
    %181 = tpu.matmul %179, %180, %cst_156 {dimension_numbers = #tpu.dot_dimension_numbers<[1], [0], [0], [1], [0, 0, 1, 1], [], []>} : vector<8x8xbf16>, vector<8x640xbf16>, vector<8x640xf32> -> vector<8x640xf32>
    %c1_157 = arith.constant 1 : index
    %c0_158 = arith.constant 0 : index
    %c0_159 = arith.constant 0 : index
    %182 = vector.load %arg3[%c1_157, %c0_158, %c0_159] : memref<27x8x8xbf16, #tpu.memory_space<vmem>>, vector<1x8x8xbf16>
    %183 = vector.shape_cast %182 : vector<1x8x8xbf16> to vector<8x8xbf16>
    %c0_160 = arith.constant 0 : index
    %c18_161 = arith.constant 18 : index
    %184 = vector.load %arg10[%c0_160, %c18_161] : memref<8x896xbf16, #tpu.memory_space<vmem>>, vector<8x640xbf16>
    %cst_162 = arith.constant dense<0.000000e+00> : vector<8x640xf32>
    %185 = tpu.matmul %183, %184, %cst_162 {dimension_numbers = #tpu.dot_dimension_numbers<[1], [0], [0], [1], [0, 0, 1, 1], [], []>} : vector<8x8xbf16>, vector<8x640xbf16>, vector<8x640xf32> -> vector<8x640xf32>
    %186 = arith.addf %181, %185 : vector<8x640xf32>
    %c2_163 = arith.constant 2 : index
    %c0_164 = arith.constant 0 : index
    %c0_165 = arith.constant 0 : index
    %187 = vector.load %arg3[%c2_163, %c0_164, %c0_165] : memref<27x8x8xbf16, #tpu.memory_space<vmem>>, vector<1x8x8xbf16>
    %188 = vector.shape_cast %187 : vector<1x8x8xbf16> to vector<8x8xbf16>
    %c0_166 = arith.constant 0 : index
    %c19_167 = arith.constant 19 : index
    %189 = vector.load %arg10[%c0_166, %c19_167] : memref<8x896xbf16, #tpu.memory_space<vmem>>, vector<8x640xbf16>
    %cst_168 = arith.constant dense<0.000000e+00> : vector<8x640xf32>
    %190 = tpu.matmul %188, %189, %cst_168 {dimension_numbers = #tpu.dot_dimension_numbers<[1], [0], [0], [1], [0, 0, 1, 1], [], []>} : vector<8x8xbf16>, vector<8x640xbf16>, vector<8x640xf32> -> vector<8x640xf32>
    %191 = arith.addf %186, %190 : vector<8x640xf32>
    %c3_169 = arith.constant 3 : index
    %c0_170 = arith.constant 0 : index
    %c0_171 = arith.constant 0 : index
    %192 = vector.load %arg3[%c3_169, %c0_170, %c0_171] : memref<27x8x8xbf16, #tpu.memory_space<vmem>>, vector<1x8x8xbf16>
    %193 = vector.shape_cast %192 : vector<1x8x8xbf16> to vector<8x8xbf16>
    %c0_172 = arith.constant 0 : index
    %c27_173 = arith.constant 27 : index
    %194 = vector.load %arg10[%c0_172, %c27_173] : memref<8x896xbf16, #tpu.memory_space<vmem>>, vector<8x640xbf16>
    %cst_174 = arith.constant dense<0.000000e+00> : vector<8x640xf32>
    %195 = tpu.matmul %193, %194, %cst_174 {dimension_numbers = #tpu.dot_dimension_numbers<[1], [0], [0], [1], [0, 0, 1, 1], [], []>} : vector<8x8xbf16>, vector<8x640xbf16>, vector<8x640xf32> -> vector<8x640xf32>
    %196 = arith.addf %191, %195 : vector<8x640xf32>
    %c4_175 = arith.constant 4 : index
    %c0_176 = arith.constant 0 : index
    %c0_177 = arith.constant 0 : index
    %197 = vector.load %arg3[%c4_175, %c0_176, %c0_177] : memref<27x8x8xbf16, #tpu.memory_space<vmem>>, vector<1x8x8xbf16>
    %198 = vector.shape_cast %197 : vector<1x8x8xbf16> to vector<8x8xbf16>
    %c0_178 = arith.constant 0 : index
    %c28_179 = arith.constant 28 : index
    %199 = vector.load %arg10[%c0_178, %c28_179] : memref<8x896xbf16, #tpu.memory_space<vmem>>, vector<8x640xbf16>
    %cst_180 = arith.constant dense<0.000000e+00> : vector<8x640xf32>
    %200 = tpu.matmul %198, %199, %cst_180 {dimension_numbers = #tpu.dot_dimension_numbers<[1], [0], [0], [1], [0, 0, 1, 1], [], []>} : vector<8x8xbf16>, vector<8x640xbf16>, vector<8x640xf32> -> vector<8x640xf32>
    %201 = arith.addf %196, %200 : vector<8x640xf32>
    %c5_181 = arith.constant 5 : index
    %c0_182 = arith.constant 0 : index
    %c0_183 = arith.constant 0 : index
    %202 = vector.load %arg3[%c5_181, %c0_182, %c0_183] : memref<27x8x8xbf16, #tpu.memory_space<vmem>>, vector<1x8x8xbf16>
    %203 = vector.shape_cast %202 : vector<1x8x8xbf16> to vector<8x8xbf16>
    %c0_184 = arith.constant 0 : index
    %c29_185 = arith.constant 29 : index
    %204 = vector.load %arg10[%c0_184, %c29_185] : memref<8x896xbf16, #tpu.memory_space<vmem>>, vector<8x640xbf16>
    %cst_186 = arith.constant dense<0.000000e+00> : vector<8x640xf32>
    %205 = tpu.matmul %203, %204, %cst_186 {dimension_numbers = #tpu.dot_dimension_numbers<[1], [0], [0], [1], [0, 0, 1, 1], [], []>} : vector<8x8xbf16>, vector<8x640xbf16>, vector<8x640xf32> -> vector<8x640xf32>
    %206 = arith.addf %201, %205 : vector<8x640xf32>
    %c6_187 = arith.constant 6 : index
    %c0_188 = arith.constant 0 : index
    %c0_189 = arith.constant 0 : index
    %207 = vector.load %arg3[%c6_187, %c0_188, %c0_189] : memref<27x8x8xbf16, #tpu.memory_space<vmem>>, vector<1x8x8xbf16>
    %208 = vector.shape_cast %207 : vector<1x8x8xbf16> to vector<8x8xbf16>
    %c0_190 = arith.constant 0 : index
    %c37_191 = arith.constant 37 : index
    %209 = vector.load %arg10[%c0_190, %c37_191] : memref<8x896xbf16, #tpu.memory_space<vmem>>, vector<8x640xbf16>
    %cst_192 = arith.constant dense<0.000000e+00> : vector<8x640xf32>
    %210 = tpu.matmul %208, %209, %cst_192 {dimension_numbers = #tpu.dot_dimension_numbers<[1], [0], [0], [1], [0, 0, 1, 1], [], []>} : vector<8x8xbf16>, vector<8x640xbf16>, vector<8x640xf32> -> vector<8x640xf32>
    %211 = arith.addf %206, %210 : vector<8x640xf32>
    %c7_193 = arith.constant 7 : index
    %c0_194 = arith.constant 0 : index
    %c0_195 = arith.constant 0 : index
    %212 = vector.load %arg3[%c7_193, %c0_194, %c0_195] : memref<27x8x8xbf16, #tpu.memory_space<vmem>>, vector<1x8x8xbf16>
    %213 = vector.shape_cast %212 : vector<1x8x8xbf16> to vector<8x8xbf16>
    %c0_196 = arith.constant 0 : index
    %c38_197 = arith.constant 38 : index
    %214 = vector.load %arg10[%c0_196, %c38_197] : memref<8x896xbf16, #tpu.memory_space<vmem>>, vector<8x640xbf16>
    %cst_198 = arith.constant dense<0.000000e+00> : vector<8x640xf32>
    %215 = tpu.matmul %213, %214, %cst_198 {dimension_numbers = #tpu.dot_dimension_numbers<[1], [0], [0], [1], [0, 0, 1, 1], [], []>} : vector<8x8xbf16>, vector<8x640xbf16>, vector<8x640xf32> -> vector<8x640xf32>
    %216 = arith.addf %211, %215 : vector<8x640xf32>
    %c8_199 = arith.constant 8 : index
    %c0_200 = arith.constant 0 : index
    %c0_201 = arith.constant 0 : index
    %217 = vector.load %arg3[%c8_199, %c0_200, %c0_201] : memref<27x8x8xbf16, #tpu.memory_space<vmem>>, vector<1x8x8xbf16>
    %218 = vector.shape_cast %217 : vector<1x8x8xbf16> to vector<8x8xbf16>
    %c0_202 = arith.constant 0 : index
    %c39_203 = arith.constant 39 : index
    %219 = vector.load %arg10[%c0_202, %c39_203] : memref<8x896xbf16, #tpu.memory_space<vmem>>, vector<8x640xbf16>
    %cst_204 = arith.constant dense<0.000000e+00> : vector<8x640xf32>
    %220 = tpu.matmul %218, %219, %cst_204 {dimension_numbers = #tpu.dot_dimension_numbers<[1], [0], [0], [1], [0, 0, 1, 1], [], []>} : vector<8x8xbf16>, vector<8x640xbf16>, vector<8x640xf32> -> vector<8x640xf32>
    %221 = arith.addf %216, %220 : vector<8x640xf32>
    %c9_205 = arith.constant 9 : index
    %c0_206 = arith.constant 0 : index
    %c0_207 = arith.constant 0 : index
    %222 = vector.load %arg3[%c9_205, %c0_206, %c0_207] : memref<27x8x8xbf16, #tpu.memory_space<vmem>>, vector<1x8x8xbf16>
    %223 = vector.shape_cast %222 : vector<1x8x8xbf16> to vector<8x8xbf16>
    %c0_208 = arith.constant 0 : index
    %c117_209 = arith.constant 117 : index
    %224 = vector.load %arg10[%c0_208, %c117_209] : memref<8x896xbf16, #tpu.memory_space<vmem>>, vector<8x640xbf16>
    %cst_210 = arith.constant dense<0.000000e+00> : vector<8x640xf32>
    %225 = tpu.matmul %223, %224, %cst_210 {dimension_numbers = #tpu.dot_dimension_numbers<[1], [0], [0], [1], [0, 0, 1, 1], [], []>} : vector<8x8xbf16>, vector<8x640xbf16>, vector<8x640xf32> -> vector<8x640xf32>
    %226 = arith.addf %221, %225 : vector<8x640xf32>
    %c10_211 = arith.constant 10 : index
    %c0_212 = arith.constant 0 : index
    %c0_213 = arith.constant 0 : index
    %227 = vector.load %arg3[%c10_211, %c0_212, %c0_213] : memref<27x8x8xbf16, #tpu.memory_space<vmem>>, vector<1x8x8xbf16>
    %228 = vector.shape_cast %227 : vector<1x8x8xbf16> to vector<8x8xbf16>
    %c0_214 = arith.constant 0 : index
    %c118_215 = arith.constant 118 : index
    %229 = vector.load %arg10[%c0_214, %c118_215] : memref<8x896xbf16, #tpu.memory_space<vmem>>, vector<8x640xbf16>
    %cst_216 = arith.constant dense<0.000000e+00> : vector<8x640xf32>
    %230 = tpu.matmul %228, %229, %cst_216 {dimension_numbers = #tpu.dot_dimension_numbers<[1], [0], [0], [1], [0, 0, 1, 1], [], []>} : vector<8x8xbf16>, vector<8x640xbf16>, vector<8x640xf32> -> vector<8x640xf32>
    %231 = arith.addf %226, %230 : vector<8x640xf32>
    %c11_217 = arith.constant 11 : index
    %c0_218 = arith.constant 0 : index
    %c0_219 = arith.constant 0 : index
    %232 = vector.load %arg3[%c11_217, %c0_218, %c0_219] : memref<27x8x8xbf16, #tpu.memory_space<vmem>>, vector<1x8x8xbf16>
    %233 = vector.shape_cast %232 : vector<1x8x8xbf16> to vector<8x8xbf16>
    %c0_220 = arith.constant 0 : index
    %c119_221 = arith.constant 119 : index
    %234 = vector.load %arg10[%c0_220, %c119_221] : memref<8x896xbf16, #tpu.memory_space<vmem>>, vector<8x640xbf16>
    %cst_222 = arith.constant dense<0.000000e+00> : vector<8x640xf32>
    %235 = tpu.matmul %233, %234, %cst_222 {dimension_numbers = #tpu.dot_dimension_numbers<[1], [0], [0], [1], [0, 0, 1, 1], [], []>} : vector<8x8xbf16>, vector<8x640xbf16>, vector<8x640xf32> -> vector<8x640xf32>
    %236 = arith.addf %231, %235 : vector<8x640xf32>
    %c12_223 = arith.constant 12 : index
    %c0_224 = arith.constant 0 : index
    %c0_225 = arith.constant 0 : index
    %237 = vector.load %arg3[%c12_223, %c0_224, %c0_225] : memref<27x8x8xbf16, #tpu.memory_space<vmem>>, vector<1x8x8xbf16>
    %238 = vector.shape_cast %237 : vector<1x8x8xbf16> to vector<8x8xbf16>
    %c0_226 = arith.constant 0 : index
    %c127_227 = arith.constant 127 : index
    %239 = vector.load %arg10[%c0_226, %c127_227] : memref<8x896xbf16, #tpu.memory_space<vmem>>, vector<8x640xbf16>
    %cst_228 = arith.constant dense<0.000000e+00> : vector<8x640xf32>
    %240 = tpu.matmul %238, %239, %cst_228 {dimension_numbers = #tpu.dot_dimension_numbers<[1], [0], [0], [1], [0, 0, 1, 1], [], []>} : vector<8x8xbf16>, vector<8x640xbf16>, vector<8x640xf32> -> vector<8x640xf32>
    %241 = arith.addf %236, %240 : vector<8x640xf32>
    %c13_229 = arith.constant 13 : index
    %c0_230 = arith.constant 0 : index
    %c0_231 = arith.constant 0 : index
    %242 = vector.load %arg3[%c13_229, %c0_230, %c0_231] : memref<27x8x8xbf16, #tpu.memory_space<vmem>>, vector<1x8x8xbf16>
    %243 = vector.shape_cast %242 : vector<1x8x8xbf16> to vector<8x8xbf16>
    %c0_232 = arith.constant 0 : index
    %c128_233 = arith.constant 128 : index
    %244 = vector.load %arg10[%c0_232, %c128_233] : memref<8x896xbf16, #tpu.memory_space<vmem>>, vector<8x640xbf16>
    %cst_234 = arith.constant dense<0.000000e+00> : vector<8x640xf32>
    %245 = tpu.matmul %243, %244, %cst_234 {dimension_numbers = #tpu.dot_dimension_numbers<[1], [0], [0], [1], [0, 0, 1, 1], [], []>} : vector<8x8xbf16>, vector<8x640xbf16>, vector<8x640xf32> -> vector<8x640xf32>
    %246 = arith.addf %241, %245 : vector<8x640xf32>
    %c14_235 = arith.constant 14 : index
    %c0_236 = arith.constant 0 : index
    %c0_237 = arith.constant 0 : index
    %247 = vector.load %arg3[%c14_235, %c0_236, %c0_237] : memref<27x8x8xbf16, #tpu.memory_space<vmem>>, vector<1x8x8xbf16>
    %248 = vector.shape_cast %247 : vector<1x8x8xbf16> to vector<8x8xbf16>
    %c0_238 = arith.constant 0 : index
    %c129_239 = arith.constant 129 : index
    %249 = vector.load %arg10[%c0_238, %c129_239] : memref<8x896xbf16, #tpu.memory_space<vmem>>, vector<8x640xbf16>
    %cst_240 = arith.constant dense<0.000000e+00> : vector<8x640xf32>
    %250 = tpu.matmul %248, %249, %cst_240 {dimension_numbers = #tpu.dot_dimension_numbers<[1], [0], [0], [1], [0, 0, 1, 1], [], []>} : vector<8x8xbf16>, vector<8x640xbf16>, vector<8x640xf32> -> vector<8x640xf32>
    %251 = arith.addf %246, %250 : vector<8x640xf32>
    %c15_241 = arith.constant 15 : index
    %c0_242 = arith.constant 0 : index
    %c0_243 = arith.constant 0 : index
    %252 = vector.load %arg3[%c15_241, %c0_242, %c0_243] : memref<27x8x8xbf16, #tpu.memory_space<vmem>>, vector<1x8x8xbf16>
    %253 = vector.shape_cast %252 : vector<1x8x8xbf16> to vector<8x8xbf16>
    %c0_244 = arith.constant 0 : index
    %c137_245 = arith.constant 137 : index
    %254 = vector.load %arg10[%c0_244, %c137_245] : memref<8x896xbf16, #tpu.memory_space<vmem>>, vector<8x640xbf16>
    %cst_246 = arith.constant dense<0.000000e+00> : vector<8x640xf32>
    %255 = tpu.matmul %253, %254, %cst_246 {dimension_numbers = #tpu.dot_dimension_numbers<[1], [0], [0], [1], [0, 0, 1, 1], [], []>} : vector<8x8xbf16>, vector<8x640xbf16>, vector<8x640xf32> -> vector<8x640xf32>
    %256 = arith.addf %251, %255 : vector<8x640xf32>
    %c16_247 = arith.constant 16 : index
    %c0_248 = arith.constant 0 : index
    %c0_249 = arith.constant 0 : index
    %257 = vector.load %arg3[%c16_247, %c0_248, %c0_249] : memref<27x8x8xbf16, #tpu.memory_space<vmem>>, vector<1x8x8xbf16>
    %258 = vector.shape_cast %257 : vector<1x8x8xbf16> to vector<8x8xbf16>
    %c0_250 = arith.constant 0 : index
    %c138_251 = arith.constant 138 : index
    %259 = vector.load %arg10[%c0_250, %c138_251] : memref<8x896xbf16, #tpu.memory_space<vmem>>, vector<8x640xbf16>
    %cst_252 = arith.constant dense<0.000000e+00> : vector<8x640xf32>
    %260 = tpu.matmul %258, %259, %cst_252 {dimension_numbers = #tpu.dot_dimension_numbers<[1], [0], [0], [1], [0, 0, 1, 1], [], []>} : vector<8x8xbf16>, vector<8x640xbf16>, vector<8x640xf32> -> vector<8x640xf32>
    %261 = arith.addf %256, %260 : vector<8x640xf32>
    %c17_253 = arith.constant 17 : index
    %c0_254 = arith.constant 0 : index
    %c0_255 = arith.constant 0 : index
    %262 = vector.load %arg3[%c17_253, %c0_254, %c0_255] : memref<27x8x8xbf16, #tpu.memory_space<vmem>>, vector<1x8x8xbf16>
    %263 = vector.shape_cast %262 : vector<1x8x8xbf16> to vector<8x8xbf16>
    %c0_256 = arith.constant 0 : index
    %c139_257 = arith.constant 139 : index
    %264 = vector.load %arg10[%c0_256, %c139_257] : memref<8x896xbf16, #tpu.memory_space<vmem>>, vector<8x640xbf16>
    %cst_258 = arith.constant dense<0.000000e+00> : vector<8x640xf32>
    %265 = tpu.matmul %263, %264, %cst_258 {dimension_numbers = #tpu.dot_dimension_numbers<[1], [0], [0], [1], [0, 0, 1, 1], [], []>} : vector<8x8xbf16>, vector<8x640xbf16>, vector<8x640xf32> -> vector<8x640xf32>
    %266 = arith.addf %261, %265 : vector<8x640xf32>
    %c18_259 = arith.constant 18 : index
    %c0_260 = arith.constant 0 : index
    %c0_261 = arith.constant 0 : index
    %267 = vector.load %arg3[%c18_259, %c0_260, %c0_261] : memref<27x8x8xbf16, #tpu.memory_space<vmem>>, vector<1x8x8xbf16>
    %268 = vector.shape_cast %267 : vector<1x8x8xbf16> to vector<8x8xbf16>
    %c0_262 = arith.constant 0 : index
    %c217_263 = arith.constant 217 : index
    %269 = vector.load %arg10[%c0_262, %c217_263] : memref<8x896xbf16, #tpu.memory_space<vmem>>, vector<8x640xbf16>
    %cst_264 = arith.constant dense<0.000000e+00> : vector<8x640xf32>
    %270 = tpu.matmul %268, %269, %cst_264 {dimension_numbers = #tpu.dot_dimension_numbers<[1], [0], [0], [1], [0, 0, 1, 1], [], []>} : vector<8x8xbf16>, vector<8x640xbf16>, vector<8x640xf32> -> vector<8x640xf32>
    %271 = arith.addf %266, %270 : vector<8x640xf32>
    %c19_265 = arith.constant 19 : index
    %c0_266 = arith.constant 0 : index
    %c0_267 = arith.constant 0 : index
    %272 = vector.load %arg3[%c19_265, %c0_266, %c0_267] : memref<27x8x8xbf16, #tpu.memory_space<vmem>>, vector<1x8x8xbf16>
    %273 = vector.shape_cast %272 : vector<1x8x8xbf16> to vector<8x8xbf16>
    %c0_268 = arith.constant 0 : index
    %c218_269 = arith.constant 218 : index
    %274 = vector.load %arg10[%c0_268, %c218_269] : memref<8x896xbf16, #tpu.memory_space<vmem>>, vector<8x640xbf16>
    %cst_270 = arith.constant dense<0.000000e+00> : vector<8x640xf32>
    %275 = tpu.matmul %273, %274, %cst_270 {dimension_numbers = #tpu.dot_dimension_numbers<[1], [0], [0], [1], [0, 0, 1, 1], [], []>} : vector<8x8xbf16>, vector<8x640xbf16>, vector<8x640xf32> -> vector<8x640xf32>
    %276 = arith.addf %271, %275 : vector<8x640xf32>
    %c20_271 = arith.constant 20 : index
    %c0_272 = arith.constant 0 : index
    %c0_273 = arith.constant 0 : index
    %277 = vector.load %arg3[%c20_271, %c0_272, %c0_273] : memref<27x8x8xbf16, #tpu.memory_space<vmem>>, vector<1x8x8xbf16>
    %278 = vector.shape_cast %277 : vector<1x8x8xbf16> to vector<8x8xbf16>
    %c0_274 = arith.constant 0 : index
    %c219_275 = arith.constant 219 : index
    %279 = vector.load %arg10[%c0_274, %c219_275] : memref<8x896xbf16, #tpu.memory_space<vmem>>, vector<8x640xbf16>
    %cst_276 = arith.constant dense<0.000000e+00> : vector<8x640xf32>
    %280 = tpu.matmul %278, %279, %cst_276 {dimension_numbers = #tpu.dot_dimension_numbers<[1], [0], [0], [1], [0, 0, 1, 1], [], []>} : vector<8x8xbf16>, vector<8x640xbf16>, vector<8x640xf32> -> vector<8x640xf32>
    %281 = arith.addf %276, %280 : vector<8x640xf32>
    %c21_277 = arith.constant 21 : index
    %c0_278 = arith.constant 0 : index
    %c0_279 = arith.constant 0 : index
    %282 = vector.load %arg3[%c21_277, %c0_278, %c0_279] : memref<27x8x8xbf16, #tpu.memory_space<vmem>>, vector<1x8x8xbf16>
    %283 = vector.shape_cast %282 : vector<1x8x8xbf16> to vector<8x8xbf16>
    %c0_280 = arith.constant 0 : index
    %c227_281 = arith.constant 227 : index
    %284 = vector.load %arg10[%c0_280, %c227_281] : memref<8x896xbf16, #tpu.memory_space<vmem>>, vector<8x640xbf16>
    %cst_282 = arith.constant dense<0.000000e+00> : vector<8x640xf32>
    %285 = tpu.matmul %283, %284, %cst_282 {dimension_numbers = #tpu.dot_dimension_numbers<[1], [0], [0], [1], [0, 0, 1, 1], [], []>} : vector<8x8xbf16>, vector<8x640xbf16>, vector<8x640xf32> -> vector<8x640xf32>
    %286 = arith.addf %281, %285 : vector<8x640xf32>
    %c22_283 = arith.constant 22 : index
    %c0_284 = arith.constant 0 : index
    %c0_285 = arith.constant 0 : index
    %287 = vector.load %arg3[%c22_283, %c0_284, %c0_285] : memref<27x8x8xbf16, #tpu.memory_space<vmem>>, vector<1x8x8xbf16>
    %288 = vector.shape_cast %287 : vector<1x8x8xbf16> to vector<8x8xbf16>
    %c0_286 = arith.constant 0 : index
    %c228_287 = arith.constant 228 : index
    %289 = vector.load %arg10[%c0_286, %c228_287] : memref<8x896xbf16, #tpu.memory_space<vmem>>, vector<8x640xbf16>
    %cst_288 = arith.constant dense<0.000000e+00> : vector<8x640xf32>
    %290 = tpu.matmul %288, %289, %cst_288 {dimension_numbers = #tpu.dot_dimension_numbers<[1], [0], [0], [1], [0, 0, 1, 1], [], []>} : vector<8x8xbf16>, vector<8x640xbf16>, vector<8x640xf32> -> vector<8x640xf32>
    %291 = arith.addf %286, %290 : vector<8x640xf32>
    %c23_289 = arith.constant 23 : index
    %c0_290 = arith.constant 0 : index
    %c0_291 = arith.constant 0 : index
    %292 = vector.load %arg3[%c23_289, %c0_290, %c0_291] : memref<27x8x8xbf16, #tpu.memory_space<vmem>>, vector<1x8x8xbf16>
    %293 = vector.shape_cast %292 : vector<1x8x8xbf16> to vector<8x8xbf16>
    %c0_292 = arith.constant 0 : index
    %c229_293 = arith.constant 229 : index
    %294 = vector.load %arg10[%c0_292, %c229_293] : memref<8x896xbf16, #tpu.memory_space<vmem>>, vector<8x640xbf16>
    %cst_294 = arith.constant dense<0.000000e+00> : vector<8x640xf32>
    %295 = tpu.matmul %293, %294, %cst_294 {dimension_numbers = #tpu.dot_dimension_numbers<[1], [0], [0], [1], [0, 0, 1, 1], [], []>} : vector<8x8xbf16>, vector<8x640xbf16>, vector<8x640xf32> -> vector<8x640xf32>
    %296 = arith.addf %291, %295 : vector<8x640xf32>
    %c24_295 = arith.constant 24 : index
    %c0_296 = arith.constant 0 : index
    %c0_297 = arith.constant 0 : index
    %297 = vector.load %arg3[%c24_295, %c0_296, %c0_297] : memref<27x8x8xbf16, #tpu.memory_space<vmem>>, vector<1x8x8xbf16>
    %298 = vector.shape_cast %297 : vector<1x8x8xbf16> to vector<8x8xbf16>
    %c0_298 = arith.constant 0 : index
    %c237_299 = arith.constant 237 : index
    %299 = vector.load %arg10[%c0_298, %c237_299] : memref<8x896xbf16, #tpu.memory_space<vmem>>, vector<8x640xbf16>
    %cst_300 = arith.constant dense<0.000000e+00> : vector<8x640xf32>
    %300 = tpu.matmul %298, %299, %cst_300 {dimension_numbers = #tpu.dot_dimension_numbers<[1], [0], [0], [1], [0, 0, 1, 1], [], []>} : vector<8x8xbf16>, vector<8x640xbf16>, vector<8x640xf32> -> vector<8x640xf32>
    %301 = arith.addf %296, %300 : vector<8x640xf32>
    %c25_301 = arith.constant 25 : index
    %c0_302 = arith.constant 0 : index
    %c0_303 = arith.constant 0 : index
    %302 = vector.load %arg3[%c25_301, %c0_302, %c0_303] : memref<27x8x8xbf16, #tpu.memory_space<vmem>>, vector<1x8x8xbf16>
    %303 = vector.shape_cast %302 : vector<1x8x8xbf16> to vector<8x8xbf16>
    %c0_304 = arith.constant 0 : index
    %c238_305 = arith.constant 238 : index
    %304 = vector.load %arg10[%c0_304, %c238_305] : memref<8x896xbf16, #tpu.memory_space<vmem>>, vector<8x640xbf16>
    %cst_306 = arith.constant dense<0.000000e+00> : vector<8x640xf32>
    %305 = tpu.matmul %303, %304, %cst_306 {dimension_numbers = #tpu.dot_dimension_numbers<[1], [0], [0], [1], [0, 0, 1, 1], [], []>} : vector<8x8xbf16>, vector<8x640xbf16>, vector<8x640xf32> -> vector<8x640xf32>
    %306 = arith.addf %301, %305 : vector<8x640xf32>
    %c26_307 = arith.constant 26 : index
    %c0_308 = arith.constant 0 : index
    %c0_309 = arith.constant 0 : index
    %307 = vector.load %arg3[%c26_307, %c0_308, %c0_309] : memref<27x8x8xbf16, #tpu.memory_space<vmem>>, vector<1x8x8xbf16>
    %308 = vector.shape_cast %307 : vector<1x8x8xbf16> to vector<8x8xbf16>
    %c0_310 = arith.constant 0 : index
    %c239_311 = arith.constant 239 : index
    %309 = vector.load %arg10[%c0_310, %c239_311] : memref<8x896xbf16, #tpu.memory_space<vmem>>, vector<8x640xbf16>
    %cst_312 = arith.constant dense<0.000000e+00> : vector<8x640xf32>
    %310 = tpu.matmul %308, %309, %cst_312 {dimension_numbers = #tpu.dot_dimension_numbers<[1], [0], [0], [1], [0, 0, 1, 1], [], []>} : vector<8x8xbf16>, vector<8x640xbf16>, vector<8x640xf32> -> vector<8x640xf32>
    %311 = arith.addf %306, %310 : vector<8x640xf32>
    %c0_313 = arith.constant 0 : index
    %c0_314 = arith.constant 0 : index
    %312 = vector.load %arg6[%c0_313, %c0_314] : memref<8x1xf32, #tpu.memory_space<vmem>>, vector<8x1xf32>
    %313 = vector.broadcast %312 : vector<8x1xf32> to vector<8x640xf32>
    %314 = arith.mulf %311, %313 : vector<8x640xf32>
    %c0_315 = arith.constant 0 : index
    %c0_316 = arith.constant 0 : index
    %315 = vector.load %arg7[%c0_315, %c0_316] : memref<8x1xf32, #tpu.memory_space<vmem>>, vector<8x1xf32>
    %316 = vector.broadcast %315 : vector<8x1xf32> to vector<8x640xf32>
    %317 = arith.addf %314, %316 : vector<8x640xf32>
    %c0_317 = arith.constant 0 : index
    %c0_318 = arith.constant 0 : index
    %c128_319 = arith.constant 128 : index
    %318 = vector.load %arg1[%c0_317, %c0_318, %c128_319] : memref<1x8x896xbf16, #tpu.memory_space<vmem>>, vector<1x8x640xbf16>
    %319 = vector.shape_cast %318 : vector<1x8x640xbf16> to vector<8x640xbf16>
    %320 = arith.extf %319 : vector<8x640xbf16> to vector<8x640xf32>
    %321 = arith.addf %317, %320 : vector<8x640xf32>
    %cst_320 = arith.constant 0.000000e+00 : f32
    %322 = vector.broadcast %cst_320 : f32 to vector<8x640xf32>
    %323 = arith.maximumf %321, %322 : vector<8x640xf32>
    %c0_321 = arith.constant 0 : index
    %c0_322 = arith.constant 0 : index
    %c0_323 = arith.constant 0 : index
    %324 = vector.load %arg9[%c0_321, %c0_322, %c0_323] : memref<1x8x640xf32, #tpu.memory_space<vmem>>, vector<1x8x640xf32>
    %325 = vector.shape_cast %324 : vector<1x8x640xf32> to vector<8x640xf32>
    %326 = vector.shape_cast %323 : vector<8x640xf32> to vector<1x8x640xf32>
    tpu.vector_store %arg9[%c0_321, %c0_322, %c0_323], %326 {strides = array<i32>} : memref<1x8x640xf32, #tpu.memory_space<vmem>>, vector<1x8x640xf32>,
    return
  }
  func.func @transform_0(%arg0: i32) -> (i32, i32, i32) {
    %c0_i32 = arith.constant 0 : i32
    %c0_i32_0 = arith.constant 0 : i32
    %c0_i32_1 = arith.constant 0 : i32
    return %arg0, %c0_i32, %c0_i32_0 : i32, i32, i32
  }
  func.func @transform_1(%arg0: i32) -> (i32, i32, i32) {
    %c0_i32 = arith.constant 0 : i32
    %c0_i32_0 = arith.constant 0 : i32
    %c0_i32_1 = arith.constant 0 : i32
    %c0_i32_2 = arith.constant 0 : i32
    return %c0_i32, %c0_i32_0, %c0_i32_1 : i32, i32, i32
  }
  func.func @transform_2(%arg0: i32) -> (i32, i32, i32) {
    %c0_i32 = arith.constant 0 : i32
    %c0_i32_0 = arith.constant 0 : i32
    %c0_i32_1 = arith.constant 0 : i32
    %c0_i32_2 = arith.constant 0 : i32
    return %c0_i32, %c0_i32_0, %c0_i32_1 : i32, i32, i32
  }
  func.func @transform_3(%arg0: i32) -> (i32, i32) {
    %c0_i32 = arith.constant 0 : i32
    %c0_i32_0 = arith.constant 0 : i32
    %c0_i32_1 = arith.constant 0 : i32
    return %c0_i32, %c0_i32_0 : i32, i32
  }
  func.func @transform_4(%arg0: i32) -> (i32, i32) {
    %c0_i32 = arith.constant 0 : i32
    %c0_i32_0 = arith.constant 0 : i32
    %c0_i32_1 = arith.constant 0 : i32
    return %c0_i32, %c0_i32_0 : i32, i32
  }
  func.func @transform_5(%arg0: i32) -> (i32, i32) {
    %c0_i32 = arith.constant 0 : i32
    %c0_i32_0 = arith.constant 0 : i32
    %c0_i32_1 = arith.constant 0 : i32
    return %c0_i32, %c0_i32_0 : i32, i32
  }
  func.func @transform_6(%arg0: i32) -> (i32, i32) {
    %c0_i32 = arith.constant 0 : i32
    %c0_i32_0 = arith.constant 0 : i32
    %c0_i32_1 = arith.constant 0 : i32
    return %c0_i32, %c0_i32_0 : i32, i32
  }
  func.func @transform_7(%arg0: i32) -> (i32, i32) {
    %c0_i32 = arith.constant 0 : i32
    %c0_i32_0 = arith.constant 0 : i32
    %c0_i32_1 = arith.constant 0 : i32
    return %c0_i32, %c0_i32_0 : i32, i32
  }
  func.func @transform_8(%arg0: i32) -> (i32, i32, i32) {
    %c0_i32 = arith.constant 0 : i32
    %c0_i32_0 = arith.constant 0 : i32
    %c0_i32_1 = arith.constant 0 : i32
    return %arg0, %c0_i32, %c0_i32_0 : i32, i32, i32
  }
}

</mosaic_0001>

<llo_original>
// kernel: basic_block_forward.1
$region0: #{basic_block_forward.1}
  #allocation0 [shape = 'u32[]', space=smem, size = 0x4, offset = 0x4, fixed_abs, tag = 'smem constant byte address 0x4 - core index']
  #allocation1 [shape = 'u32[144,128]{1,0:T(1,128)}', space=vmem, size = 0x12000, scoped, tag = 'internal scratch']
  #allocation2 [shape = 'bf16[8,896]{1,0:T(8,128)(2,1)}', space=vmem, size = 0x3800, scoped, tag = 'scratch operand']
  %s0 = inlined_call_operand.vmem [shape: bf16[2,8,896], index: 0, kind: input, shape index: {}]
  %s1 = inlined_call_operand.vmem [shape: bf16[27,8,8], index: 1, kind: input, shape index: {}]
  %s2 = inlined_call_operand.vmem [shape: bf16[27,8,8], index: 2, kind: input, shape index: {}]
  %s3 = inlined_call_operand.vmem [shape: f32[8,1], index: 3, kind: input, shape index: {}]
  %s4 = inlined_call_operand.vmem [shape: f32[8,1], index: 4, kind: input, shape index: {}]
  %s5 = inlined_call_operand.vmem [shape: f32[8,1], index: 5, kind: input, shape index: {}]
  %s6 = inlined_call_operand.vmem [shape: f32[8,1], index: 6, kind: input, shape index: {}]
  %s7 = inlined_call_operand.vmem [shape: f32[1,640], index: 7, kind: input, shape index: {}]
  %s8 = inlined_call_operand.vmem [shape: f32[2,8,640], index: 8, kind: output, shape index: {}]
  %s9 = sld [smem:[#allocation0]]
  $region65: #{basic_block_forward.1} parent=0
    _
  %s11 = ssub.s32 1, %s9
  %s12 = scalar_select 0, %s11, %s9
  loop: start=0, step=1, limit=4
  $region2: #{basic_block_forward.1} parent=0 // loop_pre_header
    _
  $region3: #{basic_block_forward.1} parent=0 // loop_header
    %s14 = sphi 0, %s18
    %p15 = scmp.ge.s32.totalorder %s14, 4
    %s24 = sphi 0, %s26
    %s27 = sphi 0, %s24
    %s28 = sphi 0, %s27
    %s44 = sphi 0, %s28
    %s48 = sphi 0, %s48
    %s50 = sphi 0, %s48
    %s51 = sphi 0, %s50
    %s65 = sphi 0, %s51
    %s69 = sphi 0, %s69
    %s71 = sphi 0, %s69
    %s72 = sphi 0, %s71
    %s86 = sphi 0, %s72
    %s90 = sphi 0, %s90
    %s92 = sphi 0, %s90
    %s93 = sphi 0, %s92
    %s107 = sphi 0, %s93
    %s111 = sphi 0, %s111
    %s113 = sphi 0, %s111
    %s114 = sphi 0, %s113
    %s128 = sphi 0, %s114
    %s132 = sphi 0, %s132
    %s134 = sphi 0, %s132
    %s135 = sphi 0, %s134
    %s149 = sphi 0, %s135
    %s153 = sphi 0, %s153
    %s155 = sphi 0, %s153
    %s156 = sphi 0, %s155
    %s170 = sphi 0, %s156
    %s174 = sphi 0, %s174
    %s176 = sphi 0, %s174
    %s177 = sphi 0, %s176
    %s191 = sphi 0, %s177
    %s197 = sphi 0, %s199
    %s200 = sphi 0, %s197
    %s201 = sphi 0, %s200
    %s217 = sphi 0, %s201
  $region4: #{basic_block_forward.1} parent=0 // loop_header_branch
    %17 = sbr.rel (%p15) target = $region8
  $region5: #{basic_block_forward.1} parent=0 // loop_body
    %s19 = ssub.s32 %s14, 1
    %s20 = ssub.s32 %s14, 2
    %s21 = sadd.s32 %s14, 1
    %s22 = ssub.s32 %s14, %s21
    %p23 = scmp.eq.s32.totalorder %s22, 0
    %s25 = sadd.s32 %s24, 1
    %s26 = scalar_select %p23, %s24, %s25
    %p29 = pneg %p23
    %p30 = scmp.eq.s32.totalorder %s14, 1
    %p31 = por %p29, %p30
    %p32 = scmp.ne.s32.totalorder %s24, %s27
    %p33 = scmp.eq.s32.totalorder %s14, 0
    %p34 = por %p32, %p33
    %p35 = scmp.ne.s32.totalorder %s24, %s27
    %p36 = scmp.eq.s32.totalorder %s19, 1
    %p37 = por %p35, %p36
    %p38 = scmp.ne.s32.totalorder %s27, %s28
    %p39 = scmp.eq.s32.totalorder %s19, 0
    %p40 = por %p38, %p39
    %p41 = scmp.ne.s32.totalorder %s27, %s28
    %p42 = scmp.eq.s32.totalorder %s20, 1
    %p43 = por %p41, %p42
    %p45 = scmp.ne.s32.totalorder %s28, %s44
    %p46 = scmp.eq.s32.totalorder %s20, 0
    %p47 = por %p45, %p46
    %s49 = sadd.s32 %s48, 1
    %p52 = scmp.eq.s32.totalorder %s14, 1
    %p53 = scmp.ne.s32.totalorder %s48, %s50
    %p54 = scmp.eq.s32.totalorder %s14, 0
    %p55 = por %p53, %p54
    %p56 = scmp.ne.s32.totalorder %s48, %s50
    %p57 = scmp.eq.s32.totalorder %s19, 1
    %p58 = por %p56, %p57
    %p59 = scmp.ne.s32.totalorder %s50, %s51
    %p60 = scmp.eq.s32.totalorder %s19, 0
    %p61 = por %p59, %p60
    %p62 = scmp.ne.s32.totalorder %s50, %s51
    %p63 = scmp.eq.s32.totalorder %s20, 1
    %p64 = por %p62, %p63
    %p66 = scmp.ne.s32.totalorder %s51, %s65
    %p67 = scmp.eq.s32.totalorder %s20, 0
    %p68 = por %p66, %p67
    %s70 = sadd.s32 %s69, 1
    %p73 = scmp.eq.s32.totalorder %s14, 1
    %p74 = scmp.ne.s32.totalorder %s69, %s71
    %p75 = scmp.eq.s32.totalorder %s14, 0
    %p76 = por %p74, %p75
    %p77 = scmp.ne.s32.totalorder %s69, %s71
    %p78 = scmp.eq.s32.totalorder %s19, 1
    %p79 = por %p77, %p78
    %p80 = scmp.ne.s32.totalorder %s71, %s72
    %p81 = scmp.eq.s32.totalorder %s19, 0
    %p82 = por %p80, %p81
    %p83 = scmp.ne.s32.totalorder %s71, %s72
    %p84 = scmp.eq.s32.totalorder %s20, 1
    %p85 = por %p83, %p84
    %p87 = scmp.ne.s32.totalorder %s72, %s86
    %p88 = scmp.eq.s32.totalorder %s20, 0
    %p89 = por %p87, %p88
    %s91 = sadd.s32 %s90, 1
    %p94 = scmp.eq.s32.totalorder %s14, 1
    %p95 = scmp.ne.s32.totalorder %s90, %s92
    %p96 = scmp.eq.s32.totalorder %s14, 0
    %p97 = por %p95, %p96
    %p98 = scmp.ne.s32.totalorder %s90, %s92
    %p99 = scmp.eq.s32.totalorder %s19, 1
    %p100 = por %p98, %p99
    %p101 = scmp.ne.s32.totalorder %s92, %s93
    %p102 = scmp.eq.s32.totalorder %s19, 0
    %p103 = por %p101, %p102
    %p104 = scmp.ne.s32.totalorder %s92, %s93
    %p105 = scmp.eq.s32.totalorder %s20, 1
    %p106 = por %p104, %p105
    %p108 = scmp.ne.s32.totalorder %s93, %s107
    %p109 = scmp.eq.s32.totalorder %s20, 0
    %p110 = por %p108, %p109
    %s112 = sadd.s32 %s111, 1
    %p115 = scmp.eq.s32.totalorder %s14, 1
    %p116 = scmp.ne.s32.totalorder %s111, %s113
    %p117 = scmp.eq.s32.totalorder %s14, 0
    %p118 = por %p116, %p117
    %p119 = scmp.ne.s32.totalorder %s111, %s113
    %p120 = scmp.eq.s32.totalorder %s19, 1
    %p121 = por %p119, %p120
    %p122 = scmp.ne.s32.totalorder %s113, %s114
    %p123 = scmp.eq.s32.totalorder %s19, 0
    %p124 = por %p122, %p123
    %p125 = scmp.ne.s32.totalorder %s113, %s114
    %p126 = scmp.eq.s32.totalorder %s20, 1
    %p127 = por %p125, %p126
    %p129 = scmp.ne.s32.totalorder %s114, %s128
    %p130 = scmp.eq.s32.totalorder %s20, 0
    %p131 = por %p129, %p130
    %s133 = sadd.s32 %s132, 1
    %p136 = scmp.eq.s32.totalorder %s14, 1
    %p137 = scmp.ne.s32.totalorder %s132, %s134
    %p138 = scmp.eq.s32.totalorder %s14, 0
    %p139 = por %p137, %p138
    %p140 = scmp.ne.s32.totalorder %s132, %s134
    %p141 = scmp.eq.s32.totalorder %s19, 1
    %p142 = por %p140, %p141
    %p143 = scmp.ne.s32.totalorder %s134, %s135
    %p144 = scmp.eq.s32.totalorder %s19, 0
    %p145 = por %p143, %p144
    %p146 = scmp.ne.s32.totalorder %s134, %s135
    %p147 = scmp.eq.s32.totalorder %s20, 1
    %p148 = por %p146, %p147
    %p150 = scmp.ne.s32.totalorder %s135, %s149
    %p151 = scmp.eq.s32.totalorder %s20, 0
    %p152 = por %p150, %p151
    %s154 = sadd.s32 %s153, 1
    %p157 = scmp.eq.s32.totalorder %s14, 1
    %p158 = scmp.ne.s32.totalorder %s153, %s155
    %p159 = scmp.eq.s32.totalorder %s14, 0
    %p160 = por %p158, %p159
    %p161 = scmp.ne.s32.totalorder %s153, %s155
    %p162 = scmp.eq.s32.totalorder %s19, 1
    %p163 = por %p161, %p162
    %p164 = scmp.ne.s32.totalorder %s155, %s156
    %p165 = scmp.eq.s32.totalorder %s19, 0
    %p166 = por %p164, %p165
    %p167 = scmp.ne.s32.totalorder %s155, %s156
    %p168 = scmp.eq.s32.totalorder %s20, 1
    %p169 = por %p167, %p168
    %p171 = scmp.ne.s32.totalorder %s156, %s170
    %p172 = scmp.eq.s32.totalorder %s20, 0
    %p173 = por %p171, %p172
    %s175 = sadd.s32 %s174, 1
    %p178 = scmp.eq.s32.totalorder %s14, 1
    %p179 = scmp.ne.s32.totalorder %s174, %s176
    %p180 = scmp.eq.s32.totalorder %s14, 0
    %p181 = por %p179, %p180
    %p182 = scmp.ne.s32.totalorder %s174, %s176
    %p183 = scmp.eq.s32.totalorder %s19, 1
    %p184 = por %p182, %p183
    %p185 = scmp.ne.s32.totalorder %s176, %s177
    %p186 = scmp.eq.s32.totalorder %s19, 0
    %p187 = por %p185, %p186
    %p188 = scmp.ne.s32.totalorder %s176, %s177
    %p189 = scmp.eq.s32.totalorder %s20, 1
    %p190 = por %p188, %p189
    %p192 = scmp.ne.s32.totalorder %s177, %s191
    %p193 = scmp.eq.s32.totalorder %s20, 0
    %p194 = por %p192, %p193
    %s195 = ssub.s32 %s14, %s21
    %p196 = scmp.eq.s32.totalorder %s195, 0
    %s198 = sadd.s32 %s197, 1
    %s199 = scalar_select %p196, %s197, %s198
    %p202 = pneg %p196
    %p203 = scmp.eq.s32.totalorder %s14, 1
    %p204 = por %p202, %p203
    %p205 = scmp.ne.s32.totalorder %s197, %s200
    %p206 = scmp.eq.s32.totalorder %s14, 0
    %p207 = por %p205, %p206
    %p208 = scmp.ne.s32.totalorder %s197, %s200
    %p209 = scmp.eq.s32.totalorder %s19, 1
    %p210 = por %p208, %p209
    %p211 = scmp.ne.s32.totalorder %s200, %s201
    %p212 = scmp.eq.s32.totalorder %s19, 0
    %p213 = por %p211, %p212
    %p214 = scmp.ne.s32.totalorder %s200, %s201
    %p215 = scmp.eq.s32.totalorder %s20, 1
    %p216 = por %p214, %p215
    %p218 = scmp.ne.s32.totalorder %s201, %s217
    %p219 = scmp.eq.s32.totalorder %s20, 0
    %p220 = por %p218, %p219
    %p221 = scmp.le.s32.totalorder 1, %s14
    %p222 = scmp.lt.s32.totalorder %s14, 3
    %p223 = pnand %p221, %p222
    %p224 = pneg %p223
    // Predicated region
    $region9: #{basic_block_forward.1} parent=5 // pred_check
      _
    $region10: #{basic_block_forward.1} parent=5 // pred_check_branch
      %226 = sbr.rel (%p223) target = $region12
    $region11: #{basic_block_forward.1} parent=5 // pred_region
      %s227 = ssub.s32 %s14, 1
      // Predicated region
      $region13: #{basic_block_forward.1} parent=11 // pred_check
        %p228 = pneg %p61
      $region14: #{basic_block_forward.1} parent=11 // pred_check_branch
        %230 = sbr.rel (%p228) target = $region16
      $region15: #{basic_block_forward.1} parent=11 // pred_region
        _
      $region16: #{basic_block_forward.1} parent=11 // pred_fallthru
        _
      // Predicated region
      $region17: #{basic_block_forward.1} parent=11 // pred_check
        %p231 = pneg %p82
      $region18: #{basic_block_forward.1} parent=11 // pred_check_branch
        %233 = sbr.rel (%p231) target = $region20
      $region19: #{basic_block_forward.1} parent=11 // pred_region
        _
      $region20: #{basic_block_forward.1} parent=11 // pred_fallthru
        _
      // Predicated region
      $region21: #{basic_block_forward.1} parent=11 // pred_check
        %p234 = pneg %p103
      $region22: #{basic_block_forward.1} parent=11 // pred_check_branch
        %236 = sbr.rel (%p234) target = $region24
      $region23: #{basic_block_forward.1} parent=11 // pred_region
        _
      $region24: #{basic_block_forward.1} parent=11 // pred_fallthru
        _
      // Predicated region
      $region25: #{basic_block_forward.1} parent=11 // pred_check
        %p237 = pneg %p124
      $region26: #{basic_block_forward.1} parent=11 // pred_check_branch
        %239 = sbr.rel (%p237) target = $region28
      $region27: #{basic_block_forward.1} parent=11 // pred_region
        _
      $region28: #{basic_block_forward.1} parent=11 // pred_fallthru
        _
      // Predicated region
      $region29: #{basic_block_forward.1} parent=11 // pred_check
        %p240 = pneg %p145
      $region30: #{basic_block_forward.1} parent=11 // pred_check_branch
        %242 = sbr.rel (%p240) target = $region32
      $region31: #{basic_block_forward.1} parent=11 // pred_region
        _
      $region32: #{basic_block_forward.1} parent=11 // pred_fallthru
        _
      // Predicated region
      $region33: #{basic_block_forward.1} parent=11 // pred_check
        %p243 = pneg %p166
      $region34: #{basic_block_forward.1} parent=11 // pred_check_branch
        %245 = sbr.rel (%p243) target = $region36
      $region35: #{basic_block_forward.1} parent=11 // pred_region
        _
      $region36: #{basic_block_forward.1} parent=11 // pred_fallthru
        _
      // Predicated region
      $region37: #{basic_block_forward.1} parent=11 // pred_check
        %p246 = pneg %p187
      $region38: #{basic_block_forward.1} parent=11 // pred_check_branch
        %248 = sbr.rel (%p246) target = $region40
      $region39: #{basic_block_forward.1} parent=11 // pred_region
        _
      $region40: #{basic_block_forward.1} parent=11 // pred_fallthru
        _
    $region12: #{basic_block_forward.1} parent=5 // pred_fallthru
      _
    %p249 = scmp.lt.s32.totalorder %s14, 2
    // Predicated region
    $region41: #{basic_block_forward.1} parent=5 // pred_check
      %p250 = pneg %p249
    $region42: #{basic_block_forward.1} parent=5 // pred_check_branch
      %252 = sbr.rel (%p250) target = $region44
    $region43: #{basic_block_forward.1} parent=5 // pred_region
      // Predicated region
      $region45: #{basic_block_forward.1} parent=43 // pred_check
        %p253 = pneg %p34
      $region46: #{basic_block_forward.1} parent=43 // pred_check_branch
        %255 = sbr.rel (%p253) target = $region48
      $region47: #{basic_block_forward.1} parent=43 // pred_region
        %p256 = scmp.lt.s32.totalorder %s14, 1
        %s257 = scalar_select %p256, %s14, 1
        %s258 = smul.addr %s257, 7
        %s259 = smul.addr %s258, 4
        %s260 = scalar_lea.vmem %s0, %s259
      $region48: #{basic_block_forward.1} parent=43 // pred_fallthru
        _
    $region44: #{basic_block_forward.1} parent=5 // pred_fallthru
      _
    %p261 = scmp.le.s32.totalorder 1, %s14
    %p262 = scmp.lt.s32.totalorder %s14, 3
    %p263 = pnand %p261, %p262
    %p264 = pneg %p263
    // Predicated region
    $region49: #{basic_block_forward.1} parent=5 // pred_check
      _
    $region50: #{basic_block_forward.1} parent=5 // pred_check_branch
      %266 = sbr.rel (%p263) target = $region52
    $region51: #{basic_block_forward.1} parent=5 // pred_region
      %s267 = ssub.s32 %s14, 1
      %p268 = scmp.lt.s32.totalorder %s19, 1
      %s269 = scalar_select %p268, %s19, 1
      %s270 = smul.addr %s269, 7
      %s271 = smul.addr %s270, 4
      %s272 = scalar_lea.vmem %s0, %s271
      %p273 = pneg %p40
      %p274 = pneg %p37
      %p275 = pneg %p61
      %p276 = pneg %p58
      %p277 = pneg %p82
      %p278 = pneg %p79
      %p279 = pneg %p103
      %p280 = pneg %p100
      %p281 = pneg %p124
      %p282 = pneg %p121
      %p283 = pneg %p145
      %p284 = pneg %p142
      %p285 = pneg %p166
      %p286 = pneg %p163
      %p287 = pneg %p187
      %p288 = pneg %p184
      %p289 = pneg %p213
      %p290 = pneg %p210
      %p291 = scmp.lt.s32.totalorder %s19, 1
      %s292 = scalar_select %p291, %s19, 1
      %s293 = smul.addr %s292, 5
      %s294 = smul.addr %s293, 8
      %s295 = scalar_lea.vmem %s8, %s294
      %p296 = scmp.lt.s32.totalorder %s19, 1
      %s297 = scalar_select %p296, %s19, 1
      %s298 = smul.addr %s297, 7
      %s299 = smul.addr %s298, 4
      %s300 = scalar_lea.vmem %s0, %s299
      %p301 = scmp.lt.s32.totalorder %s19, 1
      %s302 = scalar_select %p301, %s19, 1
      %s303 = smul.addr %s302, 5
      %s304 = smul.addr %s303, 8
      %s305 = scalar_lea.vmem %s8, %s304
      %v307 = vld [vmem:[%s1] sm:$0xf]
      %v308 = vld [vmem:[%s300] sm:$0xff]
      %v309 = vld [vmem:[%s300 + $0x8] sm:$0xff]
      %v310 = vld [vmem:[%s300 + $0x10] sm:$0xff]
      %s311 = scalar_lea.vmem %s1, 4
      %v312 = vld [vmem:[%s311] sm:$0xf]
      %v316 = vunpack.c.l.b16 %v308
      %v317 = vunpack.c.h.b16 %v308
      %v318 = vunpack.c.l.b16 %v309
      %v319 = vunpack.c.h.b16 %v309
      %v320 = vunpack.c.l.b16 %v310
      %v321 = vunpack.c.h.b16 %v310
      %v322 = vpack.c.b16 %v316, %v316
      %v323 = vpack.c.b16 %v317, %v317
      %v324 = vpack.c.b16 %v318, %v318
      %v325 = vpack.c.b16 %v319, %v319
      %v326 = vpack.c.b16 %v320, %v320
      %v327 = vpack.c.b16 %v321, %v321
      %328 = vrot.lane.b32.xlu0 %v322, 110
      %v329 = vpop.permute.xlu0 %328
      %330 = vrot.lane.b32.xlu0 %v323, 110
      %v331 = vpop.permute.xlu0 %330
      %332 = vrot.lane.b32.xlu0 %v324, 110
      %v333 = vpop.permute.xlu0 %332
      %334 = vrot.lane.b32.xlu0 %v325, 110
      %v335 = vpop.permute.xlu0 %334
      %336 = vrot.lane.b32.xlu0 %v326, 110
      %v337 = vpop.permute.xlu0 %336
      %338 = vrot.lane.b32.xlu0 %v327, 110
      %v339 = vpop.permute.xlu0 %338
      %vm340 = vcmask 900096
      %v341 = vsel %vm340, %v329, %v331
      %v342 = vsel %vm340, %v331, %v333
      %v343 = vsel %vm340, %v333, %v335
      %v344 = vsel %vm340, %v335, %v337
      %v345 = vsel %vm340, %v337, %v339
      %vm346 = vcmask 64512
      %v348 = vsel %vm346, %v312, 0
      %vm350 = vcmask 1043456
      %v352 = vsel %vm350, %v341, 0
      %v355 = vsel %vm350, %v342, 0
      %v358 = vsel %vm350, %v343, 0
      %v361 = vsel %vm350, %v344, 0
      %v364 = vsel %vm350, %v345, 0
      %366 = vmatprep.subr.bf16.mxu0 %v355
      %367 = vmatpush1.bf16.msra.mxu0 %v352
      %368 = vmatprep.subr.bf16.mxu0 0
      %369 = vmatpush1.bf16.msra.mxu0 0
      %370 = vmatprep.subr.bf16.mxu0 0
      %371 = vmatpush1.bf16.msra.mxu0 0
      %372 = vmatprep.subr.bf16.mxu0 0
      %373 = vmatpush1.bf16.msra.mxu0 0
      %374 = vmatprep.subr.bf16.mxu0 0
      %375 = vmatpush1.bf16.msra.mxu0 0
      %376 = vmatprep.subr.bf16.mxu0 0
      %377 = vmatpush1.bf16.msra.mxu0 0
      %378 = vmatprep.subr.bf16.mxu0 0
      %379 = vmatpush1.bf16.msra.mxu0 0
      %380 = vmatprep.subr.bf16.mxu0 0
      %381 = vmatpush1.bf16.msra.mxu0 0
      %382 = vmatprep.subr.bf16.mxu0 0
      %383 = vmatpush1.bf16.msra.mxu0 0
      %384 = vmatprep.subr.bf16.mxu0 0
      %385 = vmatpush1.bf16.msra.mxu0 0
      %386 = vmatprep.subr.bf16.mxu0 0
      %387 = vmatpush1.bf16.msra.mxu0 0
      %388 = vmatprep.subr.bf16.mxu0 0
      %389 = vmatpush1.bf16.msra.mxu0 0
      %390 = vmatprep.subr.bf16.mxu0 0
      %391 = vmatpush1.bf16.msra.mxu0 0
      %392 = vmatprep.subr.bf16.mxu0 0
      %393 = vmatpush1.bf16.msra.mxu0 0
      %394 = vmatprep.subr.bf16.mxu0 0
      %395 = vmatpush1.bf16.msra.mxu0 0
      %396 = vmatprep.subr.bf16.mxu0 0
      %397 = vmatpush1.bf16.msra.mxu0 0
      %398 = vmatprep.mubr.bf16.mxu0 0
      %399 = vmatmul.mubr.bf16.gmra.mrb[0].mxu0 %v348
      %v400 = vpop.f32.mrb[0].mxu0
      %v401 = vadd.f32 0.0, %v400
      %v402 = vpop.f32.mrb[0].mxu0
      %v403 = vadd.f32 0.0, %v402
      %v404 = vpop.f32.mrb[0].mxu0
      %v405 = vpop.f32.mrb[0].mxu0
      %406 = vdwg.mxu0
      %407 = vmatprep.subr.bf16.mxu0 %v361
      %408 = vmatpush1.bf16.msra.mxu0 %v358
      %409 = vmatprep.subr.bf16.mxu0 0
      %410 = vmatpush1.bf16.msra.mxu0 0
      %411 = vmatprep.subr.bf16.mxu0 0
      %412 = vmatpush1.bf16.msra.mxu0 0
      %413 = vmatprep.subr.bf16.mxu0 0
      %414 = vmatpush1.bf16.msra.mxu0 0
      %415 = vmatprep.subr.bf16.mxu0 0
      %416 = vmatpush1.bf16.msra.mxu0 0
      %417 = vmatprep.subr.bf16.mxu0 0
      %418 = vmatpush1.bf16.msra.mxu0 0
      %419 = vmatprep.subr.bf16.mxu0 0
      %420 = vmatpush1.bf16.msra.mxu0 0
      %421 = vmatprep.subr.bf16.mxu0 0
      %422 = vmatpush1.bf16.msra.mxu0 0
      %423 = vmatprep.subr.bf16.mxu0 0
      %424 = vmatpush1.bf16.msra.mxu0 0
      %425 = vmatprep.subr.bf16.mxu0 0
      %426 = vmatpush1.bf16.msra.mxu0 0
      %427 = vmatprep.subr.bf16.mxu0 0
      %428 = vmatpush1.bf16.msra.mxu0 0
      %429 = vmatprep.subr.bf16.mxu0 0
      %430 = vmatpush1.bf16.msra.mxu0 0
      %431 = vmatprep.subr.bf16.mxu0 0
      %432 = vmatpush1.bf16.msra.mxu0 0
      %433 = vmatprep.subr.bf16.mxu0 0
      %434 = vmatpush1.bf16.msra.mxu0 0
      %435 = vmatprep.subr.bf16.mxu0 0
      %436 = vmatpush1.bf16.msra.mxu0 0
      %437 = vmatprep.subr.bf16.mxu0 0
      %438 = vmatpush1.bf16.msra.mxu0 0
      %439 = vmatprep.mubr.bf16.mxu0 0
      %440 = vmatmul.mubr.bf16.gmra.mrb[0].mxu0 %v348
      %v441 = vpop.f32.mrb[0].mxu0
      %v442 = vadd.f32 0.0, %v441
      %v443 = vpop.f32.mrb[0].mxu0
      %v444 = vadd.f32 0.0, %v443
      %v445 = vpop.f32.mrb[0].mxu0
      %v446 = vpop.f32.mrb[0].mxu0
      %447 = vdwg.mxu0
      %448 = vmatprep.subr.bf16.mxu0 0
      %449 = vmatpush1.bf16.msra.mxu0 %v364
      %450 = vmatprep.subr.bf16.mxu0 0
      %451 = vmatpush1.bf16.msra.mxu0 0
      %452 = vmatprep.subr.bf16.mxu0 0
      %453 = vmatpush1.bf16.msra.mxu0 0
      %454 = vmatprep.subr.bf16.mxu0 0
      %455 = vmatpush1.bf16.msra.mxu0 0
      %456 = vmatprep.subr.bf16.mxu0 0
      %457 = vmatpush1.bf16.msra.mxu0 0
      %458 = vmatprep.subr.bf16.mxu0 0
      %459 = vmatpush1.bf16.msra.mxu0 0
      %460 = vmatprep.subr.bf16.mxu0 0
      %461 = vmatpush1.bf16.msra.mxu0 0
      %462 = vmatprep.subr.bf16.mxu0 0
      %463 = vmatpush1.bf16.msra.mxu0 0
      %464 = vmatprep.subr.bf16.mxu0 0
      %465 = vmatpush1.bf16.msra.mxu0 0
      %466 = vmatprep.subr.bf16.mxu0 0
      %467 = vmatpush1.bf16.msra.mxu0 0
      %468 = vmatprep.subr.bf16.mxu0 0
      %469 = vmatpush1.bf16.msra.mxu0 0
      %470 = vmatprep.subr.bf16.mxu0 0
      %471 = vmatpush1.bf16.msra.mxu0 0
      %472 = vmatprep.subr.bf16.mxu0 0
      %473 = vmatpush1.bf16.msra.mxu0 0
      %474 = vmatprep.subr.bf16.mxu0 0
      %475 = vmatpush1.bf16.msra.mxu0 0
      %476 = vmatprep.subr.bf16.mxu0 0
      %477 = vmatpush1.bf16.msra.mxu0 0
      %478 = vmatprep.subr.bf16.mxu0 0
      %479 = vmatpush1.bf16.msra.mxu0 0
      %480 = vmatprep.mubr.bf16.mxu0 0
      %481 = vmatmul.mubr.bf16.gmra.mrb[0].mxu0 %v348
      %v482 = vpop.f32.mrb[0].mxu0
      %v483 = vadd.f32 0.0, %v482
      %v484 = vpop.f32.mrb[0].mxu0
      %v485 = vpop.f32.mrb[0].mxu0
      %v486 = vpop.f32.mrb[0].mxu0
      %487 = vdwg.mxu0
      %488 = vrot.lane.b32.xlu0 %v322, 111
      %v489 = vpop.permute.xlu0 %488
      %490 = vrot.lane.b32.xlu0 %v323, 111
      %v491 = vpop.permute.xlu0 %490
      %492 = vrot.lane.b32.xlu0 %v324, 111
      %v493 = vpop.permute.xlu0 %492
      %494 = vrot.lane.b32.xlu0 %v325, 111
      %v495 = vpop.permute.xlu0 %494
      %496 = vrot.lane.b32.xlu0 %v326, 111
      %v497 = vpop.permute.xlu0 %496
      %498 = vrot.lane.b32.xlu0 %v327, 111
      %v499 = vpop.permute.xlu0 %498
      %vm500 = vcmask 908288
      %v501 = vsel %vm500, %v489, %v491
      %v502 = vsel %vm500, %v491, %v493
      %v503 = vsel %vm500, %v493, %v495
      %v504 = vsel %vm500, %v495, %v497
      %v505 = vsel %vm500, %v497, %v499
      %v507 = vsel %vm346, %v307, 0
      %v510 = vsel %vm350, %v501, 0
      %v513 = vsel %vm350, %v502, 0
      %v516 = vsel %vm350, %v503, 0
      %v519 = vsel %vm350, %v504, 0
      %v522 = vsel %vm350, %v505, 0
      %524 = vmatprep.subr.bf16.mxu0 %v513
      %525 = vmatpush1.bf16.msra.mxu0 %v510
      %526 = vmatprep.subr.bf16.mxu0 0
      %527 = vmatpush1.bf16.msra.mxu0 0
      %528 = vmatprep.subr.bf16.mxu0 0
      %529 = vmatpush1.bf16.msra.mxu0 0
      %530 = vmatprep.subr.bf16.mxu0 0
      %531 = vmatpush1.bf16.msra.mxu0 0
      %532 = vmatprep.subr.bf16.mxu0 0
      %533 = vmatpush1.bf16.msra.mxu0 0
      %534 = vmatprep.subr.bf16.mxu0 0
      %535 = vmatpush1.bf16.msra.mxu0 0
      %536 = vmatprep.subr.bf16.mxu0 0
      %537 = vmatpush1.bf16.msra.mxu0 0
      %538 = vmatprep.subr.bf16.mxu0 0
      %539 = vmatpush1.bf16.msra.mxu0 0
      %540 = vmatprep.subr.bf16.mxu0 0
      %541 = vmatpush1.bf16.msra.mxu0 0
      %542 = vmatprep.subr.bf16.mxu0 0
      %543 = vmatpush1.bf16.msra.mxu0 0
      %544 = vmatprep.subr.bf16.mxu0 0
      %545 = vmatpush1.bf16.msra.mxu0 0
      %546 = vmatprep.subr.bf16.mxu0 0
      %547 = vmatpush1.bf16.msra.mxu0 0
      %548 = vmatprep.subr.bf16.mxu0 0
      %549 = vmatpush1.bf16.msra.mxu0 0
      %550 = vmatprep.subr.bf16.mxu0 0
      %551 = vmatpush1.bf16.msra.mxu0 0
      %552 = vmatprep.subr.bf16.mxu0 0
      %553 = vmatpush1.bf16.msra.mxu0 0
      %554 = vmatprep.subr.bf16.mxu0 0
      %555 = vmatpush1.bf16.msra.mxu0 0
      %556 = vmatprep.mubr.bf16.mxu0 0
      %557 = vmatmul.mubr.bf16.gmra.mrb[0].mxu0 %v507
      %v558 = vpop.f32.mrb[0].mxu0
      %v559 = vadd.f32 %v401, %v558
      %v560 = vpop.f32.mrb[0].mxu0
      %v561 = vadd.f32 %v403, %v560
      %v562 = vpop.f32.mrb[0].mxu0
      %v563 = vpop.f32.mrb[0].mxu0
      %564 = vdwg.mxu0
      %565 = vmatprep.subr.bf16.mxu0 %v519
      %566 = vmatpush1.bf16.msra.mxu0 %v516
      %567 = vmatprep.subr.bf16.mxu0 0
      %568 = vmatpush1.bf16.msra.mxu0 0
      %569 = vmatprep.subr.bf16.mxu0 0
      %570 = vmatpush1.bf16.msra.mxu0 0
      %571 = vmatprep.subr.bf16.mxu0 0
      %572 = vmatpush1.bf16.msra.mxu0 0
      %573 = vmatprep.subr.bf16.mxu0 0
      %574 = vmatpush1.bf16.msra.mxu0 0
      %575 = vmatprep.subr.bf16.mxu0 0
      %576 = vmatpush1.bf16.msra.mxu0 0
      %577 = vmatprep.subr.bf16.mxu0 0
      %578 = vmatpush1.bf16.msra.mxu0 0
      %579 = vmatprep.subr.bf16.mxu0 0
      %580 = vmatpush1.bf16.msra.mxu0 0
      %581 = vmatprep.subr.bf16.mxu0 0
      %582 = vmatpush1.bf16.msra.mxu0 0
      %583 = vmatprep.subr.bf16.mxu0 0
      %584 = vmatpush1.bf16.msra.mxu0 0
      %585 = vmatprep.subr.bf16.mxu0 0
      %586 = vmatpush1.bf16.msra.mxu0 0
      %587 = vmatprep.subr.bf16.mxu0 0
      %588 = vmatpush1.bf16.msra.mxu0 0
      %589 = vmatprep.subr.bf16.mxu0 0
      %590 = vmatpush1.bf16.msra.mxu0 0
      %591 = vmatprep.subr.bf16.mxu0 0
      %592 = vmatpush1.bf16.msra.mxu0 0
      %593 = vmatprep.subr.bf16.mxu0 0
      %594 = vmatpush1.bf16.msra.mxu0 0
      %595 = vmatprep.subr.bf16.mxu0 0
      %596 = vmatpush1.bf16.msra.mxu0 0
      %597 = vmatprep.mubr.bf16.mxu0 0
      %598 = vmatmul.mubr.bf16.gmra.mrb[0].mxu0 %v507
      %v599 = vpop.f32.mrb[0].mxu0
      %v600 = vadd.f32 %v442, %v599
      %v601 = vpop.f32.mrb[0].mxu0
      %v602 = vadd.f32 %v444, %v601
      %v603 = vpop.f32.mrb[0].mxu0
      %v604 = vpop.f32.mrb[0].mxu0
      %605 = vdwg.mxu0
      %606 = vmatprep.subr.bf16.mxu0 0
      %607 = vmatpush1.bf16.msra.mxu0 %v522
      %608 = vmatprep.subr.bf16.mxu0 0
      %609 = vmatpush1.bf16.msra.mxu0 0
      %610 = vmatprep.subr.bf16.mxu0 0
      %611 = vmatpush1.bf16.msra.mxu0 0
      %612 = vmatprep.subr.bf16.mxu0 0
      %613 = vmatpush1.bf16.msra.mxu0 0
      %614 = vmatprep.subr.bf16.mxu0 0
      %615 = vmatpush1.bf16.msra.mxu0 0
      %616 = vmatprep.subr.bf16.mxu0 0
      %617 = vmatpush1.bf16.msra.mxu0 0
      %618 = vmatprep.subr.bf16.mxu0 0
      %619 = vmatpush1.bf16.msra.mxu0 0
      %620 = vmatprep.subr.bf16.mxu0 0
      %621 = vmatpush1.bf16.msra.mxu0 0
      %622 = vmatprep.subr.bf16.mxu0 0
      %623 = vmatpush1.bf16.msra.mxu0 0
      %624 = vmatprep.subr.bf16.mxu0 0
      %625 = vmatpush1.bf16.msra.mxu0 0
      %626 = vmatprep.subr.bf16.mxu0 0
      %627 = vmatpush1.bf16.msra.mxu0 0
      %628 = vmatprep.subr.bf16.mxu0 0
      %629 = vmatpush1.bf16.msra.mxu0 0
      %630 = vmatprep.subr.bf16.mxu0 0
      %631 = vmatpush1.bf16.msra.mxu0 0
      %632 = vmatprep.subr.bf16.mxu0 0
      %633 = vmatpush1.bf16.msra.mxu0 0
      %634 = vmatprep.subr.bf16.mxu0 0
      %635 = vmatpush1.bf16.msra.mxu0 0
      %636 = vmatprep.subr.bf16.mxu0 0
      %637 = vmatpush1.bf16.msra.mxu0 0
      %638 = vmatprep.mubr.bf16.mxu0 0
      %639 = vmatmul.mubr.bf16.gmra.mrb[0].mxu0 %v507
      %v640 = vpop.f32.mrb[0].mxu0
      %v641 = vadd.f32 %v483, %v640
      %v642 = vpop.f32.mrb[0].mxu0
      %v643 = vpop.f32.mrb[0].mxu0
      %v644 = vpop.f32.mrb[0].mxu0
      %645 = vdwg.mxu0
      %s646 = scalar_lea.vmem %s1, 8
      %v647 = vld [vmem:[%s646] sm:$0xf]
      %648 = vrot.lane.b32.xlu0 %v322, 109
      %v649 = vpop.permute.xlu0 %648
      %650 = vrot.lane.b32.xlu0 %v323, 109
      %v651 = vpop.permute.xlu0 %650
      %652 = vrot.lane.b32.xlu0 %v324, 109
      %v653 = vpop.permute.xlu0 %652
      %654 = vrot.lane.b32.xlu0 %v325, 109
      %v655 = vpop.permute.xlu0 %654
      %656 = vrot.lane.b32.xlu0 %v326, 109
      %v657 = vpop.permute.xlu0 %656
      %658 = vrot.lane.b32.xlu0 %v327, 109
      %v659 = vpop.permute.xlu0 %658
      %vm660 = vcmask 891904
      %v661 = vsel %vm660, %v649, %v651
      %v662 = vsel %vm660, %v651, %v653
      %v663 = vsel %vm660, %v653, %v655
      %v664 = vsel %vm660, %v655, %v657
      %v665 = vsel %vm660, %v657, %v659
      %v667 = vsel %vm346, %v647, 0
      %v670 = vsel %vm350, %v661, 0
      %v673 = vsel %vm350, %v662, 0
      %v676 = vsel %vm350, %v663, 0
      %v679 = vsel %vm350, %v664, 0
      %v682 = vsel %vm350, %v665, 0
      %684 = vmatprep.subr.bf16.mxu0 %v673
      %685 = vmatpush1.bf16.msra.mxu0 %v670
      %686 = vmatprep.subr.bf16.mxu0 0
      %687 = vmatpush1.bf16.msra.mxu0 0
      %688 = vmatprep.subr.bf16.mxu0 0
      %689 = vmatpush1.bf16.msra.mxu0 0
      %690 = vmatprep.subr.bf16.mxu0 0
      %691 = vmatpush1.bf16.msra.mxu0 0
      %692 = vmatprep.subr.bf16.mxu0 0
      %693 = vmatpush1.bf16.msra.mxu0 0
      %694 = vmatprep.subr.bf16.mxu0 0
      %695 = vmatpush1.bf16.msra.mxu0 0
      %696 = vmatprep.subr.bf16.mxu0 0
      %697 = vmatpush1.bf16.msra.mxu0 0
      %698 = vmatprep.subr.bf16.mxu0 0
      %699 = vmatpush1.bf16.msra.mxu0 0
      %700 = vmatprep.subr.bf16.mxu0 0
      %701 = vmatpush1.bf16.msra.mxu0 0
      %702 = vmatprep.subr.bf16.mxu0 0
      %703 = vmatpush1.bf16.msra.mxu0 0
      %704 = vmatprep.subr.bf16.mxu0 0
      %705 = vmatpush1.bf16.msra.mxu0 0
      %706 = vmatprep.subr.bf16.mxu0 0
      %707 = vmatpush1.bf16.msra.mxu0 0
      %708 = vmatprep.subr.bf16.mxu0 0
      %709 = vmatpush1.bf16.msra.mxu0 0
      %710 = vmatprep.subr.bf16.mxu0 0
      %711 = vmatpush1.bf16.msra.mxu0 0
      %712 = vmatprep.subr.bf16.mxu0 0
      %713 = vmatpush1.bf16.msra.mxu0 0
      %714 = vmatprep.subr.bf16.mxu0 0
      %715 = vmatpush1.bf16.msra.mxu0 0
      %716 = vmatprep.mubr.bf16.mxu0 0
      %717 = vmatmul.mubr.bf16.gmra.mrb[0].mxu0 %v667
      %v718 = vpop.f32.mrb[0].mxu0
      %v719 = vadd.f32 0.0, %v718
      %v720 = vpop.f32.mrb[0].mxu0
      %v721 = vadd.f32 0.0, %v720
      %v722 = vpop.f32.mrb[0].mxu0
      %v723 = vpop.f32.mrb[0].mxu0
      %724 = vdwg.mxu0
      %725 = vmatprep.subr.bf16.mxu0 %v679
      %726 = vmatpush1.bf16.msra.mxu0 %v676
      %727 = vmatprep.subr.bf16.mxu0 0
      %728 = vmatpush1.bf16.msra.mxu0 0
      %729 = vmatprep.subr.bf16.mxu0 0
      %730 = vmatpush1.bf16.msra.mxu0 0
      %731 = vmatprep.subr.bf16.mxu0 0
      %732 = vmatpush1.bf16.msra.mxu0 0
      %733 = vmatprep.subr.bf16.mxu0 0
      %734 = vmatpush1.bf16.msra.mxu0 0
      %735 = vmatprep.subr.bf16.mxu0 0
      %736 = vmatpush1.bf16.msra.mxu0 0
      %737 = vmatprep.subr.bf16.mxu0 0
      %738 = vmatpush1.bf16.msra.mxu0 0
      %739 = vmatprep.subr.bf16.mxu0 0
      %740 = vmatpush1.bf16.msra.mxu0 0
      %741 = vmatprep.subr.bf16.mxu0 0
      %742 = vmatpush1.bf16.msra.mxu0 0
      %743 = vmatprep.subr.bf16.mxu0 0
      %744 = vmatpush1.bf16.msra.mxu0 0
      %745 = vmatprep.subr.bf16.mxu0 0
      %746 = vmatpush1.bf16.msra.mxu0 0
      %747 = vmatprep.subr.bf16.mxu0 0
      %748 = vmatpush1.bf16.msra.mxu0 0
      %749 = vmatprep.subr.bf16.mxu0 0
      %750 = vmatpush1.bf16.msra.mxu0 0
      %751 = vmatprep.subr.bf16.mxu0 0
      %752 = vmatpush1.bf16.msra.mxu0 0
      %753 = vmatprep.subr.bf16.mxu0 0
      %754 = vmatpush1.bf16.msra.mxu0 0
      %755 = vmatprep.subr.bf16.mxu0 0
      %756 = vmatpush1.bf16.msra.mxu0 0
      %757 = vmatprep.mubr.bf16.mxu0 0
      %758 = vmatmul.mubr.bf16.gmra.mrb[0].mxu0 %v667
      %v759 = vpop.f32.mrb[0].mxu0
      %v760 = vadd.f32 0.0, %v759
      %v761 = vpop.f32.mrb[0].mxu0
      %v762 = vadd.f32 0.0, %v761
      %v763 = vpop.f32.mrb[0].mxu0
      %v764 = vpop.f32.mrb[0].mxu0
      %765 = vdwg.mxu0
      %766 = vmatprep.subr.bf16.mxu0 0
      %767 = vmatpush1.bf16.msra.mxu0 %v682
      %768 = vmatprep.subr.bf16.mxu0 0
      %769 = vmatpush1.bf16.msra.mxu0 0
      %770 = vmatprep.subr.bf16.mxu0 0
      %771 = vmatpush1.bf16.msra.mxu0 0
      %772 = vmatprep.subr.bf16.mxu0 0
      %773 = vmatpush1.bf16.msra.mxu0 0
      %774 = vmatprep.subr.bf16.mxu0 0
      %775 = vmatpush1.bf16.msra.mxu0 0
      %776 = vmatprep.subr.bf16.mxu0 0
      %777 = vmatpush1.bf16.msra.mxu0 0
      %778 = vmatprep.subr.bf16.mxu0 0
      %779 = vmatpush1.bf16.msra.mxu0 0
      %780 = vmatprep.subr.bf16.mxu0 0
      %781 = vmatpush1.bf16.msra.mxu0 0
      %782 = vmatprep.subr.bf16.mxu0 0
      %783 = vmatpush1.bf16.msra.mxu0 0
      %784 = vmatprep.subr.bf16.mxu0 0
      %785 = vmatpush1.bf16.msra.mxu0 0
      %786 = vmatprep.subr.bf16.mxu0 0
      %787 = vmatpush1.bf16.msra.mxu0 0
      %788 = vmatprep.subr.bf16.mxu0 0
      %789 = vmatpush1.bf16.msra.mxu0 0
      %790 = vmatprep.subr.bf16.mxu0 0
      %791 = vmatpush1.bf16.msra.mxu0 0
      %792 = vmatprep.subr.bf16.mxu0 0
      %793 = vmatpush1.bf16.msra.mxu0 0
      %794 = vmatprep.subr.bf16.mxu0 0
      %795 = vmatpush1.bf16.msra.mxu0 0
      %796 = vmatprep.subr.bf16.mxu0 0
      %797 = vmatpush1.bf16.msra.mxu0 0
      %798 = vmatprep.mubr.bf16.mxu0 0
      %799 = vmatmul.mubr.bf16.gmra.mrb[0].mxu0 %v667
      %v800 = vpop.f32.mrb[0].mxu0
      %v801 = vadd.f32 0.0, %v800
      %v802 = vpop.f32.mrb[0].mxu0
      %v803 = vpop.f32.mrb[0].mxu0
      %v804 = vpop.f32.mrb[0].mxu0
      %805 = vdwg.mxu0
      %v806 = vadd.f32 %v559, %v719
      %v807 = vadd.f32 %v561, %v721
      %v808 = vadd.f32 %v600, %v760
      %v809 = vadd.f32 %v602, %v762
      %v810 = vadd.f32 %v641, %v801
      %s811 = scalar_lea.vmem %s1, 12
      %v812 = vld [vmem:[%s811] sm:$0xf]
      %813 = vrot.lane.b32.xlu0 %v322, 101
      %v814 = vpop.permute.xlu0 %813
      %815 = vrot.lane.b32.xlu0 %v323, 101
      %v816 = vpop.permute.xlu0 %815
      %817 = vrot.lane.b32.xlu0 %v324, 101
      %v818 = vpop.permute.xlu0 %817
      %819 = vrot.lane.b32.xlu0 %v325, 101
      %v820 = vpop.permute.xlu0 %819
      %821 = vrot.lane.b32.xlu0 %v326, 101
      %v822 = vpop.permute.xlu0 %821
      %823 = vrot.lane.b32.xlu0 %v327, 101
      %v824 = vpop.permute.xlu0 %823
      %vm825 = vcmask 826368
      %v826 = vsel %vm825, %v814, %v816
      %v827 = vsel %vm825, %v816, %v818
      %v828 = vsel %vm825, %v818, %v820
      %v829 = vsel %vm825, %v820, %v822
      %v830 = vsel %vm825, %v822, %v824
      %v832 = vsel %vm346, %v812, 0
      %v835 = vsel %vm350, %v826, 0
      %v838 = vsel %vm350, %v827, 0
      %v841 = vsel %vm350, %v828, 0
      %v844 = vsel %vm350, %v829, 0
      %v847 = vsel %vm350, %v830, 0
      %849 = vmatprep.subr.bf16.mxu0 %v838
      %850 = vmatpush1.bf16.msra.mxu0 %v835
      %851 = vmatprep.subr.bf16.mxu0 0
      %852 = vmatpush1.bf16.msra.mxu0 0
      %853 = vmatprep.subr.bf16.mxu0 0
      %854 = vmatpush1.bf16.msra.mxu0 0
      %855 = vmatprep.subr.bf16.mxu0 0
      %856 = vmatpush1.bf16.msra.mxu0 0
      %857 = vmatprep.subr.bf16.mxu0 0
      %858 = vmatpush1.bf16.msra.mxu0 0
      %859 = vmatprep.subr.bf16.mxu0 0
      %860 = vmatpush1.bf16.msra.mxu0 0
      %861 = vmatprep.subr.bf16.mxu0 0
      %862 = vmatpush1.bf16.msra.mxu0 0
      %863 = vmatprep.subr.bf16.mxu0 0
      %864 = vmatpush1.bf16.msra.mxu0 0
      %865 = vmatprep.subr.bf16.mxu0 0
      %866 = vmatpush1.bf16.msra.mxu0 0
      %867 = vmatprep.subr.bf16.mxu0 0
      %868 = vmatpush1.bf16.msra.mxu0 0
      %869 = vmatprep.subr.bf16.mxu0 0
      %870 = vmatpush1.bf16.msra.mxu0 0
      %871 = vmatprep.subr.bf16.mxu0 0
      %872 = vmatpush1.bf16.msra.mxu0 0
      %873 = vmatprep.subr.bf16.mxu0 0
      %874 = vmatpush1.bf16.msra.mxu0 0
      %875 = vmatprep.subr.bf16.mxu0 0
      %876 = vmatpush1.bf16.msra.mxu0 0
      %877 = vmatprep.subr.bf16.mxu0 0
      %878 = vmatpush1.bf16.msra.mxu0 0
      %879 = vmatprep.subr.bf16.mxu0 0
      %880 = vmatpush1.bf16.msra.mxu0 0
      %881 = vmatprep.mubr.bf16.mxu0 0
      %882 = vmatmul.mubr.bf16.gmra.mrb[0].mxu0 %v832
      %v883 = vpop.f32.mrb[0].mxu0
      %v884 = vadd.f32 0.0, %v883
      %v885 = vpop.f32.mrb[0].mxu0
      %v886 = vadd.f32 0.0, %v885
      %v887 = vpop.f32.mrb[0].mxu0
      %v888 = vpop.f32.mrb[0].mxu0
      %889 = vdwg.mxu0
      %890 = vmatprep.subr.bf16.mxu0 %v844
      %891 = vmatpush1.bf16.msra.mxu0 %v841
      %892 = vmatprep.subr.bf16.mxu0 0
      %893 = vmatpush1.bf16.msra.mxu0 0
      %894 = vmatprep.subr.bf16.mxu0 0
      %895 = vmatpush1.bf16.msra.mxu0 0
      %896 = vmatprep.subr.bf16.mxu0 0
      %897 = vmatpush1.bf16.msra.mxu0 0
      %898 = vmatprep.subr.bf16.mxu0 0
      %899 = vmatpush1.bf16.msra.mxu0 0
      %900 = vmatprep.subr.bf16.mxu0 0
      %901 = vmatpush1.bf16.msra.mxu0 0
      %902 = vmatprep.subr.bf16.mxu0 0
      %903 = vmatpush1.bf16.msra.mxu0 0
      %904 = vmatprep.subr.bf16.mxu0 0
      %905 = vmatpush1.bf16.msra.mxu0 0
      %906 = vmatprep.subr.bf16.mxu0 0
      %907 = vmatpush1.bf16.msra.mxu0 0
      %908 = vmatprep.subr.bf16.mxu0 0
      %909 = vmatpush1.bf16.msra.mxu0 0
      %910 = vmatprep.subr.bf16.mxu0 0
      %911 = vmatpush1.bf16.msra.mxu0 0
      %912 = vmatprep.subr.bf16.mxu0 0
      %913 = vmatpush1.bf16.msra.mxu0 0
      %914 = vmatprep.subr.bf16.mxu0 0
      %915 = vmatpush1.bf16.msra.mxu0 0
      %916 = vmatprep.subr.bf16.mxu0 0
      %917 = vmatpush1.bf16.msra.mxu0 0
      %918 = vmatprep.subr.bf16.mxu0 0
      %919 = vmatpush1.bf16.msra.mxu0 0
      %920 = vmatprep.subr.bf16.mxu0 0
      %921 = vmatpush1.bf16.msra.mxu0 0
      %922 = vmatprep.mubr.bf16.mxu0 0
      %923 = vmatmul.mubr.bf16.gmra.mrb[0].mxu0 %v832
      %v924 = vpop.f32.mrb[0].mxu0
      %v925 = vadd.f32 0.0, %v924
      %v926 = vpop.f32.mrb[0].mxu0
      %v927 = vadd.f32 0.0, %v926
      %v928 = vpop.f32.mrb[0].mxu0
      %v929 = vpop.f32.mrb[0].mxu0
      %930 = vdwg.mxu0
      %931 = vmatprep.subr.bf16.mxu0 0
      %932 = vmatpush1.bf16.msra.mxu0 %v847
      %933 = vmatprep.subr.bf16.mxu0 0
      %934 = vmatpush1.bf16.msra.mxu0 0
      %935 = vmatprep.subr.bf16.mxu0 0
      %936 = vmatpush1.bf16.msra.mxu0 0
      %937 = vmatprep.subr.bf16.mxu0 0
      %938 = vmatpush1.bf16.msra.mxu0 0
      %939 = vmatprep.subr.bf16.mxu0 0
      %940 = vmatpush1.bf16.msra.mxu0 0
      %941 = vmatprep.subr.bf16.mxu0 0
      %942 = vmatpush1.bf16.msra.mxu0 0
      %943 = vmatprep.subr.bf16.mxu0 0
      %944 = vmatpush1.bf16.msra.mxu0 0
      %945 = vmatprep.subr.bf16.mxu0 0
      %946 = vmatpush1.bf16.msra.mxu0 0
      %947 = vmatprep.subr.bf16.mxu0 0
      %948 = vmatpush1.bf16.msra.mxu0 0
      %949 = vmatprep.subr.bf16.mxu0 0
      %950 = vmatpush1.bf16.msra.mxu0 0
      %951 = vmatprep.subr.bf16.mxu0 0
      %952 = vmatpush1.bf16.msra.mxu0 0
      %953 = vmatprep.subr.bf16.mxu0 0
      %954 = vmatpush1.bf16.msra.mxu0 0
      %955 = vmatprep.subr.bf16.mxu0 0
      %956 = vmatpush1.bf16.msra.mxu0 0
      %957 = vmatprep.subr.bf16.mxu0 0
      %958 = vmatpush1.bf16.msra.mxu0 0
      %959 = vmatprep.subr.bf16.mxu0 0
      %960 = vmatpush1.bf16.msra.mxu0 0
      %961 = vmatprep.subr.bf16.mxu0 0
      %962 = vmatpush1.bf16.msra.mxu0 0
      %963 = vmatprep.mubr.bf16.mxu0 0
      %964 = vmatmul.mubr.bf16.gmra.mrb[0].mxu0 %v832
      %v965 = vpop.f32.mrb[0].mxu0
      %v966 = vadd.f32 0.0, %v965
      %v967 = vpop.f32.mrb[0].mxu0
      %v968 = vpop.f32.mrb[0].mxu0
      %v969 = vpop.f32.mrb[0].mxu0
      %970 = vdwg.mxu0
      %v971 = vadd.f32 %v806, %v884
      %v972 = vadd.f32 %v807, %v886
      %v973 = vadd.f32 %v808, %v925
      %v974 = vadd.f32 %v809, %v927
      %v975 = vadd.f32 %v810, %v966
      %s976 = scalar_lea.vmem %s1, 16
      %v977 = vld [vmem:[%s976] sm:$0xf]
      %978 = vrot.lane.b32.xlu0 %v322, 100
      %v979 = vpop.permute.xlu0 %978
      %980 = vrot.lane.b32.xlu0 %v323, 100
      %v981 = vpop.permute.xlu0 %980
      %982 = vrot.lane.b32.xlu0 %v324, 100
      %v983 = vpop.permute.xlu0 %982
      %984 = vrot.lane.b32.xlu0 %v325, 100
      %v985 = vpop.permute.xlu0 %984
      %986 = vrot.lane.b32.xlu0 %v326, 100
      %v987 = vpop.permute.xlu0 %986
      %988 = vrot.lane.b32.xlu0 %v327, 100
      %v989 = vpop.permute.xlu0 %988
      %vm990 = vcmask 818176
      %v991 = vsel %vm990, %v979, %v981
      %v992 = vsel %vm990, %v981, %v983
      %v993 = vsel %vm990, %v983, %v985
      %v994 = vsel %vm990, %v985, %v987
      %v995 = vsel %vm990, %v987, %v989
      %v997 = vsel %vm346, %v977, 0
      %v1000 = vsel %vm350, %v991, 0
      %v1003 = vsel %vm350, %v992, 0
      %v1006 = vsel %vm350, %v993, 0
      %v1009 = vsel %vm350, %v994, 0
      %v1012 = vsel %vm350, %v995, 0
      %1014 = vmatprep.subr.bf16.mxu0 %v1003
      %1015 = vmatpush1.bf16.msra.mxu0 %v1000
      %1016 = vmatprep.subr.bf16.mxu0 0
      %1017 = vmatpush1.bf16.msra.mxu0 0
      %1018 = vmatprep.subr.bf16.mxu0 0
      %1019 = vmatpush1.bf16.msra.mxu0 0
      %1020 = vmatprep.subr.bf16.mxu0 0
      %1021 = vmatpush1.bf16.msra.mxu0 0
      %1022 = vmatprep.subr.bf16.mxu0 0
      %1023 = vmatpush1.bf16.msra.mxu0 0
      %1024 = vmatprep.subr.bf16.mxu0 0
      %1025 = vmatpush1.bf16.msra.mxu0 0
      %1026 = vmatprep.subr.bf16.mxu0 0
      %1027 = vmatpush1.bf16.msra.mxu0 0
      %1028 = vmatprep.subr.bf16.mxu0 0
      %1029 = vmatpush1.bf16.msra.mxu0 0
      %1030 = vmatprep.subr.bf16.mxu0 0
      %1031 = vmatpush1.bf16.msra.mxu0 0
      %1032 = vmatprep.subr.bf16.mxu0 0
      %1033 = vmatpush1.bf16.msra.mxu0 0
      %1034 = vmatprep.subr.bf16.mxu0 0
      %1035 = vmatpush1.bf16.msra.mxu0 0
      %1036 = vmatprep.subr.bf16.mxu0 0
      %1037 = vmatpush1.bf16.msra.mxu0 0
      %1038 = vmatprep.subr.bf16.mxu0 0
      %1039 = vmatpush1.bf16.msra.mxu0 0
      %1040 = vmatprep.subr.bf16.mxu0 0
      %1041 = vmatpush1.bf16.msra.mxu0 0
      %1042 = vmatprep.subr.bf16.mxu0 0
      %1043 = vmatpush1.bf16.msra.mxu0 0
      %1044 = vmatprep.subr.bf16.mxu0 0
      %1045 = vmatpush1.bf16.msra.mxu0 0
      %1046 = vmatprep.mubr.bf16.mxu0 0
      %1047 = vmatmul.mubr.bf16.gmra.mrb[0].mxu0 %v997
      %v1048 = vpop.f32.mrb[0].mxu0
      %v1049 = vadd.f32 0.0, %v1048
      %v1050 = vpop.f32.mrb[0].mxu0
      %v1051 = vadd.f32 0.0, %v1050
      %v1052 = vpop.f32.mrb[0].mxu0
      %v1053 = vpop.f32.mrb[0].mxu0
      %1054 = vdwg.mxu0
      %1055 = vmatprep.subr.bf16.mxu0 %v1009
      %1056 = vmatpush1.bf16.msra.mxu0 %v1006
      %1057 = vmatprep.subr.bf16.mxu0 0
      %1058 = vmatpush1.bf16.msra.mxu0 0
      %1059 = vmatprep.subr.bf16.mxu0 0
      %1060 = vmatpush1.bf16.msra.mxu0 0
      %1061 = vmatprep.subr.bf16.mxu0 0
      %1062 = vmatpush1.bf16.msra.mxu0 0
      %1063 = vmatprep.subr.bf16.mxu0 0
      %1064 = vmatpush1.bf16.msra.mxu0 0
      %1065 = vmatprep.subr.bf16.mxu0 0
      %1066 = vmatpush1.bf16.msra.mxu0 0
      %1067 = vmatprep.subr.bf16.mxu0 0
      %1068 = vmatpush1.bf16.msra.mxu0 0
      %1069 = vmatprep.subr.bf16.mxu0 0
      %1070 = vmatpush1.bf16.msra.mxu0 0
      %1071 = vmatprep.subr.bf16.mxu0 0
      %1072 = vmatpush1.bf16.msra.mxu0 0
      %1073 = vmatprep.subr.bf16.mxu0 0
      %1074 = vmatpush1.bf16.msra.mxu0 0
      %1075 = vmatprep.subr.bf16.mxu0 0
      %1076 = vmatpush1.bf16.msra.mxu0 0
      %1077 = vmatprep.subr.bf16.mxu0 0
      %1078 = vmatpush1.bf16.msra.mxu0 0
      %1079 = vmatprep.subr.bf16.mxu0 0
      %1080 = vmatpush1.bf16.msra.mxu0 0
      %1081 = vmatprep.subr.bf16.mxu0 0
      %1082 = vmatpush1.bf16.msra.mxu0 0
      %1083 = vmatprep.subr.bf16.mxu0 0
      %1084 = vmatpush1.bf16.msra.mxu0 0
      %1085 = vmatprep.subr.bf16.mxu0 0
      %1086 = vmatpush1.bf16.msra.mxu0 0
      %1087 = vmatprep.mubr.bf16.mxu0 0
      %1088 = vmatmul.mubr.bf16.gmra.mrb[0].mxu0 %v997
      %v1089 = vpop.f32.mrb[0].mxu0
      %v1090 = vadd.f32 0.0, %v1089
      %v1091 = vpop.f32.mrb[0].mxu0
      %v1092 = vadd.f32 0.0, %v1091
      %v1093 = vpop.f32.mrb[0].mxu0
      %v1094 = vpop.f32.mrb[0].mxu0
      %1095 = vdwg.mxu0
      %1096 = vmatprep.subr.bf16.mxu0 0
      %1097 = vmatpush1.bf16.msra.mxu0 %v1012
      %1098 = vmatprep.subr.bf16.mxu0 0
      %1099 = vmatpush1.bf16.msra.mxu0 0
      %1100 = vmatprep.subr.bf16.mxu0 0
      %1101 = vmatpush1.bf16.msra.mxu0 0
      %1102 = vmatprep.subr.bf16.mxu0 0
      %1103 = vmatpush1.bf16.msra.mxu0 0
      %1104 = vmatprep.subr.bf16.mxu0 0
      %1105 = vmatpush1.bf16.msra.mxu0 0
      %1106 = vmatprep.subr.bf16.mxu0 0
      %1107 = vmatpush1.bf16.msra.mxu0 0
      %1108 = vmatprep.subr.bf16.mxu0 0
      %1109 = vmatpush1.bf16.msra.mxu0 0
      %1110 = vmatprep.subr.bf16.mxu0 0
      %1111 = vmatpush1.bf16.msra.mxu0 0
      %1112 = vmatprep.subr.bf16.mxu0 0
      %1113 = vmatpush1.bf16.msra.mxu0 0
      %1114 = vmatprep.subr.bf16.mxu0 0
      %1115 = vmatpush1.bf16.msra.mxu0 0
      %1116 = vmatprep.subr.bf16.mxu0 0
      %1117 = vmatpush1.bf16.msra.mxu0 0
      %1118 = vmatprep.subr.bf16.mxu0 0
      %1119 = vmatpush1.bf16.msra.mxu0 0
      %1120 = vmatprep.subr.bf16.mxu0 0
      %1121 = vmatpush1.bf16.msra.mxu0 0
      %1122 = vmatprep.subr.bf16.mxu0 0
      %1123 = vmatpush1.bf16.msra.mxu0 0
      %1124 = vmatprep.subr.bf16.mxu0 0
      %1125 = vmatpush1.bf16.msra.mxu0 0
      %1126 = vmatprep.subr.bf16.mxu0 0
      %1127 = vmatpush1.bf16.msra.mxu0 0
      %1128 = vmatprep.mubr.bf16.mxu0 0
      %1129 = vmatmul.mubr.bf16.gmra.mrb[0].mxu0 %v997
      %v1130 = vpop.f32.mrb[0].mxu0
      %v1131 = vadd.f32 0.0, %v1130
      %v1132 = vpop.f32.mrb[0].mxu0
      %v1133 = vpop.f32.mrb[0].mxu0
      %v1134 = vpop.f32.mrb[0].mxu0
      %1135 = vdwg.mxu0
      %v1136 = vadd.f32 %v971, %v1049
      %v1137 = vadd.f32 %v972, %v1051
      %v1138 = vadd.f32 %v973, %v1090
      %v1139 = vadd.f32 %v974, %v1092
      %v1140 = vadd.f32 %v975, %v1131
      %s1141 = scalar_lea.vmem %s1, 20
      %v1142 = vld [vmem:[%s1141] sm:$0xf]
      %1143 = vrot.lane.b32.xlu0 %v322, 99
      %v1144 = vpop.permute.xlu0 %1143
      %1145 = vrot.lane.b32.xlu0 %v323, 99
      %v1146 = vpop.permute.xlu0 %1145
      %1147 = vrot.lane.b32.xlu0 %v324, 99
      %v1148 = vpop.permute.xlu0 %1147
      %1149 = vrot.lane.b32.xlu0 %v325, 99
      %v1150 = vpop.permute.xlu0 %1149
      %1151 = vrot.lane.b32.xlu0 %v326, 99
      %v1152 = vpop.permute.xlu0 %1151
      %1153 = vrot.lane.b32.xlu0 %v327, 99
      %v1154 = vpop.permute.xlu0 %1153
      %vm1155 = vcmask 809984
      %v1156 = vsel %vm1155, %v1144, %v1146
      %v1157 = vsel %vm1155, %v1146, %v1148
      %v1158 = vsel %vm1155, %v1148, %v1150
      %v1159 = vsel %vm1155, %v1150, %v1152
      %v1160 = vsel %vm1155, %v1152, %v1154
      %v1162 = vsel %vm346, %v1142, 0
      %v1165 = vsel %vm350, %v1156, 0
      %v1168 = vsel %vm350, %v1157, 0
      %v1171 = vsel %vm350, %v1158, 0
      %v1174 = vsel %vm350, %v1159, 0
      %v1177 = vsel %vm350, %v1160, 0
      %1179 = vmatprep.subr.bf16.mxu0 %v1168
      %1180 = vmatpush1.bf16.msra.mxu0 %v1165
      %1181 = vmatprep.subr.bf16.mxu0 0
      %1182 = vmatpush1.bf16.msra.mxu0 0
      %1183 = vmatprep.subr.bf16.mxu0 0
      %1184 = vmatpush1.bf16.msra.mxu0 0
      %1185 = vmatprep.subr.bf16.mxu0 0
      %1186 = vmatpush1.bf16.msra.mxu0 0
      %1187 = vmatprep.subr.bf16.mxu0 0
      %1188 = vmatpush1.bf16.msra.mxu0 0
      %1189 = vmatprep.subr.bf16.mxu0 0
      %1190 = vmatpush1.bf16.msra.mxu0 0
      %1191 = vmatprep.subr.bf16.mxu0 0
      %1192 = vmatpush1.bf16.msra.mxu0 0
      %1193 = vmatprep.subr.bf16.mxu0 0
      %1194 = vmatpush1.bf16.msra.mxu0 0
      %1195 = vmatprep.subr.bf16.mxu0 0
      %1196 = vmatpush1.bf16.msra.mxu0 0
      %1197 = vmatprep.subr.bf16.mxu0 0
      %1198 = vmatpush1.bf16.msra.mxu0 0
      %1199 = vmatprep.subr.bf16.mxu0 0
      %1200 = vmatpush1.bf16.msra.mxu0 0
      %1201 = vmatprep.subr.bf16.mxu0 0
      %1202 = vmatpush1.bf16.msra.mxu0 0
      %1203 = vmatprep.subr.bf16.mxu0 0
      %1204 = vmatpush1.bf16.msra.mxu0 0
      %1205 = vmatprep.subr.bf16.mxu0 0
      %1206 = vmatpush1.bf16.msra.mxu0 0
      %1207 = vmatprep.subr.bf16.mxu0 0
      %1208 = vmatpush1.bf16.msra.mxu0 0
      %1209 = vmatprep.subr.bf16.mxu0 0
      %1210 = vmatpush1.bf16.msra.mxu0 0
      %1211 = vmatprep.mubr.bf16.mxu0 0
      %1212 = vmatmul.mubr.bf16.gmra.mrb[0].mxu0 %v1162
      %v1213 = vpop.f32.mrb[0].mxu0
      %v1214 = vadd.f32 0.0, %v1213
      %v1215 = vpop.f32.mrb[0].mxu0
      %v1216 = vadd.f32 0.0, %v1215
      %v1217 = vpop.f32.mrb[0].mxu0
      %v1218 = vpop.f32.mrb[0].mxu0
      %1219 = vdwg.mxu0
      %1220 = vmatprep.subr.bf16.mxu0 %v1174
      %1221 = vmatpush1.bf16.msra.mxu0 %v1171
      %1222 = vmatprep.subr.bf16.mxu0 0
      %1223 = vmatpush1.bf16.msra.mxu0 0
      %1224 = vmatprep.subr.bf16.mxu0 0
      %1225 = vmatpush1.bf16.msra.mxu0 0
      %1226 = vmatprep.subr.bf16.mxu0 0
      %1227 = vmatpush1.bf16.msra.mxu0 0
      %1228 = vmatprep.subr.bf16.mxu0 0
      %1229 = vmatpush1.bf16.msra.mxu0 0
      %1230 = vmatprep.subr.bf16.mxu0 0
      %1231 = vmatpush1.bf16.msra.mxu0 0
      %1232 = vmatprep.subr.bf16.mxu0 0
      %1233 = vmatpush1.bf16.msra.mxu0 0
      %1234 = vmatprep.subr.bf16.mxu0 0
      %1235 = vmatpush1.bf16.msra.mxu0 0
      %1236 = vmatprep.subr.bf16.mxu0 0
      %1237 = vmatpush1.bf16.msra.mxu0 0
      %1238 = vmatprep.subr.bf16.mxu0 0
      %1239 = vmatpush1.bf16.msra.mxu0 0
      %1240 = vmatprep.subr.bf16.mxu0 0
      %1241 = vmatpush1.bf16.msra.mxu0 0
      %1242 = vmatprep.subr.bf16.mxu0 0
      %1243 = vmatpush1.bf16.msra.mxu0 0
      %1244 = vmatprep.subr.bf16.mxu0 0
      %1245 = vmatpush1.bf16.msra.mxu0 0
      %1246 = vmatprep.subr.bf16.mxu0 0
      %1247 = vmatpush1.bf16.msra.mxu0 0
      %1248 = vmatprep.subr.bf16.mxu0 0
      %1249 = vmatpush1.bf16.msra.mxu0 0
      %1250 = vmatprep.subr.bf16.mxu0 0
      %1251 = vmatpush1.bf16.msra.mxu0 0
      %1252 = vmatprep.mubr.bf16.mxu0 0
      %1253 = vmatmul.mubr.bf16.gmra.mrb[0].mxu0 %v1162
      %v1254 = vpop.f32.mrb[0].mxu0
      %v1255 = vadd.f32 0.0, %v1254
      %v1256 = vpop.f32.mrb[0].mxu0
      %v1257 = vadd.f32 0.0, %v1256
      %v1258 = vpop.f32.mrb[0].mxu0
      %v1259 = vpop.f32.mrb[0].mxu0
      %1260 = vdwg.mxu0
      %1261 = vmatprep.subr.bf16.mxu0 0
      %1262 = vmatpush1.bf16.msra.mxu0 %v1177
      %1263 = vmatprep.subr.bf16.mxu0 0
      %1264 = vmatpush1.bf16.msra.mxu0 0
      %1265 = vmatprep.subr.bf16.mxu0 0
      %1266 = vmatpush1.bf16.msra.mxu0 0
      %1267 = vmatprep.subr.bf16.mxu0 0
      %1268 = vmatpush1.bf16.msra.mxu0 0
      %1269 = vmatprep.subr.bf16.mxu0 0
      %1270 = vmatpush1.bf16.msra.mxu0 0
      %1271 = vmatprep.subr.bf16.mxu0 0
      %1272 = vmatpush1.bf16.msra.mxu0 0
      %1273 = vmatprep.subr.bf16.mxu0 0
      %1274 = vmatpush1.bf16.msra.mxu0 0
      %1275 = vmatprep.subr.bf16.mxu0 0
      %1276 = vmatpush1.bf16.msra.mxu0 0
      %1277 = vmatprep.subr.bf16.mxu0 0
      %1278 = vmatpush1.bf16.msra.mxu0 0
      %1279 = vmatprep.subr.bf16.mxu0 0
      %1280 = vmatpush1.bf16.msra.mxu0 0
      %1281 = vmatprep.subr.bf16.mxu0 0
      %1282 = vmatpush1.bf16.msra.mxu0 0
      %1283 = vmatprep.subr.bf16.mxu0 0
      %1284 = vmatpush1.bf16.msra.mxu0 0
      %1285 = vmatprep.subr.bf16.mxu0 0
      %1286 = vmatpush1.bf16.msra.mxu0 0
      %1287 = vmatprep.subr.bf16.mxu0 0
      %1288 = vmatpush1.bf16.msra.mxu0 0
      %1289 = vmatprep.subr.bf16.mxu0 0
      %1290 = vmatpush1.bf16.msra.mxu0 0
      %1291 = vmatprep.subr.bf16.mxu0 0
      %1292 = vmatpush1.bf16.msra.mxu0 0
      %1293 = vmatprep.mubr.bf16.mxu0 0
      %1294 = vmatmul.mubr.bf16.gmra.mrb[0].mxu0 %v1162
      %v1295 = vpop.f32.mrb[0].mxu0
      %v1296 = vadd.f32 0.0, %v1295
      %v1297 = vpop.f32.mrb[0].mxu0
      %v1298 = vpop.f32.mrb[0].mxu0
      %v1299 = vpop.f32.mrb[0].mxu0
      %1300 = vdwg.mxu0
      %v1301 = vadd.f32 %v1136, %v1214
      %v1302 = vadd.f32 %v1137, %v1216
      %v1303 = vadd.f32 %v1138, %v1255
      %v1304 = vadd.f32 %v1139, %v1257
      %v1305 = vadd.f32 %v1140, %v1296
      %s1306 = scalar_lea.vmem %s1, 24
      %v1307 = vld [vmem:[%s1306] sm:$0xf]
      %1308 = vrot.lane.b32.xlu0 %v322, 91
      %v1309 = vpop.permute.xlu0 %1308
      %1310 = vrot.lane.b32.xlu0 %v323, 91
      %v1311 = vpop.permute.xlu0 %1310
      %1312 = vrot.lane.b32.xlu0 %v324, 91
      %v1313 = vpop.permute.xlu0 %1312
      %1314 = vrot.lane.b32.xlu0 %v325, 91
      %v1315 = vpop.permute.xlu0 %1314
      %1316 = vrot.lane.b32.xlu0 %v326, 91
      %v1317 = vpop.permute.xlu0 %1316
      %1318 = vrot.lane.b32.xlu0 %v327, 91
      %v1319 = vpop.permute.xlu0 %1318
      %vm1320 = vcmask 744448
      %v1321 = vsel %vm1320, %v1309, %v1311
      %v1322 = vsel %vm1320, %v1311, %v1313
      %v1323 = vsel %vm1320, %v1313, %v1315
      %v1324 = vsel %vm1320, %v1315, %v1317
      %v1325 = vsel %vm1320, %v1317, %v1319
      %v1327 = vsel %vm346, %v1307, 0
      %v1330 = vsel %vm350, %v1321, 0
      %v1333 = vsel %vm350, %v1322, 0
      %v1336 = vsel %vm350, %v1323, 0
      %v1339 = vsel %vm350, %v1324, 0
      %v1342 = vsel %vm350, %v1325, 0
      %1344 = vmatprep.subr.bf16.mxu0 %v1333
      %1345 = vmatpush1.bf16.msra.mxu0 %v1330
      %1346 = vmatprep.subr.bf16.mxu0 0
      %1347 = vmatpush1.bf16.msra.mxu0 0
      %1348 = vmatprep.subr.bf16.mxu0 0
      %1349 = vmatpush1.bf16.msra.mxu0 0
      %1350 = vmatprep.subr.bf16.mxu0 0
      %1351 = vmatpush1.bf16.msra.mxu0 0
      %1352 = vmatprep.subr.bf16.mxu0 0
      %1353 = vmatpush1.bf16.msra.mxu0 0
      %1354 = vmatprep.subr.bf16.mxu0 0
      %1355 = vmatpush1.bf16.msra.mxu0 0
      %1356 = vmatprep.subr.bf16.mxu0 0
      %1357 = vmatpush1.bf16.msra.mxu0 0
      %1358 = vmatprep.subr.bf16.mxu0 0
      %1359 = vmatpush1.bf16.msra.mxu0 0
      %1360 = vmatprep.subr.bf16.mxu0 0
      %1361 = vmatpush1.bf16.msra.mxu0 0
      %1362 = vmatprep.subr.bf16.mxu0 0
      %1363 = vmatpush1.bf16.msra.mxu0 0
      %1364 = vmatprep.subr.bf16.mxu0 0
      %1365 = vmatpush1.bf16.msra.mxu0 0
      %1366 = vmatprep.subr.bf16.mxu0 0
      %1367 = vmatpush1.bf16.msra.mxu0 0
      %1368 = vmatprep.subr.bf16.mxu0 0
      %1369 = vmatpush1.bf16.msra.mxu0 0
      %1370 = vmatprep.subr.bf16.mxu0 0
      %1371 = vmatpush1.bf16.msra.mxu0 0
      %1372 = vmatprep.subr.bf16.mxu0 0
      %1373 = vmatpush1.bf16.msra.mxu0 0
      %1374 = vmatprep.subr.bf16.mxu0 0
      %1375 = vmatpush1.bf16.msra.mxu0 0
      %1376 = vmatprep.mubr.bf16.mxu0 0
      %1377 = vmatmul.mubr.bf16.gmra.mrb[0].mxu0 %v1327
      %v1378 = vpop.f32.mrb[0].mxu0
      %v1379 = vadd.f32 0.0, %v1378
      %v1380 = vpop.f32.mrb[0].mxu0
      %v1381 = vadd.f32 0.0, %v1380
      %v1382 = vpop.f32.mrb[0].mxu0
      %v1383 = vpop.f32.mrb[0].mxu0
      %1384 = vdwg.mxu0
      %1385 = vmatprep.subr.bf16.mxu0 %v1339
      %1386 = vmatpush1.bf16.msra.mxu0 %v1336
      %1387 = vmatprep.subr.bf16.mxu0 0
      %1388 = vmatpush1.bf16.msra.mxu0 0
      %1389 = vmatprep.subr.bf16.mxu0 0
      %1390 = vmatpush1.bf16.msra.mxu0 0
      %1391 = vmatprep.subr.bf16.mxu0 0
      %1392 = vmatpush1.bf16.msra.mxu0 0
      %1393 = vmatprep.subr.bf16.mxu0 0
      %1394 = vmatpush1.bf16.msra.mxu0 0
      %1395 = vmatprep.subr.bf16.mxu0 0
      %1396 = vmatpush1.bf16.msra.mxu0 0
      %1397 = vmatprep.subr.bf16.mxu0 0
      %1398 = vmatpush1.bf16.msra.mxu0 0
      %1399 = vmatprep.subr.bf16.mxu0 0
      %1400 = vmatpush1.bf16.msra.mxu0 0
      %1401 = vmatprep.subr.bf16.mxu0 0
      %1402 = vmatpush1.bf16.msra.mxu0 0
      %1403 = vmatprep.subr.bf16.mxu0 0
      %1404 = vmatpush1.bf16.msra.mxu0 0
      %1405 = vmatprep.subr.bf16.mxu0 0
      %1406 = vmatpush1.bf16.msra.mxu0 0
      %1407 = vmatprep.subr.bf16.mxu0 0
      %1408 = vmatpush1.bf16.msra.mxu0 0
      %1409 = vmatprep.subr.bf16.mxu0 0
      %1410 = vmatpush1.bf16.msra.mxu0 0
      %1411 = vmatprep.subr.bf16.mxu0 0
      %1412 = vmatpush1.bf16.msra.mxu0 0
      %1413 = vmatprep.subr.bf16.mxu0 0
      %1414 = vmatpush1.bf16.msra.mxu0 0
      %1415 = vmatprep.subr.bf16.mxu0 0
      %1416 = vmatpush1.bf16.msra.mxu0 0
      %1417 = vmatprep.mubr.bf16.mxu0 0
      %1418 = vmatmul.mubr.bf16.gmra.mrb[0].mxu0 %v1327
      %v1419 = vpop.f32.mrb[0].mxu0
      %v1420 = vadd.f32 0.0, %v1419
      %v1421 = vpop.f32.mrb[0].mxu0
      %v1422 = vadd.f32 0.0, %v1421
      %v1423 = vpop.f32.mrb[0].mxu0
      %v1424 = vpop.f32.mrb[0].mxu0
      %1425 = vdwg.mxu0
      %1426 = vmatprep.subr.bf16.mxu0 0
      %1427 = vmatpush1.bf16.msra.mxu0 %v1342
      %1428 = vmatprep.subr.bf16.mxu0 0
      %1429 = vmatpush1.bf16.msra.mxu0 0
      %1430 = vmatprep.subr.bf16.mxu0 0
      %1431 = vmatpush1.bf16.msra.mxu0 0
      %1432 = vmatprep.subr.bf16.mxu0 0
      %1433 = vmatpush1.bf16.msra.mxu0 0
      %1434 = vmatprep.subr.bf16.mxu0 0
      %1435 = vmatpush1.bf16.msra.mxu0 0
      %1436 = vmatprep.subr.bf16.mxu0 0
      %1437 = vmatpush1.bf16.msra.mxu0 0
      %1438 = vmatprep.subr.bf16.mxu0 0
      %1439 = vmatpush1.bf16.msra.mxu0 0
      %1440 = vmatprep.subr.bf16.mxu0 0
      %1441 = vmatpush1.bf16.msra.mxu0 0
      %1442 = vmatprep.subr.bf16.mxu0 0
      %1443 = vmatpush1.bf16.msra.mxu0 0
      %1444 = vmatprep.subr.bf16.mxu0 0
      %1445 = vmatpush1.bf16.msra.mxu0 0
      %1446 = vmatprep.subr.bf16.mxu0 0
      %1447 = vmatpush1.bf16.msra.mxu0 0
      %1448 = vmatprep.subr.bf16.mxu0 0
      %1449 = vmatpush1.bf16.msra.mxu0 0
      %1450 = vmatprep.subr.bf16.mxu0 0
      %1451 = vmatpush1.bf16.msra.mxu0 0
      %1452 = vmatprep.subr.bf16.mxu0 0
      %1453 = vmatpush1.bf16.msra.mxu0 0
      %1454 = vmatprep.subr.bf16.mxu0 0
      %1455 = vmatpush1.bf16.msra.mxu0 0
      %1456 = vmatprep.subr.bf16.mxu0 0
      %1457 = vmatpush1.bf16.msra.mxu0 0
      %1458 = vmatprep.mubr.bf16.mxu0 0
      %1459 = vmatmul.mubr.bf16.gmra.mrb[0].mxu0 %v1327
      %v1460 = vpop.f32.mrb[0].mxu0
      %v1461 = vadd.f32 0.0, %v1460
      %v1462 = vpop.f32.mrb[0].mxu0
      %v1463 = vpop.f32.mrb[0].mxu0
      %v1464 = vpop.f32.mrb[0].mxu0
      %1465 = vdwg.mxu0
      %v1466 = vadd.f32 %v1301, %v1379
      %v1467 = vadd.f32 %v1302, %v1381
      %v1468 = vadd.f32 %v1303, %v1420
      %v1469 = vadd.f32 %v1304, %v1422
      %v1470 = vadd.f32 %v1305, %v1461
      %s1471 = scalar_lea.vmem %s1, 28
      %v1472 = vld [vmem:[%s1471] sm:$0xf]
      %1473 = vrot.lane.b32.xlu0 %v322, 90
      %v1474 = vpop.permute.xlu0 %1473
      %1475 = vrot.lane.b32.xlu0 %v323, 90
      %v1476 = vpop.permute.xlu0 %1475
      %1477 = vrot.lane.b32.xlu0 %v324, 90
      %v1478 = vpop.permute.xlu0 %1477
      %1479 = vrot.lane.b32.xlu0 %v325, 90
      %v1480 = vpop.permute.xlu0 %1479
      %1481 = vrot.lane.b32.xlu0 %v326, 90
      %v1482 = vpop.permute.xlu0 %1481
      %1483 = vrot.lane.b32.xlu0 %v327, 90
      %v1484 = vpop.permute.xlu0 %1483
      %vm1485 = vcmask 736256
      %v1486 = vsel %vm1485, %v1474, %v1476
      %v1487 = vsel %vm1485, %v1476, %v1478
      %v1488 = vsel %vm1485, %v1478, %v1480
      %v1489 = vsel %vm1485, %v1480, %v1482
      %v1490 = vsel %vm1485, %v1482, %v1484
      %v1492 = vsel %vm346, %v1472, 0
      %v1495 = vsel %vm350, %v1486, 0
      %v1498 = vsel %vm350, %v1487, 0
      %v1501 = vsel %vm350, %v1488, 0
      %v1504 = vsel %vm350, %v1489, 0
      %v1507 = vsel %vm350, %v1490, 0
      %1509 = vmatprep.subr.bf16.mxu0 %v1498
      %1510 = vmatpush1.bf16.msra.mxu0 %v1495
      %1511 = vmatprep.subr.bf16.mxu0 0
      %1512 = vmatpush1.bf16.msra.mxu0 0
      %1513 = vmatprep.subr.bf16.mxu0 0
      %1514 = vmatpush1.bf16.msra.mxu0 0
      %1515 = vmatprep.subr.bf16.mxu0 0
      %1516 = vmatpush1.bf16.msra.mxu0 0
      %1517 = vmatprep.subr.bf16.mxu0 0
      %1518 = vmatpush1.bf16.msra.mxu0 0
      %1519 = vmatprep.subr.bf16.mxu0 0
      %1520 = vmatpush1.bf16.msra.mxu0 0
      %1521 = vmatprep.subr.bf16.mxu0 0
      %1522 = vmatpush1.bf16.msra.mxu0 0
      %1523 = vmatprep.subr.bf16.mxu0 0
      %1524 = vmatpush1.bf16.msra.mxu0 0
      %1525 = vmatprep.subr.bf16.mxu0 0
      %1526 = vmatpush1.bf16.msra.mxu0 0
      %1527 = vmatprep.subr.bf16.mxu0 0
      %1528 = vmatpush1.bf16.msra.mxu0 0
      %1529 = vmatprep.subr.bf16.mxu0 0
      %1530 = vmatpush1.bf16.msra.mxu0 0
      %1531 = vmatprep.subr.bf16.mxu0 0
      %1532 = vmatpush1.bf16.msra.mxu0 0
      %1533 = vmatprep.subr.bf16.mxu0 0
      %1534 = vmatpush1.bf16.msra.mxu0 0
      %1535 = vmatprep.subr.bf16.mxu0 0
      %1536 = vmatpush1.bf16.msra.mxu0 0
      %1537 = vmatprep.subr.bf16.mxu0 0
      %1538 = vmatpush1.bf16.msra.mxu0 0
      %1539 = vmatprep.subr.bf16.mxu0 0
      %1540 = vmatpush1.bf16.msra.mxu0 0
      %1541 = vmatprep.mubr.bf16.mxu0 0
      %1542 = vmatmul.mubr.bf16.gmra.mrb[0].mxu0 %v1492
      %v1543 = vpop.f32.mrb[0].mxu0
      %v1544 = vadd.f32 0.0, %v1543
      %v1545 = vpop.f32.mrb[0].mxu0
      %v1546 = vadd.f32 0.0, %v1545
      %v1547 = vpop.f32.mrb[0].mxu0
      %v1548 = vpop.f32.mrb[0].mxu0
      %1549 = vdwg.mxu0
      %1550 = vmatprep.subr.bf16.mxu0 %v1504
      %1551 = vmatpush1.bf16.msra.mxu0 %v1501
      %1552 = vmatprep.subr.bf16.mxu0 0
      %1553 = vmatpush1.bf16.msra.mxu0 0
      %1554 = vmatprep.subr.bf16.mxu0 0
      %1555 = vmatpush1.bf16.msra.mxu0 0
      %1556 = vmatprep.subr.bf16.mxu0 0
      %1557 = vmatpush1.bf16.msra.mxu0 0
      %1558 = vmatprep.subr.bf16.mxu0 0
      %1559 = vmatpush1.bf16.msra.mxu0 0
      %1560 = vmatprep.subr.bf16.mxu0 0
      %1561 = vmatpush1.bf16.msra.mxu0 0
      %1562 = vmatprep.subr.bf16.mxu0 0
      %1563 = vmatpush1.bf16.msra.mxu0 0
      %1564 = vmatprep.subr.bf16.mxu0 0
      %1565 = vmatpush1.bf16.msra.mxu0 0
      %1566 = vmatprep.subr.bf16.mxu0 0
      %1567 = vmatpush1.bf16.msra.mxu0 0
      %1568 = vmatprep.subr.bf16.mxu0 0
      %1569 = vmatpush1.bf16.msra.mxu0 0
      %1570 = vmatprep.subr.bf16.mxu0 0
      %1571 = vmatpush1.bf16.msra.mxu0 0
      %1572 = vmatprep.subr.bf16.mxu0 0
      %1573 = vmatpush1.bf16.msra.mxu0 0
      %1574 = vmatprep.subr.bf16.mxu0 0
      %1575 = vmatpush1.bf16.msra.mxu0 0
      %1576 = vmatprep.subr.bf16.mxu0 0
      %1577 = vmatpush1.bf16.msra.mxu0 0
      %1578 = vmatprep.subr.bf16.mxu0 0
      %1579 = vmatpush1.bf16.msra.mxu0 0
      %1580 = vmatprep.subr.bf16.mxu0 0
      %1581 = vmatpush1.bf16.msra.mxu0 0
      %1582 = vmatprep.mubr.bf16.mxu0 0
      %1583 = vmatmul.mubr.bf16.gmra.mrb[0].mxu0 %v1492
      %v1584 = vpop.f32.mrb[0].mxu0
      %v1585 = vadd.f32 0.0, %v1584
      %v1586 = vpop.f32.mrb[0].mxu0
      %v1587 = vadd.f32 0.0, %v1586
      %v1588 = vpop.f32.mrb[0].mxu0
      %v1589 = vpop.f32.mrb[0].mxu0
      %1590 = vdwg.mxu0
      %1591 = vmatprep.subr.bf16.mxu0 0
      %1592 = vmatpush1.bf16.msra.mxu0 %v1507
      %1593 = vmatprep.subr.bf16.mxu0 0
      %1594 = vmatpush1.bf16.msra.mxu0 0
      %1595 = vmatprep.subr.bf16.mxu0 0
      %1596 = vmatpush1.bf16.msra.mxu0 0
      %1597 = vmatprep.subr.bf16.mxu0 0
      %1598 = vmatpush1.bf16.msra.mxu0 0
      %1599 = vmatprep.subr.bf16.mxu0 0
      %1600 = vmatpush1.bf16.msra.mxu0 0
      %1601 = vmatprep.subr.bf16.mxu0 0
      %1602 = vmatpush1.bf16.msra.mxu0 0
      %1603 = vmatprep.subr.bf16.mxu0 0
      %1604 = vmatpush1.bf16.msra.mxu0 0
      %1605 = vmatprep.subr.bf16.mxu0 0
      %1606 = vmatpush1.bf16.msra.mxu0 0
      %1607 = vmatprep.subr.bf16.mxu0 0
      %1608 = vmatpush1.bf16.msra.mxu0 0
      %1609 = vmatprep.subr.bf16.mxu0 0
      %1610 = vmatpush1.bf16.msra.mxu0 0
      %1611 = vmatprep.subr.bf16.mxu0 0
      %1612 = vmatpush1.bf16.msra.mxu0 0
      %1613 = vmatprep.subr.bf16.mxu0 0
      %1614 = vmatpush1.bf16.msra.mxu0 0
      %1615 = vmatprep.subr.bf16.mxu0 0
      %1616 = vmatpush1.bf16.msra.mxu0 0
      %1617 = vmatprep.subr.bf16.mxu0 0
      %1618 = vmatpush1.bf16.msra.mxu0 0
      %1619 = vmatprep.subr.bf16.mxu0 0
      %1620 = vmatpush1.bf16.msra.mxu0 0
      %1621 = vmatprep.subr.bf16.mxu0 0
      %1622 = vmatpush1.bf16.msra.mxu0 0
      %1623 = vmatprep.mubr.bf16.mxu0 0
      %1624 = vmatmul.mubr.bf16.gmra.mrb[0].mxu0 %v1492
      %v1625 = vpop.f32.mrb[0].mxu0
      %v1626 = vadd.f32 0.0, %v1625
      %v1627 = vpop.f32.mrb[0].mxu0
      %v1628 = vpop.f32.mrb[0].mxu0
      %v1629 = vpop.f32.mrb[0].mxu0
      %1630 = vdwg.mxu0
      %v1631 = vadd.f32 %v1466, %v1544
      %v1632 = vadd.f32 %v1467, %v1546
      %v1633 = vadd.f32 %v1468, %v1585
      %v1634 = vadd.f32 %v1469, %v1587
      %v1635 = vadd.f32 %v1470, %v1626
      %s1636 = scalar_lea.vmem %s1, 32
      %v1637 = vld [vmem:[%s1636] sm:$0xf]
      %1638 = vrot.lane.b32.xlu0 %v322, 89
      %v1639 = vpop.permute.xlu0 %1638
      %1640 = vrot.lane.b32.xlu0 %v323, 89
      %v1641 = vpop.permute.xlu0 %1640
      %1642 = vrot.lane.b32.xlu0 %v324, 89
      %v1643 = vpop.permute.xlu0 %1642
      %1644 = vrot.lane.b32.xlu0 %v325, 89
      %v1645 = vpop.permute.xlu0 %1644
      %1646 = vrot.lane.b32.xlu0 %v326, 89
      %v1647 = vpop.permute.xlu0 %1646
      %1648 = vrot.lane.b32.xlu0 %v327, 89
      %v1649 = vpop.permute.xlu0 %1648
      %vm1650 = vcmask 728064
      %v1651 = vsel %vm1650, %v1639, %v1641
      %v1652 = vsel %vm1650, %v1641, %v1643
      %v1653 = vsel %vm1650, %v1643, %v1645
      %v1654 = vsel %vm1650, %v1645, %v1647
      %v1655 = vsel %vm1650, %v1647, %v1649
      %v1657 = vsel %vm346, %v1637, 0
      %v1660 = vsel %vm350, %v1651, 0
      %v1663 = vsel %vm350, %v1652, 0
      %v1666 = vsel %vm350, %v1653, 0
      %v1669 = vsel %vm350, %v1654, 0
      %v1672 = vsel %vm350, %v1655, 0
      %1674 = vmatprep.subr.bf16.mxu0 %v1663
      %1675 = vmatpush1.bf16.msra.mxu0 %v1660
      %1676 = vmatprep.subr.bf16.mxu0 0
      %1677 = vmatpush1.bf16.msra.mxu0 0
      %1678 = vmatprep.subr.bf16.mxu0 0
      %1679 = vmatpush1.bf16.msra.mxu0 0
      %1680 = vmatprep.subr.bf16.mxu0 0
      %1681 = vmatpush1.bf16.msra.mxu0 0
      %1682 = vmatprep.subr.bf16.mxu0 0
      %1683 = vmatpush1.bf16.msra.mxu0 0
      %1684 = vmatprep.subr.bf16.mxu0 0
      %1685 = vmatpush1.bf16.msra.mxu0 0
      %1686 = vmatprep.subr.bf16.mxu0 0
      %1687 = vmatpush1.bf16.msra.mxu0 0
      %1688 = vmatprep.subr.bf16.mxu0 0
      %1689 = vmatpush1.bf16.msra.mxu0 0
      %1690 = vmatprep.subr.bf16.mxu0 0
      %1691 = vmatpush1.bf16.msra.mxu0 0
      %1692 = vmatprep.subr.bf16.mxu0 0
      %1693 = vmatpush1.bf16.msra.mxu0 0
      %1694 = vmatprep.subr.bf16.mxu0 0
      %1695 = vmatpush1.bf16.msra.mxu0 0
      %1696 = vmatprep.subr.bf16.mxu0 0
      %1697 = vmatpush1.bf16.msra.mxu0 0
      %1698 = vmatprep.subr.bf16.mxu0 0
      %1699 = vmatpush1.bf16.msra.mxu0 0
      %1700 = vmatprep.subr.bf16.mxu0 0
      %1701 = vmatpush1.bf16.msra.mxu0 0
      %1702 = vmatprep.subr.bf16.mxu0 0
      %1703 = vmatpush1.bf16.msra.mxu0 0
      %1704 = vmatprep.subr.bf16.mxu0 0
      %1705 = vmatpush1.bf16.msra.mxu0 0
      %1706 = vmatprep.mubr.bf16.mxu0 0
      %1707 = vmatmul.mubr.bf16.gmra.mrb[0].mxu0 %v1657
      %v1708 = vpop.f32.mrb[0].mxu0
      %v1709 = vadd.f32 0.0, %v1708
      %v1710 = vpop.f32.mrb[0].mxu0
      %v1711 = vadd.f32 0.0, %v1710
      %v1712 = vpop.f32.mrb[0].mxu0
      %v1713 = vpop.f32.mrb[0].mxu0
      %1714 = vdwg.mxu0
      %1715 = vmatprep.subr.bf16.mxu0 %v1669
      %1716 = vmatpush1.bf16.msra.mxu0 %v1666
      %1717 = vmatprep.subr.bf16.mxu0 0
      %1718 = vmatpush1.bf16.msra.mxu0 0
      %1719 = vmatprep.subr.bf16.mxu0 0
      %1720 = vmatpush1.bf16.msra.mxu0 0
      %1721 = vmatprep.subr.bf16.mxu0 0
      %1722 = vmatpush1.bf16.msra.mxu0 0
      %1723 = vmatprep.subr.bf16.mxu0 0
      %1724 = vmatpush1.bf16.msra.mxu0 0
      %1725 = vmatprep.subr.bf16.mxu0 0
      %1726 = vmatpush1.bf16.msra.mxu0 0
      %1727 = vmatprep.subr.bf16.mxu0 0
      %1728 = vmatpush1.bf16.msra.mxu0 0
      %1729 = vmatprep.subr.bf16.mxu0 0
      %1730 = vmatpush1.bf16.msra.mxu0 0
      %1731 = vmatprep.subr.bf16.mxu0 0
      %1732 = vmatpush1.bf16.msra.mxu0 0
      %1733 = vmatprep.subr.bf16.mxu0 0
      %1734 = vmatpush1.bf16.msra.mxu0 0
      %1735 = vmatprep.subr.bf16.mxu0 0
      %1736 = vmatpush1.bf16.msra.mxu0 0
      %1737 = vmatprep.subr.bf16.mxu0 0
      %1738 = vmatpush1.bf16.msra.mxu0 0
      %1739 = vmatprep.subr.bf16.mxu0 0
      %1740 = vmatpush1.bf16.msra.mxu0 0
      %1741 = vmatprep.subr.bf16.mxu0 0
      %1742 = vmatpush1.bf16.msra.mxu0 0
      %1743 = vmatprep.subr.bf16.mxu0 0
      %1744 = vmatpush1.bf16.msra.mxu0 0
      %1745 = vmatprep.subr.bf16.mxu0 0
      %1746 = vmatpush1.bf16.msra.mxu0 0
      %1747 = vmatprep.mubr.bf16.mxu0 0
      %1748 = vmatmul.mubr.bf16.gmra.mrb[0].mxu0 %v1657
      %v1749 = vpop.f32.mrb[0].mxu0
      %v1750 = vadd.f32 0.0, %v1749
      %v1751 = vpop.f32.mrb[0].mxu0
      %v1752 = vadd.f32 0.0, %v1751
      %v1753 = vpop.f32.mrb[0].mxu0
      %v1754 = vpop.f32.mrb[0].mxu0
      %1755 = vdwg.mxu0
      %1756 = vmatprep.subr.bf16.mxu0 0
      %1757 = vmatpush1.bf16.msra.mxu0 %v1672
      %1758 = vmatprep.subr.bf16.mxu0 0
      %1759 = vmatpush1.bf16.msra.mxu0 0
      %1760 = vmatprep.subr.bf16.mxu0 0
      %1761 = vmatpush1.bf16.msra.mxu0 0
      %1762 = vmatprep.subr.bf16.mxu0 0
      %1763 = vmatpush1.bf16.msra.mxu0 0
      %1764 = vmatprep.subr.bf16.mxu0 0
      %1765 = vmatpush1.bf16.msra.mxu0 0
      %1766 = vmatprep.subr.bf16.mxu0 0
      %1767 = vmatpush1.bf16.msra.mxu0 0
      %1768 = vmatprep.subr.bf16.mxu0 0
      %1769 = vmatpush1.bf16.msra.mxu0 0
      %1770 = vmatprep.subr.bf16.mxu0 0
      %1771 = vmatpush1.bf16.msra.mxu0 0
      %1772 = vmatprep.subr.bf16.mxu0 0
      %1773 = vmatpush1.bf16.msra.mxu0 0
      %1774 = vmatprep.subr.bf16.mxu0 0
      %1775 = vmatpush1.bf16.msra.mxu0 0
      %1776 = vmatprep.subr.bf16.mxu0 0
      %1777 = vmatpush1.bf16.msra.mxu0 0
      %1778 = vmatprep.subr.bf16.mxu0 0
      %1779 = vmatpush1.bf16.msra.mxu0 0
      %1780 = vmatprep.subr.bf16.mxu0 0
      %1781 = vmatpush1.bf16.msra.mxu0 0
      %1782 = vmatprep.subr.bf16.mxu0 0
      %1783 = vmatpush1.bf16.msra.mxu0 0
      %1784 = vmatprep.subr.bf16.mxu0 0
      %1785 = vmatpush1.bf16.msra.mxu0 0
      %1786 = vmatprep.subr.bf16.mxu0 0
      %1787 = vmatpush1.bf16.msra.mxu0 0
      %1788 = vmatprep.mubr.bf16.mxu0 0
      %1789 = vmatmul.mubr.bf16.gmra.mrb[0].mxu0 %v1657
      %v1790 = vpop.f32.mrb[0].mxu0
      %v1791 = vadd.f32 0.0, %v1790
      %v1792 = vpop.f32.mrb[0].mxu0
      %v1793 = vpop.f32.mrb[0].mxu0
      %v1794 = vpop.f32.mrb[0].mxu0
      %1795 = vdwg.mxu0
      %v1796 = vadd.f32 %v1631, %v1709
      %v1797 = vadd.f32 %v1632, %v1711
      %v1798 = vadd.f32 %v1633, %v1750
      %v1799 = vadd.f32 %v1634, %v1752
      %v1800 = vadd.f32 %v1635, %v1791
      %s1801 = scalar_lea.vmem %s1, 36
      %v1802 = vld [vmem:[%s1801] sm:$0xf]
      %1803 = vrot.lane.b32.xlu0 %v322, 11
      %v1804 = vpop.permute.xlu0 %1803
      %1805 = vrot.lane.b32.xlu0 %v323, 11
      %v1806 = vpop.permute.xlu0 %1805
      %1807 = vrot.lane.b32.xlu0 %v324, 11
      %v1808 = vpop.permute.xlu0 %1807
      %1809 = vrot.lane.b32.xlu0 %v325, 11
      %v1810 = vpop.permute.xlu0 %1809
      %1811 = vrot.lane.b32.xlu0 %v326, 11
      %v1812 = vpop.permute.xlu0 %1811
      %1813 = vrot.lane.b32.xlu0 %v327, 11
      %v1814 = vpop.permute.xlu0 %1813
      %vm1815 = vcmask 89088
      %v1816 = vsel %vm1815, %v1804, %v1806
      %v1817 = vsel %vm1815, %v1806, %v1808
      %v1818 = vsel %vm1815, %v1808, %v1810
      %v1819 = vsel %vm1815, %v1810, %v1812
      %v1820 = vsel %vm1815, %v1812, %v1814
      %v1822 = vsel %vm346, %v1802, 0
      %v1825 = vsel %vm350, %v1816, 0
      %v1828 = vsel %vm350, %v1817, 0
      %v1831 = vsel %vm350, %v1818, 0
      %v1834 = vsel %vm350, %v1819, 0
      %v1837 = vsel %vm350, %v1820, 0
      %1839 = vmatprep.subr.bf16.mxu0 %v1828
      %1840 = vmatpush1.bf16.msra.mxu0 %v1825
      %1841 = vmatprep.subr.bf16.mxu0 0
      %1842 = vmatpush1.bf16.msra.mxu0 0
      %1843 = vmatprep.subr.bf16.mxu0 0
      %1844 = vmatpush1.bf16.msra.mxu0 0
      %1845 = vmatprep.subr.bf16.mxu0 0
      %1846 = vmatpush1.bf16.msra.mxu0 0
      %1847 = vmatprep.subr.bf16.mxu0 0
      %1848 = vmatpush1.bf16.msra.mxu0 0
      %1849 = vmatprep.subr.bf16.mxu0 0
      %1850 = vmatpush1.bf16.msra.mxu0 0
      %1851 = vmatprep.subr.bf16.mxu0 0
      %1852 = vmatpush1.bf16.msra.mxu0 0
      %1853 = vmatprep.subr.bf16.mxu0 0
      %1854 = vmatpush1.bf16.msra.mxu0 0
      %1855 = vmatprep.subr.bf16.mxu0 0
      %1856 = vmatpush1.bf16.msra.mxu0 0
      %1857 = vmatprep.subr.bf16.mxu0 0
      %1858 = vmatpush1.bf16.msra.mxu0 0
      %1859 = vmatprep.subr.bf16.mxu0 0
      %1860 = vmatpush1.bf16.msra.mxu0 0
      %1861 = vmatprep.subr.bf16.mxu0 0
      %1862 = vmatpush1.bf16.msra.mxu0 0
      %1863 = vmatprep.subr.bf16.mxu0 0
      %1864 = vmatpush1.bf16.msra.mxu0 0
      %1865 = vmatprep.subr.bf16.mxu0 0
      %1866 = vmatpush1.bf16.msra.mxu0 0
      %1867 = vmatprep.subr.bf16.mxu0 0
      %1868 = vmatpush1.bf16.msra.mxu0 0
      %1869 = vmatprep.subr.bf16.mxu0 0
      %1870 = vmatpush1.bf16.msra.mxu0 0
      %1871 = vmatprep.mubr.bf16.mxu0 0
      %1872 = vmatmul.mubr.bf16.gmra.mrb[0].mxu0 %v1822
      %v1873 = vpop.f32.mrb[0].mxu0
      %v1874 = vadd.f32 0.0, %v1873
      %v1875 = vpop.f32.mrb[0].mxu0
      %v1876 = vadd.f32 0.0, %v1875
      %v1877 = vpop.f32.mrb[0].mxu0
      %v1878 = vpop.f32.mrb[0].mxu0
      %1879 = vdwg.mxu0
      %1880 = vmatprep.subr.bf16.mxu0 %v1834
      %1881 = vmatpush1.bf16.msra.mxu0 %v1831
      %1882 = vmatprep.subr.bf16.mxu0 0
      %1883 = vmatpush1.bf16.msra.mxu0 0
      %1884 = vmatprep.subr.bf16.mxu0 0
      %1885 = vmatpush1.bf16.msra.mxu0 0
      %1886 = vmatprep.subr.bf16.mxu0 0
      %1887 = vmatpush1.bf16.msra.mxu0 0
      %1888 = vmatprep.subr.bf16.mxu0 0
      %1889 = vmatpush1.bf16.msra.mxu0 0
      %1890 = vmatprep.subr.bf16.mxu0 0
      %1891 = vmatpush1.bf16.msra.mxu0 0
      %1892 = vmatprep.subr.bf16.mxu0 0
      %1893 = vmatpush1.bf16.msra.mxu0 0
      %1894 = vmatprep.subr.bf16.mxu0 0
      %1895 = vmatpush1.bf16.msra.mxu0 0
      %1896 = vmatprep.subr.bf16.mxu0 0
      %1897 = vmatpush1.bf16.msra.mxu0 0
      %1898 = vmatprep.subr.bf16.mxu0 0
      %1899 = vmatpush1.bf16.msra.mxu0 0
      %1900 = vmatprep.subr.bf16.mxu0 0
      %1901 = vmatpush1.bf16.msra.mxu0 0
      %1902 = vmatprep.subr.bf16.mxu0 0
      %1903 = vmatpush1.bf16.msra.mxu0 0
      %1904 = vmatprep.subr.bf16.mxu0 0
      %1905 = vmatpush1.bf16.msra.mxu0 0
      %1906 = vmatprep.subr.bf16.mxu0 0
      %1907 = vmatpush1.bf16.msra.mxu0 0
      %1908 = vmatprep.subr.bf16.mxu0 0
      %1909 = vmatpush1.bf16.msra.mxu0 0
      %1910 = vmatprep.subr.bf16.mxu0 0
      %1911 = vmatpush1.bf16.msra.mxu0 0
      %1912 = vmatprep.mubr.bf16.mxu0 0
      %1913 = vmatmul.mubr.bf16.gmra.mrb[0].mxu0 %v1822
      %v1914 = vpop.f32.mrb[0].mxu0
      %v1915 = vadd.f32 0.0, %v1914
      %v1916 = vpop.f32.mrb[0].mxu0
      %v1917 = vadd.f32 0.0, %v1916
      %v1918 = vpop.f32.mrb[0].mxu0
      %v1919 = vpop.f32.mrb[0].mxu0
      %1920 = vdwg.mxu0
      %1921 = vmatprep.subr.bf16.mxu0 0
      %1922 = vmatpush1.bf16.msra.mxu0 %v1837
      %1923 = vmatprep.subr.bf16.mxu0 0
      %1924 = vmatpush1.bf16.msra.mxu0 0
      %1925 = vmatprep.subr.bf16.mxu0 0
      %1926 = vmatpush1.bf16.msra.mxu0 0
      %1927 = vmatprep.subr.bf16.mxu0 0
      %1928 = vmatpush1.bf16.msra.mxu0 0
      %1929 = vmatprep.subr.bf16.mxu0 0
      %1930 = vmatpush1.bf16.msra.mxu0 0
      %1931 = vmatprep.subr.bf16.mxu0 0
      %1932 = vmatpush1.bf16.msra.mxu0 0
      %1933 = vmatprep.subr.bf16.mxu0 0
      %1934 = vmatpush1.bf16.msra.mxu0 0
      %1935 = vmatprep.subr.bf16.mxu0 0
      %1936 = vmatpush1.bf16.msra.mxu0 0
      %1937 = vmatprep.subr.bf16.mxu0 0
      %1938 = vmatpush1.bf16.msra.mxu0 0
      %1939 = vmatprep.subr.bf16.mxu0 0
      %1940 = vmatpush1.bf16.msra.mxu0 0
      %1941 = vmatprep.subr.bf16.mxu0 0
      %1942 = vmatpush1.bf16.msra.mxu0 0
      %1943 = vmatprep.subr.bf16.mxu0 0
      %1944 = vmatpush1.bf16.msra.mxu0 0
      %1945 = vmatprep.subr.bf16.mxu0 0
      %1946 = vmatpush1.bf16.msra.mxu0 0
      %1947 = vmatprep.subr.bf16.mxu0 0
      %1948 = vmatpush1.bf16.msra.mxu0 0
      %1949 = vmatprep.subr.bf16.mxu0 0
      %1950 = vmatpush1.bf16.msra.mxu0 0
      %1951 = vmatprep.subr.bf16.mxu0 0
      %1952 = vmatpush1.bf16.msra.mxu0 0
      %1953 = vmatprep.mubr.bf16.mxu0 0
      %1954 = vmatmul.mubr.bf16.gmra.mrb[0].mxu0 %v1822
      %v1955 = vpop.f32.mrb[0].mxu0
      %v1956 = vadd.f32 0.0, %v1955
      %v1957 = vpop.f32.mrb[0].mxu0
      %v1958 = vpop.f32.mrb[0].mxu0
      %v1959 = vpop.f32.mrb[0].mxu0
      %1960 = vdwg.mxu0
      %v1961 = vadd.f32 %v1796, %v1874
      %v1962 = vadd.f32 %v1797, %v1876
      %v1963 = vadd.f32 %v1798, %v1915
      %v1964 = vadd.f32 %v1799, %v1917
      %v1965 = vadd.f32 %v1800, %v1956
      %s1966 = scalar_lea.vmem %s1, 40
      %v1967 = vld [vmem:[%s1966] sm:$0xf]
      %1968 = vrot.lane.b32.xlu0 %v322, 10
      %v1969 = vpop.permute.xlu0 %1968
      %1970 = vrot.lane.b32.xlu0 %v323, 10
      %v1971 = vpop.permute.xlu0 %1970
      %1972 = vrot.lane.b32.xlu0 %v324, 10
      %v1973 = vpop.permute.xlu0 %1972
      %1974 = vrot.lane.b32.xlu0 %v325, 10
      %v1975 = vpop.permute.xlu0 %1974
      %1976 = vrot.lane.b32.xlu0 %v326, 10
      %v1977 = vpop.permute.xlu0 %1976
      %1978 = vrot.lane.b32.xlu0 %v327, 10
      %v1979 = vpop.permute.xlu0 %1978
      %vm1980 = vcmask 80896
      %v1981 = vsel %vm1980, %v1969, %v1971
      %v1982 = vsel %vm1980, %v1971, %v1973
      %v1983 = vsel %vm1980, %v1973, %v1975
      %v1984 = vsel %vm1980, %v1975, %v1977
      %v1985 = vsel %vm1980, %v1977, %v1979
      %v1987 = vsel %vm346, %v1967, 0
      %v1990 = vsel %vm350, %v1981, 0
      %v1993 = vsel %vm350, %v1982, 0
      %v1996 = vsel %vm350, %v1983, 0
      %v1999 = vsel %vm350, %v1984, 0
      %v2002 = vsel %vm350, %v1985, 0
      %2004 = vmatprep.subr.bf16.mxu0 %v1993
      %2005 = vmatpush1.bf16.msra.mxu0 %v1990
      %2006 = vmatprep.subr.bf16.mxu0 0
      %2007 = vmatpush1.bf16.msra.mxu0 0
      %2008 = vmatprep.subr.bf16.mxu0 0
      %2009 = vmatpush1.bf16.msra.mxu0 0
      %2010 = vmatprep.subr.bf16.mxu0 0
      %2011 = vmatpush1.bf16.msra.mxu0 0
      %2012 = vmatprep.subr.bf16.mxu0 0
      %2013 = vmatpush1.bf16.msra.mxu0 0
      %2014 = vmatprep.subr.bf16.mxu0 0
      %2015 = vmatpush1.bf16.msra.mxu0 0
      %2016 = vmatprep.subr.bf16.mxu0 0
      %2017 = vmatpush1.bf16.msra.mxu0 0
      %2018 = vmatprep.subr.bf16.mxu0 0
      %2019 = vmatpush1.bf16.msra.mxu0 0
      %2020 = vmatprep.subr.bf16.mxu0 0
      %2021 = vmatpush1.bf16.msra.mxu0 0
      %2022 = vmatprep.subr.bf16.mxu0 0
      %2023 = vmatpush1.bf16.msra.mxu0 0
      %2024 = vmatprep.subr.bf16.mxu0 0
      %2025 = vmatpush1.bf16.msra.mxu0 0
      %2026 = vmatprep.subr.bf16.mxu0 0
      %2027 = vmatpush1.bf16.msra.mxu0 0
      %2028 = vmatprep.subr.bf16.mxu0 0
      %2029 = vmatpush1.bf16.msra.mxu0 0
      %2030 = vmatprep.subr.bf16.mxu0 0
      %2031 = vmatpush1.bf16.msra.mxu0 0
      %2032 = vmatprep.subr.bf16.mxu0 0
      %2033 = vmatpush1.bf16.msra.mxu0 0
      %2034 = vmatprep.subr.bf16.mxu0 0
      %2035 = vmatpush1.bf16.msra.mxu0 0
      %2036 = vmatprep.mubr.bf16.mxu0 0
      %2037 = vmatmul.mubr.bf16.gmra.mrb[0].mxu0 %v1987
      %v2038 = vpop.f32.mrb[0].mxu0
      %v2039 = vadd.f32 0.0, %v2038
      %v2040 = vpop.f32.mrb[0].mxu0
      %v2041 = vadd.f32 0.0, %v2040
      %v2042 = vpop.f32.mrb[0].mxu0
      %v2043 = vpop.f32.mrb[0].mxu0
      %2044 = vdwg.mxu0
      %2045 = vmatprep.subr.bf16.mxu0 %v1999
      %2046 = vmatpush1.bf16.msra.mxu0 %v1996
      %2047 = vmatprep.subr.bf16.mxu0 0
      %2048 = vmatpush1.bf16.msra.mxu0 0
      %2049 = vmatprep.subr.bf16.mxu0 0
      %2050 = vmatpush1.bf16.msra.mxu0 0
      %2051 = vmatprep.subr.bf16.mxu0 0
      %2052 = vmatpush1.bf16.msra.mxu0 0
      %2053 = vmatprep.subr.bf16.mxu0 0
      %2054 = vmatpush1.bf16.msra.mxu0 0
      %2055 = vmatprep.subr.bf16.mxu0 0
      %2056 = vmatpush1.bf16.msra.mxu0 0
      %2057 = vmatprep.subr.bf16.mxu0 0
      %2058 = vmatpush1.bf16.msra.mxu0 0
      %2059 = vmatprep.subr.bf16.mxu0 0
      %2060 = vmatpush1.bf16.msra.mxu0 0
      %2061 = vmatprep.subr.bf16.mxu0 0
      %2062 = vmatpush1.bf16.msra.mxu0 0
      %2063 = vmatprep.subr.bf16.mxu0 0
      %2064 = vmatpush1.bf16.msra.mxu0 0
      %2065 = vmatprep.subr.bf16.mxu0 0
      %2066 = vmatpush1.bf16.msra.mxu0 0
      %2067 = vmatprep.subr.bf16.mxu0 0
      %2068 = vmatpush1.bf16.msra.mxu0 0
      %2069 = vmatprep.subr.bf16.mxu0 0
      %2070 = vmatpush1.bf16.msra.mxu0 0
      %2071 = vmatprep.subr.bf16.mxu0 0
      %2072 = vmatpush1.bf16.msra.mxu0 0
      %2073 = vmatprep.subr.bf16.mxu0 0
      %2074 = vmatpush1.bf16.msra.mxu0 0
      %2075 = vmatprep.subr.bf16.mxu0 0
      %2076 = vmatpush1.bf16.msra.mxu0 0
      %2077 = vmatprep.mubr.bf16.mxu0 0
      %2078 = vmatmul.mubr.bf16.gmra.mrb[0].mxu0 %v1987
      %v2079 = vpop.f32.mrb[0].mxu0
      %v2080 = vadd.f32 0.0, %v2079
      %v2081 = vpop.f32.mrb[0].mxu0
      %v2082 = vadd.f32 0.0, %v2081
      %v2083 = vpop.f32.mrb[0].mxu0
      %v2084 = vpop.f32.mrb[0].mxu0
      %2085 = vdwg.mxu0
      %2086 = vmatprep.subr.bf16.mxu0 0
      %2087 = vmatpush1.bf16.msra.mxu0 %v2002
      %2088 = vmatprep.subr.bf16.mxu0 0
      %2089 = vmatpush1.bf16.msra.mxu0 0
      %2090 = vmatprep.subr.bf16.mxu0 0
      %2091 = vmatpush1.bf16.msra.mxu0 0
      %2092 = vmatprep.subr.bf16.mxu0 0
      %2093 = vmatpush1.bf16.msra.mxu0 0
      %2094 = vmatprep.subr.bf16.mxu0 0
      %2095 = vmatpush1.bf16.msra.mxu0 0
      %2096 = vmatprep.subr.bf16.mxu0 0
      %2097 = vmatpush1.bf16.msra.mxu0 0
      %2098 = vmatprep.subr.bf16.mxu0 0
      %2099 = vmatpush1.bf16.msra.mxu0 0
      %2100 = vmatprep.subr.bf16.mxu0 0
      %2101 = vmatpush1.bf16.msra.mxu0 0
      %2102 = vmatprep.subr.bf16.mxu0 0
      %2103 = vmatpush1.bf16.msra.mxu0 0
      %2104 = vmatprep.subr.bf16.mxu0 0
      %2105 = vmatpush1.bf16.msra.mxu0 0
      %2106 = vmatprep.subr.bf16.mxu0 0
      %2107 = vmatpush1.bf16.msra.mxu0 0
      %2108 = vmatprep.subr.bf16.mxu0 0
      %2109 = vmatpush1.bf16.msra.mxu0 0
      %2110 = vmatprep.subr.bf16.mxu0 0
      %2111 = vmatpush1.bf16.msra.mxu0 0
      %2112 = vmatprep.subr.bf16.mxu0 0
      %2113 = vmatpush1.bf16.msra.mxu0 0
      %2114 = vmatprep.subr.bf16.mxu0 0
      %2115 = vmatpush1.bf16.msra.mxu0 0
      %2116 = vmatprep.subr.bf16.mxu0 0
      %2117 = vmatpush1.bf16.msra.mxu0 0
      %2118 = vmatprep.mubr.bf16.mxu0 0
      %2119 = vmatmul.mubr.bf16.gmra.mrb[0].mxu0 %v1987
      %v2120 = vpop.f32.mrb[0].mxu0
      %v2121 = vadd.f32 0.0, %v2120
      %v2122 = vpop.f32.mrb[0].mxu0
      %v2123 = vpop.f32.mrb[0].mxu0
      %v2124 = vpop.f32.mrb[0].mxu0
      %2125 = vdwg.mxu0
      %v2126 = vadd.f32 %v1961, %v2039
      %v2127 = vadd.f32 %v1962, %v2041
      %v2128 = vadd.f32 %v1963, %v2080
      %v2129 = vadd.f32 %v1964, %v2082
      %v2130 = vadd.f32 %v1965, %v2121
      %s2131 = scalar_lea.vmem %s1, 44
      %v2132 = vld [vmem:[%s2131] sm:$0xf]
      %2133 = vrot.lane.b32.xlu0 %v322, 9
      %v2134 = vpop.permute.xlu0 %2133
      %2135 = vrot.lane.b32.xlu0 %v323, 9
      %v2136 = vpop.permute.xlu0 %2135
      %2137 = vrot.lane.b32.xlu0 %v324, 9
      %v2138 = vpop.permute.xlu0 %2137
      %2139 = vrot.lane.b32.xlu0 %v325, 9
      %v2140 = vpop.permute.xlu0 %2139
      %2141 = vrot.lane.b32.xlu0 %v326, 9
      %v2142 = vpop.permute.xlu0 %2141
      %2143 = vrot.lane.b32.xlu0 %v327, 9
      %v2144 = vpop.permute.xlu0 %2143
      %vm2145 = vcmask 72704
      %v2146 = vsel %vm2145, %v2134, %v2136
      %v2147 = vsel %vm2145, %v2136, %v2138
      %v2148 = vsel %vm2145, %v2138, %v2140
      %v2149 = vsel %vm2145, %v2140, %v2142
      %v2150 = vsel %vm2145, %v2142, %v2144
      %v2152 = vsel %vm346, %v2132, 0
      %v2155 = vsel %vm350, %v2146, 0
      %v2158 = vsel %vm350, %v2147, 0
      %v2161 = vsel %vm350, %v2148, 0
      %v2164 = vsel %vm350, %v2149, 0
      %v2167 = vsel %vm350, %v2150, 0
      %2169 = vmatprep.subr.bf16.mxu0 %v2158
      %2170 = vmatpush1.bf16.msra.mxu0 %v2155
      %2171 = vmatprep.subr.bf16.mxu0 0
      %2172 = vmatpush1.bf16.msra.mxu0 0
      %2173 = vmatprep.subr.bf16.mxu0 0
      %2174 = vmatpush1.bf16.msra.mxu0 0
      %2175 = vmatprep.subr.bf16.mxu0 0
      %2176 = vmatpush1.bf16.msra.mxu0 0
      %2177 = vmatprep.subr.bf16.mxu0 0
      %2178 = vmatpush1.bf16.msra.mxu0 0
      %2179 = vmatprep.subr.bf16.mxu0 0
      %2180 = vmatpush1.bf16.msra.mxu0 0
      %2181 = vmatprep.subr.bf16.mxu0 0
      %2182 = vmatpush1.bf16.msra.mxu0 0
      %2183 = vmatprep.subr.bf16.mxu0 0
      %2184 = vmatpush1.bf16.msra.mxu0 0
      %2185 = vmatprep.subr.bf16.mxu0 0
      %2186 = vmatpush1.bf16.msra.mxu0 0
      %2187 = vmatprep.subr.bf16.mxu0 0
      %2188 = vmatpush1.bf16.msra.mxu0 0
      %2189 = vmatprep.subr.bf16.mxu0 0
      %2190 = vmatpush1.bf16.msra.mxu0 0
      %2191 = vmatprep.subr.bf16.mxu0 0
      %2192 = vmatpush1.bf16.msra.mxu0 0
      %2193 = vmatprep.subr.bf16.mxu0 0
      %2194 = vmatpush1.bf16.msra.mxu0 0
      %2195 = vmatprep.subr.bf16.mxu0 0
      %2196 = vmatpush1.bf16.msra.mxu0 0
      %2197 = vmatprep.subr.bf16.mxu0 0
      %2198 = vmatpush1.bf16.msra.mxu0 0
      %2199 = vmatprep.subr.bf16.mxu0 0
      %2200 = vmatpush1.bf16.msra.mxu0 0
      %2201 = vmatprep.mubr.bf16.mxu0 0
      %2202 = vmatmul.mubr.bf16.gmra.mrb[0].mxu0 %v2152
      %v2203 = vpop.f32.mrb[0].mxu0
      %v2204 = vadd.f32 0.0, %v2203
      %v2205 = vpop.f32.mrb[0].mxu0
      %v2206 = vadd.f32 0.0, %v2205
      %v2207 = vpop.f32.mrb[0].mxu0
      %v2208 = vpop.f32.mrb[0].mxu0
      %2209 = vdwg.mxu0
      %2210 = vmatprep.subr.bf16.mxu0 %v2164
      %2211 = vmatpush1.bf16.msra.mxu0 %v2161
      %2212 = vmatprep.subr.bf16.mxu0 0
      %2213 = vmatpush1.bf16.msra.mxu0 0
      %2214 = vmatprep.subr.bf16.mxu0 0
      %2215 = vmatpush1.bf16.msra.mxu0 0
      %2216 = vmatprep.subr.bf16.mxu0 0
      %2217 = vmatpush1.bf16.msra.mxu0 0
      %2218 = vmatprep.subr.bf16.mxu0 0
      %2219 = vmatpush1.bf16.msra.mxu0 0
      %2220 = vmatprep.subr.bf16.mxu0 0
      %2221 = vmatpush1.bf16.msra.mxu0 0
      %2222 = vmatprep.subr.bf16.mxu0 0
      %2223 = vmatpush1.bf16.msra.mxu0 0
      %2224 = vmatprep.subr.bf16.mxu0 0
      %2225 = vmatpush1.bf16.msra.mxu0 0
      %2226 = vmatprep.subr.bf16.mxu0 0
      %2227 = vmatpush1.bf16.msra.mxu0 0
      %2228 = vmatprep.subr.bf16.mxu0 0
      %2229 = vmatpush1.bf16.msra.mxu0 0
      %2230 = vmatprep.subr.bf16.mxu0 0
      %2231 = vmatpush1.bf16.msra.mxu0 0
      %2232 = vmatprep.subr.bf16.mxu0 0
      %2233 = vmatpush1.bf16.msra.mxu0 0
      %2234 = vmatprep.subr.bf16.mxu0 0
      %2235 = vmatpush1.bf16.msra.mxu0 0
      %2236 = vmatprep.subr.bf16.mxu0 0
      %2237 = vmatpush1.bf16.msra.mxu0 0
      %2238 = vmatprep.subr.bf16.mxu0 0
      %2239 = vmatpush1.bf16.msra.mxu0 0
      %2240 = vmatprep.subr.bf16.mxu0 0
      %2241 = vmatpush1.bf16.msra.mxu0 0
      %2242 = vmatprep.mubr.bf16.mxu0 0
      %2243 = vmatmul.mubr.bf16.gmra.mrb[0].mxu0 %v2152
      %v2244 = vpop.f32.mrb[0].mxu0
      %v2245 = vadd.f32 0.0, %v2244
      %v2246 = vpop.f32.mrb[0].mxu0
      %v2247 = vadd.f32 0.0, %v2246
      %v2248 = vpop.f32.mrb[0].mxu0
      %v2249 = vpop.f32.mrb[0].mxu0
      %2250 = vdwg.mxu0
      %2251 = vmatprep.subr.bf16.mxu0 0
      %2252 = vmatpush1.bf16.msra.mxu0 %v2167
      %2253 = vmatprep.subr.bf16.mxu0 0
      %2254 = vmatpush1.bf16.msra.mxu0 0
      %2255 = vmatprep.subr.bf16.mxu0 0
      %2256 = vmatpush1.bf16.msra.mxu0 0
      %2257 = vmatprep.subr.bf16.mxu0 0
      %2258 = vmatpush1.bf16.msra.mxu0 0
      %2259 = vmatprep.subr.bf16.mxu0 0
      %2260 = vmatpush1.bf16.msra.mxu0 0
      %2261 = vmatprep.subr.bf16.mxu0 0
      %2262 = vmatpush1.bf16.msra.mxu0 0
      %2263 = vmatprep.subr.bf16.mxu0 0
      %2264 = vmatpush1.bf16.msra.mxu0 0
      %2265 = vmatprep.subr.bf16.mxu0 0
      %2266 = vmatpush1.bf16.msra.mxu0 0
      %2267 = vmatprep.subr.bf16.mxu0 0
      %2268 = vmatpush1.bf16.msra.mxu0 0
      %2269 = vmatprep.subr.bf16.mxu0 0
      %2270 = vmatpush1.bf16.msra.mxu0 0
      %2271 = vmatprep.subr.bf16.mxu0 0
      %2272 = vmatpush1.bf16.msra.mxu0 0
      %2273 = vmatprep.subr.bf16.mxu0 0
      %2274 = vmatpush1.bf16.msra.mxu0 0
      %2275 = vmatprep.subr.bf16.mxu0 0
      %2276 = vmatpush1.bf16.msra.mxu0 0
      %2277 = vmatprep.subr.bf16.mxu0 0
      %2278 = vmatpush1.bf16.msra.mxu0 0
      %2279 = vmatprep.subr.bf16.mxu0 0
      %2280 = vmatpush1.bf16.msra.mxu0 0
      %2281 = vmatprep.subr.bf16.mxu0 0
      %2282 = vmatpush1.bf16.msra.mxu0 0
      %2283 = vmatprep.mubr.bf16.mxu0 0
      %2284 = vmatmul.mubr.bf16.gmra.mrb[0].mxu0 %v2152
      %v2285 = vpop.f32.mrb[0].mxu0
      %v2286 = vadd.f32 0.0, %v2285
      %v2287 = vpop.f32.mrb[0].mxu0
      %v2288 = vpop.f32.mrb[0].mxu0
      %v2289 = vpop.f32.mrb[0].mxu0
      %2290 = vdwg.mxu0
      %v2291 = vadd.f32 %v2126, %v2204
      %v2292 = vadd.f32 %v2127, %v2206
      %v2293 = vadd.f32 %v2128, %v2245
      %v2294 = vadd.f32 %v2129, %v2247
      %v2295 = vadd.f32 %v2130, %v2286
      %s2296 = scalar_lea.vmem %s1, 48
      %v2297 = vld [vmem:[%s2296] sm:$0xf]
      %2298 = vrot.lane.b32.xlu0 %v322, 1
      %v2299 = vpop.permute.xlu0 %2298
      %2300 = vrot.lane.b32.xlu0 %v323, 1
      %v2301 = vpop.permute.xlu0 %2300
      %2302 = vrot.lane.b32.xlu0 %v324, 1
      %v2303 = vpop.permute.xlu0 %2302
      %2304 = vrot.lane.b32.xlu0 %v325, 1
      %v2305 = vpop.permute.xlu0 %2304
      %2306 = vrot.lane.b32.xlu0 %v326, 1
      %v2307 = vpop.permute.xlu0 %2306
      %2308 = vrot.lane.b32.xlu0 %v327, 1
      %v2309 = vpop.permute.xlu0 %2308
      %vm2310 = vcmask 7168
      %v2311 = vsel %vm2310, %v2299, %v2301
      %v2312 = vsel %vm2310, %v2301, %v2303
      %v2313 = vsel %vm2310, %v2303, %v2305
      %v2314 = vsel %vm2310, %v2305, %v2307
      %v2315 = vsel %vm2310, %v2307, %v2309
      %v2317 = vsel %vm346, %v2297, 0
      %v2320 = vsel %vm350, %v2311, 0
      %v2323 = vsel %vm350, %v2312, 0
      %v2326 = vsel %vm350, %v2313, 0
      %v2329 = vsel %vm350, %v2314, 0
      %v2332 = vsel %vm350, %v2315, 0
      %2334 = vmatprep.subr.bf16.mxu0 %v2323
      %2335 = vmatpush1.bf16.msra.mxu0 %v2320
      %2336 = vmatprep.subr.bf16.mxu0 0
      %2337 = vmatpush1.bf16.msra.mxu0 0
      %2338 = vmatprep.subr.bf16.mxu0 0
      %2339 = vmatpush1.bf16.msra.mxu0 0
      %2340 = vmatprep.subr.bf16.mxu0 0
      %2341 = vmatpush1.bf16.msra.mxu0 0
      %2342 = vmatprep.subr.bf16.mxu0 0
      %2343 = vmatpush1.bf16.msra.mxu0 0
      %2344 = vmatprep.subr.bf16.mxu0 0
      %2345 = vmatpush1.bf16.msra.mxu0 0
      %2346 = vmatprep.subr.bf16.mxu0 0
      %2347 = vmatpush1.bf16.msra.mxu0 0
      %2348 = vmatprep.subr.bf16.mxu0 0
      %2349 = vmatpush1.bf16.msra.mxu0 0
      %2350 = vmatprep.subr.bf16.mxu0 0
      %2351 = vmatpush1.bf16.msra.mxu0 0
      %2352 = vmatprep.subr.bf16.mxu0 0
      %2353 = vmatpush1.bf16.msra.mxu0 0
      %2354 = vmatprep.subr.bf16.mxu0 0
      %2355 = vmatpush1.bf16.msra.mxu0 0
      %2356 = vmatprep.subr.bf16.mxu0 0
      %2357 = vmatpush1.bf16.msra.mxu0 0
      %2358 = vmatprep.subr.bf16.mxu0 0
      %2359 = vmatpush1.bf16.msra.mxu0 0
      %2360 = vmatprep.subr.bf16.mxu0 0
      %2361 = vmatpush1.bf16.msra.mxu0 0
      %2362 = vmatprep.subr.bf16.mxu0 0
      %2363 = vmatpush1.bf16.msra.mxu0 0
      %2364 = vmatprep.subr.bf16.mxu0 0
      %2365 = vmatpush1.bf16.msra.mxu0 0
      %2366 = vmatprep.mubr.bf16.mxu0 0
      %2367 = vmatmul.mubr.bf16.gmra.mrb[0].mxu0 %v2317
      %v2368 = vpop.f32.mrb[0].mxu0
      %v2369 = vadd.f32 0.0, %v2368
      %v2370 = vpop.f32.mrb[0].mxu0
      %v2371 = vadd.f32 0.0, %v2370
      %v2372 = vpop.f32.mrb[0].mxu0
      %v2373 = vpop.f32.mrb[0].mxu0
      %2374 = vdwg.mxu0
      %2375 = vmatprep.subr.bf16.mxu0 %v2329
      %2376 = vmatpush1.bf16.msra.mxu0 %v2326
      %2377 = vmatprep.subr.bf16.mxu0 0
      %2378 = vmatpush1.bf16.msra.mxu0 0
      %2379 = vmatprep.subr.bf16.mxu0 0
      %2380 = vmatpush1.bf16.msra.mxu0 0
      %2381 = vmatprep.subr.bf16.mxu0 0
      %2382 = vmatpush1.bf16.msra.mxu0 0
      %2383 = vmatprep.subr.bf16.mxu0 0
      %2384 = vmatpush1.bf16.msra.mxu0 0
      %2385 = vmatprep.subr.bf16.mxu0 0
      %2386 = vmatpush1.bf16.msra.mxu0 0
      %2387 = vmatprep.subr.bf16.mxu0 0
      %2388 = vmatpush1.bf16.msra.mxu0 0
      %2389 = vmatprep.subr.bf16.mxu0 0
      %2390 = vmatpush1.bf16.msra.mxu0 0
      %2391 = vmatprep.subr.bf16.mxu0 0
      %2392 = vmatpush1.bf16.msra.mxu0 0
      %2393 = vmatprep.subr.bf16.mxu0 0
      %2394 = vmatpush1.bf16.msra.mxu0 0
      %2395 = vmatprep.subr.bf16.mxu0 0
      %2396 = vmatpush1.bf16.msra.mxu0 0
      %2397 = vmatprep.subr.bf16.mxu0 0
      %2398 = vmatpush1.bf16.msra.mxu0 0
      %2399 = vmatprep.subr.bf16.mxu0 0
      %2400 = vmatpush1.bf16.msra.mxu0 0
      %2401 = vmatprep.subr.bf16.mxu0 0
      %2402 = vmatpush1.bf16.msra.mxu0 0
      %2403 = vmatprep.subr.bf16.mxu0 0
      %2404 = vmatpush1.bf16.msra.mxu0 0
      %2405 = vmatprep.subr.bf16.mxu0 0
      %2406 = vmatpush1.bf16.msra.mxu0 0
      %2407 = vmatprep.mubr.bf16.mxu0 0
      %2408 = vmatmul.mubr.bf16.gmra.mrb[0].mxu0 %v2317
      %v2409 = vpop.f32.mrb[0].mxu0
      %v2410 = vadd.f32 0.0, %v2409
      %v2411 = vpop.f32.mrb[0].mxu0
      %v2412 = vadd.f32 0.0, %v2411
      %v2413 = vpop.f32.mrb[0].mxu0
      %v2414 = vpop.f32.mrb[0].mxu0
      %2415 = vdwg.mxu0
      %2416 = vmatprep.subr.bf16.mxu0 0
      %2417 = vmatpush1.bf16.msra.mxu0 %v2332
      %2418 = vmatprep.subr.bf16.mxu0 0
      %2419 = vmatpush1.bf16.msra.mxu0 0
      %2420 = vmatprep.subr.bf16.mxu0 0
      %2421 = vmatpush1.bf16.msra.mxu0 0
      %2422 = vmatprep.subr.bf16.mxu0 0
      %2423 = vmatpush1.bf16.msra.mxu0 0
      %2424 = vmatprep.subr.bf16.mxu0 0
      %2425 = vmatpush1.bf16.msra.mxu0 0
      %2426 = vmatprep.subr.bf16.mxu0 0
      %2427 = vmatpush1.bf16.msra.mxu0 0
      %2428 = vmatprep.subr.bf16.mxu0 0
      %2429 = vmatpush1.bf16.msra.mxu0 0
      %2430 = vmatprep.subr.bf16.mxu0 0
      %2431 = vmatpush1.bf16.msra.mxu0 0
      %2432 = vmatprep.subr.bf16.mxu0 0
      %2433 = vmatpush1.bf16.msra.mxu0 0
      %2434 = vmatprep.subr.bf16.mxu0 0
      %2435 = vmatpush1.bf16.msra.mxu0 0
      %2436 = vmatprep.subr.bf16.mxu0 0
      %2437 = vmatpush1.bf16.msra.mxu0 0
      %2438 = vmatprep.subr.bf16.mxu0 0
      %2439 = vmatpush1.bf16.msra.mxu0 0
      %2440 = vmatprep.subr.bf16.mxu0 0
      %2441 = vmatpush1.bf16.msra.mxu0 0
      %2442 = vmatprep.subr.bf16.mxu0 0
      %2443 = vmatpush1.bf16.msra.mxu0 0
      %2444 = vmatprep.subr.bf16.mxu0 0
      %2445 = vmatpush1.bf16.msra.mxu0 0
      %2446 = vmatprep.subr.bf16.mxu0 0
      %2447 = vmatpush1.bf16.msra.mxu0 0
      %2448 = vmatprep.mubr.bf16.mxu0 0
      %2449 = vmatmul.mubr.bf16.gmra.mrb[0].mxu0 %v2317
      %v2450 = vpop.f32.mrb[0].mxu0
      %v2451 = vadd.f32 0.0, %v2450
      %v2452 = vpop.f32.mrb[0].mxu0
      %v2453 = vpop.f32.mrb[0].mxu0
      %v2454 = vpop.f32.mrb[0].mxu0
      %2455 = vdwg.mxu0
      %v2456 = vadd.f32 %v2291, %v2369
      %v2457 = vadd.f32 %v2292, %v2371
      %v2458 = vadd.f32 %v2293, %v2410
      %v2459 = vadd.f32 %v2294, %v2412
      %v2460 = vadd.f32 %v2295, %v2451
      %s2461 = scalar_lea.vmem %s1, 52
      %v2462 = vld [vmem:[%s2461] sm:$0xf]
      %v2463 = vld [vmem:[%s300 + $0x4] sm:$0xff]
      %v2464 = vld [vmem:[%s300 + $0xc] sm:$0xff]
      %v2465 = vld [vmem:[%s300 + $0x14] sm:$0xf]
      %v2469 = vunpack.c.l.b16 %v2463
      %v2470 = vunpack.c.h.b16 %v2463
      %v2471 = vunpack.c.l.b16 %v2464
      %v2472 = vunpack.c.h.b16 %v2464
      %v2473 = vunpack.c.l.b16 %v2465
      %v2474 = vpack.c.b16 %v2469, %v2469
      %v2475 = vpack.c.b16 %v2470, %v2470
      %v2476 = vpack.c.b16 %v2471, %v2471
      %v2477 = vpack.c.b16 %v2472, %v2472
      %v2478 = vpack.c.b16 %v2473, %v2473
      %v2480 = vsel %vm346, %v2462, 0
      %v2483 = vsel %vm350, %v2474, 0
      %v2486 = vsel %vm350, %v2475, 0
      %v2489 = vsel %vm350, %v2476, 0
      %v2492 = vsel %vm350, %v2477, 0
      %v2495 = vsel %vm350, %v2478, 0
      %2497 = vmatprep.subr.bf16.mxu0 %v2486
      %2498 = vmatpush1.bf16.msra.mxu0 %v2483
      %2499 = vmatprep.subr.bf16.mxu0 0
      %2500 = vmatpush1.bf16.msra.mxu0 0
      %2501 = vmatprep.subr.bf16.mxu0 0
      %2502 = vmatpush1.bf16.msra.mxu0 0
      %2503 = vmatprep.subr.bf16.mxu0 0
      %2504 = vmatpush1.bf16.msra.mxu0 0
      %2505 = vmatprep.subr.bf16.mxu0 0
      %2506 = vmatpush1.bf16.msra.mxu0 0
      %2507 = vmatprep.subr.bf16.mxu0 0
      %2508 = vmatpush1.bf16.msra.mxu0 0
      %2509 = vmatprep.subr.bf16.mxu0 0
      %2510 = vmatpush1.bf16.msra.mxu0 0
      %2511 = vmatprep.subr.bf16.mxu0 0
      %2512 = vmatpush1.bf16.msra.mxu0 0
      %2513 = vmatprep.subr.bf16.mxu0 0
      %2514 = vmatpush1.bf16.msra.mxu0 0
      %2515 = vmatprep.subr.bf16.mxu0 0
      %2516 = vmatpush1.bf16.msra.mxu0 0
      %2517 = vmatprep.subr.bf16.mxu0 0
      %2518 = vmatpush1.bf16.msra.mxu0 0
      %2519 = vmatprep.subr.bf16.mxu0 0
      %2520 = vmatpush1.bf16.msra.mxu0 0
      %2521 = vmatprep.subr.bf16.mxu0 0
      %2522 = vmatpush1.bf16.msra.mxu0 0
      %2523 = vmatprep.subr.bf16.mxu0 0
      %2524 = vmatpush1.bf16.msra.mxu0 0
      %2525 = vmatprep.subr.bf16.mxu0 0
      %2526 = vmatpush1.bf16.msra.mxu0 0
      %2527 = vmatprep.subr.bf16.mxu0 0
      %2528 = vmatpush1.bf16.msra.mxu0 0
      %2529 = vmatprep.mubr.bf16.mxu0 0
      %2530 = vmatmul.mubr.bf16.gmra.mrb[0].mxu0 %v2480
      %v2531 = vpop.f32.mrb[0].mxu0
      %v2532 = vadd.f32 0.0, %v2531
      %v2533 = vpop.f32.mrb[0].mxu0
      %v2534 = vadd.f32 0.0, %v2533
      %v2535 = vpop.f32.mrb[0].mxu0
      %v2536 = vpop.f32.mrb[0].mxu0
      %2537 = vdwg.mxu0
      %2538 = vmatprep.subr.bf16.mxu0 %v2492
      %2539 = vmatpush1.bf16.msra.mxu0 %v2489
      %2540 = vmatprep.subr.bf16.mxu0 0
      %2541 = vmatpush1.bf16.msra.mxu0 0
      %2542 = vmatprep.subr.bf16.mxu0 0
      %2543 = vmatpush1.bf16.msra.mxu0 0
      %2544 = vmatprep.subr.bf16.mxu0 0
      %2545 = vmatpush1.bf16.msra.mxu0 0
      %2546 = vmatprep.subr.bf16.mxu0 0
      %2547 = vmatpush1.bf16.msra.mxu0 0
      %2548 = vmatprep.subr.bf16.mxu0 0
      %2549 = vmatpush1.bf16.msra.mxu0 0
      %2550 = vmatprep.subr.bf16.mxu0 0
      %2551 = vmatpush1.bf16.msra.mxu0 0
      %2552 = vmatprep.subr.bf16.mxu0 0
      %2553 = vmatpush1.bf16.msra.mxu0 0
      %2554 = vmatprep.subr.bf16.mxu0 0
      %2555 = vmatpush1.bf16.msra.mxu0 0
      %2556 = vmatprep.subr.bf16.mxu0 0
      %2557 = vmatpush1.bf16.msra.mxu0 0
      %2558 = vmatprep.subr.bf16.mxu0 0
      %2559 = vmatpush1.bf16.msra.mxu0 0
      %2560 = vmatprep.subr.bf16.mxu0 0
      %2561 = vmatpush1.bf16.msra.mxu0 0
      %2562 = vmatprep.subr.bf16.mxu0 0
      %2563 = vmatpush1.bf16.msra.mxu0 0
      %2564 = vmatprep.subr.bf16.mxu0 0
      %2565 = vmatpush1.bf16.msra.mxu0 0
      %2566 = vmatprep.subr.bf16.mxu0 0
      %2567 = vmatpush1.bf16.msra.mxu0 0
      %2568 = vmatprep.subr.bf16.mxu0 0
      %2569 = vmatpush1.bf16.msra.mxu0 0
      %2570 = vmatprep.mubr.bf16.mxu0 0
      %2571 = vmatmul.mubr.bf16.gmra.mrb[0].mxu0 %v2480
      %v2572 = vpop.f32.mrb[0].mxu0
      %v2573 = vadd.f32 0.0, %v2572
      %v2574 = vpop.f32.mrb[0].mxu0
      %v2575 = vadd.f32 0.0, %v2574
      %v2576 = vpop.f32.mrb[0].mxu0
      %v2577 = vpop.f32.mrb[0].mxu0
      %2578 = vdwg.mxu0
      %2579 = vmatprep.subr.bf16.mxu0 0
      %2580 = vmatpush1.bf16.msra.mxu0 %v2495
      %2581 = vmatprep.subr.bf16.mxu0 0
      %2582 = vmatpush1.bf16.msra.mxu0 0
      %2583 = vmatprep.subr.bf16.mxu0 0
      %2584 = vmatpush1.bf16.msra.mxu0 0
      %2585 = vmatprep.subr.bf16.mxu0 0
      %2586 = vmatpush1.bf16.msra.mxu0 0
      %2587 = vmatprep.subr.bf16.mxu0 0
      %2588 = vmatpush1.bf16.msra.mxu0 0
      %2589 = vmatprep.subr.bf16.mxu0 0
      %2590 = vmatpush1.bf16.msra.mxu0 0
      %2591 = vmatprep.subr.bf16.mxu0 0
      %2592 = vmatpush1.bf16.msra.mxu0 0
      %2593 = vmatprep.subr.bf16.mxu0 0
      %2594 = vmatpush1.bf16.msra.mxu0 0
      %2595 = vmatprep.subr.bf16.mxu0 0
      %2596 = vmatpush1.bf16.msra.mxu0 0
      %2597 = vmatprep.subr.bf16.mxu0 0
      %2598 = vmatpush1.bf16.msra.mxu0 0
      %2599 = vmatprep.subr.bf16.mxu0 0
      %2600 = vmatpush1.bf16.msra.mxu0 0
      %2601 = vmatprep.subr.bf16.mxu0 0
      %2602 = vmatpush1.bf16.msra.mxu0 0
      %2603 = vmatprep.subr.bf16.mxu0 0
      %2604 = vmatpush1.bf16.msra.mxu0 0
      %2605 = vmatprep.subr.bf16.mxu0 0
      %2606 = vmatpush1.bf16.msra.mxu0 0
      %2607 = vmatprep.subr.bf16.mxu0 0
      %2608 = vmatpush1.bf16.msra.mxu0 0
      %2609 = vmatprep.subr.bf16.mxu0 0
      %2610 = vmatpush1.bf16.msra.mxu0 0
      %2611 = vmatprep.mubr.bf16.mxu0 0
      %2612 = vmatmul.mubr.bf16.gmra.mrb[0].mxu0 %v2480
      %v2613 = vpop.f32.mrb[0].mxu0
      %v2614 = vadd.f32 0.0, %v2613
      %v2615 = vpop.f32.mrb[0].mxu0
      %v2616 = vpop.f32.mrb[0].mxu0
      %v2617 = vpop.f32.mrb[0].mxu0
      %2618 = vdwg.mxu0
      %v2619 = vadd.f32 %v2456, %v2532
      %v2620 = vadd.f32 %v2457, %v2534
      %v2621 = vadd.f32 %v2458, %v2573
      %v2622 = vadd.f32 %v2459, %v2575
      %v2623 = vadd.f32 %v2460, %v2614
      %s2624 = scalar_lea.vmem %s1, 56
      %v2625 = vld [vmem:[%s2624] sm:$0xf]
      %v2626 = vld [vmem:[%s300 + $0x4] sm:$0xff]
      %v2627 = vld [vmem:[%s300 + $0xc] sm:$0xff]
      %v2628 = vld [vmem:[%s300 + $0x14] sm:$0xff]
      %v2632 = vunpack.c.l.b16 %v2626
      %v2633 = vunpack.c.h.b16 %v2626
      %v2634 = vunpack.c.l.b16 %v2627
      %v2635 = vunpack.c.h.b16 %v2627
      %v2636 = vunpack.c.l.b16 %v2628
      %v2637 = vunpack.c.h.b16 %v2628
      %v2638 = vpack.c.b16 %v2632, %v2632
      %v2639 = vpack.c.b16 %v2633, %v2633
      %v2640 = vpack.c.b16 %v2634, %v2634
      %v2641 = vpack.c.b16 %v2635, %v2635
      %v2642 = vpack.c.b16 %v2636, %v2636
      %v2643 = vpack.c.b16 %v2637, %v2637
      %2644 = vrot.lane.b32.xlu0 %v2638, 127
      %v2645 = vpop.permute.xlu0 %2644
      %2646 = vrot.lane.b32.xlu0 %v2639, 127
      %v2647 = vpop.permute.xlu0 %2646
      %2648 = vrot.lane.b32.xlu0 %v2640, 127
      %v2649 = vpop.permute.xlu0 %2648
      %2650 = vrot.lane.b32.xlu0 %v2641, 127
      %v2651 = vpop.permute.xlu0 %2650
      %2652 = vrot.lane.b32.xlu0 %v2642, 127
      %v2653 = vpop.permute.xlu0 %2652
      %2654 = vrot.lane.b32.xlu0 %v2643, 127
      %v2655 = vpop.permute.xlu0 %2654
      %vm2656 = vcmask 1039360
      %v2657 = vsel %vm2656, %v2645, %v2647
      %v2658 = vsel %vm2656, %v2647, %v2649
      %v2659 = vsel %vm2656, %v2649, %v2651
      %v2660 = vsel %vm2656, %v2651, %v2653
      %v2661 = vsel %vm2656, %v2653, %v2655
      %v2663 = vsel %vm346, %v2625, 0
      %v2666 = vsel %vm350, %v2657, 0
      %v2669 = vsel %vm350, %v2658, 0
      %v2672 = vsel %vm350, %v2659, 0
      %v2675 = vsel %vm350, %v2660, 0
      %v2678 = vsel %vm350, %v2661, 0
      %2680 = vmatprep.subr.bf16.mxu0 %v2669
      %2681 = vmatpush1.bf16.msra.mxu0 %v2666
      %2682 = vmatprep.subr.bf16.mxu0 0
      %2683 = vmatpush1.bf16.msra.mxu0 0
      %2684 = vmatprep.subr.bf16.mxu0 0
      %2685 = vmatpush1.bf16.msra.mxu0 0
      %2686 = vmatprep.subr.bf16.mxu0 0
      %2687 = vmatpush1.bf16.msra.mxu0 0
      %2688 = vmatprep.subr.bf16.mxu0 0
      %2689 = vmatpush1.bf16.msra.mxu0 0
      %2690 = vmatprep.subr.bf16.mxu0 0
      %2691 = vmatpush1.bf16.msra.mxu0 0
      %2692 = vmatprep.subr.bf16.mxu0 0
      %2693 = vmatpush1.bf16.msra.mxu0 0
      %2694 = vmatprep.subr.bf16.mxu0 0
      %2695 = vmatpush1.bf16.msra.mxu0 0
      %2696 = vmatprep.subr.bf16.mxu0 0
      %2697 = vmatpush1.bf16.msra.mxu0 0
      %2698 = vmatprep.subr.bf16.mxu0 0
      %2699 = vmatpush1.bf16.msra.mxu0 0
      %2700 = vmatprep.subr.bf16.mxu0 0
      %2701 = vmatpush1.bf16.msra.mxu0 0
      %2702 = vmatprep.subr.bf16.mxu0 0
      %2703 = vmatpush1.bf16.msra.mxu0 0
      %2704 = vmatprep.subr.bf16.mxu0 0
      %2705 = vmatpush1.bf16.msra.mxu0 0
      %2706 = vmatprep.subr.bf16.mxu0 0
      %2707 = vmatpush1.bf16.msra.mxu0 0
      %2708 = vmatprep.subr.bf16.mxu0 0
      %2709 = vmatpush1.bf16.msra.mxu0 0
      %2710 = vmatprep.subr.bf16.mxu0 0
      %2711 = vmatpush1.bf16.msra.mxu0 0
      %2712 = vmatprep.mubr.bf16.mxu0 0
      %2713 = vmatmul.mubr.bf16.gmra.mrb[0].mxu0 %v2663
      %v2714 = vpop.f32.mrb[0].mxu0
      %v2715 = vadd.f32 0.0, %v2714
      %v2716 = vpop.f32.mrb[0].mxu0
      %v2717 = vadd.f32 0.0, %v2716
      %v2718 = vpop.f32.mrb[0].mxu0
      %v2719 = vpop.f32.mrb[0].mxu0
      %2720 = vdwg.mxu0
      %2721 = vmatprep.subr.bf16.mxu0 %v2675
      %2722 = vmatpush1.bf16.msra.mxu0 %v2672
      %2723 = vmatprep.subr.bf16.mxu0 0
      %2724 = vmatpush1.bf16.msra.mxu0 0
      %2725 = vmatprep.subr.bf16.mxu0 0
      %2726 = vmatpush1.bf16.msra.mxu0 0
      %2727 = vmatprep.subr.bf16.mxu0 0
      %2728 = vmatpush1.bf16.msra.mxu0 0
      %2729 = vmatprep.subr.bf16.mxu0 0
      %2730 = vmatpush1.bf16.msra.mxu0 0
      %2731 = vmatprep.subr.bf16.mxu0 0
      %2732 = vmatpush1.bf16.msra.mxu0 0
      %2733 = vmatprep.subr.bf16.mxu0 0
      %2734 = vmatpush1.bf16.msra.mxu0 0
      %2735 = vmatprep.subr.bf16.mxu0 0
      %2736 = vmatpush1.bf16.msra.mxu0 0
      %2737 = vmatprep.subr.bf16.mxu0 0
      %2738 = vmatpush1.bf16.msra.mxu0 0
      %2739 = vmatprep.subr.bf16.mxu0 0
      %2740 = vmatpush1.bf16.msra.mxu0 0
      %2741 = vmatprep.subr.bf16.mxu0 0
      %2742 = vmatpush1.bf16.msra.mxu0 0
      %2743 = vmatprep.subr.bf16.mxu0 0
      %2744 = vmatpush1.bf16.msra.mxu0 0
      %2745 = vmatprep.subr.bf16.mxu0 0
      %2746 = vmatpush1.bf16.msra.mxu0 0
      %2747 = vmatprep.subr.bf16.mxu0 0
      %2748 = vmatpush1.bf16.msra.mxu0 0
      %2749 = vmatprep.subr.bf16.mxu0 0
      %2750 = vmatpush1.bf16.msra.mxu0 0
      %2751 = vmatprep.subr.bf16.mxu0 0
      %2752 = vmatpush1.bf16.msra.mxu0 0
      %2753 = vmatprep.mubr.bf16.mxu0 0
      %2754 = vmatmul.mubr.bf16.gmra.mrb[0].mxu0 %v2663
      %v2755 = vpop.f32.mrb[0].mxu0
      %v2756 = vadd.f32 0.0, %v2755
      %v2757 = vpop.f32.mrb[0].mxu0
      %v2758 = vadd.f32 0.0, %v2757
      %v2759 = vpop.f32.mrb[0].mxu0
      %v2760 = vpop.f32.mrb[0].mxu0
      %2761 = vdwg.mxu0
      %2762 = vmatprep.subr.bf16.mxu0 0
      %2763 = vmatpush1.bf16.msra.mxu0 %v2678
      %2764 = vmatprep.subr.bf16.mxu0 0
      %2765 = vmatpush1.bf16.msra.mxu0 0
      %2766 = vmatprep.subr.bf16.mxu0 0
      %2767 = vmatpush1.bf16.msra.mxu0 0
      %2768 = vmatprep.subr.bf16.mxu0 0
      %2769 = vmatpush1.bf16.msra.mxu0 0
      %2770 = vmatprep.subr.bf16.mxu0 0
      %2771 = vmatpush1.bf16.msra.mxu0 0
      %2772 = vmatprep.subr.bf16.mxu0 0
      %2773 = vmatpush1.bf16.msra.mxu0 0
      %2774 = vmatprep.subr.bf16.mxu0 0
      %2775 = vmatpush1.bf16.msra.mxu0 0
      %2776 = vmatprep.subr.bf16.mxu0 0
      %2777 = vmatpush1.bf16.msra.mxu0 0
      %2778 = vmatprep.subr.bf16.mxu0 0
      %2779 = vmatpush1.bf16.msra.mxu0 0
      %2780 = vmatprep.subr.bf16.mxu0 0
      %2781 = vmatpush1.bf16.msra.mxu0 0
      %2782 = vmatprep.subr.bf16.mxu0 0
      %2783 = vmatpush1.bf16.msra.mxu0 0
      %2784 = vmatprep.subr.bf16.mxu0 0
      %2785 = vmatpush1.bf16.msra.mxu0 0
      %2786 = vmatprep.subr.bf16.mxu0 0
      %2787 = vmatpush1.bf16.msra.mxu0 0
      %2788 = vmatprep.subr.bf16.mxu0 0
      %2789 = vmatpush1.bf16.msra.mxu0 0
      %2790 = vmatprep.subr.bf16.mxu0 0
      %2791 = vmatpush1.bf16.msra.mxu0 0
      %2792 = vmatprep.subr.bf16.mxu0 0
      %2793 = vmatpush1.bf16.msra.mxu0 0
      %2794 = vmatprep.mubr.bf16.mxu0 0
      %2795 = vmatmul.mubr.bf16.gmra.mrb[0].mxu0 %v2663
      %v2796 = vpop.f32.mrb[0].mxu0
      %v2797 = vadd.f32 0.0, %v2796
      %v2798 = vpop.f32.mrb[0].mxu0
      %v2799 = vpop.f32.mrb[0].mxu0
      %v2800 = vpop.f32.mrb[0].mxu0
      %2801 = vdwg.mxu0
      %v2802 = vadd.f32 %v2619, %v2715
      %v2803 = vadd.f32 %v2620, %v2717
      %v2804 = vadd.f32 %v2621, %v2756
      %v2805 = vadd.f32 %v2622, %v2758
      %v2806 = vadd.f32 %v2623, %v2797
      %s2807 = scalar_lea.vmem %s1, 60
      %v2808 = vld [vmem:[%s2807] sm:$0xf]
      %2809 = vrot.lane.b32.xlu0 %v2638, 119
      %v2810 = vpop.permute.xlu0 %2809
      %2811 = vrot.lane.b32.xlu0 %v2639, 119
      %v2812 = vpop.permute.xlu0 %2811
      %2813 = vrot.lane.b32.xlu0 %v2640, 119
      %v2814 = vpop.permute.xlu0 %2813
      %2815 = vrot.lane.b32.xlu0 %v2641, 119
      %v2816 = vpop.permute.xlu0 %2815
      %2817 = vrot.lane.b32.xlu0 %v2642, 119
      %v2818 = vpop.permute.xlu0 %2817
      %2819 = vrot.lane.b32.xlu0 %v2643, 119
      %v2820 = vpop.permute.xlu0 %2819
      %vm2821 = vcmask 973824
      %v2822 = vsel %vm2821, %v2810, %v2812
      %v2823 = vsel %vm2821, %v2812, %v2814
      %v2824 = vsel %vm2821, %v2814, %v2816
      %v2825 = vsel %vm2821, %v2816, %v2818
      %v2826 = vsel %vm2821, %v2818, %v2820
      %v2828 = vsel %vm346, %v2808, 0
      %v2831 = vsel %vm350, %v2822, 0
      %v2834 = vsel %vm350, %v2823, 0
      %v2837 = vsel %vm350, %v2824, 0
      %v2840 = vsel %vm350, %v2825, 0
      %v2843 = vsel %vm350, %v2826, 0
      %2845 = vmatprep.subr.bf16.mxu0 %v2834
      %2846 = vmatpush1.bf16.msra.mxu0 %v2831
      %2847 = vmatprep.subr.bf16.mxu0 0
      %2848 = vmatpush1.bf16.msra.mxu0 0
      %2849 = vmatprep.subr.bf16.mxu0 0
      %2850 = vmatpush1.bf16.msra.mxu0 0
      %2851 = vmatprep.subr.bf16.mxu0 0
      %2852 = vmatpush1.bf16.msra.mxu0 0
      %2853 = vmatprep.subr.bf16.mxu0 0
      %2854 = vmatpush1.bf16.msra.mxu0 0
      %2855 = vmatprep.subr.bf16.mxu0 0
      %2856 = vmatpush1.bf16.msra.mxu0 0
      %2857 = vmatprep.subr.bf16.mxu0 0
      %2858 = vmatpush1.bf16.msra.mxu0 0
      %2859 = vmatprep.subr.bf16.mxu0 0
      %2860 = vmatpush1.bf16.msra.mxu0 0
      %2861 = vmatprep.subr.bf16.mxu0 0
      %2862 = vmatpush1.bf16.msra.mxu0 0
      %2863 = vmatprep.subr.bf16.mxu0 0
      %2864 = vmatpush1.bf16.msra.mxu0 0
      %2865 = vmatprep.subr.bf16.mxu0 0
      %2866 = vmatpush1.bf16.msra.mxu0 0
      %2867 = vmatprep.subr.bf16.mxu0 0
      %2868 = vmatpush1.bf16.msra.mxu0 0
      %2869 = vmatprep.subr.bf16.mxu0 0
      %2870 = vmatpush1.bf16.msra.mxu0 0
      %2871 = vmatprep.subr.bf16.mxu0 0
      %2872 = vmatpush1.bf16.msra.mxu0 0
      %2873 = vmatprep.subr.bf16.mxu0 0
      %2874 = vmatpush1.bf16.msra.mxu0 0
      %2875 = vmatprep.subr.bf16.mxu0 0
      %2876 = vmatpush1.bf16.msra.mxu0 0
      %2877 = vmatprep.mubr.bf16.mxu0 0
      %2878 = vmatmul.mubr.bf16.gmra.mrb[0].mxu0 %v2828
      %v2879 = vpop.f32.mrb[0].mxu0
      %v2880 = vadd.f32 0.0, %v2879
      %v2881 = vpop.f32.mrb[0].mxu0
      %v2882 = vadd.f32 0.0, %v2881
      %v2883 = vpop.f32.mrb[0].mxu0
      %v2884 = vpop.f32.mrb[0].mxu0
      %2885 = vdwg.mxu0
      %2886 = vmatprep.subr.bf16.mxu0 %v2840
      %2887 = vmatpush1.bf16.msra.mxu0 %v2837
      %2888 = vmatprep.subr.bf16.mxu0 0
      %2889 = vmatpush1.bf16.msra.mxu0 0
      %2890 = vmatprep.subr.bf16.mxu0 0
      %2891 = vmatpush1.bf16.msra.mxu0 0
      %2892 = vmatprep.subr.bf16.mxu0 0
      %2893 = vmatpush1.bf16.msra.mxu0 0
      %2894 = vmatprep.subr.bf16.mxu0 0
      %2895 = vmatpush1.bf16.msra.mxu0 0
      %2896 = vmatprep.subr.bf16.mxu0 0
      %2897 = vmatpush1.bf16.msra.mxu0 0
      %2898 = vmatprep.subr.bf16.mxu0 0
      %2899 = vmatpush1.bf16.msra.mxu0 0
      %2900 = vmatprep.subr.bf16.mxu0 0
      %2901 = vmatpush1.bf16.msra.mxu0 0
      %2902 = vmatprep.subr.bf16.mxu0 0
      %2903 = vmatpush1.bf16.msra.mxu0 0
      %2904 = vmatprep.subr.bf16.mxu0 0
      %2905 = vmatpush1.bf16.msra.mxu0 0
      %2906 = vmatprep.subr.bf16.mxu0 0
      %2907 = vmatpush1.bf16.msra.mxu0 0
      %2908 = vmatprep.subr.bf16.mxu0 0
      %2909 = vmatpush1.bf16.msra.mxu0 0
      %2910 = vmatprep.subr.bf16.mxu0 0
      %2911 = vmatpush1.bf16.msra.mxu0 0
      %2912 = vmatprep.subr.bf16.mxu0 0
      %2913 = vmatpush1.bf16.msra.mxu0 0
      %2914 = vmatprep.subr.bf16.mxu0 0
      %2915 = vmatpush1.bf16.msra.mxu0 0
      %2916 = vmatprep.subr.bf16.mxu0 0
      %2917 = vmatpush1.bf16.msra.mxu0 0
      %2918 = vmatprep.mubr.bf16.mxu0 0
      %2919 = vmatmul.mubr.bf16.gmra.mrb[0].mxu0 %v2828
      %v2920 = vpop.f32.mrb[0].mxu0
      %v2921 = vadd.f32 0.0, %v2920
      %v2922 = vpop.f32.mrb[0].mxu0
      %v2923 = vadd.f32 0.0, %v2922
      %v2924 = vpop.f32.mrb[0].mxu0
      %v2925 = vpop.f32.mrb[0].mxu0
      %2926 = vdwg.mxu0
      %2927 = vmatprep.subr.bf16.mxu0 0
      %2928 = vmatpush1.bf16.msra.mxu0 %v2843
      %2929 = vmatprep.subr.bf16.mxu0 0
      %2930 = vmatpush1.bf16.msra.mxu0 0
      %2931 = vmatprep.subr.bf16.mxu0 0
      %2932 = vmatpush1.bf16.msra.mxu0 0
      %2933 = vmatprep.subr.bf16.mxu0 0
      %2934 = vmatpush1.bf16.msra.mxu0 0
      %2935 = vmatprep.subr.bf16.mxu0 0
      %2936 = vmatpush1.bf16.msra.mxu0 0
      %2937 = vmatprep.subr.bf16.mxu0 0
      %2938 = vmatpush1.bf16.msra.mxu0 0
      %2939 = vmatprep.subr.bf16.mxu0 0
      %2940 = vmatpush1.bf16.msra.mxu0 0
      %2941 = vmatprep.subr.bf16.mxu0 0
      %2942 = vmatpush1.bf16.msra.mxu0 0
      %2943 = vmatprep.subr.bf16.mxu0 0
      %2944 = vmatpush1.bf16.msra.mxu0 0
      %2945 = vmatprep.subr.bf16.mxu0 0
      %2946 = vmatpush1.bf16.msra.mxu0 0
      %2947 = vmatprep.subr.bf16.mxu0 0
      %2948 = vmatpush1.bf16.msra.mxu0 0
      %2949 = vmatprep.subr.bf16.mxu0 0
      %2950 = vmatpush1.bf16.msra.mxu0 0
      %2951 = vmatprep.subr.bf16.mxu0 0
      %2952 = vmatpush1.bf16.msra.mxu0 0
      %2953 = vmatprep.subr.bf16.mxu0 0
      %2954 = vmatpush1.bf16.msra.mxu0 0
      %2955 = vmatprep.subr.bf16.mxu0 0
      %2956 = vmatpush1.bf16.msra.mxu0 0
      %2957 = vmatprep.subr.bf16.mxu0 0
      %2958 = vmatpush1.bf16.msra.mxu0 0
      %2959 = vmatprep.mubr.bf16.mxu0 0
      %2960 = vmatmul.mubr.bf16.gmra.mrb[0].mxu0 %v2828
      %v2961 = vpop.f32.mrb[0].mxu0
      %v2962 = vadd.f32 0.0, %v2961
      %v2963 = vpop.f32.mrb[0].mxu0
      %v2964 = vpop.f32.mrb[0].mxu0
      %v2965 = vpop.f32.mrb[0].mxu0
      %2966 = vdwg.mxu0
      %v2967 = vadd.f32 %v2802, %v2880
      %v2968 = vadd.f32 %v2803, %v2882
      %v2969 = vadd.f32 %v2804, %v2921
      %v2970 = vadd.f32 %v2805, %v2923
      %v2971 = vadd.f32 %v2806, %v2962
      %s2972 = scalar_lea.vmem %s1, 64
      %v2973 = vld [vmem:[%s2972] sm:$0xf]
      %2974 = vrot.lane.b32.xlu0 %v2638, 118
      %v2975 = vpop.permute.xlu0 %2974
      %2976 = vrot.lane.b32.xlu0 %v2639, 118
      %v2977 = vpop.permute.xlu0 %2976
      %2978 = vrot.lane.b32.xlu0 %v2640, 118
      %v2979 = vpop.permute.xlu0 %2978
      %2980 = vrot.lane.b32.xlu0 %v2641, 118
      %v2981 = vpop.permute.xlu0 %2980
      %2982 = vrot.lane.b32.xlu0 %v2642, 118
      %v2983 = vpop.permute.xlu0 %2982
      %2984 = vrot.lane.b32.xlu0 %v2643, 118
      %v2985 = vpop.permute.xlu0 %2984
      %vm2986 = vcmask 965632
      %v2987 = vsel %vm2986, %v2975, %v2977
      %v2988 = vsel %vm2986, %v2977, %v2979
      %v2989 = vsel %vm2986, %v2979, %v2981
      %v2990 = vsel %vm2986, %v2981, %v2983
      %v2991 = vsel %vm2986, %v2983, %v2985
      %v2993 = vsel %vm346, %v2973, 0
      %v2996 = vsel %vm350, %v2987, 0
      %v2999 = vsel %vm350, %v2988, 0
      %v3002 = vsel %vm350, %v2989, 0
      %v3005 = vsel %vm350, %v2990, 0
      %v3008 = vsel %vm350, %v2991, 0
      %3010 = vmatprep.subr.bf16.mxu0 %v2999
      %3011 = vmatpush1.bf16.msra.mxu0 %v2996
      %3012 = vmatprep.subr.bf16.mxu0 0
      %3013 = vmatpush1.bf16.msra.mxu0 0
      %3014 = vmatprep.subr.bf16.mxu0 0
      %3015 = vmatpush1.bf16.msra.mxu0 0
      %3016 = vmatprep.subr.bf16.mxu0 0
      %3017 = vmatpush1.bf16.msra.mxu0 0
      %3018 = vmatprep.subr.bf16.mxu0 0
      %3019 = vmatpush1.bf16.msra.mxu0 0
      %3020 = vmatprep.subr.bf16.mxu0 0
      %3021 = vmatpush1.bf16.msra.mxu0 0
      %3022 = vmatprep.subr.bf16.mxu0 0
      %3023 = vmatpush1.bf16.msra.mxu0 0
      %3024 = vmatprep.subr.bf16.mxu0 0
      %3025 = vmatpush1.bf16.msra.mxu0 0
      %3026 = vmatprep.subr.bf16.mxu0 0
      %3027 = vmatpush1.bf16.msra.mxu0 0
      %3028 = vmatprep.subr.bf16.mxu0 0
      %3029 = vmatpush1.bf16.msra.mxu0 0
      %3030 = vmatprep.subr.bf16.mxu0 0
      %3031 = vmatpush1.bf16.msra.mxu0 0
      %3032 = vmatprep.subr.bf16.mxu0 0
      %3033 = vmatpush1.bf16.msra.mxu0 0
      %3034 = vmatprep.subr.bf16.mxu0 0
      %3035 = vmatpush1.bf16.msra.mxu0 0
      %3036 = vmatprep.subr.bf16.mxu0 0
      %3037 = vmatpush1.bf16.msra.mxu0 0
      %3038 = vmatprep.subr.bf16.mxu0 0
      %3039 = vmatpush1.bf16.msra.mxu0 0
      %3040 = vmatprep.subr.bf16.mxu0 0
      %3041 = vmatpush1.bf16.msra.mxu0 0
      %3042 = vmatprep.mubr.bf16.mxu0 0
      %3043 = vmatmul.mubr.bf16.gmra.mrb[0].mxu0 %v2993
      %v3044 = vpop.f32.mrb[0].mxu0
      %v3045 = vadd.f32 0.0, %v3044
      %v3046 = vpop.f32.mrb[0].mxu0
      %v3047 = vadd.f32 0.0, %v3046
      %v3048 = vpop.f32.mrb[0].mxu0
      %v3049 = vpop.f32.mrb[0].mxu0
      %3050 = vdwg.mxu0
      %3051 = vmatprep.subr.bf16.mxu0 %v3005
      %3052 = vmatpush1.bf16.msra.mxu0 %v3002
      %3053 = vmatprep.subr.bf16.mxu0 0
      %3054 = vmatpush1.bf16.msra.mxu0 0
      %3055 = vmatprep.subr.bf16.mxu0 0
      %3056 = vmatpush1.bf16.msra.mxu0 0
      %3057 = vmatprep.subr.bf16.mxu0 0
      %3058 = vmatpush1.bf16.msra.mxu0 0
      %3059 = vmatprep.subr.bf16.mxu0 0
      %3060 = vmatpush1.bf16.msra.mxu0 0
      %3061 = vmatprep.subr.bf16.mxu0 0
      %3062 = vmatpush1.bf16.msra.mxu0 0
      %3063 = vmatprep.subr.bf16.mxu0 0
      %3064 = vmatpush1.bf16.msra.mxu0 0
      %3065 = vmatprep.subr.bf16.mxu0 0
      %3066 = vmatpush1.bf16.msra.mxu0 0
      %3067 = vmatprep.subr.bf16.mxu0 0
      %3068 = vmatpush1.bf16.msra.mxu0 0
      %3069 = vmatprep.subr.bf16.mxu0 0
      %3070 = vmatpush1.bf16.msra.mxu0 0
      %3071 = vmatprep.subr.bf16.mxu0 0
      %3072 = vmatpush1.bf16.msra.mxu0 0
      %3073 = vmatprep.subr.bf16.mxu0 0
      %3074 = vmatpush1.bf16.msra.mxu0 0
      %3075 = vmatprep.subr.bf16.mxu0 0
      %3076 = vmatpush1.bf16.msra.mxu0 0
      %3077 = vmatprep.subr.bf16.mxu0 0
      %3078 = vmatpush1.bf16.msra.mxu0 0
      %3079 = vmatprep.subr.bf16.mxu0 0
      %3080 = vmatpush1.bf16.msra.mxu0 0
      %3081 = vmatprep.subr.bf16.mxu0 0
      %3082 = vmatpush1.bf16.msra.mxu0 0
      %3083 = vmatprep.mubr.bf16.mxu0 0
      %3084 = vmatmul.mubr.bf16.gmra.mrb[0].mxu0 %v2993
      %v3085 = vpop.f32.mrb[0].mxu0
      %v3086 = vadd.f32 0.0, %v3085
      %v3087 = vpop.f32.mrb[0].mxu0
      %v3088 = vadd.f32 0.0, %v3087
      %v3089 = vpop.f32.mrb[0].mxu0
      %v3090 = vpop.f32.mrb[0].mxu0
      %3091 = vdwg.mxu0
      %3092 = vmatprep.subr.bf16.mxu0 0
      %3093 = vmatpush1.bf16.msra.mxu0 %v3008
      %3094 = vmatprep.subr.bf16.mxu0 0
      %3095 = vmatpush1.bf16.msra.mxu0 0
      %3096 = vmatprep.subr.bf16.mxu0 0
      %3097 = vmatpush1.bf16.msra.mxu0 0
      %3098 = vmatprep.subr.bf16.mxu0 0
      %3099 = vmatpush1.bf16.msra.mxu0 0
      %3100 = vmatprep.subr.bf16.mxu0 0
      %3101 = vmatpush1.bf16.msra.mxu0 0
      %3102 = vmatprep.subr.bf16.mxu0 0
      %3103 = vmatpush1.bf16.msra.mxu0 0
      %3104 = vmatprep.subr.bf16.mxu0 0
      %3105 = vmatpush1.bf16.msra.mxu0 0
      %3106 = vmatprep.subr.bf16.mxu0 0
      %3107 = vmatpush1.bf16.msra.mxu0 0
      %3108 = vmatprep.subr.bf16.mxu0 0
      %3109 = vmatpush1.bf16.msra.mxu0 0
      %3110 = vmatprep.subr.bf16.mxu0 0
      %3111 = vmatpush1.bf16.msra.mxu0 0
      %3112 = vmatprep.subr.bf16.mxu0 0
      %3113 = vmatpush1.bf16.msra.mxu0 0
      %3114 = vmatprep.subr.bf16.mxu0 0
      %3115 = vmatpush1.bf16.msra.mxu0 0
      %3116 = vmatprep.subr.bf16.mxu0 0
      %3117 = vmatpush1.bf16.msra.mxu0 0
      %3118 = vmatprep.subr.bf16.mxu0 0
      %3119 = vmatpush1.bf16.msra.mxu0 0
      %3120 = vmatprep.subr.bf16.mxu0 0
      %3121 = vmatpush1.bf16.msra.mxu0 0
      %3122 = vmatprep.subr.bf16.mxu0 0
      %3123 = vmatpush1.bf16.msra.mxu0 0
      %3124 = vmatprep.mubr.bf16.mxu0 0
      %3125 = vmatmul.mubr.bf16.gmra.mrb[0].mxu0 %v2993
      %v3126 = vpop.f32.mrb[0].mxu0
      %v3127 = vadd.f32 0.0, %v3126
      %v3128 = vpop.f32.mrb[0].mxu0
      %v3129 = vpop.f32.mrb[0].mxu0
      %v3130 = vpop.f32.mrb[0].mxu0
      %3131 = vdwg.mxu0
      %v3132 = vadd.f32 %v2967, %v3045
      %v3133 = vadd.f32 %v2968, %v3047
      %v3134 = vadd.f32 %v2969, %v3086
      %v3135 = vadd.f32 %v2970, %v3088
      %v3136 = vadd.f32 %v2971, %v3127
      %s3137 = scalar_lea.vmem %s1, 68
      %v3138 = vld [vmem:[%s3137] sm:$0xf]
      %3139 = vrot.lane.b32.xlu0 %v2638, 117
      %v3140 = vpop.permute.xlu0 %3139
      %3141 = vrot.lane.b32.xlu0 %v2639, 117
      %v3142 = vpop.permute.xlu0 %3141
      %3143 = vrot.lane.b32.xlu0 %v2640, 117
      %v3144 = vpop.permute.xlu0 %3143
      %3145 = vrot.lane.b32.xlu0 %v2641, 117
      %v3146 = vpop.permute.xlu0 %3145
      %3147 = vrot.lane.b32.xlu0 %v2642, 117
      %v3148 = vpop.permute.xlu0 %3147
      %3149 = vrot.lane.b32.xlu0 %v2643, 117
      %v3150 = vpop.permute.xlu0 %3149
      %vm3151 = vcmask 957440
      %v3152 = vsel %vm3151, %v3140, %v3142
      %v3153 = vsel %vm3151, %v3142, %v3144
      %v3154 = vsel %vm3151, %v3144, %v3146
      %v3155 = vsel %vm3151, %v3146, %v3148
      %v3156 = vsel %vm3151, %v3148, %v3150
      %v3158 = vsel %vm346, %v3138, 0
      %v3161 = vsel %vm350, %v3152, 0
      %v3164 = vsel %vm350, %v3153, 0
      %v3167 = vsel %vm350, %v3154, 0
      %v3170 = vsel %vm350, %v3155, 0
      %v3173 = vsel %vm350, %v3156, 0
      %3175 = vmatprep.subr.bf16.mxu0 %v3164
      %3176 = vmatpush1.bf16.msra.mxu0 %v3161
      %3177 = vmatprep.subr.bf16.mxu0 0
      %3178 = vmatpush1.bf16.msra.mxu0 0
      %3179 = vmatprep.subr.bf16.mxu0 0
      %3180 = vmatpush1.bf16.msra.mxu0 0
      %3181 = vmatprep.subr.bf16.mxu0 0
      %3182 = vmatpush1.bf16.msra.mxu0 0
      %3183 = vmatprep.subr.bf16.mxu0 0
      %3184 = vmatpush1.bf16.msra.mxu0 0
      %3185 = vmatprep.subr.bf16.mxu0 0
      %3186 = vmatpush1.bf16.msra.mxu0 0
      %3187 = vmatprep.subr.bf16.mxu0 0
      %3188 = vmatpush1.bf16.msra.mxu0 0
      %3189 = vmatprep.subr.bf16.mxu0 0
      %3190 = vmatpush1.bf16.msra.mxu0 0
      %3191 = vmatprep.subr.bf16.mxu0 0
      %3192 = vmatpush1.bf16.msra.mxu0 0
      %3193 = vmatprep.subr.bf16.mxu0 0
      %3194 = vmatpush1.bf16.msra.mxu0 0
      %3195 = vmatprep.subr.bf16.mxu0 0
      %3196 = vmatpush1.bf16.msra.mxu0 0
      %3197 = vmatprep.subr.bf16.mxu0 0
      %3198 = vmatpush1.bf16.msra.mxu0 0
      %3199 = vmatprep.subr.bf16.mxu0 0
      %3200 = vmatpush1.bf16.msra.mxu0 0
      %3201 = vmatprep.subr.bf16.mxu0 0
      %3202 = vmatpush1.bf16.msra.mxu0 0
      %3203 = vmatprep.subr.bf16.mxu0 0
      %3204 = vmatpush1.bf16.msra.mxu0 0
      %3205 = vmatprep.subr.bf16.mxu0 0
      %3206 = vmatpush1.bf16.msra.mxu0 0
      %3207 = vmatprep.mubr.bf16.mxu0 0
      %3208 = vmatmul.mubr.bf16.gmra.mrb[0].mxu0 %v3158
      %v3209 = vpop.f32.mrb[0].mxu0
      %v3210 = vadd.f32 0.0, %v3209
      %v3211 = vpop.f32.mrb[0].mxu0
      %v3212 = vadd.f32 0.0, %v3211
      %v3213 = vpop.f32.mrb[0].mxu0
      %v3214 = vpop.f32.mrb[0].mxu0
      %3215 = vdwg.mxu0
      %3216 = vmatprep.subr.bf16.mxu0 %v3170
      %3217 = vmatpush1.bf16.msra.mxu0 %v3167
      %3218 = vmatprep.subr.bf16.mxu0 0
      %3219 = vmatpush1.bf16.msra.mxu0 0
      %3220 = vmatprep.subr.bf16.mxu0 0
      %3221 = vmatpush1.bf16.msra.mxu0 0
      %3222 = vmatprep.subr.bf16.mxu0 0
      %3223 = vmatpush1.bf16.msra.mxu0 0
      %3224 = vmatprep.subr.bf16.mxu0 0
      %3225 = vmatpush1.bf16.msra.mxu0 0
      %3226 = vmatprep.subr.bf16.mxu0 0
      %3227 = vmatpush1.bf16.msra.mxu0 0
      %3228 = vmatprep.subr.bf16.mxu0 0
      %3229 = vmatpush1.bf16.msra.mxu0 0
      %3230 = vmatprep.subr.bf16.mxu0 0
      %3231 = vmatpush1.bf16.msra.mxu0 0
      %3232 = vmatprep.subr.bf16.mxu0 0
      %3233 = vmatpush1.bf16.msra.mxu0 0
      %3234 = vmatprep.subr.bf16.mxu0 0
      %3235 = vmatpush1.bf16.msra.mxu0 0
      %3236 = vmatprep.subr.bf16.mxu0 0
      %3237 = vmatpush1.bf16.msra.mxu0 0
      %3238 = vmatprep.subr.bf16.mxu0 0
      %3239 = vmatpush1.bf16.msra.mxu0 0
      %3240 = vmatprep.subr.bf16.mxu0 0
      %3241 = vmatpush1.bf16.msra.mxu0 0
      %3242 = vmatprep.subr.bf16.mxu0 0
      %3243 = vmatpush1.bf16.msra.mxu0 0
      %3244 = vmatprep.subr.bf16.mxu0 0
      %3245 = vmatpush1.bf16.msra.mxu0 0
      %3246 = vmatprep.subr.bf16.mxu0 0
      %3247 = vmatpush1.bf16.msra.mxu0 0
      %3248 = vmatprep.mubr.bf16.mxu0 0
      %3249 = vmatmul.mubr.bf16.gmra.mrb[0].mxu0 %v3158
      %v3250 = vpop.f32.mrb[0].mxu0
      %v3251 = vadd.f32 0.0, %v3250
      %v3252 = vpop.f32.mrb[0].mxu0
      %v3253 = vadd.f32 0.0, %v3252
      %v3254 = vpop.f32.mrb[0].mxu0
      %v3255 = vpop.f32.mrb[0].mxu0
      %3256 = vdwg.mxu0
      %3257 = vmatprep.subr.bf16.mxu0 0
      %3258 = vmatpush1.bf16.msra.mxu0 %v3173
      %3259 = vmatprep.subr.bf16.mxu0 0
      %3260 = vmatpush1.bf16.msra.mxu0 0
      %3261 = vmatprep.subr.bf16.mxu0 0
      %3262 = vmatpush1.bf16.msra.mxu0 0
      %3263 = vmatprep.subr.bf16.mxu0 0
      %3264 = vmatpush1.bf16.msra.mxu0 0
      %3265 = vmatprep.subr.bf16.mxu0 0
      %3266 = vmatpush1.bf16.msra.mxu0 0
      %3267 = vmatprep.subr.bf16.mxu0 0
      %3268 = vmatpush1.bf16.msra.mxu0 0
      %3269 = vmatprep.subr.bf16.mxu0 0
      %3270 = vmatpush1.bf16.msra.mxu0 0
      %3271 = vmatprep.subr.bf16.mxu0 0
      %3272 = vmatpush1.bf16.msra.mxu0 0
      %3273 = vmatprep.subr.bf16.mxu0 0
      %3274 = vmatpush1.bf16.msra.mxu0 0
      %3275 = vmatprep.subr.bf16.mxu0 0
      %3276 = vmatpush1.bf16.msra.mxu0 0
      %3277 = vmatprep.subr.bf16.mxu0 0
      %3278 = vmatpush1.bf16.msra.mxu0 0
      %3279 = vmatprep.subr.bf16.mxu0 0
      %3280 = vmatpush1.bf16.msra.mxu0 0
      %3281 = vmatprep.subr.bf16.mxu0 0
      %3282 = vmatpush1.bf16.msra.mxu0 0
      %3283 = vmatprep.subr.bf16.mxu0 0
      %3284 = vmatpush1.bf16.msra.mxu0 0
      %3285 = vmatprep.subr.bf16.mxu0 0
      %3286 = vmatpush1.bf16.msra.mxu0 0
      %3287 = vmatprep.subr.bf16.mxu0 0
      %3288 = vmatpush1.bf16.msra.mxu0 0
      %3289 = vmatprep.mubr.bf16.mxu0 0
      %3290 = vmatmul.mubr.bf16.gmra.mrb[0].mxu0 %v3158
      %v3291 = vpop.f32.mrb[0].mxu0
      %v3292 = vadd.f32 0.0, %v3291
      %v3293 = vpop.f32.mrb[0].mxu0
      %v3294 = vpop.f32.mrb[0].mxu0
      %v3295 = vpop.f32.mrb[0].mxu0
      %3296 = vdwg.mxu0
      %v3297 = vadd.f32 %v3132, %v3210
      %v3298 = vadd.f32 %v3133, %v3212
      %v3299 = vadd.f32 %v3134, %v3251
      %v3300 = vadd.f32 %v3135, %v3253
      %v3301 = vadd.f32 %v3136, %v3292
      %s3302 = scalar_lea.vmem %s1, 72
      %v3303 = vld [vmem:[%s3302] sm:$0xf]
      %3304 = vrot.lane.b32.xlu0 %v2638, 39
      %v3305 = vpop.permute.xlu0 %3304
      %3306 = vrot.lane.b32.xlu0 %v2639, 39
      %v3307 = vpop.permute.xlu0 %3306
      %3308 = vrot.lane.b32.xlu0 %v2640, 39
      %v3309 = vpop.permute.xlu0 %3308
      %3310 = vrot.lane.b32.xlu0 %v2641, 39
      %v3311 = vpop.permute.xlu0 %3310
      %3312 = vrot.lane.b32.xlu0 %v2642, 39
      %v3313 = vpop.permute.xlu0 %3312
      %3314 = vrot.lane.b32.xlu0 %v2643, 39
      %v3315 = vpop.permute.xlu0 %3314
      %vm3316 = vcmask 318464
      %v3317 = vsel %vm3316, %v3305, %v3307
      %v3318 = vsel %vm3316, %v3307, %v3309
      %v3319 = vsel %vm3316, %v3309, %v3311
      %v3320 = vsel %vm3316, %v3311, %v3313
      %v3321 = vsel %vm3316, %v3313, %v3315
      %v3323 = vsel %vm346, %v3303, 0
      %v3326 = vsel %vm350, %v3317, 0
      %v3329 = vsel %vm350, %v3318, 0
      %v3332 = vsel %vm350, %v3319, 0
      %v3335 = vsel %vm350, %v3320, 0
      %v3338 = vsel %vm350, %v3321, 0
      %3340 = vmatprep.subr.bf16.mxu0 %v3329
      %3341 = vmatpush1.bf16.msra.mxu0 %v3326
      %3342 = vmatprep.subr.bf16.mxu0 0
      %3343 = vmatpush1.bf16.msra.mxu0 0
      %3344 = vmatprep.subr.bf16.mxu0 0
      %3345 = vmatpush1.bf16.msra.mxu0 0
      %3346 = vmatprep.subr.bf16.mxu0 0
      %3347 = vmatpush1.bf16.msra.mxu0 0
      %3348 = vmatprep.subr.bf16.mxu0 0
      %3349 = vmatpush1.bf16.msra.mxu0 0
      %3350 = vmatprep.subr.bf16.mxu0 0
      %3351 = vmatpush1.bf16.msra.mxu0 0
      %3352 = vmatprep.subr.bf16.mxu0 0
      %3353 = vmatpush1.bf16.msra.mxu0 0
      %3354 = vmatprep.subr.bf16.mxu0 0
      %3355 = vmatpush1.bf16.msra.mxu0 0
      %3356 = vmatprep.subr.bf16.mxu0 0
      %3357 = vmatpush1.bf16.msra.mxu0 0
      %3358 = vmatprep.subr.bf16.mxu0 0
      %3359 = vmatpush1.bf16.msra.mxu0 0
      %3360 = vmatprep.subr.bf16.mxu0 0
      %3361 = vmatpush1.bf16.msra.mxu0 0
      %3362 = vmatprep.subr.bf16.mxu0 0
      %3363 = vmatpush1.bf16.msra.mxu0 0
      %3364 = vmatprep.subr.bf16.mxu0 0
      %3365 = vmatpush1.bf16.msra.mxu0 0
      %3366 = vmatprep.subr.bf16.mxu0 0
      %3367 = vmatpush1.bf16.msra.mxu0 0
      %3368 = vmatprep.subr.bf16.mxu0 0
      %3369 = vmatpush1.bf16.msra.mxu0 0
      %3370 = vmatprep.subr.bf16.mxu0 0
      %3371 = vmatpush1.bf16.msra.mxu0 0
      %3372 = vmatprep.mubr.bf16.mxu0 0
      %3373 = vmatmul.mubr.bf16.gmra.mrb[0].mxu0 %v3323
      %v3374 = vpop.f32.mrb[0].mxu0
      %v3375 = vadd.f32 0.0, %v3374
      %v3376 = vpop.f32.mrb[0].mxu0
      %v3377 = vadd.f32 0.0, %v3376
      %v3378 = vpop.f32.mrb[0].mxu0
      %v3379 = vpop.f32.mrb[0].mxu0
      %3380 = vdwg.mxu0
      %3381 = vmatprep.subr.bf16.mxu0 %v3335
      %3382 = vmatpush1.bf16.msra.mxu0 %v3332
      %3383 = vmatprep.subr.bf16.mxu0 0
      %3384 = vmatpush1.bf16.msra.mxu0 0
      %3385 = vmatprep.subr.bf16.mxu0 0
      %3386 = vmatpush1.bf16.msra.mxu0 0
      %3387 = vmatprep.subr.bf16.mxu0 0
      %3388 = vmatpush1.bf16.msra.mxu0 0
      %3389 = vmatprep.subr.bf16.mxu0 0
      %3390 = vmatpush1.bf16.msra.mxu0 0
      %3391 = vmatprep.subr.bf16.mxu0 0
      %3392 = vmatpush1.bf16.msra.mxu0 0
      %3393 = vmatprep.subr.bf16.mxu0 0
      %3394 = vmatpush1.bf16.msra.mxu0 0
      %3395 = vmatprep.subr.bf16.mxu0 0
      %3396 = vmatpush1.bf16.msra.mxu0 0
      %3397 = vmatprep.subr.bf16.mxu0 0
      %3398 = vmatpush1.bf16.msra.mxu0 0
      %3399 = vmatprep.subr.bf16.mxu0 0
      %3400 = vmatpush1.bf16.msra.mxu0 0
      %3401 = vmatprep.subr.bf16.mxu0 0
      %3402 = vmatpush1.bf16.msra.mxu0 0
      %3403 = vmatprep.subr.bf16.mxu0 0
      %3404 = vmatpush1.bf16.msra.mxu0 0
      %3405 = vmatprep.subr.bf16.mxu0 0
      %3406 = vmatpush1.bf16.msra.mxu0 0
      %3407 = vmatprep.subr.bf16.mxu0 0
      %3408 = vmatpush1.bf16.msra.mxu0 0
      %3409 = vmatprep.subr.bf16.mxu0 0
      %3410 = vmatpush1.bf16.msra.mxu0 0
      %3411 = vmatprep.subr.bf16.mxu0 0
      %3412 = vmatpush1.bf16.msra.mxu0 0
      %3413 = vmatprep.mubr.bf16.mxu0 0
      %3414 = vmatmul.mubr.bf16.gmra.mrb[0].mxu0 %v3323
      %v3415 = vpop.f32.mrb[0].mxu0
      %v3416 = vadd.f32 0.0, %v3415
      %v3417 = vpop.f32.mrb[0].mxu0
      %v3418 = vadd.f32 0.0, %v3417
      %v3419 = vpop.f32.mrb[0].mxu0
      %v3420 = vpop.f32.mrb[0].mxu0
      %3421 = vdwg.mxu0
      %3422 = vmatprep.subr.bf16.mxu0 0
      %3423 = vmatpush1.bf16.msra.mxu0 %v3338
      %3424 = vmatprep.subr.bf16.mxu0 0
      %3425 = vmatpush1.bf16.msra.mxu0 0
      %3426 = vmatprep.subr.bf16.mxu0 0
      %3427 = vmatpush1.bf16.msra.mxu0 0
      %3428 = vmatprep.subr.bf16.mxu0 0
      %3429 = vmatpush1.bf16.msra.mxu0 0
      %3430 = vmatprep.subr.bf16.mxu0 0
      %3431 = vmatpush1.bf16.msra.mxu0 0
      %3432 = vmatprep.subr.bf16.mxu0 0
      %3433 = vmatpush1.bf16.msra.mxu0 0
      %3434 = vmatprep.subr.bf16.mxu0 0
      %3435 = vmatpush1.bf16.msra.mxu0 0
      %3436 = vmatprep.subr.bf16.mxu0 0
      %3437 = vmatpush1.bf16.msra.mxu0 0
      %3438 = vmatprep.subr.bf16.mxu0 0
      %3439 = vmatpush1.bf16.msra.mxu0 0
      %3440 = vmatprep.subr.bf16.mxu0 0
      %3441 = vmatpush1.bf16.msra.mxu0 0
      %3442 = vmatprep.subr.bf16.mxu0 0
      %3443 = vmatpush1.bf16.msra.mxu0 0
      %3444 = vmatprep.subr.bf16.mxu0 0
      %3445 = vmatpush1.bf16.msra.mxu0 0
      %3446 = vmatprep.subr.bf16.mxu0 0
      %3447 = vmatpush1.bf16.msra.mxu0 0
      %3448 = vmatprep.subr.bf16.mxu0 0
      %3449 = vmatpush1.bf16.msra.mxu0 0
      %3450 = vmatprep.subr.bf16.mxu0 0
      %3451 = vmatpush1.bf16.msra.mxu0 0
      %3452 = vmatprep.subr.bf16.mxu0 0
      %3453 = vmatpush1.bf16.msra.mxu0 0
      %3454 = vmatprep.mubr.bf16.mxu0 0
      %3455 = vmatmul.mubr.bf16.gmra.mrb[0].mxu0 %v3323
      %v3456 = vpop.f32.mrb[0].mxu0
      %v3457 = vadd.f32 0.0, %v3456
      %v3458 = vpop.f32.mrb[0].mxu0
      %v3459 = vpop.f32.mrb[0].mxu0
      %v3460 = vpop.f32.mrb[0].mxu0
      %3461 = vdwg.mxu0
      %v3462 = vadd.f32 %v3297, %v3375
      %v3463 = vadd.f32 %v3298, %v3377
      %v3464 = vadd.f32 %v3299, %v3416
      %v3465 = vadd.f32 %v3300, %v3418
      %v3466 = vadd.f32 %v3301, %v3457
      %s3467 = scalar_lea.vmem %s1, 76
      %v3468 = vld [vmem:[%s3467] sm:$0xf]
      %3469 = vrot.lane.b32.xlu0 %v2638, 38
      %v3470 = vpop.permute.xlu0 %3469
      %3471 = vrot.lane.b32.xlu0 %v2639, 38
      %v3472 = vpop.permute.xlu0 %3471
      %3473 = vrot.lane.b32.xlu0 %v2640, 38
      %v3474 = vpop.permute.xlu0 %3473
      %3475 = vrot.lane.b32.xlu0 %v2641, 38
      %v3476 = vpop.permute.xlu0 %3475
      %3477 = vrot.lane.b32.xlu0 %v2642, 38
      %v3478 = vpop.permute.xlu0 %3477
      %3479 = vrot.lane.b32.xlu0 %v2643, 38
      %v3480 = vpop.permute.xlu0 %3479
      %vm3481 = vcmask 310272
      %v3482 = vsel %vm3481, %v3470, %v3472
      %v3483 = vsel %vm3481, %v3472, %v3474
      %v3484 = vsel %vm3481, %v3474, %v3476
      %v3485 = vsel %vm3481, %v3476, %v3478
      %v3486 = vsel %vm3481, %v3478, %v3480
      %v3488 = vsel %vm346, %v3468, 0
      %v3491 = vsel %vm350, %v3482, 0
      %v3494 = vsel %vm350, %v3483, 0
      %v3497 = vsel %vm350, %v3484, 0
      %v3500 = vsel %vm350, %v3485, 0
      %v3503 = vsel %vm350, %v3486, 0
      %3505 = vmatprep.subr.bf16.mxu0 %v3494
      %3506 = vmatpush1.bf16.msra.mxu0 %v3491
      %3507 = vmatprep.subr.bf16.mxu0 0
      %3508 = vmatpush1.bf16.msra.mxu0 0
      %3509 = vmatprep.subr.bf16.mxu0 0
      %3510 = vmatpush1.bf16.msra.mxu0 0
      %3511 = vmatprep.subr.bf16.mxu0 0
      %3512 = vmatpush1.bf16.msra.mxu0 0
      %3513 = vmatprep.subr.bf16.mxu0 0
      %3514 = vmatpush1.bf16.msra.mxu0 0
      %3515 = vmatprep.subr.bf16.mxu0 0
      %3516 = vmatpush1.bf16.msra.mxu0 0
      %3517 = vmatprep.subr.bf16.mxu0 0
      %3518 = vmatpush1.bf16.msra.mxu0 0
      %3519 = vmatprep.subr.bf16.mxu0 0
      %3520 = vmatpush1.bf16.msra.mxu0 0
      %3521 = vmatprep.subr.bf16.mxu0 0
      %3522 = vmatpush1.bf16.msra.mxu0 0
      %3523 = vmatprep.subr.bf16.mxu0 0
      %3524 = vmatpush1.bf16.msra.mxu0 0
      %3525 = vmatprep.subr.bf16.mxu0 0
      %3526 = vmatpush1.bf16.msra.mxu0 0
      %3527 = vmatprep.subr.bf16.mxu0 0
      %3528 = vmatpush1.bf16.msra.mxu0 0
      %3529 = vmatprep.subr.bf16.mxu0 0
      %3530 = vmatpush1.bf16.msra.mxu0 0
      %3531 = vmatprep.subr.bf16.mxu0 0
      %3532 = vmatpush1.bf16.msra.mxu0 0
      %3533 = vmatprep.subr.bf16.mxu0 0
      %3534 = vmatpush1.bf16.msra.mxu0 0
      %3535 = vmatprep.subr.bf16.mxu0 0
      %3536 = vmatpush1.bf16.msra.mxu0 0
      %3537 = vmatprep.mubr.bf16.mxu0 0
      %3538 = vmatmul.mubr.bf16.gmra.mrb[0].mxu0 %v3488
      %v3539 = vpop.f32.mrb[0].mxu0
      %v3540 = vadd.f32 0.0, %v3539
      %v3541 = vpop.f32.mrb[0].mxu0
      %v3542 = vadd.f32 0.0, %v3541
      %v3543 = vpop.f32.mrb[0].mxu0
      %v3544 = vpop.f32.mrb[0].mxu0
      %3545 = vdwg.mxu0
      %3546 = vmatprep.subr.bf16.mxu0 %v3500
      %3547 = vmatpush1.bf16.msra.mxu0 %v3497
      %3548 = vmatprep.subr.bf16.mxu0 0
      %3549 = vmatpush1.bf16.msra.mxu0 0
      %3550 = vmatprep.subr.bf16.mxu0 0
      %3551 = vmatpush1.bf16.msra.mxu0 0
      %3552 = vmatprep.subr.bf16.mxu0 0
      %3553 = vmatpush1.bf16.msra.mxu0 0
      %3554 = vmatprep.subr.bf16.mxu0 0
      %3555 = vmatpush1.bf16.msra.mxu0 0
      %3556 = vmatprep.subr.bf16.mxu0 0
      %3557 = vmatpush1.bf16.msra.mxu0 0
      %3558 = vmatprep.subr.bf16.mxu0 0
      %3559 = vmatpush1.bf16.msra.mxu0 0
      %3560 = vmatprep.subr.bf16.mxu0 0
      %3561 = vmatpush1.bf16.msra.mxu0 0
      %3562 = vmatprep.subr.bf16.mxu0 0
      %3563 = vmatpush1.bf16.msra.mxu0 0
      %3564 = vmatprep.subr.bf16.mxu0 0
      %3565 = vmatpush1.bf16.msra.mxu0 0
      %3566 = vmatprep.subr.bf16.mxu0 0
      %3567 = vmatpush1.bf16.msra.mxu0 0
      %3568 = vmatprep.subr.bf16.mxu0 0
      %3569 = vmatpush1.bf16.msra.mxu0 0
      %3570 = vmatprep.subr.bf16.mxu0 0
      %3571 = vmatpush1.bf16.msra.mxu0 0
      %3572 = vmatprep.subr.bf16.mxu0 0
      %3573 = vmatpush1.bf16.msra.mxu0 0
      %3574 = vmatprep.subr.bf16.mxu0 0
      %3575 = vmatpush1.bf16.msra.mxu0 0
      %3576 = vmatprep.subr.bf16.mxu0 0
      %3577 = vmatpush1.bf16.msra.mxu0 0
      %3578 = vmatprep.mubr.bf16.mxu0 0
      %3579 = vmatmul.mubr.bf16.gmra.mrb[0].mxu0 %v3488
      %v3580 = vpop.f32.mrb[0].mxu0
      %v3581 = vadd.f32 0.0, %v3580
      %v3582 = vpop.f32.mrb[0].mxu0
      %v3583 = vadd.f32 0.0, %v3582
      %v3584 = vpop.f32.mrb[0].mxu0
      %v3585 = vpop.f32.mrb[0].mxu0
      %3586 = vdwg.mxu0
      %3587 = vmatprep.subr.bf16.mxu0 0
      %3588 = vmatpush1.bf16.msra.mxu0 %v3503
      %3589 = vmatprep.subr.bf16.mxu0 0
      %3590 = vmatpush1.bf16.msra.mxu0 0
      %3591 = vmatprep.subr.bf16.mxu0 0
      %3592 = vmatpush1.bf16.msra.mxu0 0
      %3593 = vmatprep.subr.bf16.mxu0 0
      %3594 = vmatpush1.bf16.msra.mxu0 0
      %3595 = vmatprep.subr.bf16.mxu0 0
      %3596 = vmatpush1.bf16.msra.mxu0 0
      %3597 = vmatprep.subr.bf16.mxu0 0
      %3598 = vmatpush1.bf16.msra.mxu0 0
      %3599 = vmatprep.subr.bf16.mxu0 0
      %3600 = vmatpush1.bf16.msra.mxu0 0
      %3601 = vmatprep.subr.bf16.mxu0 0
      %3602 = vmatpush1.bf16.msra.mxu0 0
      %3603 = vmatprep.subr.bf16.mxu0 0
      %3604 = vmatpush1.bf16.msra.mxu0 0
      %3605 = vmatprep.subr.bf16.mxu0 0
      %3606 = vmatpush1.bf16.msra.mxu0 0
      %3607 = vmatprep.subr.bf16.mxu0 0
      %3608 = vmatpush1.bf16.msra.mxu0 0
      %3609 = vmatprep.subr.bf16.mxu0 0
      %3610 = vmatpush1.bf16.msra.mxu0 0
      %3611 = vmatprep.subr.bf16.mxu0 0
      %3612 = vmatpush1.bf16.msra.mxu0 0
      %3613 = vmatprep.subr.bf16.mxu0 0
      %3614 = vmatpush1.bf16.msra.mxu0 0
      %3615 = vmatprep.subr.bf16.mxu0 0
      %3616 = vmatpush1.bf16.msra.mxu0 0
      %3617 = vmatprep.subr.bf16.mxu0 0
      %3618 = vmatpush1.bf16.msra.mxu0 0
      %3619 = vmatprep.mubr.bf16.mxu0 0
      %3620 = vmatmul.mubr.bf16.gmra.mrb[0].mxu0 %v3488
      %v3621 = vpop.f32.mrb[0].mxu0
      %v3622 = vadd.f32 0.0, %v3621
      %v3623 = vpop.f32.mrb[0].mxu0
      %v3624 = vpop.f32.mrb[0].mxu0
      %v3625 = vpop.f32.mrb[0].mxu0
      %3626 = vdwg.mxu0
      %v3627 = vadd.f32 %v3462, %v3540
      %v3628 = vadd.f32 %v3463, %v3542
      %v3629 = vadd.f32 %v3464, %v3581
      %v3630 = vadd.f32 %v3465, %v3583
      %v3631 = vadd.f32 %v3466, %v3622
      %s3632 = scalar_lea.vmem %s1, 80
      %v3633 = vld [vmem:[%s3632] sm:$0xf]
      %3634 = vrot.lane.b32.xlu0 %v2638, 37
      %v3635 = vpop.permute.xlu0 %3634
      %3636 = vrot.lane.b32.xlu0 %v2639, 37
      %v3637 = vpop.permute.xlu0 %3636
      %3638 = vrot.lane.b32.xlu0 %v2640, 37
      %v3639 = vpop.permute.xlu0 %3638
      %3640 = vrot.lane.b32.xlu0 %v2641, 37
      %v3641 = vpop.permute.xlu0 %3640
      %3642 = vrot.lane.b32.xlu0 %v2642, 37
      %v3643 = vpop.permute.xlu0 %3642
      %3644 = vrot.lane.b32.xlu0 %v2643, 37
      %v3645 = vpop.permute.xlu0 %3644
      %vm3646 = vcmask 302080
      %v3647 = vsel %vm3646, %v3635, %v3637
      %v3648 = vsel %vm3646, %v3637, %v3639
      %v3649 = vsel %vm3646, %v3639, %v3641
      %v3650 = vsel %vm3646, %v3641, %v3643
      %v3651 = vsel %vm3646, %v3643, %v3645
      %v3653 = vsel %vm346, %v3633, 0
      %v3656 = vsel %vm350, %v3647, 0
      %v3659 = vsel %vm350, %v3648, 0
      %v3662 = vsel %vm350, %v3649, 0
      %v3665 = vsel %vm350, %v3650, 0
      %v3668 = vsel %vm350, %v3651, 0
      %3670 = vmatprep.subr.bf16.mxu0 %v3659
      %3671 = vmatpush1.bf16.msra.mxu0 %v3656
      %3672 = vmatprep.subr.bf16.mxu0 0
      %3673 = vmatpush1.bf16.msra.mxu0 0
      %3674 = vmatprep.subr.bf16.mxu0 0
      %3675 = vmatpush1.bf16.msra.mxu0 0
      %3676 = vmatprep.subr.bf16.mxu0 0
      %3677 = vmatpush1.bf16.msra.mxu0 0
      %3678 = vmatprep.subr.bf16.mxu0 0
      %3679 = vmatpush1.bf16.msra.mxu0 0
      %3680 = vmatprep.subr.bf16.mxu0 0
      %3681 = vmatpush1.bf16.msra.mxu0 0
      %3682 = vmatprep.subr.bf16.mxu0 0
      %3683 = vmatpush1.bf16.msra.mxu0 0
      %3684 = vmatprep.subr.bf16.mxu0 0
      %3685 = vmatpush1.bf16.msra.mxu0 0
      %3686 = vmatprep.subr.bf16.mxu0 0
      %3687 = vmatpush1.bf16.msra.mxu0 0
      %3688 = vmatprep.subr.bf16.mxu0 0
      %3689 = vmatpush1.bf16.msra.mxu0 0
      %3690 = vmatprep.subr.bf16.mxu0 0
      %3691 = vmatpush1.bf16.msra.mxu0 0
      %3692 = vmatprep.subr.bf16.mxu0 0
      %3693 = vmatpush1.bf16.msra.mxu0 0
      %3694 = vmatprep.subr.bf16.mxu0 0
      %3695 = vmatpush1.bf16.msra.mxu0 0
      %3696 = vmatprep.subr.bf16.mxu0 0
      %3697 = vmatpush1.bf16.msra.mxu0 0
      %3698 = vmatprep.subr.bf16.mxu0 0
      %3699 = vmatpush1.bf16.msra.mxu0 0
      %3700 = vmatprep.subr.bf16.mxu0 0
      %3701 = vmatpush1.bf16.msra.mxu0 0
      %3702 = vmatprep.mubr.bf16.mxu0 0
      %3703 = vmatmul.mubr.bf16.gmra.mrb[0].mxu0 %v3653
      %v3704 = vpop.f32.mrb[0].mxu0
      %v3705 = vadd.f32 0.0, %v3704
      %v3706 = vpop.f32.mrb[0].mxu0
      %v3707 = vadd.f32 0.0, %v3706
      %v3708 = vpop.f32.mrb[0].mxu0
      %v3709 = vpop.f32.mrb[0].mxu0
      %3710 = vdwg.mxu0
      %3711 = vmatprep.subr.bf16.mxu0 %v3665
      %3712 = vmatpush1.bf16.msra.mxu0 %v3662
      %3713 = vmatprep.subr.bf16.mxu0 0
      %3714 = vmatpush1.bf16.msra.mxu0 0
      %3715 = vmatprep.subr.bf16.mxu0 0
      %3716 = vmatpush1.bf16.msra.mxu0 0
      %3717 = vmatprep.subr.bf16.mxu0 0
      %3718 = vmatpush1.bf16.msra.mxu0 0
      %3719 = vmatprep.subr.bf16.mxu0 0
      %3720 = vmatpush1.bf16.msra.mxu0 0
      %3721 = vmatprep.subr.bf16.mxu0 0
      %3722 = vmatpush1.bf16.msra.mxu0 0
      %3723 = vmatprep.subr.bf16.mxu0 0
      %3724 = vmatpush1.bf16.msra.mxu0 0
      %3725 = vmatprep.subr.bf16.mxu0 0
      %3726 = vmatpush1.bf16.msra.mxu0 0
      %3727 = vmatprep.subr.bf16.mxu0 0
      %3728 = vmatpush1.bf16.msra.mxu0 0
      %3729 = vmatprep.subr.bf16.mxu0 0
      %3730 = vmatpush1.bf16.msra.mxu0 0
      %3731 = vmatprep.subr.bf16.mxu0 0
      %3732 = vmatpush1.bf16.msra.mxu0 0
      %3733 = vmatprep.subr.bf16.mxu0 0
      %3734 = vmatpush1.bf16.msra.mxu0 0
      %3735 = vmatprep.subr.bf16.mxu0 0
      %3736 = vmatpush1.bf16.msra.mxu0 0
      %3737 = vmatprep.subr.bf16.mxu0 0
      %3738 = vmatpush1.bf16.msra.mxu0 0
      %3739 = vmatprep.subr.bf16.mxu0 0
      %3740 = vmatpush1.bf16.msra.mxu0 0
      %3741 = vmatprep.subr.bf16.mxu0 0
      %3742 = vmatpush1.bf16.msra.mxu0 0
      %3743 = vmatprep.mubr.bf16.mxu0 0
      %3744 = vmatmul.mubr.bf16.gmra.mrb[0].mxu0 %v3653
      %v3745 = vpop.f32.mrb[0].mxu0
      %v3746 = vadd.f32 0.0, %v3745
      %v3747 = vpop.f32.mrb[0].mxu0
      %v3748 = vadd.f32 0.0, %v3747
      %v3749 = vpop.f32.mrb[0].mxu0
      %v3750 = vpop.f32.mrb[0].mxu0
      %3751 = vdwg.mxu0
      %3752 = vmatprep.subr.bf16.mxu0 0
      %3753 = vmatpush1.bf16.msra.mxu0 %v3668
      %3754 = vmatprep.subr.bf16.mxu0 0
      %3755 = vmatpush1.bf16.msra.mxu0 0
      %3756 = vmatprep.subr.bf16.mxu0 0
      %3757 = vmatpush1.bf16.msra.mxu0 0
      %3758 = vmatprep.subr.bf16.mxu0 0
      %3759 = vmatpush1.bf16.msra.mxu0 0
      %3760 = vmatprep.subr.bf16.mxu0 0
      %3761 = vmatpush1.bf16.msra.mxu0 0
      %3762 = vmatprep.subr.bf16.mxu0 0
      %3763 = vmatpush1.bf16.msra.mxu0 0
      %3764 = vmatprep.subr.bf16.mxu0 0
      %3765 = vmatpush1.bf16.msra.mxu0 0
      %3766 = vmatprep.subr.bf16.mxu0 0
      %3767 = vmatpush1.bf16.msra.mxu0 0
      %3768 = vmatprep.subr.bf16.mxu0 0
      %3769 = vmatpush1.bf16.msra.mxu0 0
      %3770 = vmatprep.subr.bf16.mxu0 0
      %3771 = vmatpush1.bf16.msra.mxu0 0
      %3772 = vmatprep.subr.bf16.mxu0 0
      %3773 = vmatpush1.bf16.msra.mxu0 0
      %3774 = vmatprep.subr.bf16.mxu0 0
      %3775 = vmatpush1.bf16.msra.mxu0 0
      %3776 = vmatprep.subr.bf16.mxu0 0
      %3777 = vmatpush1.bf16.msra.mxu0 0
      %3778 = vmatprep.subr.bf16.mxu0 0
      %3779 = vmatpush1.bf16.msra.mxu0 0
      %3780 = vmatprep.subr.bf16.mxu0 0
      %3781 = vmatpush1.bf16.msra.mxu0 0
      %3782 = vmatprep.subr.bf16.mxu0 0
      %3783 = vmatpush1.bf16.msra.mxu0 0
      %3784 = vmatprep.mubr.bf16.mxu0 0
      %3785 = vmatmul.mubr.bf16.gmra.mrb[0].mxu0 %v3653
      %v3786 = vpop.f32.mrb[0].mxu0
      %v3787 = vadd.f32 0.0, %v3786
      %v3788 = vpop.f32.mrb[0].mxu0
      %v3789 = vpop.f32.mrb[0].mxu0
      %v3790 = vpop.f32.mrb[0].mxu0
      %3791 = vdwg.mxu0
      %v3792 = vadd.f32 %v3627, %v3705
      %v3793 = vadd.f32 %v3628, %v3707
      %v3794 = vadd.f32 %v3629, %v3746
      %v3795 = vadd.f32 %v3630, %v3748
      %v3796 = vadd.f32 %v3631, %v3787
      %s3797 = scalar_lea.vmem %s1, 84
      %v3798 = vld [vmem:[%s3797] sm:$0xf]
      %3799 = vrot.lane.b32.xlu0 %v2638, 29
      %v3800 = vpop.permute.xlu0 %3799
      %3801 = vrot.lane.b32.xlu0 %v2639, 29
      %v3802 = vpop.permute.xlu0 %3801
      %3803 = vrot.lane.b32.xlu0 %v2640, 29
      %v3804 = vpop.permute.xlu0 %3803
      %3805 = vrot.lane.b32.xlu0 %v2641, 29
      %v3806 = vpop.permute.xlu0 %3805
      %3807 = vrot.lane.b32.xlu0 %v2642, 29
      %v3808 = vpop.permute.xlu0 %3807
      %3809 = vrot.lane.b32.xlu0 %v2643, 29
      %v3810 = vpop.permute.xlu0 %3809
      %vm3811 = vcmask 236544
      %v3812 = vsel %vm3811, %v3800, %v3802
      %v3813 = vsel %vm3811, %v3802, %v3804
      %v3814 = vsel %vm3811, %v3804, %v3806
      %v3815 = vsel %vm3811, %v3806, %v3808
      %v3816 = vsel %vm3811, %v3808, %v3810
      %v3818 = vsel %vm346, %v3798, 0
      %v3821 = vsel %vm350, %v3812, 0
      %v3824 = vsel %vm350, %v3813, 0
      %v3827 = vsel %vm350, %v3814, 0
      %v3830 = vsel %vm350, %v3815, 0
      %v3833 = vsel %vm350, %v3816, 0
      %3835 = vmatprep.subr.bf16.mxu0 %v3824
      %3836 = vmatpush1.bf16.msra.mxu0 %v3821
      %3837 = vmatprep.subr.bf16.mxu0 0
      %3838 = vmatpush1.bf16.msra.mxu0 0
      %3839 = vmatprep.subr.bf16.mxu0 0
      %3840 = vmatpush1.bf16.msra.mxu0 0
      %3841 = vmatprep.subr.bf16.mxu0 0
      %3842 = vmatpush1.bf16.msra.mxu0 0
      %3843 = vmatprep.subr.bf16.mxu0 0
      %3844 = vmatpush1.bf16.msra.mxu0 0
      %3845 = vmatprep.subr.bf16.mxu0 0
      %3846 = vmatpush1.bf16.msra.mxu0 0
      %3847 = vmatprep.subr.bf16.mxu0 0
      %3848 = vmatpush1.bf16.msra.mxu0 0
      %3849 = vmatprep.subr.bf16.mxu0 0
      %3850 = vmatpush1.bf16.msra.mxu0 0
      %3851 = vmatprep.subr.bf16.mxu0 0
      %3852 = vmatpush1.bf16.msra.mxu0 0
      %3853 = vmatprep.subr.bf16.mxu0 0
      %3854 = vmatpush1.bf16.msra.mxu0 0
      %3855 = vmatprep.subr.bf16.mxu0 0
      %3856 = vmatpush1.bf16.msra.mxu0 0
      %3857 = vmatprep.subr.bf16.mxu0 0
      %3858 = vmatpush1.bf16.msra.mxu0 0
      %3859 = vmatprep.subr.bf16.mxu0 0
      %3860 = vmatpush1.bf16.msra.mxu0 0
      %3861 = vmatprep.subr.bf16.mxu0 0
      %3862 = vmatpush1.bf16.msra.mxu0 0
      %3863 = vmatprep.subr.bf16.mxu0 0
      %3864 = vmatpush1.bf16.msra.mxu0 0
      %3865 = vmatprep.subr.bf16.mxu0 0
      %3866 = vmatpush1.bf16.msra.mxu0 0
      %3867 = vmatprep.mubr.bf16.mxu0 0
      %3868 = vmatmul.mubr.bf16.gmra.mrb[0].mxu0 %v3818
      %v3869 = vpop.f32.mrb[0].mxu0
      %v3870 = vadd.f32 0.0, %v3869
      %v3871 = vpop.f32.mrb[0].mxu0
      %v3872 = vadd.f32 0.0, %v3871
      %v3873 = vpop.f32.mrb[0].mxu0
      %v3874 = vpop.f32.mrb[0].mxu0
      %3875 = vdwg.mxu0
      %3876 = vmatprep.subr.bf16.mxu0 %v3830
      %3877 = vmatpush1.bf16.msra.mxu0 %v3827
      %3878 = vmatprep.subr.bf16.mxu0 0
      %3879 = vmatpush1.bf16.msra.mxu0 0
      %3880 = vmatprep.subr.bf16.mxu0 0
      %3881 = vmatpush1.bf16.msra.mxu0 0
      %3882 = vmatprep.subr.bf16.mxu0 0
      %3883 = vmatpush1.bf16.msra.mxu0 0
      %3884 = vmatprep.subr.bf16.mxu0 0
      %3885 = vmatpush1.bf16.msra.mxu0 0
      %3886 = vmatprep.subr.bf16.mxu0 0
      %3887 = vmatpush1.bf16.msra.mxu0 0
      %3888 = vmatprep.subr.bf16.mxu0 0
      %3889 = vmatpush1.bf16.msra.mxu0 0
      %3890 = vmatprep.subr.bf16.mxu0 0
      %3891 = vmatpush1.bf16.msra.mxu0 0
      %3892 = vmatprep.subr.bf16.mxu0 0
      %3893 = vmatpush1.bf16.msra.mxu0 0
      %3894 = vmatprep.subr.bf16.mxu0 0
      %3895 = vmatpush1.bf16.msra.mxu0 0
      %3896 = vmatprep.subr.bf16.mxu0 0
      %3897 = vmatpush1.bf16.msra.mxu0 0
      %3898 = vmatprep.subr.bf16.mxu0 0
      %3899 = vmatpush1.bf16.msra.mxu0 0
      %3900 = vmatprep.subr.bf16.mxu0 0
      %3901 = vmatpush1.bf16.msra.mxu0 0
      %3902 = vmatprep.subr.bf16.mxu0 0
      %3903 = vmatpush1.bf16.msra.mxu0 0
      %3904 = vmatprep.subr.bf16.mxu0 0
      %3905 = vmatpush1.bf16.msra.mxu0 0
      %3906 = vmatprep.subr.bf16.mxu0 0
      %3907 = vmatpush1.bf16.msra.mxu0 0
      %3908 = vmatprep.mubr.bf16.mxu0 0
      %3909 = vmatmul.mubr.bf16.gmra.mrb[0].mxu0 %v3818
      %v3910 = vpop.f32.mrb[0].mxu0
      %v3911 = vadd.f32 0.0, %v3910
      %v3912 = vpop.f32.mrb[0].mxu0
      %v3913 = vadd.f32 0.0, %v3912
      %v3914 = vpop.f32.mrb[0].mxu0
      %v3915 = vpop.f32.mrb[0].mxu0
      %3916 = vdwg.mxu0
      %3917 = vmatprep.subr.bf16.mxu0 0
      %3918 = vmatpush1.bf16.msra.mxu0 %v3833
      %3919 = vmatprep.subr.bf16.mxu0 0
      %3920 = vmatpush1.bf16.msra.mxu0 0
      %3921 = vmatprep.subr.bf16.mxu0 0
      %3922 = vmatpush1.bf16.msra.mxu0 0
      %3923 = vmatprep.subr.bf16.mxu0 0
      %3924 = vmatpush1.bf16.msra.mxu0 0
      %3925 = vmatprep.subr.bf16.mxu0 0
      %3926 = vmatpush1.bf16.msra.mxu0 0
      %3927 = vmatprep.subr.bf16.mxu0 0
      %3928 = vmatpush1.bf16.msra.mxu0 0
      %3929 = vmatprep.subr.bf16.mxu0 0
      %3930 = vmatpush1.bf16.msra.mxu0 0
      %3931 = vmatprep.subr.bf16.mxu0 0
      %3932 = vmatpush1.bf16.msra.mxu0 0
      %3933 = vmatprep.subr.bf16.mxu0 0
      %3934 = vmatpush1.bf16.msra.mxu0 0
      %3935 = vmatprep.subr.bf16.mxu0 0
      %3936 = vmatpush1.bf16.msra.mxu0 0
      %3937 = vmatprep.subr.bf16.mxu0 0
      %3938 = vmatpush1.bf16.msra.mxu0 0
      %3939 = vmatprep.subr.bf16.mxu0 0
      %3940 = vmatpush1.bf16.msra.mxu0 0
      %3941 = vmatprep.subr.bf16.mxu0 0
      %3942 = vmatpush1.bf16.msra.mxu0 0
      %3943 = vmatprep.subr.bf16.mxu0 0
      %3944 = vmatpush1.bf16.msra.mxu0 0
      %3945 = vmatprep.subr.bf16.mxu0 0
      %3946 = vmatpush1.bf16.msra.mxu0 0
      %3947 = vmatprep.subr.bf16.mxu0 0
      %3948 = vmatpush1.bf16.msra.mxu0 0
      %3949 = vmatprep.mubr.bf16.mxu0 0
      %3950 = vmatmul.mubr.bf16.gmra.mrb[0].mxu0 %v3818
      %v3951 = vpop.f32.mrb[0].mxu0
      %v3952 = vadd.f32 0.0, %v3951
      %v3953 = vpop.f32.mrb[0].mxu0
      %v3954 = vpop.f32.mrb[0].mxu0
      %v3955 = vpop.f32.mrb[0].mxu0
      %3956 = vdwg.mxu0
      %v3957 = vadd.f32 %v3792, %v3870
      %v3958 = vadd.f32 %v3793, %v3872
      %v3959 = vadd.f32 %v3794, %v3911
      %v3960 = vadd.f32 %v3795, %v3913
      %v3961 = vadd.f32 %v3796, %v3952
      %s3962 = scalar_lea.vmem %s1, 88
      %v3963 = vld [vmem:[%s3962] sm:$0xf]
      %3964 = vrot.lane.b32.xlu0 %v2638, 28
      %v3965 = vpop.permute.xlu0 %3964
      %3966 = vrot.lane.b32.xlu0 %v2639, 28
      %v3967 = vpop.permute.xlu0 %3966
      %3968 = vrot.lane.b32.xlu0 %v2640, 28
      %v3969 = vpop.permute.xlu0 %3968
      %3970 = vrot.lane.b32.xlu0 %v2641, 28
      %v3971 = vpop.permute.xlu0 %3970
      %3972 = vrot.lane.b32.xlu0 %v2642, 28
      %v3973 = vpop.permute.xlu0 %3972
      %3974 = vrot.lane.b32.xlu0 %v2643, 28
      %v3975 = vpop.permute.xlu0 %3974
      %vm3976 = vcmask 228352
      %v3977 = vsel %vm3976, %v3965, %v3967
      %v3978 = vsel %vm3976, %v3967, %v3969
      %v3979 = vsel %vm3976, %v3969, %v3971
      %v3980 = vsel %vm3976, %v3971, %v3973
      %v3981 = vsel %vm3976, %v3973, %v3975
      %v3983 = vsel %vm346, %v3963, 0
      %v3986 = vsel %vm350, %v3977, 0
      %v3989 = vsel %vm350, %v3978, 0
      %v3992 = vsel %vm350, %v3979, 0
      %v3995 = vsel %vm350, %v3980, 0
      %v3998 = vsel %vm350, %v3981, 0
      %4000 = vmatprep.subr.bf16.mxu0 %v3989
      %4001 = vmatpush1.bf16.msra.mxu0 %v3986
      %4002 = vmatprep.subr.bf16.mxu0 0
      %4003 = vmatpush1.bf16.msra.mxu0 0
      %4004 = vmatprep.subr.bf16.mxu0 0
      %4005 = vmatpush1.bf16.msra.mxu0 0
      %4006 = vmatprep.subr.bf16.mxu0 0
      %4007 = vmatpush1.bf16.msra.mxu0 0
      %4008 = vmatprep.subr.bf16.mxu0 0
      %4009 = vmatpush1.bf16.msra.mxu0 0
      %4010 = vmatprep.subr.bf16.mxu0 0
      %4011 = vmatpush1.bf16.msra.mxu0 0
      %4012 = vmatprep.subr.bf16.mxu0 0
      %4013 = vmatpush1.bf16.msra.mxu0 0
      %4014 = vmatprep.subr.bf16.mxu0 0
      %4015 = vmatpush1.bf16.msra.mxu0 0
      %4016 = vmatprep.subr.bf16.mxu0 0
      %4017 = vmatpush1.bf16.msra.mxu0 0
      %4018 = vmatprep.subr.bf16.mxu0 0
      %4019 = vmatpush1.bf16.msra.mxu0 0
      %4020 = vmatprep.subr.bf16.mxu0 0
      %4021 = vmatpush1.bf16.msra.mxu0 0
      %4022 = vmatprep.subr.bf16.mxu0 0
      %4023 = vmatpush1.bf16.msra.mxu0 0
      %4024 = vmatprep.subr.bf16.mxu0 0
      %4025 = vmatpush1.bf16.msra.mxu0 0
      %4026 = vmatprep.subr.bf16.mxu0 0
      %4027 = vmatpush1.bf16.msra.mxu0 0
      %4028 = vmatprep.subr.bf16.mxu0 0
      %4029 = vmatpush1.bf16.msra.mxu0 0
      %4030 = vmatprep.subr.bf16.mxu0 0
      %4031 = vmatpush1.bf16.msra.mxu0 0
      %4032 = vmatprep.mubr.bf16.mxu0 0
      %4033 = vmatmul.mubr.bf16.gmra.mrb[0].mxu0 %v3983
      %v4034 = vpop.f32.mrb[0].mxu0
      %v4035 = vadd.f32 0.0, %v4034
      %v4036 = vpop.f32.mrb[0].mxu0
      %v4037 = vadd.f32 0.0, %v4036
      %v4038 = vpop.f32.mrb[0].mxu0
      %v4039 = vpop.f32.mrb[0].mxu0
      %4040 = vdwg.mxu0
      %4041 = vmatprep.subr.bf16.mxu0 %v3995
      %4042 = vmatpush1.bf16.msra.mxu0 %v3992
      %4043 = vmatprep.subr.bf16.mxu0 0
      %4044 = vmatpush1.bf16.msra.mxu0 0
      %4045 = vmatprep.subr.bf16.mxu0 0
      %4046 = vmatpush1.bf16.msra.mxu0 0
      %4047 = vmatprep.subr.bf16.mxu0 0
      %4048 = vmatpush1.bf16.msra.mxu0 0
      %4049 = vmatprep.subr.bf16.mxu0 0
      %4050 = vmatpush1.bf16.msra.mxu0 0
      %4051 = vmatprep.subr.bf16.mxu0 0
      %4052 = vmatpush1.bf16.msra.mxu0 0
      %4053 = vmatprep.subr.bf16.mxu0 0
      %4054 = vmatpush1.bf16.msra.mxu0 0
      %4055 = vmatprep.subr.bf16.mxu0 0
      %4056 = vmatpush1.bf16.msra.mxu0 0
      %4057 = vmatprep.subr.bf16.mxu0 0
      %4058 = vmatpush1.bf16.msra.mxu0 0
      %4059 = vmatprep.subr.bf16.mxu0 0
      %4060 = vmatpush1.bf16.msra.mxu0 0
      %4061 = vmatprep.subr.bf16.mxu0 0
      %4062 = vmatpush1.bf16.msra.mxu0 0
      %4063 = vmatprep.subr.bf16.mxu0 0
      %4064 = vmatpush1.bf16.msra.mxu0 0
      %4065 = vmatprep.subr.bf16.mxu0 0
      %4066 = vmatpush1.bf16.msra.mxu0 0
      %4067 = vmatprep.subr.bf16.mxu0 0
      %4068 = vmatpush1.bf16.msra.mxu0 0
      %4069 = vmatprep.subr.bf16.mxu0 0
      %4070 = vmatpush1.bf16.msra.mxu0 0
      %4071 = vmatprep.subr.bf16.mxu0 0
      %4072 = vmatpush1.bf16.msra.mxu0 0
      %4073 = vmatprep.mubr.bf16.mxu0 0
      %4074 = vmatmul.mubr.bf16.gmra.mrb[0].mxu0 %v3983
      %v4075 = vpop.f32.mrb[0].mxu0
      %v4076 = vadd.f32 0.0, %v4075
      %v4077 = vpop.f32.mrb[0].mxu0
      %v4078 = vadd.f32 0.0, %v4077
      %v4079 = vpop.f32.mrb[0].mxu0
      %v4080 = vpop.f32.mrb[0].mxu0
      %4081 = vdwg.mxu0
      %4082 = vmatprep.subr.bf16.mxu0 0
      %4083 = vmatpush1.bf16.msra.mxu0 %v3998
      %4084 = vmatprep.subr.bf16.mxu0 0
      %4085 = vmatpush1.bf16.msra.mxu0 0
      %4086 = vmatprep.subr.bf16.mxu0 0
      %4087 = vmatpush1.bf16.msra.mxu0 0
      %4088 = vmatprep.subr.bf16.mxu0 0
      %4089 = vmatpush1.bf16.msra.mxu0 0
      %4090 = vmatprep.subr.bf16.mxu0 0
      %4091 = vmatpush1.bf16.msra.mxu0 0
      %4092 = vmatprep.subr.bf16.mxu0 0
      %4093 = vmatpush1.bf16.msra.mxu0 0
      %4094 = vmatprep.subr.bf16.mxu0 0
      %4095 = vmatpush1.bf16.msra.mxu0 0
      %4096 = vmatprep.subr.bf16.mxu0 0
      %4097 = vmatpush1.bf16.msra.mxu0 0
      %4098 = vmatprep.subr.bf16.mxu0 0
      %4099 = vmatpush1.bf16.msra.mxu0 0
      %4100 = vmatprep.subr.bf16.mxu0 0
      %4101 = vmatpush1.bf16.msra.mxu0 0
      %4102 = vmatprep.subr.bf16.mxu0 0
      %4103 = vmatpush1.bf16.msra.mxu0 0
      %4104 = vmatprep.subr.bf16.mxu0 0
      %4105 = vmatpush1.bf16.msra.mxu0 0
      %4106 = vmatprep.subr.bf16.mxu0 0
      %4107 = vmatpush1.bf16.msra.mxu0 0
      %4108 = vmatprep.subr.bf16.mxu0 0
      %4109 = vmatpush1.bf16.msra.mxu0 0
      %4110 = vmatprep.subr.bf16.mxu0 0
      %4111 = vmatpush1.bf16.msra.mxu0 0
      %4112 = vmatprep.subr.bf16.mxu0 0
      %4113 = vmatpush1.bf16.msra.mxu0 0
      %4114 = vmatprep.mubr.bf16.mxu0 0
      %4115 = vmatmul.mubr.bf16.gmra.mrb[0].mxu0 %v3983
      %v4116 = vpop.f32.mrb[0].mxu0
      %v4117 = vadd.f32 0.0, %v4116
      %v4118 = vpop.f32.mrb[0].mxu0
      %v4119 = vpop.f32.mrb[0].mxu0
      %v4120 = vpop.f32.mrb[0].mxu0
      %4121 = vdwg.mxu0
      %v4122 = vadd.f32 %v3957, %v4035
      %v4123 = vadd.f32 %v3958, %v4037
      %v4124 = vadd.f32 %v3959, %v4076
      %v4125 = vadd.f32 %v3960, %v4078
      %v4126 = vadd.f32 %v3961, %v4117
      %s4127 = scalar_lea.vmem %s1, 92
      %v4128 = vld [vmem:[%s4127] sm:$0xf]
      %4129 = vrot.lane.b32.xlu0 %v2638, 27
      %v4130 = vpop.permute.xlu0 %4129
      %4131 = vrot.lane.b32.xlu0 %v2639, 27
      %v4132 = vpop.permute.xlu0 %4131
      %4133 = vrot.lane.b32.xlu0 %v2640, 27
      %v4134 = vpop.permute.xlu0 %4133
      %4135 = vrot.lane.b32.xlu0 %v2641, 27
      %v4136 = vpop.permute.xlu0 %4135
      %4137 = vrot.lane.b32.xlu0 %v2642, 27
      %v4138 = vpop.permute.xlu0 %4137
      %4139 = vrot.lane.b32.xlu0 %v2643, 27
      %v4140 = vpop.permute.xlu0 %4139
      %vm4141 = vcmask 220160
      %v4142 = vsel %vm4141, %v4130, %v4132
      %v4143 = vsel %vm4141, %v4132, %v4134
      %v4144 = vsel %vm4141, %v4134, %v4136
      %v4145 = vsel %vm4141, %v4136, %v4138
      %v4146 = vsel %vm4141, %v4138, %v4140
      %v4148 = vsel %vm346, %v4128, 0
      %v4151 = vsel %vm350, %v4142, 0
      %v4154 = vsel %vm350, %v4143, 0
      %v4157 = vsel %vm350, %v4144, 0
      %v4160 = vsel %vm350, %v4145, 0
      %v4163 = vsel %vm350, %v4146, 0
      %4165 = vmatprep.subr.bf16.mxu0 %v4154
      %4166 = vmatpush1.bf16.msra.mxu0 %v4151
      %4167 = vmatprep.subr.bf16.mxu0 0
      %4168 = vmatpush1.bf16.msra.mxu0 0
      %4169 = vmatprep.subr.bf16.mxu0 0
      %4170 = vmatpush1.bf16.msra.mxu0 0
      %4171 = vmatprep.subr.bf16.mxu0 0
      %4172 = vmatpush1.bf16.msra.mxu0 0
      %4173 = vmatprep.subr.bf16.mxu0 0
      %4174 = vmatpush1.bf16.msra.mxu0 0
      %4175 = vmatprep.subr.bf16.mxu0 0
      %4176 = vmatpush1.bf16.msra.mxu0 0
      %4177 = vmatprep.subr.bf16.mxu0 0
      %4178 = vmatpush1.bf16.msra.mxu0 0
      %4179 = vmatprep.subr.bf16.mxu0 0
      %4180 = vmatpush1.bf16.msra.mxu0 0
      %4181 = vmatprep.subr.bf16.mxu0 0
      %4182 = vmatpush1.bf16.msra.mxu0 0
      %4183 = vmatprep.subr.bf16.mxu0 0
      %4184 = vmatpush1.bf16.msra.mxu0 0
      %4185 = vmatprep.subr.bf16.mxu0 0
      %4186 = vmatpush1.bf16.msra.mxu0 0
      %4187 = vmatprep.subr.bf16.mxu0 0
      %4188 = vmatpush1.bf16.msra.mxu0 0
      %4189 = vmatprep.subr.bf16.mxu0 0
      %4190 = vmatpush1.bf16.msra.mxu0 0
      %4191 = vmatprep.subr.bf16.mxu0 0
      %4192 = vmatpush1.bf16.msra.mxu0 0
      %4193 = vmatprep.subr.bf16.mxu0 0
      %4194 = vmatpush1.bf16.msra.mxu0 0
      %4195 = vmatprep.subr.bf16.mxu0 0
      %4196 = vmatpush1.bf16.msra.mxu0 0
      %4197 = vmatprep.mubr.bf16.mxu0 0
      %4198 = vmatmul.mubr.bf16.gmra.mrb[0].mxu0 %v4148
      %v4199 = vpop.f32.mrb[0].mxu0
      %v4200 = vadd.f32 0.0, %v4199
      %v4201 = vpop.f32.mrb[0].mxu0
      %v4202 = vadd.f32 0.0, %v4201
      %v4203 = vpop.f32.mrb[0].mxu0
      %v4204 = vpop.f32.mrb[0].mxu0
      %4205 = vdwg.mxu0
      %4206 = vmatprep.subr.bf16.mxu0 %v4160
      %4207 = vmatpush1.bf16.msra.mxu0 %v4157
      %4208 = vmatprep.subr.bf16.mxu0 0
      %4209 = vmatpush1.bf16.msra.mxu0 0
      %4210 = vmatprep.subr.bf16.mxu0 0
      %4211 = vmatpush1.bf16.msra.mxu0 0
      %4212 = vmatprep.subr.bf16.mxu0 0
      %4213 = vmatpush1.bf16.msra.mxu0 0
      %4214 = vmatprep.subr.bf16.mxu0 0
      %4215 = vmatpush1.bf16.msra.mxu0 0
      %4216 = vmatprep.subr.bf16.mxu0 0
      %4217 = vmatpush1.bf16.msra.mxu0 0
      %4218 = vmatprep.subr.bf16.mxu0 0
      %4219 = vmatpush1.bf16.msra.mxu0 0
      %4220 = vmatprep.subr.bf16.mxu0 0
      %4221 = vmatpush1.bf16.msra.mxu0 0
      %4222 = vmatprep.subr.bf16.mxu0 0
      %4223 = vmatpush1.bf16.msra.mxu0 0
      %4224 = vmatprep.subr.bf16.mxu0 0
      %4225 = vmatpush1.bf16.msra.mxu0 0
      %4226 = vmatprep.subr.bf16.mxu0 0
      %4227 = vmatpush1.bf16.msra.mxu0 0
      %4228 = vmatprep.subr.bf16.mxu0 0
      %4229 = vmatpush1.bf16.msra.mxu0 0
      %4230 = vmatprep.subr.bf16.mxu0 0
      %4231 = vmatpush1.bf16.msra.mxu0 0
      %4232 = vmatprep.subr.bf16.mxu0 0
      %4233 = vmatpush1.bf16.msra.mxu0 0
      %4234 = vmatprep.subr.bf16.mxu0 0
      %4235 = vmatpush1.bf16.msra.mxu0 0
      %4236 = vmatprep.subr.bf16.mxu0 0
      %4237 = vmatpush1.bf16.msra.mxu0 0
      %4238 = vmatprep.mubr.bf16.mxu0 0
      %4239 = vmatmul.mubr.bf16.gmra.mrb[0].mxu0 %v4148
      %v4240 = vpop.f32.mrb[0].mxu0
      %v4241 = vadd.f32 0.0, %v4240
      %v4242 = vpop.f32.mrb[0].mxu0
      %v4243 = vadd.f32 0.0, %v4242
      %v4244 = vpop.f32.mrb[0].mxu0
      %v4245 = vpop.f32.mrb[0].mxu0
      %4246 = vdwg.mxu0
      %4247 = vmatprep.subr.bf16.mxu0 0
      %4248 = vmatpush1.bf16.msra.mxu0 %v4163
      %4249 = vmatprep.subr.bf16.mxu0 0
      %4250 = vmatpush1.bf16.msra.mxu0 0
      %4251 = vmatprep.subr.bf16.mxu0 0
      %4252 = vmatpush1.bf16.msra.mxu0 0
      %4253 = vmatprep.subr.bf16.mxu0 0
      %4254 = vmatpush1.bf16.msra.mxu0 0
      %4255 = vmatprep.subr.bf16.mxu0 0
      %4256 = vmatpush1.bf16.msra.mxu0 0
      %4257 = vmatprep.subr.bf16.mxu0 0
      %4258 = vmatpush1.bf16.msra.mxu0 0
      %4259 = vmatprep.subr.bf16.mxu0 0
      %4260 = vmatpush1.bf16.msra.mxu0 0
      %4261 = vmatprep.subr.bf16.mxu0 0
      %4262 = vmatpush1.bf16.msra.mxu0 0
      %4263 = vmatprep.subr.bf16.mxu0 0
      %4264 = vmatpush1.bf16.msra.mxu0 0
      %4265 = vmatprep.subr.bf16.mxu0 0
      %4266 = vmatpush1.bf16.msra.mxu0 0
      %4267 = vmatprep.subr.bf16.mxu0 0
      %4268 = vmatpush1.bf16.msra.mxu0 0
      %4269 = vmatprep.subr.bf16.mxu0 0
      %4270 = vmatpush1.bf16.msra.mxu0 0
      %4271 = vmatprep.subr.bf16.mxu0 0
      %4272 = vmatpush1.bf16.msra.mxu0 0
      %4273 = vmatprep.subr.bf16.mxu0 0
      %4274 = vmatpush1.bf16.msra.mxu0 0
      %4275 = vmatprep.subr.bf16.mxu0 0
      %4276 = vmatpush1.bf16.msra.mxu0 0
      %4277 = vmatprep.subr.bf16.mxu0 0
      %4278 = vmatpush1.bf16.msra.mxu0 0
      %4279 = vmatprep.mubr.bf16.mxu0 0
      %4280 = vmatmul.mubr.bf16.gmra.mrb[0].mxu0 %v4148
      %v4281 = vpop.f32.mrb[0].mxu0
      %v4282 = vadd.f32 0.0, %v4281
      %v4283 = vpop.f32.mrb[0].mxu0
      %v4284 = vpop.f32.mrb[0].mxu0
      %v4285 = vpop.f32.mrb[0].mxu0
      %4286 = vdwg.mxu0
      %v4287 = vadd.f32 %v4122, %v4200
      %v4288 = vadd.f32 %v4123, %v4202
      %v4289 = vadd.f32 %v4124, %v4241
      %v4290 = vadd.f32 %v4125, %v4243
      %v4291 = vadd.f32 %v4126, %v4282
      %s4292 = scalar_lea.vmem %s1, 96
      %v4293 = vld [vmem:[%s4292] sm:$0xf]
      %4294 = vrot.lane.b32.xlu0 %v2638, 19
      %v4295 = vpop.permute.xlu0 %4294
      %4296 = vrot.lane.b32.xlu0 %v2639, 19
      %v4297 = vpop.permute.xlu0 %4296
      %4298 = vrot.lane.b32.xlu0 %v2640, 19
      %v4299 = vpop.permute.xlu0 %4298
      %4300 = vrot.lane.b32.xlu0 %v2641, 19
      %v4301 = vpop.permute.xlu0 %4300
      %4302 = vrot.lane.b32.xlu0 %v2642, 19
      %v4303 = vpop.permute.xlu0 %4302
      %4304 = vrot.lane.b32.xlu0 %v2643, 19
      %v4305 = vpop.permute.xlu0 %4304
      %vm4306 = vcmask 154624
      %v4307 = vsel %vm4306, %v4295, %v4297
      %v4308 = vsel %vm4306, %v4297, %v4299
      %v4309 = vsel %vm4306, %v4299, %v4301
      %v4310 = vsel %vm4306, %v4301, %v4303
      %v4311 = vsel %vm4306, %v4303, %v4305
      %v4313 = vsel %vm346, %v4293, 0
      %v4316 = vsel %vm350, %v4307, 0
      %v4319 = vsel %vm350, %v4308, 0
      %v4322 = vsel %vm350, %v4309, 0
      %v4325 = vsel %vm350, %v4310, 0
      %v4328 = vsel %vm350, %v4311, 0
      %4330 = vmatprep.subr.bf16.mxu0 %v4319
      %4331 = vmatpush1.bf16.msra.mxu0 %v4316
      %4332 = vmatprep.subr.bf16.mxu0 0
      %4333 = vmatpush1.bf16.msra.mxu0 0
      %4334 = vmatprep.subr.bf16.mxu0 0
      %4335 = vmatpush1.bf16.msra.mxu0 0
      %4336 = vmatprep.subr.bf16.mxu0 0
      %4337 = vmatpush1.bf16.msra.mxu0 0
      %4338 = vmatprep.subr.bf16.mxu0 0
      %4339 = vmatpush1.bf16.msra.mxu0 0
      %4340 = vmatprep.subr.bf16.mxu0 0
      %4341 = vmatpush1.bf16.msra.mxu0 0
      %4342 = vmatprep.subr.bf16.mxu0 0
      %4343 = vmatpush1.bf16.msra.mxu0 0
      %4344 = vmatprep.subr.bf16.mxu0 0
      %4345 = vmatpush1.bf16.msra.mxu0 0
      %4346 = vmatprep.subr.bf16.mxu0 0
      %4347 = vmatpush1.bf16.msra.mxu0 0
      %4348 = vmatprep.subr.bf16.mxu0 0
      %4349 = vmatpush1.bf16.msra.mxu0 0
      %4350 = vmatprep.subr.bf16.mxu0 0
      %4351 = vmatpush1.bf16.msra.mxu0 0
      %4352 = vmatprep.subr.bf16.mxu0 0
      %4353 = vmatpush1.bf16.msra.mxu0 0
      %4354 = vmatprep.subr.bf16.mxu0 0
      %4355 = vmatpush1.bf16.msra.mxu0 0
      %4356 = vmatprep.subr.bf16.mxu0 0
      %4357 = vmatpush1.bf16.msra.mxu0 0
      %4358 = vmatprep.subr.bf16.mxu0 0
      %4359 = vmatpush1.bf16.msra.mxu0 0
      %4360 = vmatprep.subr.bf16.mxu0 0
      %4361 = vmatpush1.bf16.msra.mxu0 0
      %4362 = vmatprep.mubr.bf16.mxu0 0
      %4363 = vmatmul.mubr.bf16.gmra.mrb[0].mxu0 %v4313
      %v4364 = vpop.f32.mrb[0].mxu0
      %v4365 = vadd.f32 0.0, %v4364
      %v4366 = vpop.f32.mrb[0].mxu0
      %v4367 = vadd.f32 0.0, %v4366
      %v4368 = vpop.f32.mrb[0].mxu0
      %v4369 = vpop.f32.mrb[0].mxu0
      %4370 = vdwg.mxu0
      %4371 = vmatprep.subr.bf16.mxu0 %v4325
      %4372 = vmatpush1.bf16.msra.mxu0 %v4322
      %4373 = vmatprep.subr.bf16.mxu0 0
      %4374 = vmatpush1.bf16.msra.mxu0 0
      %4375 = vmatprep.subr.bf16.mxu0 0
      %4376 = vmatpush1.bf16.msra.mxu0 0
      %4377 = vmatprep.subr.bf16.mxu0 0
      %4378 = vmatpush1.bf16.msra.mxu0 0
      %4379 = vmatprep.subr.bf16.mxu0 0
      %4380 = vmatpush1.bf16.msra.mxu0 0
      %4381 = vmatprep.subr.bf16.mxu0 0
      %4382 = vmatpush1.bf16.msra.mxu0 0
      %4383 = vmatprep.subr.bf16.mxu0 0
      %4384 = vmatpush1.bf16.msra.mxu0 0
      %4385 = vmatprep.subr.bf16.mxu0 0
      %4386 = vmatpush1.bf16.msra.mxu0 0
      %4387 = vmatprep.subr.bf16.mxu0 0
      %4388 = vmatpush1.bf16.msra.mxu0 0
      %4389 = vmatprep.subr.bf16.mxu0 0
      %4390 = vmatpush1.bf16.msra.mxu0 0
      %4391 = vmatprep.subr.bf16.mxu0 0
      %4392 = vmatpush1.bf16.msra.mxu0 0
      %4393 = vmatprep.subr.bf16.mxu0 0
      %4394 = vmatpush1.bf16.msra.mxu0 0
      %4395 = vmatprep.subr.bf16.mxu0 0
      %4396 = vmatpush1.bf16.msra.mxu0 0
      %4397 = vmatprep.subr.bf16.mxu0 0
      %4398 = vmatpush1.bf16.msra.mxu0 0
      %4399 = vmatprep.subr.bf16.mxu0 0
      %4400 = vmatpush1.bf16.msra.mxu0 0
      %4401 = vmatprep.subr.bf16.mxu0 0
      %4402 = vmatpush1.bf16.msra.mxu0 0
      %4403 = vmatprep.mubr.bf16.mxu0 0
      %4404 = vmatmul.mubr.bf16.gmra.mrb[0].mxu0 %v4313
      %v4405 = vpop.f32.mrb[0].mxu0
      %v4406 = vadd.f32 0.0, %v4405
      %v4407 = vpop.f32.mrb[0].mxu0
      %v4408 = vadd.f32 0.0, %v4407
      %v4409 = vpop.f32.mrb[0].mxu0
      %v4410 = vpop.f32.mrb[0].mxu0
      %4411 = vdwg.mxu0
      %4412 = vmatprep.subr.bf16.mxu0 0
      %4413 = vmatpush1.bf16.msra.mxu0 %v4328
      %4414 = vmatprep.subr.bf16.mxu0 0
      %4415 = vmatpush1.bf16.msra.mxu0 0
      %4416 = vmatprep.subr.bf16.mxu0 0
      %4417 = vmatpush1.bf16.msra.mxu0 0
      %4418 = vmatprep.subr.bf16.mxu0 0
      %4419 = vmatpush1.bf16.msra.mxu0 0
      %4420 = vmatprep.subr.bf16.mxu0 0
      %4421 = vmatpush1.bf16.msra.mxu0 0
      %4422 = vmatprep.subr.bf16.mxu0 0
      %4423 = vmatpush1.bf16.msra.mxu0 0
      %4424 = vmatprep.subr.bf16.mxu0 0
      %4425 = vmatpush1.bf16.msra.mxu0 0
      %4426 = vmatprep.subr.bf16.mxu0 0
      %4427 = vmatpush1.bf16.msra.mxu0 0
      %4428 = vmatprep.subr.bf16.mxu0 0
      %4429 = vmatpush1.bf16.msra.mxu0 0
      %4430 = vmatprep.subr.bf16.mxu0 0
      %4431 = vmatpush1.bf16.msra.mxu0 0
      %4432 = vmatprep.subr.bf16.mxu0 0
      %4433 = vmatpush1.bf16.msra.mxu0 0
      %4434 = vmatprep.subr.bf16.mxu0 0
      %4435 = vmatpush1.bf16.msra.mxu0 0
      %4436 = vmatprep.subr.bf16.mxu0 0
      %4437 = vmatpush1.bf16.msra.mxu0 0
      %4438 = vmatprep.subr.bf16.mxu0 0
      %4439 = vmatpush1.bf16.msra.mxu0 0
      %4440 = vmatprep.subr.bf16.mxu0 0
      %4441 = vmatpush1.bf16.msra.mxu0 0
      %4442 = vmatprep.subr.bf16.mxu0 0
      %4443 = vmatpush1.bf16.msra.mxu0 0
      %4444 = vmatprep.mubr.bf16.mxu0 0
      %4445 = vmatmul.mubr.bf16.gmra.mrb[0].mxu0 %v4313
      %v4446 = vpop.f32.mrb[0].mxu0
      %v4447 = vadd.f32 0.0, %v4446
      %v4448 = vpop.f32.mrb[0].mxu0
      %v4449 = vpop.f32.mrb[0].mxu0
      %v4450 = vpop.f32.mrb[0].mxu0
      %4451 = vdwg.mxu0
      %v4452 = vadd.f32 %v4287, %v4365
      %v4453 = vadd.f32 %v4288, %v4367
      %v4454 = vadd.f32 %v4289, %v4406
      %v4455 = vadd.f32 %v4290, %v4408
      %v4456 = vadd.f32 %v4291, %v4447
      %s4457 = scalar_lea.vmem %s1, 100
      %v4458 = vld [vmem:[%s4457] sm:$0xf]
      %4459 = vrot.lane.b32.xlu0 %v2638, 18
      %v4460 = vpop.permute.xlu0 %4459
      %4461 = vrot.lane.b32.xlu0 %v2639, 18
      %v4462 = vpop.permute.xlu0 %4461
      %4463 = vrot.lane.b32.xlu0 %v2640, 18
      %v4464 = vpop.permute.xlu0 %4463
      %4465 = vrot.lane.b32.xlu0 %v2641, 18
      %v4466 = vpop.permute.xlu0 %4465
      %4467 = vrot.lane.b32.xlu0 %v2642, 18
      %v4468 = vpop.permute.xlu0 %4467
      %4469 = vrot.lane.b32.xlu0 %v2643, 18
      %v4470 = vpop.permute.xlu0 %4469
      %vm4471 = vcmask 146432
      %v4472 = vsel %vm4471, %v4460, %v4462
      %v4473 = vsel %vm4471, %v4462, %v4464
      %v4474 = vsel %vm4471, %v4464, %v4466
      %v4475 = vsel %vm4471, %v4466, %v4468
      %v4476 = vsel %vm4471, %v4468, %v4470
      %v4478 = vsel %vm346, %v4458, 0
      %v4481 = vsel %vm350, %v4472, 0
      %v4484 = vsel %vm350, %v4473, 0
      %v4487 = vsel %vm350, %v4474, 0
      %v4490 = vsel %vm350, %v4475, 0
      %v4493 = vsel %vm350, %v4476, 0
      %4495 = vmatprep.subr.bf16.mxu0 %v4484
      %4496 = vmatpush1.bf16.msra.mxu0 %v4481
      %4497 = vmatprep.subr.bf16.mxu0 0
      %4498 = vmatpush1.bf16.msra.mxu0 0
      %4499 = vmatprep.subr.bf16.mxu0 0
      %4500 = vmatpush1.bf16.msra.mxu0 0
      %4501 = vmatprep.subr.bf16.mxu0 0
      %4502 = vmatpush1.bf16.msra.mxu0 0
      %4503 = vmatprep.subr.bf16.mxu0 0
      %4504 = vmatpush1.bf16.msra.mxu0 0
      %4505 = vmatprep.subr.bf16.mxu0 0
      %4506 = vmatpush1.bf16.msra.mxu0 0
      %4507 = vmatprep.subr.bf16.mxu0 0
      %4508 = vmatpush1.bf16.msra.mxu0 0
      %4509 = vmatprep.subr.bf16.mxu0 0
      %4510 = vmatpush1.bf16.msra.mxu0 0
      %4511 = vmatprep.subr.bf16.mxu0 0
      %4512 = vmatpush1.bf16.msra.mxu0 0
      %4513 = vmatprep.subr.bf16.mxu0 0
      %4514 = vmatpush1.bf16.msra.mxu0 0
      %4515 = vmatprep.subr.bf16.mxu0 0
      %4516 = vmatpush1.bf16.msra.mxu0 0
      %4517 = vmatprep.subr.bf16.mxu0 0
      %4518 = vmatpush1.bf16.msra.mxu0 0
      %4519 = vmatprep.subr.bf16.mxu0 0
      %4520 = vmatpush1.bf16.msra.mxu0 0
      %4521 = vmatprep.subr.bf16.mxu0 0
      %4522 = vmatpush1.bf16.msra.mxu0 0
      %4523 = vmatprep.subr.bf16.mxu0 0
      %4524 = vmatpush1.bf16.msra.mxu0 0
      %4525 = vmatprep.subr.bf16.mxu0 0
      %4526 = vmatpush1.bf16.msra.mxu0 0
      %4527 = vmatprep.mubr.bf16.mxu0 0
      %4528 = vmatmul.mubr.bf16.gmra.mrb[0].mxu0 %v4478
      %v4529 = vpop.f32.mrb[0].mxu0
      %v4530 = vadd.f32 0.0, %v4529
      %v4531 = vpop.f32.mrb[0].mxu0
      %v4532 = vadd.f32 0.0, %v4531
      %v4533 = vpop.f32.mrb[0].mxu0
      %v4534 = vpop.f32.mrb[0].mxu0
      %4535 = vdwg.mxu0
      %4536 = vmatprep.subr.bf16.mxu0 %v4490
      %4537 = vmatpush1.bf16.msra.mxu0 %v4487
      %4538 = vmatprep.subr.bf16.mxu0 0
      %4539 = vmatpush1.bf16.msra.mxu0 0
      %4540 = vmatprep.subr.bf16.mxu0 0
      %4541 = vmatpush1.bf16.msra.mxu0 0
      %4542 = vmatprep.subr.bf16.mxu0 0
      %4543 = vmatpush1.bf16.msra.mxu0 0
      %4544 = vmatprep.subr.bf16.mxu0 0
      %4545 = vmatpush1.bf16.msra.mxu0 0
      %4546 = vmatprep.subr.bf16.mxu0 0
      %4547 = vmatpush1.bf16.msra.mxu0 0
      %4548 = vmatprep.subr.bf16.mxu0 0
      %4549 = vmatpush1.bf16.msra.mxu0 0
      %4550 = vmatprep.subr.bf16.mxu0 0
      %4551 = vmatpush1.bf16.msra.mxu0 0
      %4552 = vmatprep.subr.bf16.mxu0 0
      %4553 = vmatpush1.bf16.msra.mxu0 0
      %4554 = vmatprep.subr.bf16.mxu0 0
      %4555 = vmatpush1.bf16.msra.mxu0 0
      %4556 = vmatprep.subr.bf16.mxu0 0
      %4557 = vmatpush1.bf16.msra.mxu0 0
      %4558 = vmatprep.subr.bf16.mxu0 0
      %4559 = vmatpush1.bf16.msra.mxu0 0
      %4560 = vmatprep.subr.bf16.mxu0 0
      %4561 = vmatpush1.bf16.msra.mxu0 0
      %4562 = vmatprep.subr.bf16.mxu0 0
      %4563 = vmatpush1.bf16.msra.mxu0 0
      %4564 = vmatprep.subr.bf16.mxu0 0
      %4565 = vmatpush1.bf16.msra.mxu0 0
      %4566 = vmatprep.subr.bf16.mxu0 0
      %4567 = vmatpush1.bf16.msra.mxu0 0
      %4568 = vmatprep.mubr.bf16.mxu0 0
      %4569 = vmatmul.mubr.bf16.gmra.mrb[0].mxu0 %v4478
      %v4570 = vpop.f32.mrb[0].mxu0
      %v4571 = vadd.f32 0.0, %v4570
      %v4572 = vpop.f32.mrb[0].mxu0
      %v4573 = vadd.f32 0.0, %v4572
      %v4574 = vpop.f32.mrb[0].mxu0
      %v4575 = vpop.f32.mrb[0].mxu0
      %4576 = vdwg.mxu0
      %4577 = vmatprep.subr.bf16.mxu0 0
      %4578 = vmatpush1.bf16.msra.mxu0 %v4493
      %4579 = vmatprep.subr.bf16.mxu0 0
      %4580 = vmatpush1.bf16.msra.mxu0 0
      %4581 = vmatprep.subr.bf16.mxu0 0
      %4582 = vmatpush1.bf16.msra.mxu0 0
      %4583 = vmatprep.subr.bf16.mxu0 0
      %4584 = vmatpush1.bf16.msra.mxu0 0
      %4585 = vmatprep.subr.bf16.mxu0 0
      %4586 = vmatpush1.bf16.msra.mxu0 0
      %4587 = vmatprep.subr.bf16.mxu0 0
      %4588 = vmatpush1.bf16.msra.mxu0 0
      %4589 = vmatprep.subr.bf16.mxu0 0
      %4590 = vmatpush1.bf16.msra.mxu0 0
      %4591 = vmatprep.subr.bf16.mxu0 0
      %4592 = vmatpush1.bf16.msra.mxu0 0
      %4593 = vmatprep.subr.bf16.mxu0 0
      %4594 = vmatpush1.bf16.msra.mxu0 0
      %4595 = vmatprep.subr.bf16.mxu0 0
      %4596 = vmatpush1.bf16.msra.mxu0 0
      %4597 = vmatprep.subr.bf16.mxu0 0
      %4598 = vmatpush1.bf16.msra.mxu0 0
      %4599 = vmatprep.subr.bf16.mxu0 0
      %4600 = vmatpush1.bf16.msra.mxu0 0
      %4601 = vmatprep.subr.bf16.mxu0 0
      %4602 = vmatpush1.bf16.msra.mxu0 0
      %4603 = vmatprep.subr.bf16.mxu0 0
      %4604 = vmatpush1.bf16.msra.mxu0 0
      %4605 = vmatprep.subr.bf16.mxu0 0
      %4606 = vmatpush1.bf16.msra.mxu0 0
      %4607 = vmatprep.subr.bf16.mxu0 0
      %4608 = vmatpush1.bf16.msra.mxu0 0
      %4609 = vmatprep.mubr.bf16.mxu0 0
      %4610 = vmatmul.mubr.bf16.gmra.mrb[0].mxu0 %v4478
      %v4611 = vpop.f32.mrb[0].mxu0
      %v4612 = vadd.f32 0.0, %v4611
      %v4613 = vpop.f32.mrb[0].mxu0
      %v4614 = vpop.f32.mrb[0].mxu0
      %v4615 = vpop.f32.mrb[0].mxu0
      %4616 = vdwg.mxu0
      %v4617 = vadd.f32 %v4452, %v4530
      %v4618 = vadd.f32 %v4453, %v4532
      %v4619 = vadd.f32 %v4454, %v4571
      %v4620 = vadd.f32 %v4455, %v4573
      %v4621 = vadd.f32 %v4456, %v4612
      %s4622 = scalar_lea.vmem %s1, 104
      %v4623 = vld [vmem:[%s4622] sm:$0xf]
      %4624 = vrot.lane.b32.xlu0 %v2638, 17
      %v4625 = vpop.permute.xlu0 %4624
      %4626 = vrot.lane.b32.xlu0 %v2639, 17
      %v4627 = vpop.permute.xlu0 %4626
      %4628 = vrot.lane.b32.xlu0 %v2640, 17
      %v4629 = vpop.permute.xlu0 %4628
      %4630 = vrot.lane.b32.xlu0 %v2641, 17
      %v4631 = vpop.permute.xlu0 %4630
      %4632 = vrot.lane.b32.xlu0 %v2642, 17
      %v4633 = vpop.permute.xlu0 %4632
      %4634 = vrot.lane.b32.xlu0 %v2643, 17
      %v4635 = vpop.permute.xlu0 %4634
      %vm4636 = vcmask 138240
      %v4637 = vsel %vm4636, %v4625, %v4627
      %v4638 = vsel %vm4636, %v4627, %v4629
      %v4639 = vsel %vm4636, %v4629, %v4631
      %v4640 = vsel %vm4636, %v4631, %v4633
      %v4641 = vsel %vm4636, %v4633, %v4635
      %v4643 = vsel %vm346, %v4623, 0
      %v4646 = vsel %vm350, %v4637, 0
      %v4649 = vsel %vm350, %v4638, 0
      %v4652 = vsel %vm350, %v4639, 0
      %v4655 = vsel %vm350, %v4640, 0
      %v4658 = vsel %vm350, %v4641, 0
      %4660 = vmatprep.subr.bf16.mxu0 %v4649
      %4661 = vmatpush1.bf16.msra.mxu0 %v4646
      %4662 = vmatprep.subr.bf16.mxu0 0
      %4663 = vmatpush1.bf16.msra.mxu0 0
      %4664 = vmatprep.subr.bf16.mxu0 0
      %4665 = vmatpush1.bf16.msra.mxu0 0
      %4666 = vmatprep.subr.bf16.mxu0 0
      %4667 = vmatpush1.bf16.msra.mxu0 0
      %4668 = vmatprep.subr.bf16.mxu0 0
      %4669 = vmatpush1.bf16.msra.mxu0 0
      %4670 = vmatprep.subr.bf16.mxu0 0
      %4671 = vmatpush1.bf16.msra.mxu0 0
      %4672 = vmatprep.subr.bf16.mxu0 0
      %4673 = vmatpush1.bf16.msra.mxu0 0
      %4674 = vmatprep.subr.bf16.mxu0 0
      %4675 = vmatpush1.bf16.msra.mxu0 0
      %4676 = vmatprep.subr.bf16.mxu0 0
      %4677 = vmatpush1.bf16.msra.mxu0 0
      %4678 = vmatprep.subr.bf16.mxu0 0
      %4679 = vmatpush1.bf16.msra.mxu0 0
      %4680 = vmatprep.subr.bf16.mxu0 0
      %4681 = vmatpush1.bf16.msra.mxu0 0
      %4682 = vmatprep.subr.bf16.mxu0 0
      %4683 = vmatpush1.bf16.msra.mxu0 0
      %4684 = vmatprep.subr.bf16.mxu0 0
      %4685 = vmatpush1.bf16.msra.mxu0 0
      %4686 = vmatprep.subr.bf16.mxu0 0
      %4687 = vmatpush1.bf16.msra.mxu0 0
      %4688 = vmatprep.subr.bf16.mxu0 0
      %4689 = vmatpush1.bf16.msra.mxu0 0
      %4690 = vmatprep.subr.bf16.mxu0 0
      %4691 = vmatpush1.bf16.msra.mxu0 0
      %4692 = vmatprep.mubr.bf16.mxu0 0
      %4693 = vmatmul.mubr.bf16.gmra.mrb[0].mxu0 %v4643
      %v4694 = vpop.f32.mrb[0].mxu0
      %v4695 = vadd.f32 0.0, %v4694
      %v4696 = vpop.f32.mrb[0].mxu0
      %v4697 = vadd.f32 0.0, %v4696
      %v4698 = vpop.f32.mrb[0].mxu0
      %v4699 = vpop.f32.mrb[0].mxu0
      %4700 = vdwg.mxu0
      %4701 = vmatprep.subr.bf16.mxu0 %v4655
      %4702 = vmatpush1.bf16.msra.mxu0 %v4652
      %4703 = vmatprep.subr.bf16.mxu0 0
      %4704 = vmatpush1.bf16.msra.mxu0 0
      %4705 = vmatprep.subr.bf16.mxu0 0
      %4706 = vmatpush1.bf16.msra.mxu0 0
      %4707 = vmatprep.subr.bf16.mxu0 0
      %4708 = vmatpush1.bf16.msra.mxu0 0
      %4709 = vmatprep.subr.bf16.mxu0 0
      %4710 = vmatpush1.bf16.msra.mxu0 0
      %4711 = vmatprep.subr.bf16.mxu0 0
      %4712 = vmatpush1.bf16.msra.mxu0 0
      %4713 = vmatprep.subr.bf16.mxu0 0
      %4714 = vmatpush1.bf16.msra.mxu0 0
      %4715 = vmatprep.subr.bf16.mxu0 0
      %4716 = vmatpush1.bf16.msra.mxu0 0
      %4717 = vmatprep.subr.bf16.mxu0 0
      %4718 = vmatpush1.bf16.msra.mxu0 0
      %4719 = vmatprep.subr.bf16.mxu0 0
      %4720 = vmatpush1.bf16.msra.mxu0 0
      %4721 = vmatprep.subr.bf16.mxu0 0
      %4722 = vmatpush1.bf16.msra.mxu0 0
      %4723 = vmatprep.subr.bf16.mxu0 0
      %4724 = vmatpush1.bf16.msra.mxu0 0
      %4725 = vmatprep.subr.bf16.mxu0 0
      %4726 = vmatpush1.bf16.msra.mxu0 0
      %4727 = vmatprep.subr.bf16.mxu0 0
      %4728 = vmatpush1.bf16.msra.mxu0 0
      %4729 = vmatprep.subr.bf16.mxu0 0
      %4730 = vmatpush1.bf16.msra.mxu0 0
      %4731 = vmatprep.subr.bf16.mxu0 0
      %4732 = vmatpush1.bf16.msra.mxu0 0
      %4733 = vmatprep.mubr.bf16.mxu0 0
      %4734 = vmatmul.mubr.bf16.gmra.mrb[0].mxu0 %v4643
      %v4735 = vpop.f32.mrb[0].mxu0
      %v4736 = vadd.f32 0.0, %v4735
      %v4737 = vpop.f32.mrb[0].mxu0
      %v4738 = vadd.f32 0.0, %v4737
      %v4739 = vpop.f32.mrb[0].mxu0
      %v4740 = vpop.f32.mrb[0].mxu0
      %4741 = vdwg.mxu0
      %4742 = vmatprep.subr.bf16.mxu0 0
      %4743 = vmatpush1.bf16.msra.mxu0 %v4658
      %4744 = vmatprep.subr.bf16.mxu0 0
      %4745 = vmatpush1.bf16.msra.mxu0 0
      %4746 = vmatprep.subr.bf16.mxu0 0
      %4747 = vmatpush1.bf16.msra.mxu0 0
      %4748 = vmatprep.subr.bf16.mxu0 0
      %4749 = vmatpush1.bf16.msra.mxu0 0
      %4750 = vmatprep.subr.bf16.mxu0 0
      %4751 = vmatpush1.bf16.msra.mxu0 0
      %4752 = vmatprep.subr.bf16.mxu0 0
      %4753 = vmatpush1.bf16.msra.mxu0 0
      %4754 = vmatprep.subr.bf16.mxu0 0
      %4755 = vmatpush1.bf16.msra.mxu0 0
      %4756 = vmatprep.subr.bf16.mxu0 0
      %4757 = vmatpush1.bf16.msra.mxu0 0
      %4758 = vmatprep.subr.bf16.mxu0 0
      %4759 = vmatpush1.bf16.msra.mxu0 0
      %4760 = vmatprep.subr.bf16.mxu0 0
      %4761 = vmatpush1.bf16.msra.mxu0 0
      %4762 = vmatprep.subr.bf16.mxu0 0
      %4763 = vmatpush1.bf16.msra.mxu0 0
      %4764 = vmatprep.subr.bf16.mxu0 0
      %4765 = vmatpush1.bf16.msra.mxu0 0
      %4766 = vmatprep.subr.bf16.mxu0 0
      %4767 = vmatpush1.bf16.msra.mxu0 0
      %4768 = vmatprep.subr.bf16.mxu0 0
      %4769 = vmatpush1.bf16.msra.mxu0 0
      %4770 = vmatprep.subr.bf16.mxu0 0
      %4771 = vmatpush1.bf16.msra.mxu0 0
      %4772 = vmatprep.subr.bf16.mxu0 0
      %4773 = vmatpush1.bf16.msra.mxu0 0
      %4774 = vmatprep.mubr.bf16.mxu0 0
      %4775 = vmatmul.mubr.bf16.gmra.mrb[0].mxu0 %v4643
      %v4776 = vpop.f32.mrb[0].mxu0
      %v4777 = vadd.f32 0.0, %v4776
      %v4778 = vpop.f32.mrb[0].mxu0
      %v4779 = vpop.f32.mrb[0].mxu0
      %v4780 = vpop.f32.mrb[0].mxu0
      %4781 = vdwg.mxu0
      %v4782 = vadd.f32 %v4617, %v4695
      %v4783 = vadd.f32 %v4618, %v4697
      %v4784 = vadd.f32 %v4619, %v4736
      %v4785 = vadd.f32 %v4620, %v4738
      %v4786 = vadd.f32 %v4621, %v4777
      %v4787 = vld [vmem:[%s3] sm:$0xff]
      %4789 = vset.pattern.permute.xlu0 0
      %4790 = vperm.xlu0 %4789, %v4787
      %v4791 = vpop.permute.xlu0 %4790
      %v4793 = vmul.f32 %v4782, %v4791
      %v4794 = vmul.f32 %v4783, %v4791
      %v4795 = vmul.f32 %v4784, %v4791
      %v4796 = vmul.f32 %v4785, %v4791
      %v4797 = vmul.f32 %v4786, %v4791
      %v4798 = vld [vmem:[%s4] sm:$0xff]
      %4800 = vset.pattern.permute.xlu0 0
      %4801 = vperm.xlu0 %4800, %v4798
      %v4802 = vpop.permute.xlu0 %4801
      %v4804 = vadd.f32 %v4793, %v4802
      %v4805 = vadd.f32 %v4794, %v4802
      %v4806 = vadd.f32 %v4795, %v4802
      %v4807 = vadd.f32 %v4796, %v4802
      %v4808 = vadd.f32 %v4797, %v4802
      %v4809 = vmax.f32 %v4804, 0.0
      %v4810 = vmax.f32 %v4805, 0.0
      %v4811 = vmax.f32 %v4806, 0.0
      %v4812 = vmax.f32 %v4807, 0.0
      %v4813 = vmax.f32 %v4808, 0.0
      %v4814 = vld [vmem:[%s7] sm:$0x1f]
      %v4816 = vlaneseq
      %v4817 = vshrl.u32 %v4816, 7
      %v4818 = vsub.s32 0, %v4817
      %v4819 = vrot.slane %v4814, %v4818
      %v4820 = vlaneseq
      %v4821 = vshrl.u32 %v4820, 7
      %v4822 = vsub.s32 1, %v4821
      %v4823 = vrot.slane %v4814, %v4822
      %v4824 = vlaneseq
      %v4825 = vshrl.u32 %v4824, 7
      %v4826 = vsub.s32 2, %v4825
      %v4827 = vrot.slane %v4814, %v4826
      %v4828 = vlaneseq
      %v4829 = vshrl.u32 %v4828, 7
      %v4830 = vsub.s32 3, %v4829
      %v4831 = vrot.slane %v4814, %v4830
      %v4832 = vlaneseq
      %v4833 = vshrl.u32 %v4832, 7
      %v4834 = vsub.s32 4, %v4833
      %v4835 = vrot.slane %v4814, %v4834
      %v4841 = vmul.f32 %v4809, %v4819
      %v4842 = vmul.f32 %v4810, %v4823
      %v4843 = vmul.f32 %v4811, %v4827
      %v4844 = vmul.f32 %v4812, %v4831
      %v4845 = vmul.f32 %v4813, %v4835
      %4846 = vst [vmem:[#allocation2] sm:$0xf] 0
      %v4847 = vpack.c.bf16 %v4841, %v4841
      %v4848 = vpack.c.bf16 %v4842, %v4842
      %v4849 = vpack.c.bf16 %v4843, %v4843
      %v4850 = vpack.c.bf16 %v4844, %v4844
      %v4851 = vpack.c.bf16 %v4845, %v4845
      %v4857 = vunpack.c.l.b16 %v4847
      %v4858 = vunpack.c.l.b16 %v4848
      %v4859 = vunpack.c.l.b16 %v4849
      %v4860 = vunpack.c.l.b16 %v4850
      %v4861 = vunpack.c.l.b16 %v4851
      %v4862 = vpack.c.b16 %v4858, %v4857
      %v4863 = vpack.c.b16 %v4860, %v4859
      %v4864 = vpack.c.b16 %v4861, %v4861
      %4868 = vst [vmem:[#allocation2 + $0x4] sm:$0xff] %v4862
      %4869 = vst [vmem:[#allocation2 + $0xc] sm:$0xff] %v4863
      %4870 = vst [vmem:[#allocation2 + $0x14] sm:$0xf] %v4864
      %4871 = vst [vmem:[#allocation2 + $0x18] sm:$0xf] 0
      %v4872 = vld [vmem:[%s2] sm:$0xf]
      %v4873 = vld [vmem:[#allocation2] sm:$0xff]
      %v4874 = vld [vmem:[#allocation2 + $0x8] sm:$0xff]
      %v4875 = vld [vmem:[#allocation2 + $0x10] sm:$0xff]
      %s4876 = scalar_lea.vmem %s2, 4
      %v4877 = vld [vmem:[%s4876] sm:$0xf]
      %v4881 = vunpack.c.l.b16 %v4873
      %v4882 = vunpack.c.h.b16 %v4873
      %v4883 = vunpack.c.l.b16 %v4874
      %v4884 = vunpack.c.h.b16 %v4874
      %v4885 = vunpack.c.l.b16 %v4875
      %v4886 = vunpack.c.h.b16 %v4875
      %v4887 = vpack.c.b16 %v4881, %v4881
      %v4888 = vpack.c.b16 %v4882, %v4882
      %v4889 = vpack.c.b16 %v4883, %v4883
      %v4890 = vpack.c.b16 %v4884, %v4884
      %v4891 = vpack.c.b16 %v4885, %v4885
      %v4892 = vpack.c.b16 %v4886, %v4886
      %4893 = vrot.lane.b32.xlu0 %v4887, 110
      %v4894 = vpop.permute.xlu0 %4893
      %4895 = vrot.lane.b32.xlu0 %v4888, 110
      %v4896 = vpop.permute.xlu0 %4895
      %4897 = vrot.lane.b32.xlu0 %v4889, 110
      %v4898 = vpop.permute.xlu0 %4897
      %4899 = vrot.lane.b32.xlu0 %v4890, 110
      %v4900 = vpop.permute.xlu0 %4899
      %4901 = vrot.lane.b32.xlu0 %v4891, 110
      %v4902 = vpop.permute.xlu0 %4901
      %4903 = vrot.lane.b32.xlu0 %v4892, 110
      %v4904 = vpop.permute.xlu0 %4903
      %v4905 = vsel %vm340, %v4894, %v4896
      %v4906 = vsel %vm340, %v4896, %v4898
      %v4907 = vsel %vm340, %v4898, %v4900
      %v4908 = vsel %vm340, %v4900, %v4902
      %v4909 = vsel %vm340, %v4902, %v4904
      %v4911 = vsel %vm346, %v4877, 0
      %v4914 = vsel %vm350, %v4905, 0
      %v4917 = vsel %vm350, %v4906, 0
      %v4920 = vsel %vm350, %v4907, 0
      %v4923 = vsel %vm350, %v4908, 0
      %v4926 = vsel %vm350, %v4909, 0
      %4928 = vmatprep.subr.bf16.mxu0 %v4917
      %4929 = vmatpush1.bf16.msra.mxu0 %v4914
      %4930 = vmatprep.subr.bf16.mxu0 0
      %4931 = vmatpush1.bf16.msra.mxu0 0
      %4932 = vmatprep.subr.bf16.mxu0 0
      %4933 = vmatpush1.bf16.msra.mxu0 0
      %4934 = vmatprep.subr.bf16.mxu0 0
      %4935 = vmatpush1.bf16.msra.mxu0 0
      %4936 = vmatprep.subr.bf16.mxu0 0
      %4937 = vmatpush1.bf16.msra.mxu0 0
      %4938 = vmatprep.subr.bf16.mxu0 0
      %4939 = vmatpush1.bf16.msra.mxu0 0
      %4940 = vmatprep.subr.bf16.mxu0 0
      %4941 = vmatpush1.bf16.msra.mxu0 0
      %4942 = vmatprep.subr.bf16.mxu0 0
      %4943 = vmatpush1.bf16.msra.mxu0 0
      %4944 = vmatprep.subr.bf16.mxu0 0
      %4945 = vmatpush1.bf16.msra.mxu0 0
      %4946 = vmatprep.subr.bf16.mxu0 0
      %4947 = vmatpush1.bf16.msra.mxu0 0
      %4948 = vmatprep.subr.bf16.mxu0 0
      %4949 = vmatpush1.bf16.msra.mxu0 0
      %4950 = vmatprep.subr.bf16.mxu0 0
      %4951 = vmatpush1.bf16.msra.mxu0 0
      %4952 = vmatprep.subr.bf16.mxu0 0
      %4953 = vmatpush1.bf16.msra.mxu0 0
      %4954 = vmatprep.subr.bf16.mxu0 0
      %4955 = vmatpush1.bf16.msra.mxu0 0
      %4956 = vmatprep.subr.bf16.mxu0 0
      %4957 = vmatpush1.bf16.msra.mxu0 0
      %4958 = vmatprep.subr.bf16.mxu0 0
      %4959 = vmatpush1.bf16.msra.mxu0 0
      %4960 = vmatprep.mubr.bf16.mxu0 0
      %4961 = vmatmul.mubr.bf16.gmra.mrb[0].mxu0 %v4911
      %v4962 = vpop.f32.mrb[0].mxu0
      %v4963 = vadd.f32 0.0, %v4962
      %v4964 = vpop.f32.mrb[0].mxu0
      %v4965 = vadd.f32 0.0, %v4964
      %v4966 = vpop.f32.mrb[0].mxu0
      %v4967 = vpop.f32.mrb[0].mxu0
      %4968 = vdwg.mxu0
      %4969 = vmatprep.subr.bf16.mxu0 %v4923
      %4970 = vmatpush1.bf16.msra.mxu0 %v4920
      %4971 = vmatprep.subr.bf16.mxu0 0
      %4972 = vmatpush1.bf16.msra.mxu0 0
      %4973 = vmatprep.subr.bf16.mxu0 0
      %4974 = vmatpush1.bf16.msra.mxu0 0
      %4975 = vmatprep.subr.bf16.mxu0 0
      %4976 = vmatpush1.bf16.msra.mxu0 0
      %4977 = vmatprep.subr.bf16.mxu0 0
      %4978 = vmatpush1.bf16.msra.mxu0 0
      %4979 = vmatprep.subr.bf16.mxu0 0
      %4980 = vmatpush1.bf16.msra.mxu0 0
      %4981 = vmatprep.subr.bf16.mxu0 0
      %4982 = vmatpush1.bf16.msra.mxu0 0
      %4983 = vmatprep.subr.bf16.mxu0 0
      %4984 = vmatpush1.bf16.msra.mxu0 0
      %4985 = vmatprep.subr.bf16.mxu0 0
      %4986 = vmatpush1.bf16.msra.mxu0 0
      %4987 = vmatprep.subr.bf16.mxu0 0
      %4988 = vmatpush1.bf16.msra.mxu0 0
      %4989 = vmatprep.subr.bf16.mxu0 0
      %4990 = vmatpush1.bf16.msra.mxu0 0
      %4991 = vmatprep.subr.bf16.mxu0 0
      %4992 = vmatpush1.bf16.msra.mxu0 0
      %4993 = vmatprep.subr.bf16.mxu0 0
      %4994 = vmatpush1.bf16.msra.mxu0 0
      %4995 = vmatprep.subr.bf16.mxu0 0
      %4996 = vmatpush1.bf16.msra.mxu0 0
      %4997 = vmatprep.subr.bf16.mxu0 0
      %4998 = vmatpush1.bf16.msra.mxu0 0
      %4999 = vmatprep.subr.bf16.mxu0 0
      %5000 = vmatpush1.bf16.msra.mxu0 0
      %5001 = vmatprep.mubr.bf16.mxu0 0
      %5002 = vmatmul.mubr.bf16.gmra.mrb[0].mxu0 %v4911
      %v5003 = vpop.f32.mrb[0].mxu0
      %v5004 = vadd.f32 0.0, %v5003
      %v5005 = vpop.f32.mrb[0].mxu0
      %v5006 = vadd.f32 0.0, %v5005
      %v5007 = vpop.f32.mrb[0].mxu0
      %v5008 = vpop.f32.mrb[0].mxu0
      %5009 = vdwg.mxu0
      %5010 = vmatprep.subr.bf16.mxu0 0
      %5011 = vmatpush1.bf16.msra.mxu0 %v4926
      %5012 = vmatprep.subr.bf16.mxu0 0
      %5013 = vmatpush1.bf16.msra.mxu0 0
      %5014 = vmatprep.subr.bf16.mxu0 0
      %5015 = vmatpush1.bf16.msra.mxu0 0
      %5016 = vmatprep.subr.bf16.mxu0 0
      %5017 = vmatpush1.bf16.msra.mxu0 0
      %5018 = vmatprep.subr.bf16.mxu0 0
      %5019 = vmatpush1.bf16.msra.mxu0 0
      %5020 = vmatprep.subr.bf16.mxu0 0
      %5021 = vmatpush1.bf16.msra.mxu0 0
      %5022 = vmatprep.subr.bf16.mxu0 0
      %5023 = vmatpush1.bf16.msra.mxu0 0
      %5024 = vmatprep.subr.bf16.mxu0 0
      %5025 = vmatpush1.bf16.msra.mxu0 0
      %5026 = vmatprep.subr.bf16.mxu0 0
      %5027 = vmatpush1.bf16.msra.mxu0 0
      %5028 = vmatprep.subr.bf16.mxu0 0
      %5029 = vmatpush1.bf16.msra.mxu0 0
      %5030 = vmatprep.subr.bf16.mxu0 0
      %5031 = vmatpush1.bf16.msra.mxu0 0
      %5032 = vmatprep.subr.bf16.mxu0 0
      %5033 = vmatpush1.bf16.msra.mxu0 0
      %5034 = vmatprep.subr.bf16.mxu0 0
      %5035 = vmatpush1.bf16.msra.mxu0 0
      %5036 = vmatprep.subr.bf16.mxu0 0
      %5037 = vmatpush1.bf16.msra.mxu0 0
      %5038 = vmatprep.subr.bf16.mxu0 0
      %5039 = vmatpush1.bf16.msra.mxu0 0
      %5040 = vmatprep.subr.bf16.mxu0 0
      %5041 = vmatpush1.bf16.msra.mxu0 0
      %5042 = vmatprep.mubr.bf16.mxu0 0
      %5043 = vmatmul.mubr.bf16.gmra.mrb[0].mxu0 %v4911
      %v5044 = vpop.f32.mrb[0].mxu0
      %v5045 = vadd.f32 0.0, %v5044
      %v5046 = vpop.f32.mrb[0].mxu0
      %v5047 = vpop.f32.mrb[0].mxu0
      %v5048 = vpop.f32.mrb[0].mxu0
      %5049 = vdwg.mxu0
      %5050 = vrot.lane.b32.xlu0 %v4887, 111
      %v5051 = vpop.permute.xlu0 %5050
      %5052 = vrot.lane.b32.xlu0 %v4888, 111
      %v5053 = vpop.permute.xlu0 %5052
      %5054 = vrot.lane.b32.xlu0 %v4889, 111
      %v5055 = vpop.permute.xlu0 %5054
      %5056 = vrot.lane.b32.xlu0 %v4890, 111
      %v5057 = vpop.permute.xlu0 %5056
      %5058 = vrot.lane.b32.xlu0 %v4891, 111
      %v5059 = vpop.permute.xlu0 %5058
      %5060 = vrot.lane.b32.xlu0 %v4892, 111
      %v5061 = vpop.permute.xlu0 %5060
      %v5062 = vsel %vm500, %v5051, %v5053
      %v5063 = vsel %vm500, %v5053, %v5055
      %v5064 = vsel %vm500, %v5055, %v5057
      %v5065 = vsel %vm500, %v5057, %v5059
      %v5066 = vsel %vm500, %v5059, %v5061
      %v5068 = vsel %vm346, %v4872, 0
      %v5071 = vsel %vm350, %v5062, 0
      %v5074 = vsel %vm350, %v5063, 0
      %v5077 = vsel %vm350, %v5064, 0
      %v5080 = vsel %vm350, %v5065, 0
      %v5083 = vsel %vm350, %v5066, 0
      %5085 = vmatprep.subr.bf16.mxu0 %v5074
      %5086 = vmatpush1.bf16.msra.mxu0 %v5071
      %5087 = vmatprep.subr.bf16.mxu0 0
      %5088 = vmatpush1.bf16.msra.mxu0 0
      %5089 = vmatprep.subr.bf16.mxu0 0
      %5090 = vmatpush1.bf16.msra.mxu0 0
      %5091 = vmatprep.subr.bf16.mxu0 0
      %5092 = vmatpush1.bf16.msra.mxu0 0
      %5093 = vmatprep.subr.bf16.mxu0 0
      %5094 = vmatpush1.bf16.msra.mxu0 0
      %5095 = vmatprep.subr.bf16.mxu0 0
      %5096 = vmatpush1.bf16.msra.mxu0 0
      %5097 = vmatprep.subr.bf16.mxu0 0
      %5098 = vmatpush1.bf16.msra.mxu0 0
      %5099 = vmatprep.subr.bf16.mxu0 0
      %5100 = vmatpush1.bf16.msra.mxu0 0
      %5101 = vmatprep.subr.bf16.mxu0 0
      %5102 = vmatpush1.bf16.msra.mxu0 0
      %5103 = vmatprep.subr.bf16.mxu0 0
      %5104 = vmatpush1.bf16.msra.mxu0 0
      %5105 = vmatprep.subr.bf16.mxu0 0
      %5106 = vmatpush1.bf16.msra.mxu0 0
      %5107 = vmatprep.subr.bf16.mxu0 0
      %5108 = vmatpush1.bf16.msra.mxu0 0
      %5109 = vmatprep.subr.bf16.mxu0 0
      %5110 = vmatpush1.bf16.msra.mxu0 0
      %5111 = vmatprep.subr.bf16.mxu0 0
      %5112 = vmatpush1.bf16.msra.mxu0 0
      %5113 = vmatprep.subr.bf16.mxu0 0
      %5114 = vmatpush1.bf16.msra.mxu0 0
      %5115 = vmatprep.subr.bf16.mxu0 0
      %5116 = vmatpush1.bf16.msra.mxu0 0
      %5117 = vmatprep.mubr.bf16.mxu0 0
      %5118 = vmatmul.mubr.bf16.gmra.mrb[0].mxu0 %v5068
      %v5119 = vpop.f32.mrb[0].mxu0
      %v5120 = vadd.f32 %v4963, %v5119
      %v5121 = vpop.f32.mrb[0].mxu0
      %v5122 = vadd.f32 %v4965, %v5121
      %v5123 = vpop.f32.mrb[0].mxu0
      %v5124 = vpop.f32.mrb[0].mxu0
      %5125 = vdwg.mxu0
      %5126 = vmatprep.subr.bf16.mxu0 %v5080
      %5127 = vmatpush1.bf16.msra.mxu0 %v5077
      %5128 = vmatprep.subr.bf16.mxu0 0
      %5129 = vmatpush1.bf16.msra.mxu0 0
      %5130 = vmatprep.subr.bf16.mxu0 0
      %5131 = vmatpush1.bf16.msra.mxu0 0
      %5132 = vmatprep.subr.bf16.mxu0 0
      %5133 = vmatpush1.bf16.msra.mxu0 0
      %5134 = vmatprep.subr.bf16.mxu0 0
      %5135 = vmatpush1.bf16.msra.mxu0 0
      %5136 = vmatprep.subr.bf16.mxu0 0
      %5137 = vmatpush1.bf16.msra.mxu0 0
      %5138 = vmatprep.subr.bf16.mxu0 0
      %5139 = vmatpush1.bf16.msra.mxu0 0
      %5140 = vmatprep.subr.bf16.mxu0 0
      %5141 = vmatpush1.bf16.msra.mxu0 0
      %5142 = vmatprep.subr.bf16.mxu0 0
      %5143 = vmatpush1.bf16.msra.mxu0 0
      %5144 = vmatprep.subr.bf16.mxu0 0
      %5145 = vmatpush1.bf16.msra.mxu0 0
      %5146 = vmatprep.subr.bf16.mxu0 0
      %5147 = vmatpush1.bf16.msra.mxu0 0
      %5148 = vmatprep.subr.bf16.mxu0 0
      %5149 = vmatpush1.bf16.msra.mxu0 0
      %5150 = vmatprep.subr.bf16.mxu0 0
      %5151 = vmatpush1.bf16.msra.mxu0 0
      %5152 = vmatprep.subr.bf16.mxu0 0
      %5153 = vmatpush1.bf16.msra.mxu0 0
      %5154 = vmatprep.subr.bf16.mxu0 0
      %5155 = vmatpush1.bf16.msra.mxu0 0
      %5156 = vmatprep.subr.bf16.mxu0 0
      %5157 = vmatpush1.bf16.msra.mxu0 0
      %5158 = vmatprep.mubr.bf16.mxu0 0
      %5159 = vmatmul.mubr.bf16.gmra.mrb[0].mxu0 %v5068
      %v5160 = vpop.f32.mrb[0].mxu0
      %v5161 = vadd.f32 %v5004, %v5160
      %v5162 = vpop.f32.mrb[0].mxu0
      %v5163 = vadd.f32 %v5006, %v5162
      %v5164 = vpop.f32.mrb[0].mxu0
      %v5165 = vpop.f32.mrb[0].mxu0
      %5166 = vdwg.mxu0
      %5167 = vmatprep.subr.bf16.mxu0 0
      %5168 = vmatpush1.bf16.msra.mxu0 %v5083
      %5169 = vmatprep.subr.bf16.mxu0 0
      %5170 = vmatpush1.bf16.msra.mxu0 0
      %5171 = vmatprep.subr.bf16.mxu0 0
      %5172 = vmatpush1.bf16.msra.mxu0 0
      %5173 = vmatprep.subr.bf16.mxu0 0
      %5174 = vmatpush1.bf16.msra.mxu0 0
      %5175 = vmatprep.subr.bf16.mxu0 0
      %5176 = vmatpush1.bf16.msra.mxu0 0
      %5177 = vmatprep.subr.bf16.mxu0 0
      %5178 = vmatpush1.bf16.msra.mxu0 0
      %5179 = vmatprep.subr.bf16.mxu0 0
      %5180 = vmatpush1.bf16.msra.mxu0 0
      %5181 = vmatprep.subr.bf16.mxu0 0
      %5182 = vmatpush1.bf16.msra.mxu0 0
      %5183 = vmatprep.subr.bf16.mxu0 0
      %5184 = vmatpush1.bf16.msra.mxu0 0
      %5185 = vmatprep.subr.bf16.mxu0 0
      %5186 = vmatpush1.bf16.msra.mxu0 0
      %5187 = vmatprep.subr.bf16.mxu0 0
      %5188 = vmatpush1.bf16.msra.mxu0 0
      %5189 = vmatprep.subr.bf16.mxu0 0
      %5190 = vmatpush1.bf16.msra.mxu0 0
      %5191 = vmatprep.subr.bf16.mxu0 0
      %5192 = vmatpush1.bf16.msra.mxu0 0
      %5193 = vmatprep.subr.bf16.mxu0 0
      %5194 = vmatpush1.bf16.msra.mxu0 0
      %5195 = vmatprep.subr.bf16.mxu0 0
      %5196 = vmatpush1.bf16.msra.mxu0 0
      %5197 = vmatprep.subr.bf16.mxu0 0
      %5198 = vmatpush1.bf16.msra.mxu0 0
      %5199 = vmatprep.mubr.bf16.mxu0 0
      %5200 = vmatmul.mubr.bf16.gmra.mrb[0].mxu0 %v5068
      %v5201 = vpop.f32.mrb[0].mxu0
      %v5202 = vadd.f32 %v5045, %v5201
      %v5203 = vpop.f32.mrb[0].mxu0
      %v5204 = vpop.f32.mrb[0].mxu0
      %v5205 = vpop.f32.mrb[0].mxu0
      %5206 = vdwg.mxu0
      %s5207 = scalar_lea.vmem %s2, 8
      %v5208 = vld [vmem:[%s5207] sm:$0xf]
      %5209 = vrot.lane.b32.xlu0 %v4887, 109
      %v5210 = vpop.permute.xlu0 %5209
      %5211 = vrot.lane.b32.xlu0 %v4888, 109
      %v5212 = vpop.permute.xlu0 %5211
      %5213 = vrot.lane.b32.xlu0 %v4889, 109
      %v5214 = vpop.permute.xlu0 %5213
      %5215 = vrot.lane.b32.xlu0 %v4890, 109
      %v5216 = vpop.permute.xlu0 %5215
      %5217 = vrot.lane.b32.xlu0 %v4891, 109
      %v5218 = vpop.permute.xlu0 %5217
      %5219 = vrot.lane.b32.xlu0 %v4892, 109
      %v5220 = vpop.permute.xlu0 %5219
      %v5221 = vsel %vm660, %v5210, %v5212
      %v5222 = vsel %vm660, %v5212, %v5214
      %v5223 = vsel %vm660, %v5214, %v5216
      %v5224 = vsel %vm660, %v5216, %v5218
      %v5225 = vsel %vm660, %v5218, %v5220
      %v5227 = vsel %vm346, %v5208, 0
      %v5230 = vsel %vm350, %v5221, 0
      %v5233 = vsel %vm350, %v5222, 0
      %v5236 = vsel %vm350, %v5223, 0
      %v5239 = vsel %vm350, %v5224, 0
      %v5242 = vsel %vm350, %v5225, 0
      %5244 = vmatprep.subr.bf16.mxu0 %v5233
      %5245 = vmatpush1.bf16.msra.mxu0 %v5230
      %5246 = vmatprep.subr.bf16.mxu0 0
      %5247 = vmatpush1.bf16.msra.mxu0 0
      %5248 = vmatprep.subr.bf16.mxu0 0
      %5249 = vmatpush1.bf16.msra.mxu0 0
      %5250 = vmatprep.subr.bf16.mxu0 0
      %5251 = vmatpush1.bf16.msra.mxu0 0
      %5252 = vmatprep.subr.bf16.mxu0 0
      %5253 = vmatpush1.bf16.msra.mxu0 0
      %5254 = vmatprep.subr.bf16.mxu0 0
      %5255 = vmatpush1.bf16.msra.mxu0 0
      %5256 = vmatprep.subr.bf16.mxu0 0
      %5257 = vmatpush1.bf16.msra.mxu0 0
      %5258 = vmatprep.subr.bf16.mxu0 0
      %5259 = vmatpush1.bf16.msra.mxu0 0
      %5260 = vmatprep.subr.bf16.mxu0 0
      %5261 = vmatpush1.bf16.msra.mxu0 0
      %5262 = vmatprep.subr.bf16.mxu0 0
      %5263 = vmatpush1.bf16.msra.mxu0 0
      %5264 = vmatprep.subr.bf16.mxu0 0
      %5265 = vmatpush1.bf16.msra.mxu0 0
      %5266 = vmatprep.subr.bf16.mxu0 0
      %5267 = vmatpush1.bf16.msra.mxu0 0
      %5268 = vmatprep.subr.bf16.mxu0 0
      %5269 = vmatpush1.bf16.msra.mxu0 0
      %5270 = vmatprep.subr.bf16.mxu0 0
      %5271 = vmatpush1.bf16.msra.mxu0 0
      %5272 = vmatprep.subr.bf16.mxu0 0
      %5273 = vmatpush1.bf16.msra.mxu0 0
      %5274 = vmatprep.subr.bf16.mxu0 0
      %5275 = vmatpush1.bf16.msra.mxu0 0
      %5276 = vmatprep.mubr.bf16.mxu0 0
      %5277 = vmatmul.mubr.bf16.gmra.mrb[0].mxu0 %v5227
      %v5278 = vpop.f32.mrb[0].mxu0
      %v5279 = vadd.f32 0.0, %v5278
      %v5280 = vpop.f32.mrb[0].mxu0
      %v5281 = vadd.f32 0.0, %v5280
      %v5282 = vpop.f32.mrb[0].mxu0
      %v5283 = vpop.f32.mrb[0].mxu0
      %5284 = vdwg.mxu0
      %5285 = vmatprep.subr.bf16.mxu0 %v5239
      %5286 = vmatpush1.bf16.msra.mxu0 %v5236
      %5287 = vmatprep.subr.bf16.mxu0 0
      %5288 = vmatpush1.bf16.msra.mxu0 0
      %5289 = vmatprep.subr.bf16.mxu0 0
      %5290 = vmatpush1.bf16.msra.mxu0 0
      %5291 = vmatprep.subr.bf16.mxu0 0
      %5292 = vmatpush1.bf16.msra.mxu0 0
      %5293 = vmatprep.subr.bf16.mxu0 0
      %5294 = vmatpush1.bf16.msra.mxu0 0
      %5295 = vmatprep.subr.bf16.mxu0 0
      %5296 = vmatpush1.bf16.msra.mxu0 0
      %5297 = vmatprep.subr.bf16.mxu0 0
      %5298 = vmatpush1.bf16.msra.mxu0 0
      %5299 = vmatprep.subr.bf16.mxu0 0
      %5300 = vmatpush1.bf16.msra.mxu0 0
      %5301 = vmatprep.subr.bf16.mxu0 0
      %5302 = vmatpush1.bf16.msra.mxu0 0
      %5303 = vmatprep.subr.bf16.mxu0 0
      %5304 = vmatpush1.bf16.msra.mxu0 0
      %5305 = vmatprep.subr.bf16.mxu0 0
      %5306 = vmatpush1.bf16.msra.mxu0 0
      %5307 = vmatprep.subr.bf16.mxu0 0
      %5308 = vmatpush1.bf16.msra.mxu0 0
      %5309 = vmatprep.subr.bf16.mxu0 0
      %5310 = vmatpush1.bf16.msra.mxu0 0
      %5311 = vmatprep.subr.bf16.mxu0 0
      %5312 = vmatpush1.bf16.msra.mxu0 0
      %5313 = vmatprep.subr.bf16.mxu0 0
      %5314 = vmatpush1.bf16.msra.mxu0 0
      %5315 = vmatprep.subr.bf16.mxu0 0
      %5316 = vmatpush1.bf16.msra.mxu0 0
      %5317 = vmatprep.mubr.bf16.mxu0 0
      %5318 = vmatmul.mubr.bf16.gmra.mrb[0].mxu0 %v5227
      %v5319 = vpop.f32.mrb[0].mxu0
      %v5320 = vadd.f32 0.0, %v5319
      %v5321 = vpop.f32.mrb[0].mxu0
      %v5322 = vadd.f32 0.0, %v5321
      %v5323 = vpop.f32.mrb[0].mxu0
      %v5324 = vpop.f32.mrb[0].mxu0
      %5325 = vdwg.mxu0
      %5326 = vmatprep.subr.bf16.mxu0 0
      %5327 = vmatpush1.bf16.msra.mxu0 %v5242
      %5328 = vmatprep.subr.bf16.mxu0 0
      %5329 = vmatpush1.bf16.msra.mxu0 0
      %5330 = vmatprep.subr.bf16.mxu0 0
      %5331 = vmatpush1.bf16.msra.mxu0 0
      %5332 = vmatprep.subr.bf16.mxu0 0
      %5333 = vmatpush1.bf16.msra.mxu0 0
      %5334 = vmatprep.subr.bf16.mxu0 0
      %5335 = vmatpush1.bf16.msra.mxu0 0
      %5336 = vmatprep.subr.bf16.mxu0 0
      %5337 = vmatpush1.bf16.msra.mxu0 0
      %5338 = vmatprep.subr.bf16.mxu0 0
      %5339 = vmatpush1.bf16.msra.mxu0 0
      %5340 = vmatprep.subr.bf16.mxu0 0
      %5341 = vmatpush1.bf16.msra.mxu0 0
      %5342 = vmatprep.subr.bf16.mxu0 0
      %5343 = vmatpush1.bf16.msra.mxu0 0
      %5344 = vmatprep.subr.bf16.mxu0 0
      %5345 = vmatpush1.bf16.msra.mxu0 0
      %5346 = vmatprep.subr.bf16.mxu0 0
      %5347 = vmatpush1.bf16.msra.mxu0 0
      %5348 = vmatprep.subr.bf16.mxu0 0
      %5349 = vmatpush1.bf16.msra.mxu0 0
      %5350 = vmatprep.subr.bf16.mxu0 0
      %5351 = vmatpush1.bf16.msra.mxu0 0
      %5352 = vmatprep.subr.bf16.mxu0 0
      %5353 = vmatpush1.bf16.msra.mxu0 0
      %5354 = vmatprep.subr.bf16.mxu0 0
      %5355 = vmatpush1.bf16.msra.mxu0 0
      %5356 = vmatprep.subr.bf16.mxu0 0
      %5357 = vmatpush1.bf16.msra.mxu0 0
      %5358 = vmatprep.mubr.bf16.mxu0 0
      %5359 = vmatmul.mubr.bf16.gmra.mrb[0].mxu0 %v5227
      %v5360 = vpop.f32.mrb[0].mxu0
      %v5361 = vadd.f32 0.0, %v5360
      %v5362 = vpop.f32.mrb[0].mxu0
      %v5363 = vpop.f32.mrb[0].mxu0
      %v5364 = vpop.f32.mrb[0].mxu0
      %5365 = vdwg.mxu0
      %v5366 = vadd.f32 %v5120, %v5279
      %v5367 = vadd.f32 %v5122, %v5281
      %v5368 = vadd.f32 %v5161, %v5320
      %v5369 = vadd.f32 %v5163, %v5322
      %v5370 = vadd.f32 %v5202, %v5361
      %s5371 = scalar_lea.vmem %s2, 12
      %v5372 = vld [vmem:[%s5371] sm:$0xf]
      %5373 = vrot.lane.b32.xlu0 %v4887, 101
      %v5374 = vpop.permute.xlu0 %5373
      %5375 = vrot.lane.b32.xlu0 %v4888, 101
      %v5376 = vpop.permute.xlu0 %5375
      %5377 = vrot.lane.b32.xlu0 %v4889, 101
      %v5378 = vpop.permute.xlu0 %5377
      %5379 = vrot.lane.b32.xlu0 %v4890, 101
      %v5380 = vpop.permute.xlu0 %5379
      %5381 = vrot.lane.b32.xlu0 %v4891, 101
      %v5382 = vpop.permute.xlu0 %5381
      %5383 = vrot.lane.b32.xlu0 %v4892, 101
      %v5384 = vpop.permute.xlu0 %5383
      %v5385 = vsel %vm825, %v5374, %v5376
      %v5386 = vsel %vm825, %v5376, %v5378
      %v5387 = vsel %vm825, %v5378, %v5380
      %v5388 = vsel %vm825, %v5380, %v5382
      %v5389 = vsel %vm825, %v5382, %v5384
      %v5391 = vsel %vm346, %v5372, 0
      %v5394 = vsel %vm350, %v5385, 0
      %v5397 = vsel %vm350, %v5386, 0
      %v5400 = vsel %vm350, %v5387, 0
      %v5403 = vsel %vm350, %v5388, 0
      %v5406 = vsel %vm350, %v5389, 0
      %5408 = vmatprep.subr.bf16.mxu0 %v5397
      %5409 = vmatpush1.bf16.msra.mxu0 %v5394
      %5410 = vmatprep.subr.bf16.mxu0 0
      %5411 = vmatpush1.bf16.msra.mxu0 0
      %5412 = vmatprep.subr.bf16.mxu0 0
      %5413 = vmatpush1.bf16.msra.mxu0 0
      %5414 = vmatprep.subr.bf16.mxu0 0
      %5415 = vmatpush1.bf16.msra.mxu0 0
      %5416 = vmatprep.subr.bf16.mxu0 0
      %5417 = vmatpush1.bf16.msra.mxu0 0
      %5418 = vmatprep.subr.bf16.mxu0 0
      %5419 = vmatpush1.bf16.msra.mxu0 0
      %5420 = vmatprep.subr.bf16.mxu0 0
      %5421 = vmatpush1.bf16.msra.mxu0 0
      %5422 = vmatprep.subr.bf16.mxu0 0
      %5423 = vmatpush1.bf16.msra.mxu0 0
      %5424 = vmatprep.subr.bf16.mxu0 0
      %5425 = vmatpush1.bf16.msra.mxu0 0
      %5426 = vmatprep.subr.bf16.mxu0 0
      %5427 = vmatpush1.bf16.msra.mxu0 0
      %5428 = vmatprep.subr.bf16.mxu0 0
      %5429 = vmatpush1.bf16.msra.mxu0 0
      %5430 = vmatprep.subr.bf16.mxu0 0
      %5431 = vmatpush1.bf16.msra.mxu0 0
      %5432 = vmatprep.subr.bf16.mxu0 0
      %5433 = vmatpush1.bf16.msra.mxu0 0
      %5434 = vmatprep.subr.bf16.mxu0 0
      %5435 = vmatpush1.bf16.msra.mxu0 0
      %5436 = vmatprep.subr.bf16.mxu0 0
      %5437 = vmatpush1.bf16.msra.mxu0 0
      %5438 = vmatprep.subr.bf16.mxu0 0
      %5439 = vmatpush1.bf16.msra.mxu0 0
      %5440 = vmatprep.mubr.bf16.mxu0 0
      %5441 = vmatmul.mubr.bf16.gmra.mrb[0].mxu0 %v5391
      %v5442 = vpop.f32.mrb[0].mxu0
      %v5443 = vadd.f32 0.0, %v5442
      %v5444 = vpop.f32.mrb[0].mxu0
      %v5445 = vadd.f32 0.0, %v5444
      %v5446 = vpop.f32.mrb[0].mxu0
      %v5447 = vpop.f32.mrb[0].mxu0
      %5448 = vdwg.mxu0
      %5449 = vmatprep.subr.bf16.mxu0 %v5403
      %5450 = vmatpush1.bf16.msra.mxu0 %v5400
      %5451 = vmatprep.subr.bf16.mxu0 0
      %5452 = vmatpush1.bf16.msra.mxu0 0
      %5453 = vmatprep.subr.bf16.mxu0 0
      %5454 = vmatpush1.bf16.msra.mxu0 0
      %5455 = vmatprep.subr.bf16.mxu0 0
      %5456 = vmatpush1.bf16.msra.mxu0 0
      %5457 = vmatprep.subr.bf16.mxu0 0
      %5458 = vmatpush1.bf16.msra.mxu0 0
      %5459 = vmatprep.subr.bf16.mxu0 0
      %5460 = vmatpush1.bf16.msra.mxu0 0
      %5461 = vmatprep.subr.bf16.mxu0 0
      %5462 = vmatpush1.bf16.msra.mxu0 0
      %5463 = vmatprep.subr.bf16.mxu0 0
      %5464 = vmatpush1.bf16.msra.mxu0 0
      %5465 = vmatprep.subr.bf16.mxu0 0
      %5466 = vmatpush1.bf16.msra.mxu0 0
      %5467 = vmatprep.subr.bf16.mxu0 0
      %5468 = vmatpush1.bf16.msra.mxu0 0
      %5469 = vmatprep.subr.bf16.mxu0 0
      %5470 = vmatpush1.bf16.msra.mxu0 0
      %5471 = vmatprep.subr.bf16.mxu0 0
      %5472 = vmatpush1.bf16.msra.mxu0 0
      %5473 = vmatprep.subr.bf16.mxu0 0
      %5474 = vmatpush1.bf16.msra.mxu0 0
      %5475 = vmatprep.subr.bf16.mxu0 0
      %5476 = vmatpush1.bf16.msra.mxu0 0
      %5477 = vmatprep.subr.bf16.mxu0 0
      %5478 = vmatpush1.bf16.msra.mxu0 0
      %5479 = vmatprep.subr.bf16.mxu0 0
      %5480 = vmatpush1.bf16.msra.mxu0 0
      %5481 = vmatprep.mubr.bf16.mxu0 0
      %5482 = vmatmul.mubr.bf16.gmra.mrb[0].mxu0 %v5391
      %v5483 = vpop.f32.mrb[0].mxu0
      %v5484 = vadd.f32 0.0, %v5483
      %v5485 = vpop.f32.mrb[0].mxu0
      %v5486 = vadd.f32 0.0, %v5485
      %v5487 = vpop.f32.mrb[0].mxu0
      %v5488 = vpop.f32.mrb[0].mxu0
      %5489 = vdwg.mxu0
      %5490 = vmatprep.subr.bf16.mxu0 0
      %5491 = vmatpush1.bf16.msra.mxu0 %v5406
      %5492 = vmatprep.subr.bf16.mxu0 0
      %5493 = vmatpush1.bf16.msra.mxu0 0
      %5494 = vmatprep.subr.bf16.mxu0 0
      %5495 = vmatpush1.bf16.msra.mxu0 0
      %5496 = vmatprep.subr.bf16.mxu0 0
      %5497 = vmatpush1.bf16.msra.mxu0 0
      %5498 = vmatprep.subr.bf16.mxu0 0
      %5499 = vmatpush1.bf16.msra.mxu0 0
      %5500 = vmatprep.subr.bf16.mxu0 0
      %5501 = vmatpush1.bf16.msra.mxu0 0
      %5502 = vmatprep.subr.bf16.mxu0 0
      %5503 = vmatpush1.bf16.msra.mxu0 0
      %5504 = vmatprep.subr.bf16.mxu0 0
      %5505 = vmatpush1.bf16.msra.mxu0 0
      %5506 = vmatprep.subr.bf16.mxu0 0
      %5507 = vmatpush1.bf16.msra.mxu0 0
      %5508 = vmatprep.subr.bf16.mxu0 0
      %5509 = vmatpush1.bf16.msra.mxu0 0
      %5510 = vmatprep.subr.bf16.mxu0 0
      %5511 = vmatpush1.bf16.msra.mxu0 0
      %5512 = vmatprep.subr.bf16.mxu0 0
      %5513 = vmatpush1.bf16.msra.mxu0 0
      %5514 = vmatprep.subr.bf16.mxu0 0
      %5515 = vmatpush1.bf16.msra.mxu0 0
      %5516 = vmatprep.subr.bf16.mxu0 0
      %5517 = vmatpush1.bf16.msra.mxu0 0
      %5518 = vmatprep.subr.bf16.mxu0 0
      %5519 = vmatpush1.bf16.msra.mxu0 0
      %5520 = vmatprep.subr.bf16.mxu0 0
      %5521 = vmatpush1.bf16.msra.mxu0 0
      %5522 = vmatprep.mubr.bf16.mxu0 0
      %5523 = vmatmul.mubr.bf16.gmra.mrb[0].mxu0 %v5391
      %v5524 = vpop.f32.mrb[0].mxu0
      %v5525 = vadd.f32 0.0, %v5524
      %v5526 = vpop.f32.mrb[0].mxu0
      %v5527 = vpop.f32.mrb[0].mxu0
      %v5528 = vpop.f32.mrb[0].mxu0
      %5529 = vdwg.mxu0
      %v5530 = vadd.f32 %v5366, %v5443
      %v5531 = vadd.f32 %v5367, %v5445
      %v5532 = vadd.f32 %v5368, %v5484
      %v5533 = vadd.f32 %v5369, %v5486
      %v5534 = vadd.f32 %v5370, %v5525
      %s5535 = scalar_lea.vmem %s2, 16
      %v5536 = vld [vmem:[%s5535] sm:$0xf]
      %5537 = vrot.lane.b32.xlu0 %v4887, 100
      %v5538 = vpop.permute.xlu0 %5537
      %5539 = vrot.lane.b32.xlu0 %v4888, 100
      %v5540 = vpop.permute.xlu0 %5539
      %5541 = vrot.lane.b32.xlu0 %v4889, 100
      %v5542 = vpop.permute.xlu0 %5541
      %5543 = vrot.lane.b32.xlu0 %v4890, 100
      %v5544 = vpop.permute.xlu0 %5543
      %5545 = vrot.lane.b32.xlu0 %v4891, 100
      %v5546 = vpop.permute.xlu0 %5545
      %5547 = vrot.lane.b32.xlu0 %v4892, 100
      %v5548 = vpop.permute.xlu0 %5547
      %v5549 = vsel %vm990, %v5538, %v5540
      %v5550 = vsel %vm990, %v5540, %v5542
      %v5551 = vsel %vm990, %v5542, %v5544
      %v5552 = vsel %vm990, %v5544, %v5546
      %v5553 = vsel %vm990, %v5546, %v5548
      %v5555 = vsel %vm346, %v5536, 0
      %v5558 = vsel %vm350, %v5549, 0
      %v5561 = vsel %vm350, %v5550, 0
      %v5564 = vsel %vm350, %v5551, 0
      %v5567 = vsel %vm350, %v5552, 0
      %v5570 = vsel %vm350, %v5553, 0
      %5572 = vmatprep.subr.bf16.mxu0 %v5561
      %5573 = vmatpush1.bf16.msra.mxu0 %v5558
      %5574 = vmatprep.subr.bf16.mxu0 0
      %5575 = vmatpush1.bf16.msra.mxu0 0
      %5576 = vmatprep.subr.bf16.mxu0 0
      %5577 = vmatpush1.bf16.msra.mxu0 0
      %5578 = vmatprep.subr.bf16.mxu0 0
      %5579 = vmatpush1.bf16.msra.mxu0 0
      %5580 = vmatprep.subr.bf16.mxu0 0
      %5581 = vmatpush1.bf16.msra.mxu0 0
      %5582 = vmatprep.subr.bf16.mxu0 0
      %5583 = vmatpush1.bf16.msra.mxu0 0
      %5584 = vmatprep.subr.bf16.mxu0 0
      %5585 = vmatpush1.bf16.msra.mxu0 0
      %5586 = vmatprep.subr.bf16.mxu0 0
      %5587 = vmatpush1.bf16.msra.mxu0 0
      %5588 = vmatprep.subr.bf16.mxu0 0
      %5589 = vmatpush1.bf16.msra.mxu0 0
      %5590 = vmatprep.subr.bf16.mxu0 0
      %5591 = vmatpush1.bf16.msra.mxu0 0
      %5592 = vmatprep.subr.bf16.mxu0 0
      %5593 = vmatpush1.bf16.msra.mxu0 0
      %5594 = vmatprep.subr.bf16.mxu0 0
      %5595 = vmatpush1.bf16.msra.mxu0 0
      %5596 = vmatprep.subr.bf16.mxu0 0
      %5597 = vmatpush1.bf16.msra.mxu0 0
      %5598 = vmatprep.subr.bf16.mxu0 0
      %5599 = vmatpush1.bf16.msra.mxu0 0
      %5600 = vmatprep.subr.bf16.mxu0 0
      %5601 = vmatpush1.bf16.msra.mxu0 0
      %5602 = vmatprep.subr.bf16.mxu0 0
      %5603 = vmatpush1.bf16.msra.mxu0 0
      %5604 = vmatprep.mubr.bf16.mxu0 0
      %5605 = vmatmul.mubr.bf16.gmra.mrb[0].mxu0 %v5555
      %v5606 = vpop.f32.mrb[0].mxu0
      %v5607 = vadd.f32 0.0, %v5606
      %v5608 = vpop.f32.mrb[0].mxu0
      %v5609 = vadd.f32 0.0, %v5608
      %v5610 = vpop.f32.mrb[0].mxu0
      %v5611 = vpop.f32.mrb[0].mxu0
      %5612 = vdwg.mxu0
      %5613 = vmatprep.subr.bf16.mxu0 %v5567
      %5614 = vmatpush1.bf16.msra.mxu0 %v5564
      %5615 = vmatprep.subr.bf16.mxu0 0
      %5616 = vmatpush1.bf16.msra.mxu0 0
      %5617 = vmatprep.subr.bf16.mxu0 0
      %5618 = vmatpush1.bf16.msra.mxu0 0
      %5619 = vmatprep.subr.bf16.mxu0 0
      %5620 = vmatpush1.bf16.msra.mxu0 0
      %5621 = vmatprep.subr.bf16.mxu0 0
      %5622 = vmatpush1.bf16.msra.mxu0 0
      %5623 = vmatprep.subr.bf16.mxu0 0
      %5624 = vmatpush1.bf16.msra.mxu0 0
      %5625 = vmatprep.subr.bf16.mxu0 0
      %5626 = vmatpush1.bf16.msra.mxu0 0
      %5627 = vmatprep.subr.bf16.mxu0 0
      %5628 = vmatpush1.bf16.msra.mxu0 0
      %5629 = vmatprep.subr.bf16.mxu0 0
      %5630 = vmatpush1.bf16.msra.mxu0 0
      %5631 = vmatprep.subr.bf16.mxu0 0
      %5632 = vmatpush1.bf16.msra.mxu0 0
      %5633 = vmatprep.subr.bf16.mxu0 0
      %5634 = vmatpush1.bf16.msra.mxu0 0
      %5635 = vmatprep.subr.bf16.mxu0 0
      %5636 = vmatpush1.bf16.msra.mxu0 0
      %5637 = vmatprep.subr.bf16.mxu0 0
      %5638 = vmatpush1.bf16.msra.mxu0 0
      %5639 = vmatprep.subr.bf16.mxu0 0
      %5640 = vmatpush1.bf16.msra.mxu0 0
      %5641 = vmatprep.subr.bf16.mxu0 0
      %5642 = vmatpush1.bf16.msra.mxu0 0
      %5643 = vmatprep.subr.bf16.mxu0 0
      %5644 = vmatpush1.bf16.msra.mxu0 0
      %5645 = vmatprep.mubr.bf16.mxu0 0
      %5646 = vmatmul.mubr.bf16.gmra.mrb[0].mxu0 %v5555
      %v5647 = vpop.f32.mrb[0].mxu0
      %v5648 = vadd.f32 0.0, %v5647
      %v5649 = vpop.f32.mrb[0].mxu0
      %v5650 = vadd.f32 0.0, %v5649
      %v5651 = vpop.f32.mrb[0].mxu0
      %v5652 = vpop.f32.mrb[0].mxu0
      %5653 = vdwg.mxu0
      %5654 = vmatprep.subr.bf16.mxu0 0
      %5655 = vmatpush1.bf16.msra.mxu0 %v5570
      %5656 = vmatprep.subr.bf16.mxu0 0
      %5657 = vmatpush1.bf16.msra.mxu0 0
      %5658 = vmatprep.subr.bf16.mxu0 0
      %5659 = vmatpush1.bf16.msra.mxu0 0
      %5660 = vmatprep.subr.bf16.mxu0 0
      %5661 = vmatpush1.bf16.msra.mxu0 0
      %5662 = vmatprep.subr.bf16.mxu0 0
      %5663 = vmatpush1.bf16.msra.mxu0 0
      %5664 = vmatprep.subr.bf16.mxu0 0
      %5665 = vmatpush1.bf16.msra.mxu0 0
      %5666 = vmatprep.subr.bf16.mxu0 0
      %5667 = vmatpush1.bf16.msra.mxu0 0
      %5668 = vmatprep.subr.bf16.mxu0 0
      %5669 = vmatpush1.bf16.msra.mxu0 0
      %5670 = vmatprep.subr.bf16.mxu0 0
      %5671 = vmatpush1.bf16.msra.mxu0 0
      %5672 = vmatprep.subr.bf16.mxu0 0
      %5673 = vmatpush1.bf16.msra.mxu0 0
      %5674 = vmatprep.subr.bf16.mxu0 0
      %5675 = vmatpush1.bf16.msra.mxu0 0
      %5676 = vmatprep.subr.bf16.mxu0 0
      %5677 = vmatpush1.bf16.msra.mxu0 0
      %5678 = vmatprep.subr.bf16.mxu0 0
      %5679 = vmatpush1.bf16.msra.mxu0 0
      %5680 = vmatprep.subr.bf16.mxu0 0
      %5681 = vmatpush1.bf16.msra.mxu0 0
      %5682 = vmatprep.subr.bf16.mxu0 0
      %5683 = vmatpush1.bf16.msra.mxu0 0
      %5684 = vmatprep.subr.bf16.mxu0 0
      %5685 = vmatpush1.bf16.msra.mxu0 0
      %5686 = vmatprep.mubr.bf16.mxu0 0
      %5687 = vmatmul.mubr.bf16.gmra.mrb[0].mxu0 %v5555
      %v5688 = vpop.f32.mrb[0].mxu0
      %v5689 = vadd.f32 0.0, %v5688
      %v5690 = vpop.f32.mrb[0].mxu0
      %v5691 = vpop.f32.mrb[0].mxu0
      %v5692 = vpop.f32.mrb[0].mxu0
      %5693 = vdwg.mxu0
      %v5694 = vadd.f32 %v5530, %v5607
      %v5695 = vadd.f32 %v5531, %v5609
      %v5696 = vadd.f32 %v5532, %v5648
      %v5697 = vadd.f32 %v5533, %v5650
      %v5698 = vadd.f32 %v5534, %v5689
      %s5699 = scalar_lea.vmem %s2, 20
      %v5700 = vld [vmem:[%s5699] sm:$0xf]
      %5701 = vrot.lane.b32.xlu0 %v4887, 99
      %v5702 = vpop.permute.xlu0 %5701
      %5703 = vrot.lane.b32.xlu0 %v4888, 99
      %v5704 = vpop.permute.xlu0 %5703
      %5705 = vrot.lane.b32.xlu0 %v4889, 99
      %v5706 = vpop.permute.xlu0 %5705
      %5707 = vrot.lane.b32.xlu0 %v4890, 99
      %v5708 = vpop.permute.xlu0 %5707
      %5709 = vrot.lane.b32.xlu0 %v4891, 99
      %v5710 = vpop.permute.xlu0 %5709
      %5711 = vrot.lane.b32.xlu0 %v4892, 99
      %v5712 = vpop.permute.xlu0 %5711
      %v5713 = vsel %vm1155, %v5702, %v5704
      %v5714 = vsel %vm1155, %v5704, %v5706
      %v5715 = vsel %vm1155, %v5706, %v5708
      %v5716 = vsel %vm1155, %v5708, %v5710
      %v5717 = vsel %vm1155, %v5710, %v5712
      %v5719 = vsel %vm346, %v5700, 0
      %v5722 = vsel %vm350, %v5713, 0
      %v5725 = vsel %vm350, %v5714, 0
      %v5728 = vsel %vm350, %v5715, 0
      %v5731 = vsel %vm350, %v5716, 0
      %v5734 = vsel %vm350, %v5717, 0
      %5736 = vmatprep.subr.bf16.mxu0 %v5725
      %5737 = vmatpush1.bf16.msra.mxu0 %v5722
      %5738 = vmatprep.subr.bf16.mxu0 0
      %5739 = vmatpush1.bf16.msra.mxu0 0
      %5740 = vmatprep.subr.bf16.mxu0 0
      %5741 = vmatpush1.bf16.msra.mxu0 0
      %5742 = vmatprep.subr.bf16.mxu0 0
      %5743 = vmatpush1.bf16.msra.mxu0 0
      %5744 = vmatprep.subr.bf16.mxu0 0
      %5745 = vmatpush1.bf16.msra.mxu0 0
      %5746 = vmatprep.subr.bf16.mxu0 0
      %5747 = vmatpush1.bf16.msra.mxu0 0
      %5748 = vmatprep.subr.bf16.mxu0 0
      %5749 = vmatpush1.bf16.msra.mxu0 0
      %5750 = vmatprep.subr.bf16.mxu0 0
      %5751 = vmatpush1.bf16.msra.mxu0 0
      %5752 = vmatprep.subr.bf16.mxu0 0
      %5753 = vmatpush1.bf16.msra.mxu0 0
      %5754 = vmatprep.subr.bf16.mxu0 0
      %5755 = vmatpush1.bf16.msra.mxu0 0
      %5756 = vmatprep.subr.bf16.mxu0 0
      %5757 = vmatpush1.bf16.msra.mxu0 0
      %5758 = vmatprep.subr.bf16.mxu0 0
      %5759 = vmatpush1.bf16.msra.mxu0 0
      %5760 = vmatprep.subr.bf16.mxu0 0
      %5761 = vmatpush1.bf16.msra.mxu0 0
      %5762 = vmatprep.subr.bf16.mxu0 0
      %5763 = vmatpush1.bf16.msra.mxu0 0
      %5764 = vmatprep.subr.bf16.mxu0 0
      %5765 = vmatpush1.bf16.msra.mxu0 0
      %5766 = vmatprep.subr.bf16.mxu0 0
      %5767 = vmatpush1.bf16.msra.mxu0 0
      %5768 = vmatprep.mubr.bf16.mxu0 0
      %5769 = vmatmul.mubr.bf16.gmra.mrb[0].mxu0 %v5719
      %v5770 = vpop.f32.mrb[0].mxu0
      %v5771 = vadd.f32 0.0, %v5770
      %v5772 = vpop.f32.mrb[0].mxu0
      %v5773 = vadd.f32 0.0, %v5772
      %v5774 = vpop.f32.mrb[0].mxu0
      %v5775 = vpop.f32.mrb[0].mxu0
      %5776 = vdwg.mxu0
      %5777 = vmatprep.subr.bf16.mxu0 %v5731
      %5778 = vmatpush1.bf16.msra.mxu0 %v5728
      %5779 = vmatprep.subr.bf16.mxu0 0
      %5780 = vmatpush1.bf16.msra.mxu0 0
      %5781 = vmatprep.subr.bf16.mxu0 0
      %5782 = vmatpush1.bf16.msra.mxu0 0
      %5783 = vmatprep.subr.bf16.mxu0 0
      %5784 = vmatpush1.bf16.msra.mxu0 0
      %5785 = vmatprep.subr.bf16.mxu0 0
      %5786 = vmatpush1.bf16.msra.mxu0 0
      %5787 = vmatprep.subr.bf16.mxu0 0
      %5788 = vmatpush1.bf16.msra.mxu0 0
      %5789 = vmatprep.subr.bf16.mxu0 0
      %5790 = vmatpush1.bf16.msra.mxu0 0
      %5791 = vmatprep.subr.bf16.mxu0 0
      %5792 = vmatpush1.bf16.msra.mxu0 0
      %5793 = vmatprep.subr.bf16.mxu0 0
      %5794 = vmatpush1.bf16.msra.mxu0 0
      %5795 = vmatprep.subr.bf16.mxu0 0
      %5796 = vmatpush1.bf16.msra.mxu0 0
      %5797 = vmatprep.subr.bf16.mxu0 0
      %5798 = vmatpush1.bf16.msra.mxu0 0
      %5799 = vmatprep.subr.bf16.mxu0 0
      %5800 = vmatpush1.bf16.msra.mxu0 0
      %5801 = vmatprep.subr.bf16.mxu0 0
      %5802 = vmatpush1.bf16.msra.mxu0 0
      %5803 = vmatprep.subr.bf16.mxu0 0
      %5804 = vmatpush1.bf16.msra.mxu0 0
      %5805 = vmatprep.subr.bf16.mxu0 0
      %5806 = vmatpush1.bf16.msra.mxu0 0
      %5807 = vmatprep.subr.bf16.mxu0 0
      %5808 = vmatpush1.bf16.msra.mxu0 0
      %5809 = vmatprep.mubr.bf16.mxu0 0
      %5810 = vmatmul.mubr.bf16.gmra.mrb[0].mxu0 %v5719
      %v5811 = vpop.f32.mrb[0].mxu0
      %v5812 = vadd.f32 0.0, %v5811
      %v5813 = vpop.f32.mrb[0].mxu0
      %v5814 = vadd.f32 0.0, %v5813
      %v5815 = vpop.f32.mrb[0].mxu0
      %v5816 = vpop.f32.mrb[0].mxu0
      %5817 = vdwg.mxu0
      %5818 = vmatprep.subr.bf16.mxu0 0
      %5819 = vmatpush1.bf16.msra.mxu0 %v5734
      %5820 = vmatprep.subr.bf16.mxu0 0
      %5821 = vmatpush1.bf16.msra.mxu0 0
      %5822 = vmatprep.subr.bf16.mxu0 0
      %5823 = vmatpush1.bf16.msra.mxu0 0
      %5824 = vmatprep.subr.bf16.mxu0 0
      %5825 = vmatpush1.bf16.msra.mxu0 0
      %5826 = vmatprep.subr.bf16.mxu0 0
      %5827 = vmatpush1.bf16.msra.mxu0 0
      %5828 = vmatprep.subr.bf16.mxu0 0
      %5829 = vmatpush1.bf16.msra.mxu0 0
      %5830 = vmatprep.subr.bf16.mxu0 0
      %5831 = vmatpush1.bf16.msra.mxu0 0
      %5832 = vmatprep.subr.bf16.mxu0 0
      %5833 = vmatpush1.bf16.msra.mxu0 0
      %5834 = vmatprep.subr.bf16.mxu0 0
      %5835 = vmatpush1.bf16.msra.mxu0 0
      %5836 = vmatprep.subr.bf16.mxu0 0
      %5837 = vmatpush1.bf16.msra.mxu0 0
      %5838 = vmatprep.subr.bf16.mxu0 0
      %5839 = vmatpush1.bf16.msra.mxu0 0
      %5840 = vmatprep.subr.bf16.mxu0 0
      %5841 = vmatpush1.bf16.msra.mxu0 0
      %5842 = vmatprep.subr.bf16.mxu0 0
      %5843 = vmatpush1.bf16.msra.mxu0 0
      %5844 = vmatprep.subr.bf16.mxu0 0
      %5845 = vmatpush1.bf16.msra.mxu0 0
      %5846 = vmatprep.subr.bf16.mxu0 0
      %5847 = vmatpush1.bf16.msra.mxu0 0
      %5848 = vmatprep.subr.bf16.mxu0 0
      %5849 = vmatpush1.bf16.msra.mxu0 0
      %5850 = vmatprep.mubr.bf16.mxu0 0
      %5851 = vmatmul.mubr.bf16.gmra.mrb[0].mxu0 %v5719
      %v5852 = vpop.f32.mrb[0].mxu0
      %v5853 = vadd.f32 0.0, %v5852
      %v5854 = vpop.f32.mrb[0].mxu0
      %v5855 = vpop.f32.mrb[0].mxu0
      %v5856 = vpop.f32.mrb[0].mxu0
      %5857 = vdwg.mxu0
      %v5858 = vadd.f32 %v5694, %v5771
      %v5859 = vadd.f32 %v5695, %v5773
      %v5860 = vadd.f32 %v5696, %v5812
      %v5861 = vadd.f32 %v5697, %v5814
      %v5862 = vadd.f32 %v5698, %v5853
      %s5863 = scalar_lea.vmem %s2, 24
      %v5864 = vld [vmem:[%s5863] sm:$0xf]
      %5865 = vrot.lane.b32.xlu0 %v4887, 91
      %v5866 = vpop.permute.xlu0 %5865
      %5867 = vrot.lane.b32.xlu0 %v4888, 91
      %v5868 = vpop.permute.xlu0 %5867
      %5869 = vrot.lane.b32.xlu0 %v4889, 91
      %v5870 = vpop.permute.xlu0 %5869
      %5871 = vrot.lane.b32.xlu0 %v4890, 91
      %v5872 = vpop.permute.xlu0 %5871
      %5873 = vrot.lane.b32.xlu0 %v4891, 91
      %v5874 = vpop.permute.xlu0 %5873
      %5875 = vrot.lane.b32.xlu0 %v4892, 91
      %v5876 = vpop.permute.xlu0 %5875
      %v5877 = vsel %vm1320, %v5866, %v5868
      %v5878 = vsel %vm1320, %v5868, %v5870
      %v5879 = vsel %vm1320, %v5870, %v5872
      %v5880 = vsel %vm1320, %v5872, %v5874
      %v5881 = vsel %vm1320, %v5874, %v5876
      %v5883 = vsel %vm346, %v5864, 0
      %v5886 = vsel %vm350, %v5877, 0
      %v5889 = vsel %vm350, %v5878, 0
      %v5892 = vsel %vm350, %v5879, 0
      %v5895 = vsel %vm350, %v5880, 0
      %v5898 = vsel %vm350, %v5881, 0
      %5900 = vmatprep.subr.bf16.mxu0 %v5889
      %5901 = vmatpush1.bf16.msra.mxu0 %v5886
      %5902 = vmatprep.subr.bf16.mxu0 0
      %5903 = vmatpush1.bf16.msra.mxu0 0
      %5904 = vmatprep.subr.bf16.mxu0 0
      %5905 = vmatpush1.bf16.msra.mxu0 0
      %5906 = vmatprep.subr.bf16.mxu0 0
      %5907 = vmatpush1.bf16.msra.mxu0 0
      %5908 = vmatprep.subr.bf16.mxu0 0
      %5909 = vmatpush1.bf16.msra.mxu0 0
      %5910 = vmatprep.subr.bf16.mxu0 0
      %5911 = vmatpush1.bf16.msra.mxu0 0
      %5912 = vmatprep.subr.bf16.mxu0 0
      %5913 = vmatpush1.bf16.msra.mxu0 0
      %5914 = vmatprep.subr.bf16.mxu0 0
      %5915 = vmatpush1.bf16.msra.mxu0 0
      %5916 = vmatprep.subr.bf16.mxu0 0
      %5917 = vmatpush1.bf16.msra.mxu0 0
      %5918 = vmatprep.subr.bf16.mxu0 0
      %5919 = vmatpush1.bf16.msra.mxu0 0
      %5920 = vmatprep.subr.bf16.mxu0 0
      %5921 = vmatpush1.bf16.msra.mxu0 0
      %5922 = vmatprep.subr.bf16.mxu0 0
      %5923 = vmatpush1.bf16.msra.mxu0 0
      %5924 = vmatprep.subr.bf16.mxu0 0
      %5925 = vmatpush1.bf16.msra.mxu0 0
      %5926 = vmatprep.subr.bf16.mxu0 0
      %5927 = vmatpush1.bf16.msra.mxu0 0
      %5928 = vmatprep.subr.bf16.mxu0 0
      %5929 = vmatpush1.bf16.msra.mxu0 0
      %5930 = vmatprep.subr.bf16.mxu0 0
      %5931 = vmatpush1.bf16.msra.mxu0 0
      %5932 = vmatprep.mubr.bf16.mxu0 0
      %5933 = vmatmul.mubr.bf16.gmra.mrb[0].mxu0 %v5883
      %v5934 = vpop.f32.mrb[0].mxu0
      %v5935 = vadd.f32 0.0, %v5934
      %v5936 = vpop.f32.mrb[0].mxu0
      %v5937 = vadd.f32 0.0, %v5936
      %v5938 = vpop.f32.mrb[0].mxu0
      %v5939 = vpop.f32.mrb[0].mxu0
      %5940 = vdwg.mxu0
      %5941 = vmatprep.subr.bf16.mxu0 %v5895
      %5942 = vmatpush1.bf16.msra.mxu0 %v5892
      %5943 = vmatprep.subr.bf16.mxu0 0
      %5944 = vmatpush1.bf16.msra.mxu0 0
      %5945 = vmatprep.subr.bf16.mxu0 0
      %5946 = vmatpush1.bf16.msra.mxu0 0
      %5947 = vmatprep.subr.bf16.mxu0 0
      %5948 = vmatpush1.bf16.msra.mxu0 0
      %5949 = vmatprep.subr.bf16.mxu0 0
      %5950 = vmatpush1.bf16.msra.mxu0 0
      %5951 = vmatprep.subr.bf16.mxu0 0
      %5952 = vmatpush1.bf16.msra.mxu0 0
      %5953 = vmatprep.subr.bf16.mxu0 0
      %5954 = vmatpush1.bf16.msra.mxu0 0
      %5955 = vmatprep.subr.bf16.mxu0 0
      %5956 = vmatpush1.bf16.msra.mxu0 0
      %5957 = vmatprep.subr.bf16.mxu0 0
      %5958 = vmatpush1.bf16.msra.mxu0 0
      %5959 = vmatprep.subr.bf16.mxu0 0
      %5960 = vmatpush1.bf16.msra.mxu0 0
      %5961 = vmatprep.subr.bf16.mxu0 0
      %5962 = vmatpush1.bf16.msra.mxu0 0
      %5963 = vmatprep.subr.bf16.mxu0 0
      %5964 = vmatpush1.bf16.msra.mxu0 0
      %5965 = vmatprep.subr.bf16.mxu0 0
      %5966 = vmatpush1.bf16.msra.mxu0 0
      %5967 = vmatprep.subr.bf16.mxu0 0
      %5968 = vmatpush1.bf16.msra.mxu0 0
      %5969 = vmatprep.subr.bf16.mxu0 0
      %5970 = vmatpush1.bf16.msra.mxu0 0
      %5971 = vmatprep.subr.bf16.mxu0 0
      %5972 = vmatpush1.bf16.msra.mxu0 0
      %5973 = vmatprep.mubr.bf16.mxu0 0
      %5974 = vmatmul.mubr.bf16.gmra.mrb[0].mxu0 %v5883
      %v5975 = vpop.f32.mrb[0].mxu0
      %v5976 = vadd.f32 0.0, %v5975
      %v5977 = vpop.f32.mrb[0].mxu0
      %v5978 = vadd.f32 0.0, %v5977
      %v5979 = vpop.f32.mrb[0].mxu0
      %v5980 = vpop.f32.mrb[0].mxu0
      %5981 = vdwg.mxu0
      %5982 = vmatprep.subr.bf16.mxu0 0
      %5983 = vmatpush1.bf16.msra.mxu0 %v5898
      %5984 = vmatprep.subr.bf16.mxu0 0
      %5985 = vmatpush1.bf16.msra.mxu0 0
      %5986 = vmatprep.subr.bf16.mxu0 0
      %5987 = vmatpush1.bf16.msra.mxu0 0
      %5988 = vmatprep.subr.bf16.mxu0 0
      %5989 = vmatpush1.bf16.msra.mxu0 0
      %5990 = vmatprep.subr.bf16.mxu0 0
      %5991 = vmatpush1.bf16.msra.mxu0 0
      %5992 = vmatprep.subr.bf16.mxu0 0
      %5993 = vmatpush1.bf16.msra.mxu0 0
      %5994 = vmatprep.subr.bf16.mxu0 0
      %5995 = vmatpush1.bf16.msra.mxu0 0
      %5996 = vmatprep.subr.bf16.mxu0 0
      %5997 = vmatpush1.bf16.msra.mxu0 0
      %5998 = vmatprep.subr.bf16.mxu0 0
      %5999 = vmatpush1.bf16.msra.mxu0 0
      %6000 = vmatprep.subr.bf16.mxu0 0
      %6001 = vmatpush1.bf16.msra.mxu0 0
      %6002 = vmatprep.subr.bf16.mxu0 0
      %6003 = vmatpush1.bf16.msra.mxu0 0
      %6004 = vmatprep.subr.bf16.mxu0 0
      %6005 = vmatpush1.bf16.msra.mxu0 0
      %6006 = vmatprep.subr.bf16.mxu0 0
      %6007 = vmatpush1.bf16.msra.mxu0 0
      %6008 = vmatprep.subr.bf16.mxu0 0
      %6009 = vmatpush1.bf16.msra.mxu0 0
      %6010 = vmatprep.subr.bf16.mxu0 0
      %6011 = vmatpush1.bf16.msra.mxu0 0
      %6012 = vmatprep.subr.bf16.mxu0 0
      %6013 = vmatpush1.bf16.msra.mxu0 0
      %6014 = vmatprep.mubr.bf16.mxu0 0
      %6015 = vmatmul.mubr.bf16.gmra.mrb[0].mxu0 %v5883
      %v6016 = vpop.f32.mrb[0].mxu0
      %v6017 = vadd.f32 0.0, %v6016
      %v6018 = vpop.f32.mrb[0].mxu0
      %v6019 = vpop.f32.mrb[0].mxu0
      %v6020 = vpop.f32.mrb[0].mxu0
      %6021 = vdwg.mxu0
      %v6022 = vadd.f32 %v5858, %v5935
      %v6023 = vadd.f32 %v5859, %v5937
      %v6024 = vadd.f32 %v5860, %v5976
      %v6025 = vadd.f32 %v5861, %v5978
      %v6026 = vadd.f32 %v5862, %v6017
      %s6027 = scalar_lea.vmem %s2, 28
      %v6028 = vld [vmem:[%s6027] sm:$0xf]
      %6029 = vrot.lane.b32.xlu0 %v4887, 90
      %v6030 = vpop.permute.xlu0 %6029
      %6031 = vrot.lane.b32.xlu0 %v4888, 90
      %v6032 = vpop.permute.xlu0 %6031
      %6033 = vrot.lane.b32.xlu0 %v4889, 90
      %v6034 = vpop.permute.xlu0 %6033
      %6035 = vrot.lane.b32.xlu0 %v4890, 90
      %v6036 = vpop.permute.xlu0 %6035
      %6037 = vrot.lane.b32.xlu0 %v4891, 90
      %v6038 = vpop.permute.xlu0 %6037
      %6039 = vrot.lane.b32.xlu0 %v4892, 90
      %v6040 = vpop.permute.xlu0 %6039
      %v6041 = vsel %vm1485, %v6030, %v6032
      %v6042 = vsel %vm1485, %v6032, %v6034
      %v6043 = vsel %vm1485, %v6034, %v6036
      %v6044 = vsel %vm1485, %v6036, %v6038
      %v6045 = vsel %vm1485, %v6038, %v6040
      %v6047 = vsel %vm346, %v6028, 0
      %v6050 = vsel %vm350, %v6041, 0
      %v6053 = vsel %vm350, %v6042, 0
      %v6056 = vsel %vm350, %v6043, 0
      %v6059 = vsel %vm350, %v6044, 0
      %v6062 = vsel %vm350, %v6045, 0
      %6064 = vmatprep.subr.bf16.mxu0 %v6053
      %6065 = vmatpush1.bf16.msra.mxu0 %v6050
      %6066 = vmatprep.subr.bf16.mxu0 0
      %6067 = vmatpush1.bf16.msra.mxu0 0
      %6068 = vmatprep.subr.bf16.mxu0 0
      %6069 = vmatpush1.bf16.msra.mxu0 0
      %6070 = vmatprep.subr.bf16.mxu0 0
      %6071 = vmatpush1.bf16.msra.mxu0 0
      %6072 = vmatprep.subr.bf16.mxu0 0
      %6073 = vmatpush1.bf16.msra.mxu0 0
      %6074 = vmatprep.subr.bf16.mxu0 0
      %6075 = vmatpush1.bf16.msra.mxu0 0
      %6076 = vmatprep.subr.bf16.mxu0 0
      %6077 = vmatpush1.bf16.msra.mxu0 0
      %6078 = vmatprep.subr.bf16.mxu0 0
      %6079 = vmatpush1.bf16.msra.mxu0 0
      %6080 = vmatprep.subr.bf16.mxu0 0
      %6081 = vmatpush1.bf16.msra.mxu0 0
      %6082 = vmatprep.subr.bf16.mxu0 0
      %6083 = vmatpush1.bf16.msra.mxu0 0
      %6084 = vmatprep.subr.bf16.mxu0 0
      %6085 = vmatpush1.bf16.msra.mxu0 0
      %6086 = vmatprep.subr.bf16.mxu0 0
      %6087 = vmatpush1.bf16.msra.mxu0 0
      %6088 = vmatprep.subr.bf16.mxu0 0
      %6089 = vmatpush1.bf16.msra.mxu0 0
      %6090 = vmatprep.subr.bf16.mxu0 0
      %6091 = vmatpush1.bf16.msra.mxu0 0
      %6092 = vmatprep.subr.bf16.mxu0 0
      %6093 = vmatpush1.bf16.msra.mxu0 0
      %6094 = vmatprep.subr.bf16.mxu0 0
      %6095 = vmatpush1.bf16.msra.mxu0 0
      %6096 = vmatprep.mubr.bf16.mxu0 0
      %6097 = vmatmul.mubr.bf16.gmra.mrb[0].mxu0 %v6047
      %v6098 = vpop.f32.mrb[0].mxu0
      %v6099 = vadd.f32 0.0, %v6098
      %v6100 = vpop.f32.mrb[0].mxu0
      %v6101 = vadd.f32 0.0, %v6100
      %v6102 = vpop.f32.mrb[0].mxu0
      %v6103 = vpop.f32.mrb[0].mxu0
      %6104 = vdwg.mxu0
      %6105 = vmatprep.subr.bf16.mxu0 %v6059
      %6106 = vmatpush1.bf16.msra.mxu0 %v6056
      %6107 = vmatprep.subr.bf16.mxu0 0
      %6108 = vmatpush1.bf16.msra.mxu0 0
      %6109 = vmatprep.subr.bf16.mxu0 0
      %6110 = vmatpush1.bf16.msra.mxu0 0
      %6111 = vmatprep.subr.bf16.mxu0 0
      %6112 = vmatpush1.bf16.msra.mxu0 0
      %6113 = vmatprep.subr.bf16.mxu0 0
      %6114 = vmatpush1.bf16.msra.mxu0 0
      %6115 = vmatprep.subr.bf16.mxu0 0
      %6116 = vmatpush1.bf16.msra.mxu0 0
      %6117 = vmatprep.subr.bf16.mxu0 0
      %6118 = vmatpush1.bf16.msra.mxu0 0
      %6119 = vmatprep.subr.bf16.mxu0 0
      %6120 = vmatpush1.bf16.msra.mxu0 0
      %6121 = vmatprep.subr.bf16.mxu0 0
      %6122 = vmatpush1.bf16.msra.mxu0 0
      %6123 = vmatprep.subr.bf16.mxu0 0
      %6124 = vmatpush1.bf16.msra.mxu0 0
      %6125 = vmatprep.subr.bf16.mxu0 0
      %6126 = vmatpush1.bf16.msra.mxu0 0
      %6127 = vmatprep.subr.bf16.mxu0 0
      %6128 = vmatpush1.bf16.msra.mxu0 0
      %6129 = vmatprep.subr.bf16.mxu0 0
      %6130 = vmatpush1.bf16.msra.mxu0 0
      %6131 = vmatprep.subr.bf16.mxu0 0
      %6132 = vmatpush1.bf16.msra.mxu0 0
      %6133 = vmatprep.subr.bf16.mxu0 0
      %6134 = vmatpush1.bf16.msra.mxu0 0
      %6135 = vmatprep.subr.bf16.mxu0 0
      %6136 = vmatpush1.bf16.msra.mxu0 0
      %6137 = vmatprep.mubr.bf16.mxu0 0
      %6138 = vmatmul.mubr.bf16.gmra.mrb[0].mxu0 %v6047
      %v6139 = vpop.f32.mrb[0].mxu0
      %v6140 = vadd.f32 0.0, %v6139
      %v6141 = vpop.f32.mrb[0].mxu0
      %v6142 = vadd.f32 0.0, %v6141
      %v6143 = vpop.f32.mrb[0].mxu0
      %v6144 = vpop.f32.mrb[0].mxu0
      %6145 = vdwg.mxu0
      %6146 = vmatprep.subr.bf16.mxu0 0
      %6147 = vmatpush1.bf16.msra.mxu0 %v6062
      %6148 = vmatprep.subr.bf16.mxu0 0
      %6149 = vmatpush1.bf16.msra.mxu0 0
      %6150 = vmatprep.subr.bf16.mxu0 0
      %6151 = vmatpush1.bf16.msra.mxu0 0
      %6152 = vmatprep.subr.bf16.mxu0 0
      %6153 = vmatpush1.bf16.msra.mxu0 0
      %6154 = vmatprep.subr.bf16.mxu0 0
      %6155 = vmatpush1.bf16.msra.mxu0 0
      %6156 = vmatprep.subr.bf16.mxu0 0
      %6157 = vmatpush1.bf16.msra.mxu0 0
      %6158 = vmatprep.subr.bf16.mxu0 0
      %6159 = vmatpush1.bf16.msra.mxu0 0
      %6160 = vmatprep.subr.bf16.mxu0 0
      %6161 = vmatpush1.bf16.msra.mxu0 0
      %6162 = vmatprep.subr.bf16.mxu0 0
      %6163 = vmatpush1.bf16.msra.mxu0 0
      %6164 = vmatprep.subr.bf16.mxu0 0
      %6165 = vmatpush1.bf16.msra.mxu0 0
      %6166 = vmatprep.subr.bf16.mxu0 0
      %6167 = vmatpush1.bf16.msra.mxu0 0
      %6168 = vmatprep.subr.bf16.mxu0 0
      %6169 = vmatpush1.bf16.msra.mxu0 0
      %6170 = vmatprep.subr.bf16.mxu0 0
      %6171 = vmatpush1.bf16.msra.mxu0 0
      %6172 = vmatprep.subr.bf16.mxu0 0
      %6173 = vmatpush1.bf16.msra.mxu0 0
      %6174 = vmatprep.subr.bf16.mxu0 0
      %6175 = vmatpush1.bf16.msra.mxu0 0
      %6176 = vmatprep.subr.bf16.mxu0 0
      %6177 = vmatpush1.bf16.msra.mxu0 0
      %6178 = vmatprep.mubr.bf16.mxu0 0
      %6179 = vmatmul.mubr.bf16.gmra.mrb[0].mxu0 %v6047
      %v6180 = vpop.f32.mrb[0].mxu0
      %v6181 = vadd.f32 0.0, %v6180
      %v6182 = vpop.f32.mrb[0].mxu0
      %v6183 = vpop.f32.mrb[0].mxu0
      %v6184 = vpop.f32.mrb[0].mxu0
      %6185 = vdwg.mxu0
      %v6186 = vadd.f32 %v6022, %v6099
      %v6187 = vadd.f32 %v6023, %v6101
      %v6188 = vadd.f32 %v6024, %v6140
      %v6189 = vadd.f32 %v6025, %v6142
      %v6190 = vadd.f32 %v6026, %v6181
      %s6191 = scalar_lea.vmem %s2, 32
      %v6192 = vld [vmem:[%s6191] sm:$0xf]
      %6193 = vrot.lane.b32.xlu0 %v4887, 89
      %v6194 = vpop.permute.xlu0 %6193
      %6195 = vrot.lane.b32.xlu0 %v4888, 89
      %v6196 = vpop.permute.xlu0 %6195
      %6197 = vrot.lane.b32.xlu0 %v4889, 89
      %v6198 = vpop.permute.xlu0 %6197
      %6199 = vrot.lane.b32.xlu0 %v4890, 89
      %v6200 = vpop.permute.xlu0 %6199
      %6201 = vrot.lane.b32.xlu0 %v4891, 89
      %v6202 = vpop.permute.xlu0 %6201
      %6203 = vrot.lane.b32.xlu0 %v4892, 89
      %v6204 = vpop.permute.xlu0 %6203
      %v6205 = vsel %vm1650, %v6194, %v6196
      %v6206 = vsel %vm1650, %v6196, %v6198
      %v6207 = vsel %vm1650, %v6198, %v6200
      %v6208 = vsel %vm1650, %v6200, %v6202
      %v6209 = vsel %vm1650, %v6202, %v6204
      %v6211 = vsel %vm346, %v6192, 0
      %v6214 = vsel %vm350, %v6205, 0
      %v6217 = vsel %vm350, %v6206, 0
      %v6220 = vsel %vm350, %v6207, 0
      %v6223 = vsel %vm350, %v6208, 0
      %v6226 = vsel %vm350, %v6209, 0
      %6228 = vmatprep.subr.bf16.mxu0 %v6217
      %6229 = vmatpush1.bf16.msra.mxu0 %v6214
      %6230 = vmatprep.subr.bf16.mxu0 0
      %6231 = vmatpush1.bf16.msra.mxu0 0
      %6232 = vmatprep.subr.bf16.mxu0 0
      %6233 = vmatpush1.bf16.msra.mxu0 0
      %6234 = vmatprep.subr.bf16.mxu0 0
      %6235 = vmatpush1.bf16.msra.mxu0 0
      %6236 = vmatprep.subr.bf16.mxu0 0
      %6237 = vmatpush1.bf16.msra.mxu0 0
      %6238 = vmatprep.subr.bf16.mxu0 0
      %6239 = vmatpush1.bf16.msra.mxu0 0
      %6240 = vmatprep.subr.bf16.mxu0 0
      %6241 = vmatpush1.bf16.msra.mxu0 0
      %6242 = vmatprep.subr.bf16.mxu0 0
      %6243 = vmatpush1.bf16.msra.mxu0 0
      %6244 = vmatprep.subr.bf16.mxu0 0
      %6245 = vmatpush1.bf16.msra.mxu0 0
      %6246 = vmatprep.subr.bf16.mxu0 0
      %6247 = vmatpush1.bf16.msra.mxu0 0
      %6248 = vmatprep.subr.bf16.mxu0 0
      %6249 = vmatpush1.bf16.msra.mxu0 0
      %6250 = vmatprep.subr.bf16.mxu0 0
      %6251 = vmatpush1.bf16.msra.mxu0 0
      %6252 = vmatprep.subr.bf16.mxu0 0
      %6253 = vmatpush1.bf16.msra.mxu0 0
      %6254 = vmatprep.subr.bf16.mxu0 0
      %6255 = vmatpush1.bf16.msra.mxu0 0
      %6256 = vmatprep.subr.bf16.mxu0 0
      %6257 = vmatpush1.bf16.msra.mxu0 0
      %6258 = vmatprep.subr.bf16.mxu0 0
      %6259 = vmatpush1.bf16.msra.mxu0 0
      %6260 = vmatprep.mubr.bf16.mxu0 0
      %6261 = vmatmul.mubr.bf16.gmra.mrb[0].mxu0 %v6211
      %v6262 = vpop.f32.mrb[0].mxu0
      %v6263 = vadd.f32 0.0, %v6262
      %v6264 = vpop.f32.mrb[0].mxu0
      %v6265 = vadd.f32 0.0, %v6264
      %v6266 = vpop.f32.mrb[0].mxu0
      %v6267 = vpop.f32.mrb[0].mxu0
      %6268 = vdwg.mxu0
      %6269 = vmatprep.subr.bf16.mxu0 %v6223
      %6270 = vmatpush1.bf16.msra.mxu0 %v6220
      %6271 = vmatprep.subr.bf16.mxu0 0
      %6272 = vmatpush1.bf16.msra.mxu0 0
      %6273 = vmatprep.subr.bf16.mxu0 0
      %6274 = vmatpush1.bf16.msra.mxu0 0
      %6275 = vmatprep.subr.bf16.mxu0 0
      %6276 = vmatpush1.bf16.msra.mxu0 0
      %6277 = vmatprep.subr.bf16.mxu0 0
      %6278 = vmatpush1.bf16.msra.mxu0 0
      %6279 = vmatprep.subr.bf16.mxu0 0
      %6280 = vmatpush1.bf16.msra.mxu0 0
      %6281 = vmatprep.subr.bf16.mxu0 0
      %6282 = vmatpush1.bf16.msra.mxu0 0
      %6283 = vmatprep.subr.bf16.mxu0 0
      %6284 = vmatpush1.bf16.msra.mxu0 0
      %6285 = vmatprep.subr.bf16.mxu0 0
      %6286 = vmatpush1.bf16.msra.mxu0 0
      %6287 = vmatprep.subr.bf16.mxu0 0
      %6288 = vmatpush1.bf16.msra.mxu0 0
      %6289 = vmatprep.subr.bf16.mxu0 0
      %6290 = vmatpush1.bf16.msra.mxu0 0
      %6291 = vmatprep.subr.bf16.mxu0 0
      %6292 = vmatpush1.bf16.msra.mxu0 0
      %6293 = vmatprep.subr.bf16.mxu0 0
      %6294 = vmatpush1.bf16.msra.mxu0 0
      %6295 = vmatprep.subr.bf16.mxu0 0
      %6296 = vmatpush1.bf16.msra.mxu0 0
      %6297 = vmatprep.subr.bf16.mxu0 0
      %6298 = vmatpush1.bf16.msra.mxu0 0
      %6299 = vmatprep.subr.bf16.mxu0 0
      %6300 = vmatpush1.bf16.msra.mxu0 0
      %6301 = vmatprep.mubr.bf16.mxu0 0
      %6302 = vmatmul.mubr.bf16.gmra.mrb[0].mxu0 %v6211
      %v6303 = vpop.f32.mrb[0].mxu0
      %v6304 = vadd.f32 0.0, %v6303
      %v6305 = vpop.f32.mrb[0].mxu0
      %v6306 = vadd.f32 0.0, %v6305
      %v6307 = vpop.f32.mrb[0].mxu0
      %v6308 = vpop.f32.mrb[0].mxu0
      %6309 = vdwg.mxu0
      %6310 = vmatprep.subr.bf16.mxu0 0
      %6311 = vmatpush1.bf16.msra.mxu0 %v6226
      %6312 = vmatprep.subr.bf16.mxu0 0
      %6313 = vmatpush1.bf16.msra.mxu0 0
      %6314 = vmatprep.subr.bf16.mxu0 0
      %6315 = vmatpush1.bf16.msra.mxu0 0
      %6316 = vmatprep.subr.bf16.mxu0 0
      %6317 = vmatpush1.bf16.msra.mxu0 0
      %6318 = vmatprep.subr.bf16.mxu0 0
      %6319 = vmatpush1.bf16.msra.mxu0 0
      %6320 = vmatprep.subr.bf16.mxu0 0
      %6321 = vmatpush1.bf16.msra.mxu0 0
      %6322 = vmatprep.subr.bf16.mxu0 0
      %6323 = vmatpush1.bf16.msra.mxu0 0
      %6324 = vmatprep.subr.bf16.mxu0 0
      %6325 = vmatpush1.bf16.msra.mxu0 0
      %6326 = vmatprep.subr.bf16.mxu0 0
      %6327 = vmatpush1.bf16.msra.mxu0 0
      %6328 = vmatprep.subr.bf16.mxu0 0
      %6329 = vmatpush1.bf16.msra.mxu0 0
      %6330 = vmatprep.subr.bf16.mxu0 0
      %6331 = vmatpush1.bf16.msra.mxu0 0
      %6332 = vmatprep.subr.bf16.mxu0 0
      %6333 = vmatpush1.bf16.msra.mxu0 0
      %6334 = vmatprep.subr.bf16.mxu0 0
      %6335 = vmatpush1.bf16.msra.mxu0 0
      %6336 = vmatprep.subr.bf16.mxu0 0
      %6337 = vmatpush1.bf16.msra.mxu0 0
      %6338 = vmatprep.subr.bf16.mxu0 0
      %6339 = vmatpush1.bf16.msra.mxu0 0
      %6340 = vmatprep.subr.bf16.mxu0 0
      %6341 = vmatpush1.bf16.msra.mxu0 0
      %6342 = vmatprep.mubr.bf16.mxu0 0
      %6343 = vmatmul.mubr.bf16.gmra.mrb[0].mxu0 %v6211
      %v6344 = vpop.f32.mrb[0].mxu0
      %v6345 = vadd.f32 0.0, %v6344
      %v6346 = vpop.f32.mrb[0].mxu0
      %v6347 = vpop.f32.mrb[0].mxu0
      %v6348 = vpop.f32.mrb[0].mxu0
      %6349 = vdwg.mxu0
      %v6350 = vadd.f32 %v6186, %v6263
      %v6351 = vadd.f32 %v6187, %v6265
      %v6352 = vadd.f32 %v6188, %v6304
      %v6353 = vadd.f32 %v6189, %v6306
      %v6354 = vadd.f32 %v6190, %v6345
      %s6355 = scalar_lea.vmem %s2, 36
      %v6356 = vld [vmem:[%s6355] sm:$0xf]
      %6357 = vrot.lane.b32.xlu0 %v4887, 11
      %v6358 = vpop.permute.xlu0 %6357
      %6359 = vrot.lane.b32.xlu0 %v4888, 11
      %v6360 = vpop.permute.xlu0 %6359
      %6361 = vrot.lane.b32.xlu0 %v4889, 11
      %v6362 = vpop.permute.xlu0 %6361
      %6363 = vrot.lane.b32.xlu0 %v4890, 11
      %v6364 = vpop.permute.xlu0 %6363
      %6365 = vrot.lane.b32.xlu0 %v4891, 11
      %v6366 = vpop.permute.xlu0 %6365
      %6367 = vrot.lane.b32.xlu0 %v4892, 11
      %v6368 = vpop.permute.xlu0 %6367
      %v6369 = vsel %vm1815, %v6358, %v6360
      %v6370 = vsel %vm1815, %v6360, %v6362
      %v6371 = vsel %vm1815, %v6362, %v6364
      %v6372 = vsel %vm1815, %v6364, %v6366
      %v6373 = vsel %vm1815, %v6366, %v6368
      %v6375 = vsel %vm346, %v6356, 0
      %v6378 = vsel %vm350, %v6369, 0
      %v6381 = vsel %vm350, %v6370, 0
      %v6384 = vsel %vm350, %v6371, 0
      %v6387 = vsel %vm350, %v6372, 0
      %v6390 = vsel %vm350, %v6373, 0
      %6392 = vmatprep.subr.bf16.mxu0 %v6381
      %6393 = vmatpush1.bf16.msra.mxu0 %v6378
      %6394 = vmatprep.subr.bf16.mxu0 0
      %6395 = vmatpush1.bf16.msra.mxu0 0
      %6396 = vmatprep.subr.bf16.mxu0 0
      %6397 = vmatpush1.bf16.msra.mxu0 0
      %6398 = vmatprep.subr.bf16.mxu0 0
      %6399 = vmatpush1.bf16.msra.mxu0 0
      %6400 = vmatprep.subr.bf16.mxu0 0
      %6401 = vmatpush1.bf16.msra.mxu0 0
      %6402 = vmatprep.subr.bf16.mxu0 0
      %6403 = vmatpush1.bf16.msra.mxu0 0
      %6404 = vmatprep.subr.bf16.mxu0 0
      %6405 = vmatpush1.bf16.msra.mxu0 0
      %6406 = vmatprep.subr.bf16.mxu0 0
      %6407 = vmatpush1.bf16.msra.mxu0 0
      %6408 = vmatprep.subr.bf16.mxu0 0
      %6409 = vmatpush1.bf16.msra.mxu0 0
      %6410 = vmatprep.subr.bf16.mxu0 0
      %6411 = vmatpush1.bf16.msra.mxu0 0
      %6412 = vmatprep.subr.bf16.mxu0 0
      %6413 = vmatpush1.bf16.msra.mxu0 0
      %6414 = vmatprep.subr.bf16.mxu0 0
      %6415 = vmatpush1.bf16.msra.mxu0 0
      %6416 = vmatprep.subr.bf16.mxu0 0
      %6417 = vmatpush1.bf16.msra.mxu0 0
      %6418 = vmatprep.subr.bf16.mxu0 0
      %6419 = vmatpush1.bf16.msra.mxu0 0
      %6420 = vmatprep.subr.bf16.mxu0 0
      %6421 = vmatpush1.bf16.msra.mxu0 0
      %6422 = vmatprep.subr.bf16.mxu0 0
      %6423 = vmatpush1.bf16.msra.mxu0 0
      %6424 = vmatprep.mubr.bf16.mxu0 0
      %6425 = vmatmul.mubr.bf16.gmra.mrb[0].mxu0 %v6375
      %v6426 = vpop.f32.mrb[0].mxu0
      %v6427 = vadd.f32 0.0, %v6426
      %v6428 = vpop.f32.mrb[0].mxu0
      %v6429 = vadd.f32 0.0, %v6428
      %v6430 = vpop.f32.mrb[0].mxu0
      %v6431 = vpop.f32.mrb[0].mxu0
      %6432 = vdwg.mxu0
      %6433 = vmatprep.subr.bf16.mxu0 %v6387
      %6434 = vmatpush1.bf16.msra.mxu0 %v6384
      %6435 = vmatprep.subr.bf16.mxu0 0
      %6436 = vmatpush1.bf16.msra.mxu0 0
      %6437 = vmatprep.subr.bf16.mxu0 0
      %6438 = vmatpush1.bf16.msra.mxu0 0
      %6439 = vmatprep.subr.bf16.mxu0 0
      %6440 = vmatpush1.bf16.msra.mxu0 0
      %6441 = vmatprep.subr.bf16.mxu0 0
      %6442 = vmatpush1.bf16.msra.mxu0 0
      %6443 = vmatprep.subr.bf16.mxu0 0
      %6444 = vmatpush1.bf16.msra.mxu0 0
      %6445 = vmatprep.subr.bf16.mxu0 0
      %6446 = vmatpush1.bf16.msra.mxu0 0
      %6447 = vmatprep.subr.bf16.mxu0 0
      %6448 = vmatpush1.bf16.msra.mxu0 0
      %6449 = vmatprep.subr.bf16.mxu0 0
      %6450 = vmatpush1.bf16.msra.mxu0 0
      %6451 = vmatprep.subr.bf16.mxu0 0
      %6452 = vmatpush1.bf16.msra.mxu0 0
      %6453 = vmatprep.subr.bf16.mxu0 0
      %6454 = vmatpush1.bf16.msra.mxu0 0
      %6455 = vmatprep.subr.bf16.mxu0 0
      %6456 = vmatpush1.bf16.msra.mxu0 0
      %6457 = vmatprep.subr.bf16.mxu0 0
      %6458 = vmatpush1.bf16.msra.mxu0 0
      %6459 = vmatprep.subr.bf16.mxu0 0
      %6460 = vmatpush1.bf16.msra.mxu0 0
      %6461 = vmatprep.subr.bf16.mxu0 0
      %6462 = vmatpush1.bf16.msra.mxu0 0
      %6463 = vmatprep.subr.bf16.mxu0 0
      %6464 = vmatpush1.bf16.msra.mxu0 0
      %6465 = vmatprep.mubr.bf16.mxu0 0
      %6466 = vmatmul.mubr.bf16.gmra.mrb[0].mxu0 %v6375
      %v6467 = vpop.f32.mrb[0].mxu0
      %v6468 = vadd.f32 0.0, %v6467
      %v6469 = vpop.f32.mrb[0].mxu0
      %v6470 = vadd.f32 0.0, %v6469
      %v6471 = vpop.f32.mrb[0].mxu0
      %v6472 = vpop.f32.mrb[0].mxu0
      %6473 = vdwg.mxu0
      %6474 = vmatprep.subr.bf16.mxu0 0
      %6475 = vmatpush1.bf16.msra.mxu0 %v6390
      %6476 = vmatprep.subr.bf16.mxu0 0
      %6477 = vmatpush1.bf16.msra.mxu0 0
      %6478 = vmatprep.subr.bf16.mxu0 0
      %6479 = vmatpush1.bf16.msra.mxu0 0
      %6480 = vmatprep.subr.bf16.mxu0 0
      %6481 = vmatpush1.bf16.msra.mxu0 0
      %6482 = vmatprep.subr.bf16.mxu0 0
      %6483 = vmatpush1.bf16.msra.mxu0 0
      %6484 = vmatprep.subr.bf16.mxu0 0
      %6485 = vmatpush1.bf16.msra.mxu0 0
      %6486 = vmatprep.subr.bf16.mxu0 0
      %6487 = vmatpush1.bf16.msra.mxu0 0
      %6488 = vmatprep.subr.bf16.mxu0 0
      %6489 = vmatpush1.bf16.msra.mxu0 0
      %6490 = vmatprep.subr.bf16.mxu0 0
      %6491 = vmatpush1.bf16.msra.mxu0 0
      %6492 = vmatprep.subr.bf16.mxu0 0
      %6493 = vmatpush1.bf16.msra.mxu0 0
      %6494 = vmatprep.subr.bf16.mxu0 0
      %6495 = vmatpush1.bf16.msra.mxu0 0
      %6496 = vmatprep.subr.bf16.mxu0 0
      %6497 = vmatpush1.bf16.msra.mxu0 0
      %6498 = vmatprep.subr.bf16.mxu0 0
      %6499 = vmatpush1.bf16.msra.mxu0 0
      %6500 = vmatprep.subr.bf16.mxu0 0
      %6501 = vmatpush1.bf16.msra.mxu0 0
      %6502 = vmatprep.subr.bf16.mxu0 0
      %6503 = vmatpush1.bf16.msra.mxu0 0
      %6504 = vmatprep.subr.bf16.mxu0 0
      %6505 = vmatpush1.bf16.msra.mxu0 0
      %6506 = vmatprep.mubr.bf16.mxu0 0
      %6507 = vmatmul.mubr.bf16.gmra.mrb[0].mxu0 %v6375
      %v6508 = vpop.f32.mrb[0].mxu0
      %v6509 = vadd.f32 0.0, %v6508
      %v6510 = vpop.f32.mrb[0].mxu0
      %v6511 = vpop.f32.mrb[0].mxu0
      %v6512 = vpop.f32.mrb[0].mxu0
      %6513 = vdwg.mxu0
      %v6514 = vadd.f32 %v6350, %v6427
      %v6515 = vadd.f32 %v6351, %v6429
      %v6516 = vadd.f32 %v6352, %v6468
      %v6517 = vadd.f32 %v6353, %v6470
      %v6518 = vadd.f32 %v6354, %v6509
      %s6519 = scalar_lea.vmem %s2, 40
      %v6520 = vld [vmem:[%s6519] sm:$0xf]
      %6521 = vrot.lane.b32.xlu0 %v4887, 10
      %v6522 = vpop.permute.xlu0 %6521
      %6523 = vrot.lane.b32.xlu0 %v4888, 10
      %v6524 = vpop.permute.xlu0 %6523
      %6525 = vrot.lane.b32.xlu0 %v4889, 10
      %v6526 = vpop.permute.xlu0 %6525
      %6527 = vrot.lane.b32.xlu0 %v4890, 10
      %v6528 = vpop.permute.xlu0 %6527
      %6529 = vrot.lane.b32.xlu0 %v4891, 10
      %v6530 = vpop.permute.xlu0 %6529
      %6531 = vrot.lane.b32.xlu0 %v4892, 10
      %v6532 = vpop.permute.xlu0 %6531
      %v6533 = vsel %vm1980, %v6522, %v6524
      %v6534 = vsel %vm1980, %v6524, %v6526
      %v6535 = vsel %vm1980, %v6526, %v6528
      %v6536 = vsel %vm1980, %v6528, %v6530
      %v6537 = vsel %vm1980, %v6530, %v6532
      %v6539 = vsel %vm346, %v6520, 0
      %v6542 = vsel %vm350, %v6533, 0
      %v6545 = vsel %vm350, %v6534, 0
      %v6548 = vsel %vm350, %v6535, 0
      %v6551 = vsel %vm350, %v6536, 0
      %v6554 = vsel %vm350, %v6537, 0
      %6556 = vmatprep.subr.bf16.mxu0 %v6545
      %6557 = vmatpush1.bf16.msra.mxu0 %v6542
      %6558 = vmatprep.subr.bf16.mxu0 0
      %6559 = vmatpush1.bf16.msra.mxu0 0
      %6560 = vmatprep.subr.bf16.mxu0 0
      %6561 = vmatpush1.bf16.msra.mxu0 0
      %6562 = vmatprep.subr.bf16.mxu0 0
      %6563 = vmatpush1.bf16.msra.mxu0 0
      %6564 = vmatprep.subr.bf16.mxu0 0
      %6565 = vmatpush1.bf16.msra.mxu0 0
      %6566 = vmatprep.subr.bf16.mxu0 0
      %6567 = vmatpush1.bf16.msra.mxu0 0
      %6568 = vmatprep.subr.bf16.mxu0 0
      %6569 = vmatpush1.bf16.msra.mxu0 0
      %6570 = vmatprep.subr.bf16.mxu0 0
      %6571 = vmatpush1.bf16.msra.mxu0 0
      %6572 = vmatprep.subr.bf16.mxu0 0
      %6573 = vmatpush1.bf16.msra.mxu0 0
      %6574 = vmatprep.subr.bf16.mxu0 0
      %6575 = vmatpush1.bf16.msra.mxu0 0
      %6576 = vmatprep.subr.bf16.mxu0 0
      %6577 = vmatpush1.bf16.msra.mxu0 0
      %6578 = vmatprep.subr.bf16.mxu0 0
      %6579 = vmatpush1.bf16.msra.mxu0 0
      %6580 = vmatprep.subr.bf16.mxu0 0
      %6581 = vmatpush1.bf16.msra.mxu0 0
      %6582 = vmatprep.subr.bf16.mxu0 0
      %6583 = vmatpush1.bf16.msra.mxu0 0
      %6584 = vmatprep.subr.bf16.mxu0 0
      %6585 = vmatpush1.bf16.msra.mxu0 0
      %6586 = vmatprep.subr.bf16.mxu0 0
      %6587 = vmatpush1.bf16.msra.mxu0 0
      %6588 = vmatprep.mubr.bf16.mxu0 0
      %6589 = vmatmul.mubr.bf16.gmra.mrb[0].mxu0 %v6539
      %v6590 = vpop.f32.mrb[0].mxu0
      %v6591 = vadd.f32 0.0, %v6590
      %v6592 = vpop.f32.mrb[0].mxu0
      %v6593 = vadd.f32 0.0, %v6592
      %v6594 = vpop.f32.mrb[0].mxu0
      %v6595 = vpop.f32.mrb[0].mxu0
      %6596 = vdwg.mxu0
      %6597 = vmatprep.subr.bf16.mxu0 %v6551
      %6598 = vmatpush1.bf16.msra.mxu0 %v6548
      %6599 = vmatprep.subr.bf16.mxu0 0
      %6600 = vmatpush1.bf16.msra.mxu0 0
      %6601 = vmatprep.subr.bf16.mxu0 0
      %6602 = vmatpush1.bf16.msra.mxu0 0
      %6603 = vmatprep.subr.bf16.mxu0 0
      %6604 = vmatpush1.bf16.msra.mxu0 0
      %6605 = vmatprep.subr.bf16.mxu0 0
      %6606 = vmatpush1.bf16.msra.mxu0 0
      %6607 = vmatprep.subr.bf16.mxu0 0
      %6608 = vmatpush1.bf16.msra.mxu0 0
      %6609 = vmatprep.subr.bf16.mxu0 0
      %6610 = vmatpush1.bf16.msra.mxu0 0
      %6611 = vmatprep.subr.bf16.mxu0 0
      %6612 = vmatpush1.bf16.msra.mxu0 0
      %6613 = vmatprep.subr.bf16.mxu0 0
      %6614 = vmatpush1.bf16.msra.mxu0 0
      %6615 = vmatprep.subr.bf16.mxu0 0
      %6616 = vmatpush1.bf16.msra.mxu0 0
      %6617 = vmatprep.subr.bf16.mxu0 0
      %6618 = vmatpush1.bf16.msra.mxu0 0
      %6619 = vmatprep.subr.bf16.mxu0 0
      %6620 = vmatpush1.bf16.msra.mxu0 0
      %6621 = vmatprep.subr.bf16.mxu0 0
      %6622 = vmatpush1.bf16.msra.mxu0 0
      %6623 = vmatprep.subr.bf16.mxu0 0
      %6624 = vmatpush1.bf16.msra.mxu0 0
      %6625 = vmatprep.subr.bf16.mxu0 0
      %6626 = vmatpush1.bf16.msra.mxu0 0
      %6627 = vmatprep.subr.bf16.mxu0 0
      %6628 = vmatpush1.bf16.msra.mxu0 0
      %6629 = vmatprep.mubr.bf16.mxu0 0
      %6630 = vmatmul.mubr.bf16.gmra.mrb[0].mxu0 %v6539
      %v6631 = vpop.f32.mrb[0].mxu0
      %v6632 = vadd.f32 0.0, %v6631
      %v6633 = vpop.f32.mrb[0].mxu0
      %v6634 = vadd.f32 0.0, %v6633
      %v6635 = vpop.f32.mrb[0].mxu0
      %v6636 = vpop.f32.mrb[0].mxu0
      %6637 = vdwg.mxu0
      %6638 = vmatprep.subr.bf16.mxu0 0
      %6639 = vmatpush1.bf16.msra.mxu0 %v6554
      %6640 = vmatprep.subr.bf16.mxu0 0
      %6641 = vmatpush1.bf16.msra.mxu0 0
      %6642 = vmatprep.subr.bf16.mxu0 0
      %6643 = vmatpush1.bf16.msra.mxu0 0
      %6644 = vmatprep.subr.bf16.mxu0 0
      %6645 = vmatpush1.bf16.msra.mxu0 0
      %6646 = vmatprep.subr.bf16.mxu0 0
      %6647 = vmatpush1.bf16.msra.mxu0 0
      %6648 = vmatprep.subr.bf16.mxu0 0
      %6649 = vmatpush1.bf16.msra.mxu0 0
      %6650 = vmatprep.subr.bf16.mxu0 0
      %6651 = vmatpush1.bf16.msra.mxu0 0
      %6652 = vmatprep.subr.bf16.mxu0 0
      %6653 = vmatpush1.bf16.msra.mxu0 0
      %6654 = vmatprep.subr.bf16.mxu0 0
      %6655 = vmatpush1.bf16.msra.mxu0 0
      %6656 = vmatprep.subr.bf16.mxu0 0
      %6657 = vmatpush1.bf16.msra.mxu0 0
      %6658 = vmatprep.subr.bf16.mxu0 0
      %6659 = vmatpush1.bf16.msra.mxu0 0
      %6660 = vmatprep.subr.bf16.mxu0 0
      %6661 = vmatpush1.bf16.msra.mxu0 0
      %6662 = vmatprep.subr.bf16.mxu0 0
      %6663 = vmatpush1.bf16.msra.mxu0 0
      %6664 = vmatprep.subr.bf16.mxu0 0
      %6665 = vmatpush1.bf16.msra.mxu0 0
      %6666 = vmatprep.subr.bf16.mxu0 0
      %6667 = vmatpush1.bf16.msra.mxu0 0
      %6668 = vmatprep.subr.bf16.mxu0 0
      %6669 = vmatpush1.bf16.msra.mxu0 0
      %6670 = vmatprep.mubr.bf16.mxu0 0
      %6671 = vmatmul.mubr.bf16.gmra.mrb[0].mxu0 %v6539
      %v6672 = vpop.f32.mrb[0].mxu0
      %v6673 = vadd.f32 0.0, %v6672
      %v6674 = vpop.f32.mrb[0].mxu0
      %v6675 = vpop.f32.mrb[0].mxu0
      %v6676 = vpop.f32.mrb[0].mxu0
      %6677 = vdwg.mxu0
      %v6678 = vadd.f32 %v6514, %v6591
      %v6679 = vadd.f32 %v6515, %v6593
      %v6680 = vadd.f32 %v6516, %v6632
      %v6681 = vadd.f32 %v6517, %v6634
      %v6682 = vadd.f32 %v6518, %v6673
      %s6683 = scalar_lea.vmem %s2, 44
      %v6684 = vld [vmem:[%s6683] sm:$0xf]
      %6685 = vrot.lane.b32.xlu0 %v4887, 9
      %v6686 = vpop.permute.xlu0 %6685
      %6687 = vrot.lane.b32.xlu0 %v4888, 9
      %v6688 = vpop.permute.xlu0 %6687
      %6689 = vrot.lane.b32.xlu0 %v4889, 9
      %v6690 = vpop.permute.xlu0 %6689
      %6691 = vrot.lane.b32.xlu0 %v4890, 9
      %v6692 = vpop.permute.xlu0 %6691
      %6693 = vrot.lane.b32.xlu0 %v4891, 9
      %v6694 = vpop.permute.xlu0 %6693
      %6695 = vrot.lane.b32.xlu0 %v4892, 9
      %v6696 = vpop.permute.xlu0 %6695
      %v6697 = vsel %vm2145, %v6686, %v6688
      %v6698 = vsel %vm2145, %v6688, %v6690
      %v6699 = vsel %vm2145, %v6690, %v6692
      %v6700 = vsel %vm2145, %v6692, %v6694
      %v6701 = vsel %vm2145, %v6694, %v6696
      %v6703 = vsel %vm346, %v6684, 0
      %v6706 = vsel %vm350, %v6697, 0
      %v6709 = vsel %vm350, %v6698, 0
      %v6712 = vsel %vm350, %v6699, 0
      %v6715 = vsel %vm350, %v6700, 0
      %v6718 = vsel %vm350, %v6701, 0
      %6720 = vmatprep.subr.bf16.mxu0 %v6709
      %6721 = vmatpush1.bf16.msra.mxu0 %v6706
      %6722 = vmatprep.subr.bf16.mxu0 0
      %6723 = vmatpush1.bf16.msra.mxu0 0
      %6724 = vmatprep.subr.bf16.mxu0 0
      %6725 = vmatpush1.bf16.msra.mxu0 0
      %6726 = vmatprep.subr.bf16.mxu0 0
      %6727 = vmatpush1.bf16.msra.mxu0 0
      %6728 = vmatprep.subr.bf16.mxu0 0
      %6729 = vmatpush1.bf16.msra.mxu0 0
      %6730 = vmatprep.subr.bf16.mxu0 0
      %6731 = vmatpush1.bf16.msra.mxu0 0
      %6732 = vmatprep.subr.bf16.mxu0 0
      %6733 = vmatpush1.bf16.msra.mxu0 0
      %6734 = vmatprep.subr.bf16.mxu0 0
      %6735 = vmatpush1.bf16.msra.mxu0 0
      %6736 = vmatprep.subr.bf16.mxu0 0
      %6737 = vmatpush1.bf16.msra.mxu0 0
      %6738 = vmatprep.subr.bf16.mxu0 0
      %6739 = vmatpush1.bf16.msra.mxu0 0
      %6740 = vmatprep.subr.bf16.mxu0 0
      %6741 = vmatpush1.bf16.msra.mxu0 0
      %6742 = vmatprep.subr.bf16.mxu0 0
      %6743 = vmatpush1.bf16.msra.mxu0 0
      %6744 = vmatprep.subr.bf16.mxu0 0
      %6745 = vmatpush1.bf16.msra.mxu0 0
      %6746 = vmatprep.subr.bf16.mxu0 0
      %6747 = vmatpush1.bf16.msra.mxu0 0
      %6748 = vmatprep.subr.bf16.mxu0 0
      %6749 = vmatpush1.bf16.msra.mxu0 0
      %6750 = vmatprep.subr.bf16.mxu0 0
      %6751 = vmatpush1.bf16.msra.mxu0 0
      %6752 = vmatprep.mubr.bf16.mxu0 0
      %6753 = vmatmul.mubr.bf16.gmra.mrb[0].mxu0 %v6703
      %v6754 = vpop.f32.mrb[0].mxu0
      %v6755 = vadd.f32 0.0, %v6754
      %v6756 = vpop.f32.mrb[0].mxu0
      %v6757 = vadd.f32 0.0, %v6756
      %v6758 = vpop.f32.mrb[0].mxu0
      %v6759 = vpop.f32.mrb[0].mxu0
      %6760 = vdwg.mxu0
      %6761 = vmatprep.subr.bf16.mxu0 %v6715
      %6762 = vmatpush1.bf16.msra.mxu0 %v6712
      %6763 = vmatprep.subr.bf16.mxu0 0
      %6764 = vmatpush1.bf16.msra.mxu0 0
      %6765 = vmatprep.subr.bf16.mxu0 0
      %6766 = vmatpush1.bf16.msra.mxu0 0
      %6767 = vmatprep.subr.bf16.mxu0 0
      %6768 = vmatpush1.bf16.msra.mxu0 0
      %6769 = vmatprep.subr.bf16.mxu0 0
      %6770 = vmatpush1.bf16.msra.mxu0 0
      %6771 = vmatprep.subr.bf16.mxu0 0
      %6772 = vmatpush1.bf16.msra.mxu0 0
      %6773 = vmatprep.subr.bf16.mxu0 0
      %6774 = vmatpush1.bf16.msra.mxu0 0
      %6775 = vmatprep.subr.bf16.mxu0 0
      %6776 = vmatpush1.bf16.msra.mxu0 0
      %6777 = vmatprep.subr.bf16.mxu0 0
      %6778 = vmatpush1.bf16.msra.mxu0 0
      %6779 = vmatprep.subr.bf16.mxu0 0
      %6780 = vmatpush1.bf16.msra.mxu0 0
      %6781 = vmatprep.subr.bf16.mxu0 0
      %6782 = vmatpush1.bf16.msra.mxu0 0
      %6783 = vmatprep.subr.bf16.mxu0 0
      %6784 = vmatpush1.bf16.msra.mxu0 0
      %6785 = vmatprep.subr.bf16.mxu0 0
      %6786 = vmatpush1.bf16.msra.mxu0 0
      %6787 = vmatprep.subr.bf16.mxu0 0
      %6788 = vmatpush1.bf16.msra.mxu0 0
      %6789 = vmatprep.subr.bf16.mxu0 0
      %6790 = vmatpush1.bf16.msra.mxu0 0
      %6791 = vmatprep.subr.bf16.mxu0 0
      %6792 = vmatpush1.bf16.msra.mxu0 0
      %6793 = vmatprep.mubr.bf16.mxu0 0
      %6794 = vmatmul.mubr.bf16.gmra.mrb[0].mxu0 %v6703
      %v6795 = vpop.f32.mrb[0].mxu0
      %v6796 = vadd.f32 0.0, %v6795
      %v6797 = vpop.f32.mrb[0].mxu0
      %v6798 = vadd.f32 0.0, %v6797
      %v6799 = vpop.f32.mrb[0].mxu0
      %v6800 = vpop.f32.mrb[0].mxu0
      %6801 = vdwg.mxu0
      %6802 = vmatprep.subr.bf16.mxu0 0
      %6803 = vmatpush1.bf16.msra.mxu0 %v6718
      %6804 = vmatprep.subr.bf16.mxu0 0
      %6805 = vmatpush1.bf16.msra.mxu0 0
      %6806 = vmatprep.subr.bf16.mxu0 0
      %6807 = vmatpush1.bf16.msra.mxu0 0
      %6808 = vmatprep.subr.bf16.mxu0 0
      %6809 = vmatpush1.bf16.msra.mxu0 0
      %6810 = vmatprep.subr.bf16.mxu0 0
      %6811 = vmatpush1.bf16.msra.mxu0 0
      %6812 = vmatprep.subr.bf16.mxu0 0
      %6813 = vmatpush1.bf16.msra.mxu0 0
      %6814 = vmatprep.subr.bf16.mxu0 0
      %6815 = vmatpush1.bf16.msra.mxu0 0
      %6816 = vmatprep.subr.bf16.mxu0 0
      %6817 = vmatpush1.bf16.msra.mxu0 0
      %6818 = vmatprep.subr.bf16.mxu0 0
      %6819 = vmatpush1.bf16.msra.mxu0 0
      %6820 = vmatprep.subr.bf16.mxu0 0
      %6821 = vmatpush1.bf16.msra.mxu0 0
      %6822 = vmatprep.subr.bf16.mxu0 0
      %6823 = vmatpush1.bf16.msra.mxu0 0
      %6824 = vmatprep.subr.bf16.mxu0 0
      %6825 = vmatpush1.bf16.msra.mxu0 0
      %6826 = vmatprep.subr.bf16.mxu0 0
      %6827 = vmatpush1.bf16.msra.mxu0 0
      %6828 = vmatprep.subr.bf16.mxu0 0
      %6829 = vmatpush1.bf16.msra.mxu0 0
      %6830 = vmatprep.subr.bf16.mxu0 0
      %6831 = vmatpush1.bf16.msra.mxu0 0
      %6832 = vmatprep.subr.bf16.mxu0 0
      %6833 = vmatpush1.bf16.msra.mxu0 0
      %6834 = vmatprep.mubr.bf16.mxu0 0
      %6835 = vmatmul.mubr.bf16.gmra.mrb[0].mxu0 %v6703
      %v6836 = vpop.f32.mrb[0].mxu0
      %v6837 = vadd.f32 0.0, %v6836
      %v6838 = vpop.f32.mrb[0].mxu0
      %v6839 = vpop.f32.mrb[0].mxu0
      %v6840 = vpop.f32.mrb[0].mxu0
      %6841 = vdwg.mxu0
      %v6842 = vadd.f32 %v6678, %v6755
      %v6843 = vadd.f32 %v6679, %v6757
      %v6844 = vadd.f32 %v6680, %v6796
      %v6845 = vadd.f32 %v6681, %v6798
      %v6846 = vadd.f32 %v6682, %v6837
      %s6847 = scalar_lea.vmem %s2, 48
      %v6848 = vld [vmem:[%s6847] sm:$0xf]
      %6849 = vrot.lane.b32.xlu0 %v4887, 1
      %v6850 = vpop.permute.xlu0 %6849
      %6851 = vrot.lane.b32.xlu0 %v4888, 1
      %v6852 = vpop.permute.xlu0 %6851
      %6853 = vrot.lane.b32.xlu0 %v4889, 1
      %v6854 = vpop.permute.xlu0 %6853
      %6855 = vrot.lane.b32.xlu0 %v4890, 1
      %v6856 = vpop.permute.xlu0 %6855
      %6857 = vrot.lane.b32.xlu0 %v4891, 1
      %v6858 = vpop.permute.xlu0 %6857
      %6859 = vrot.lane.b32.xlu0 %v4892, 1
      %v6860 = vpop.permute.xlu0 %6859
      %v6861 = vsel %vm2310, %v6850, %v6852
      %v6862 = vsel %vm2310, %v6852, %v6854
      %v6863 = vsel %vm2310, %v6854, %v6856
      %v6864 = vsel %vm2310, %v6856, %v6858
      %v6865 = vsel %vm2310, %v6858, %v6860
      %v6867 = vsel %vm346, %v6848, 0
      %v6870 = vsel %vm350, %v6861, 0
      %v6873 = vsel %vm350, %v6862, 0
      %v6876 = vsel %vm350, %v6863, 0
      %v6879 = vsel %vm350, %v6864, 0
      %v6882 = vsel %vm350, %v6865, 0
      %6884 = vmatprep.subr.bf16.mxu0 %v6873
      %6885 = vmatpush1.bf16.msra.mxu0 %v6870
      %6886 = vmatprep.subr.bf16.mxu0 0
      %6887 = vmatpush1.bf16.msra.mxu0 0
      %6888 = vmatprep.subr.bf16.mxu0 0
      %6889 = vmatpush1.bf16.msra.mxu0 0
      %6890 = vmatprep.subr.bf16.mxu0 0
      %6891 = vmatpush1.bf16.msra.mxu0 0
      %6892 = vmatprep.subr.bf16.mxu0 0
      %6893 = vmatpush1.bf16.msra.mxu0 0
      %6894 = vmatprep.subr.bf16.mxu0 0
      %6895 = vmatpush1.bf16.msra.mxu0 0
      %6896 = vmatprep.subr.bf16.mxu0 0
      %6897 = vmatpush1.bf16.msra.mxu0 0
      %6898 = vmatprep.subr.bf16.mxu0 0
      %6899 = vmatpush1.bf16.msra.mxu0 0
      %6900 = vmatprep.subr.bf16.mxu0 0
      %6901 = vmatpush1.bf16.msra.mxu0 0
      %6902 = vmatprep.subr.bf16.mxu0 0
      %6903 = vmatpush1.bf16.msra.mxu0 0
      %6904 = vmatprep.subr.bf16.mxu0 0
      %6905 = vmatpush1.bf16.msra.mxu0 0
      %6906 = vmatprep.subr.bf16.mxu0 0
      %6907 = vmatpush1.bf16.msra.mxu0 0
      %6908 = vmatprep.subr.bf16.mxu0 0
      %6909 = vmatpush1.bf16.msra.mxu0 0
      %6910 = vmatprep.subr.bf16.mxu0 0
      %6911 = vmatpush1.bf16.msra.mxu0 0
      %6912 = vmatprep.subr.bf16.mxu0 0
      %6913 = vmatpush1.bf16.msra.mxu0 0
      %6914 = vmatprep.subr.bf16.mxu0 0
      %6915 = vmatpush1.bf16.msra.mxu0 0
      %6916 = vmatprep.mubr.bf16.mxu0 0
      %6917 = vmatmul.mubr.bf16.gmra.mrb[0].mxu0 %v6867
      %v6918 = vpop.f32.mrb[0].mxu0
      %v6919 = vadd.f32 0.0, %v6918
      %v6920 = vpop.f32.mrb[0].mxu0
      %v6921 = vadd.f32 0.0, %v6920
      %v6922 = vpop.f32.mrb[0].mxu0
      %v6923 = vpop.f32.mrb[0].mxu0
      %6924 = vdwg.mxu0
      %6925 = vmatprep.subr.bf16.mxu0 %v6879
      %6926 = vmatpush1.bf16.msra.mxu0 %v6876
      %6927 = vmatprep.subr.bf16.mxu0 0
      %6928 = vmatpush1.bf16.msra.mxu0 0
      %6929 = vmatprep.subr.bf16.mxu0 0
      %6930 = vmatpush1.bf16.msra.mxu0 0
      %6931 = vmatprep.subr.bf16.mxu0 0
      %6932 = vmatpush1.bf16.msra.mxu0 0
      %6933 = vmatprep.subr.bf16.mxu0 0
      %6934 = vmatpush1.bf16.msra.mxu0 0
      %6935 = vmatprep.subr.bf16.mxu0 0
      %6936 = vmatpush1.bf16.msra.mxu0 0
      %6937 = vmatprep.subr.bf16.mxu0 0
      %6938 = vmatpush1.bf16.msra.mxu0 0
      %6939 = vmatprep.subr.bf16.mxu0 0
      %6940 = vmatpush1.bf16.msra.mxu0 0
      %6941 = vmatprep.subr.bf16.mxu0 0
      %6942 = vmatpush1.bf16.msra.mxu0 0
      %6943 = vmatprep.subr.bf16.mxu0 0
      %6944 = vmatpush1.bf16.msra.mxu0 0
      %6945 = vmatprep.subr.bf16.mxu0 0
      %6946 = vmatpush1.bf16.msra.mxu0 0
      %6947 = vmatprep.subr.bf16.mxu0 0
      %6948 = vmatpush1.bf16.msra.mxu0 0
      %6949 = vmatprep.subr.bf16.mxu0 0
      %6950 = vmatpush1.bf16.msra.mxu0 0
      %6951 = vmatprep.subr.bf16.mxu0 0
      %6952 = vmatpush1.bf16.msra.mxu0 0
      %6953 = vmatprep.subr.bf16.mxu0 0
      %6954 = vmatpush1.bf16.msra.mxu0 0
      %6955 = vmatprep.subr.bf16.mxu0 0
      %6956 = vmatpush1.bf16.msra.mxu0 0
      %6957 = vmatprep.mubr.bf16.mxu0 0
      %6958 = vmatmul.mubr.bf16.gmra.mrb[0].mxu0 %v6867
      %v6959 = vpop.f32.mrb[0].mxu0
      %v6960 = vadd.f32 0.0, %v6959
      %v6961 = vpop.f32.mrb[0].mxu0
      %v6962 = vadd.f32 0.0, %v6961
      %v6963 = vpop.f32.mrb[0].mxu0
      %v6964 = vpop.f32.mrb[0].mxu0
      %6965 = vdwg.mxu0
      %6966 = vmatprep.subr.bf16.mxu0 0
      %6967 = vmatpush1.bf16.msra.mxu0 %v6882
      %6968 = vmatprep.subr.bf16.mxu0 0
      %6969 = vmatpush1.bf16.msra.mxu0 0
      %6970 = vmatprep.subr.bf16.mxu0 0
      %6971 = vmatpush1.bf16.msra.mxu0 0
      %6972 = vmatprep.subr.bf16.mxu0 0
      %6973 = vmatpush1.bf16.msra.mxu0 0
      %6974 = vmatprep.subr.bf16.mxu0 0
      %6975 = vmatpush1.bf16.msra.mxu0 0
      %6976 = vmatprep.subr.bf16.mxu0 0
      %6977 = vmatpush1.bf16.msra.mxu0 0
      %6978 = vmatprep.subr.bf16.mxu0 0
      %6979 = vmatpush1.bf16.msra.mxu0 0
      %6980 = vmatprep.subr.bf16.mxu0 0
      %6981 = vmatpush1.bf16.msra.mxu0 0
      %6982 = vmatprep.subr.bf16.mxu0 0
      %6983 = vmatpush1.bf16.msra.mxu0 0
      %6984 = vmatprep.subr.bf16.mxu0 0
      %6985 = vmatpush1.bf16.msra.mxu0 0
      %6986 = vmatprep.subr.bf16.mxu0 0
      %6987 = vmatpush1.bf16.msra.mxu0 0
      %6988 = vmatprep.subr.bf16.mxu0 0
      %6989 = vmatpush1.bf16.msra.mxu0 0
      %6990 = vmatprep.subr.bf16.mxu0 0
      %6991 = vmatpush1.bf16.msra.mxu0 0
      %6992 = vmatprep.subr.bf16.mxu0 0
      %6993 = vmatpush1.bf16.msra.mxu0 0
      %6994 = vmatprep.subr.bf16.mxu0 0
      %6995 = vmatpush1.bf16.msra.mxu0 0
      %6996 = vmatprep.subr.bf16.mxu0 0
      %6997 = vmatpush1.bf16.msra.mxu0 0
      %6998 = vmatprep.mubr.bf16.mxu0 0
      %6999 = vmatmul.mubr.bf16.gmra.mrb[0].mxu0 %v6867
      %v7000 = vpop.f32.mrb[0].mxu0
      %v7001 = vadd.f32 0.0, %v7000
      %v7002 = vpop.f32.mrb[0].mxu0
      %v7003 = vpop.f32.mrb[0].mxu0
      %v7004 = vpop.f32.mrb[0].mxu0
      %7005 = vdwg.mxu0
      %v7006 = vadd.f32 %v6842, %v6919
      %v7007 = vadd.f32 %v6843, %v6921
      %v7008 = vadd.f32 %v6844, %v6960
      %v7009 = vadd.f32 %v6845, %v6962
      %v7010 = vadd.f32 %v6846, %v7001
      %s7011 = scalar_lea.vmem %s2, 52
      %v7012 = vld [vmem:[%s7011] sm:$0xf]
      %v7013 = vld [vmem:[#allocation2 + $0x4] sm:$0xff]
      %v7014 = vld [vmem:[#allocation2 + $0xc] sm:$0xff]
      %v7015 = vld [vmem:[#allocation2 + $0x14] sm:$0xf]
      %v7019 = vunpack.c.l.b16 %v7013
      %v7020 = vunpack.c.h.b16 %v7013
      %v7021 = vunpack.c.l.b16 %v7014
      %v7022 = vunpack.c.h.b16 %v7014
      %v7023 = vunpack.c.l.b16 %v7015
      %v7024 = vpack.c.b16 %v7019, %v7019
      %v7025 = vpack.c.b16 %v7020, %v7020
      %v7026 = vpack.c.b16 %v7021, %v7021
      %v7027 = vpack.c.b16 %v7022, %v7022
      %v7028 = vpack.c.b16 %v7023, %v7023
      %v7030 = vsel %vm346, %v7012, 0
      %v7033 = vsel %vm350, %v7024, 0
      %v7036 = vsel %vm350, %v7025, 0
      %v7039 = vsel %vm350, %v7026, 0
      %v7042 = vsel %vm350, %v7027, 0
      %v7045 = vsel %vm350, %v7028, 0
      %7047 = vmatprep.subr.bf16.mxu0 %v7036
      %7048 = vmatpush1.bf16.msra.mxu0 %v7033
      %7049 = vmatprep.subr.bf16.mxu0 0
      %7050 = vmatpush1.bf16.msra.mxu0 0
      %7051 = vmatprep.subr.bf16.mxu0 0
      %7052 = vmatpush1.bf16.msra.mxu0 0
      %7053 = vmatprep.subr.bf16.mxu0 0
      %7054 = vmatpush1.bf16.msra.mxu0 0
      %7055 = vmatprep.subr.bf16.mxu0 0
      %7056 = vmatpush1.bf16.msra.mxu0 0
      %7057 = vmatprep.subr.bf16.mxu0 0
      %7058 = vmatpush1.bf16.msra.mxu0 0
      %7059 = vmatprep.subr.bf16.mxu0 0
      %7060 = vmatpush1.bf16.msra.mxu0 0
      %7061 = vmatprep.subr.bf16.mxu0 0
      %7062 = vmatpush1.bf16.msra.mxu0 0
      %7063 = vmatprep.subr.bf16.mxu0 0
      %7064 = vmatpush1.bf16.msra.mxu0 0
      %7065 = vmatprep.subr.bf16.mxu0 0
      %7066 = vmatpush1.bf16.msra.mxu0 0
      %7067 = vmatprep.subr.bf16.mxu0 0
      %7068 = vmatpush1.bf16.msra.mxu0 0
      %7069 = vmatprep.subr.bf16.mxu0 0
      %7070 = vmatpush1.bf16.msra.mxu0 0
      %7071 = vmatprep.subr.bf16.mxu0 0
      %7072 = vmatpush1.bf16.msra.mxu0 0
      %7073 = vmatprep.subr.bf16.mxu0 0
      %7074 = vmatpush1.bf16.msra.mxu0 0
      %7075 = vmatprep.subr.bf16.mxu0 0
      %7076 = vmatpush1.bf16.msra.mxu0 0
      %7077 = vmatprep.subr.bf16.mxu0 0
      %7078 = vmatpush1.bf16.msra.mxu0 0
      %7079 = vmatprep.mubr.bf16.mxu0 0
      %7080 = vmatmul.mubr.bf16.gmra.mrb[0].mxu0 %v7030
      %v7081 = vpop.f32.mrb[0].mxu0
      %v7082 = vadd.f32 0.0, %v7081
      %v7083 = vpop.f32.mrb[0].mxu0
      %v7084 = vadd.f32 0.0, %v7083
      %v7085 = vpop.f32.mrb[0].mxu0
      %v7086 = vpop.f32.mrb[0].mxu0
      %7087 = vdwg.mxu0
      %7088 = vmatprep.subr.bf16.mxu0 %v7042
      %7089 = vmatpush1.bf16.msra.mxu0 %v7039
      %7090 = vmatprep.subr.bf16.mxu0 0
      %7091 = vmatpush1.bf16.msra.mxu0 0
      %7092 = vmatprep.subr.bf16.mxu0 0
      %7093 = vmatpush1.bf16.msra.mxu0 0
      %7094 = vmatprep.subr.bf16.mxu0 0
      %7095 = vmatpush1.bf16.msra.mxu0 0
      %7096 = vmatprep.subr.bf16.mxu0 0
      %7097 = vmatpush1.bf16.msra.mxu0 0
      %7098 = vmatprep.subr.bf16.mxu0 0
      %7099 = vmatpush1.bf16.msra.mxu0 0
      %7100 = vmatprep.subr.bf16.mxu0 0
      %7101 = vmatpush1.bf16.msra.mxu0 0
      %7102 = vmatprep.subr.bf16.mxu0 0
      %7103 = vmatpush1.bf16.msra.mxu0 0
      %7104 = vmatprep.subr.bf16.mxu0 0
      %7105 = vmatpush1.bf16.msra.mxu0 0
      %7106 = vmatprep.subr.bf16.mxu0 0
      %7107 = vmatpush1.bf16.msra.mxu0 0
      %7108 = vmatprep.subr.bf16.mxu0 0
      %7109 = vmatpush1.bf16.msra.mxu0 0
      %7110 = vmatprep.subr.bf16.mxu0 0
      %7111 = vmatpush1.bf16.msra.mxu0 0
      %7112 = vmatprep.subr.bf16.mxu0 0
      %7113 = vmatpush1.bf16.msra.mxu0 0
      %7114 = vmatprep.subr.bf16.mxu0 0
      %7115 = vmatpush1.bf16.msra.mxu0 0
      %7116 = vmatprep.subr.bf16.mxu0 0
      %7117 = vmatpush1.bf16.msra.mxu0 0
      %7118 = vmatprep.subr.bf16.mxu0 0
      %7119 = vmatpush1.bf16.msra.mxu0 0
      %7120 = vmatprep.mubr.bf16.mxu0 0
      %7121 = vmatmul.mubr.bf16.gmra.mrb[0].mxu0 %v7030
      %v7122 = vpop.f32.mrb[0].mxu0
      %v7123 = vadd.f32 0.0, %v7122
      %v7124 = vpop.f32.mrb[0].mxu0
      %v7125 = vadd.f32 0.0, %v7124
      %v7126 = vpop.f32.mrb[0].mxu0
      %v7127 = vpop.f32.mrb[0].mxu0
      %7128 = vdwg.mxu0
      %7129 = vmatprep.subr.bf16.mxu0 0
      %7130 = vmatpush1.bf16.msra.mxu0 %v7045
      %7131 = vmatprep.subr.bf16.mxu0 0
      %7132 = vmatpush1.bf16.msra.mxu0 0
      %7133 = vmatprep.subr.bf16.mxu0 0
      %7134 = vmatpush1.bf16.msra.mxu0 0
      %7135 = vmatprep.subr.bf16.mxu0 0
      %7136 = vmatpush1.bf16.msra.mxu0 0
      %7137 = vmatprep.subr.bf16.mxu0 0
      %7138 = vmatpush1.bf16.msra.mxu0 0
      %7139 = vmatprep.subr.bf16.mxu0 0
      %7140 = vmatpush1.bf16.msra.mxu0 0
      %7141 = vmatprep.subr.bf16.mxu0 0
      %7142 = vmatpush1.bf16.msra.mxu0 0
      %7143 = vmatprep.subr.bf16.mxu0 0
      %7144 = vmatpush1.bf16.msra.mxu0 0
      %7145 = vmatprep.subr.bf16.mxu0 0
      %7146 = vmatpush1.bf16.msra.mxu0 0
      %7147 = vmatprep.subr.bf16.mxu0 0
      %7148 = vmatpush1.bf16.msra.mxu0 0
      %7149 = vmatprep.subr.bf16.mxu0 0
      %7150 = vmatpush1.bf16.msra.mxu0 0
      %7151 = vmatprep.subr.bf16.mxu0 0
      %7152 = vmatpush1.bf16.msra.mxu0 0
      %7153 = vmatprep.subr.bf16.mxu0 0
      %7154 = vmatpush1.bf16.msra.mxu0 0
      %7155 = vmatprep.subr.bf16.mxu0 0
      %7156 = vmatpush1.bf16.msra.mxu0 0
      %7157 = vmatprep.subr.bf16.mxu0 0
      %7158 = vmatpush1.bf16.msra.mxu0 0
      %7159 = vmatprep.subr.bf16.mxu0 0
      %7160 = vmatpush1.bf16.msra.mxu0 0
      %7161 = vmatprep.mubr.bf16.mxu0 0
      %7162 = vmatmul.mubr.bf16.gmra.mrb[0].mxu0 %v7030
      %v7163 = vpop.f32.mrb[0].mxu0
      %v7164 = vadd.f32 0.0, %v7163
      %v7165 = vpop.f32.mrb[0].mxu0
      %v7166 = vpop.f32.mrb[0].mxu0
      %v7167 = vpop.f32.mrb[0].mxu0
      %7168 = vdwg.mxu0
      %v7169 = vadd.f32 %v7006, %v7082
      %v7170 = vadd.f32 %v7007, %v7084
      %v7171 = vadd.f32 %v7008, %v7123
      %v7172 = vadd.f32 %v7009, %v7125
      %v7173 = vadd.f32 %v7010, %v7164
      %s7174 = scalar_lea.vmem %s2, 56
      %v7175 = vld [vmem:[%s7174] sm:$0xf]
      %v7176 = vld [vmem:[#allocation2 + $0x4] sm:$0xff]
      %v7177 = vld [vmem:[#allocation2 + $0xc] sm:$0xff]
      %v7178 = vld [vmem:[#allocation2 + $0x14] sm:$0xff]
      %v7182 = vunpack.c.l.b16 %v7176
      %v7183 = vunpack.c.h.b16 %v7176
      %v7184 = vunpack.c.l.b16 %v7177
      %v7185 = vunpack.c.h.b16 %v7177
      %v7186 = vunpack.c.l.b16 %v7178
      %v7187 = vunpack.c.h.b16 %v7178
      %v7188 = vpack.c.b16 %v7182, %v7182
      %v7189 = vpack.c.b16 %v7183, %v7183
      %v7190 = vpack.c.b16 %v7184, %v7184
      %v7191 = vpack.c.b16 %v7185, %v7185
      %v7192 = vpack.c.b16 %v7186, %v7186
      %v7193 = vpack.c.b16 %v7187, %v7187
      %7194 = vrot.lane.b32.xlu0 %v7188, 127
      %v7195 = vpop.permute.xlu0 %7194
      %7196 = vrot.lane.b32.xlu0 %v7189, 127
      %v7197 = vpop.permute.xlu0 %7196
      %7198 = vrot.lane.b32.xlu0 %v7190, 127
      %v7199 = vpop.permute.xlu0 %7198
      %7200 = vrot.lane.b32.xlu0 %v7191, 127
      %v7201 = vpop.permute.xlu0 %7200
      %7202 = vrot.lane.b32.xlu0 %v7192, 127
      %v7203 = vpop.permute.xlu0 %7202
      %7204 = vrot.lane.b32.xlu0 %v7193, 127
      %v7205 = vpop.permute.xlu0 %7204
      %v7206 = vsel %vm2656, %v7195, %v7197
      %v7207 = vsel %vm2656, %v7197, %v7199
      %v7208 = vsel %vm2656, %v7199, %v7201
      %v7209 = vsel %vm2656, %v7201, %v7203
      %v7210 = vsel %vm2656, %v7203, %v7205
      %v7212 = vsel %vm346, %v7175, 0
      %v7215 = vsel %vm350, %v7206, 0
      %v7218 = vsel %vm350, %v7207, 0
      %v7221 = vsel %vm350, %v7208, 0
      %v7224 = vsel %vm350, %v7209, 0
      %v7227 = vsel %vm350, %v7210, 0
      %7229 = vmatprep.subr.bf16.mxu0 %v7218
      %7230 = vmatpush1.bf16.msra.mxu0 %v7215
      %7231 = vmatprep.subr.bf16.mxu0 0
      %7232 = vmatpush1.bf16.msra.mxu0 0
      %7233 = vmatprep.subr.bf16.mxu0 0
      %7234 = vmatpush1.bf16.msra.mxu0 0
      %7235 = vmatprep.subr.bf16.mxu0 0
      %7236 = vmatpush1.bf16.msra.mxu0 0
      %7237 = vmatprep.subr.bf16.mxu0 0
      %7238 = vmatpush1.bf16.msra.mxu0 0
      %7239 = vmatprep.subr.bf16.mxu0 0
      %7240 = vmatpush1.bf16.msra.mxu0 0
      %7241 = vmatprep.subr.bf16.mxu0 0
      %7242 = vmatpush1.bf16.msra.mxu0 0
      %7243 = vmatprep.subr.bf16.mxu0 0
      %7244 = vmatpush1.bf16.msra.mxu0 0
      %7245 = vmatprep.subr.bf16.mxu0 0
      %7246 = vmatpush1.bf16.msra.mxu0 0
      %7247 = vmatprep.subr.bf16.mxu0 0
      %7248 = vmatpush1.bf16.msra.mxu0 0
      %7249 = vmatprep.subr.bf16.mxu0 0
      %7250 = vmatpush1.bf16.msra.mxu0 0
      %7251 = vmatprep.subr.bf16.mxu0 0
      %7252 = vmatpush1.bf16.msra.mxu0 0
      %7253 = vmatprep.subr.bf16.mxu0 0
      %7254 = vmatpush1.bf16.msra.mxu0 0
      %7255 = vmatprep.subr.bf16.mxu0 0
      %7256 = vmatpush1.bf16.msra.mxu0 0
      %7257 = vmatprep.subr.bf16.mxu0 0
      %7258 = vmatpush1.bf16.msra.mxu0 0
      %7259 = vmatprep.subr.bf16.mxu0 0
      %7260 = vmatpush1.bf16.msra.mxu0 0
      %7261 = vmatprep.mubr.bf16.mxu0 0
      %7262 = vmatmul.mubr.bf16.gmra.mrb[0].mxu0 %v7212
      %v7263 = vpop.f32.mrb[0].mxu0
      %v7264 = vadd.f32 0.0, %v7263
      %v7265 = vpop.f32.mrb[0].mxu0
      %v7266 = vadd.f32 0.0, %v7265
      %v7267 = vpop.f32.mrb[0].mxu0
      %v7268 = vpop.f32.mrb[0].mxu0
      %7269 = vdwg.mxu0
      %7270 = vmatprep.subr.bf16.mxu0 %v7224
      %7271 = vmatpush1.bf16.msra.mxu0 %v7221
      %7272 = vmatprep.subr.bf16.mxu0 0
      %7273 = vmatpush1.bf16.msra.mxu0 0
      %7274 = vmatprep.subr.bf16.mxu0 0
      %7275 = vmatpush1.bf16.msra.mxu0 0
      %7276 = vmatprep.subr.bf16.mxu0 0
      %7277 = vmatpush1.bf16.msra.mxu0 0
      %7278 = vmatprep.subr.bf16.mxu0 0
      %7279 = vmatpush1.bf16.msra.mxu0 0
      %7280 = vmatprep.subr.bf16.mxu0 0
      %7281 = vmatpush1.bf16.msra.mxu0 0
      %7282 = vmatprep.subr.bf16.mxu0 0
      %7283 = vmatpush1.bf16.msra.mxu0 0
      %7284 = vmatprep.subr.bf16.mxu0 0
      %7285 = vmatpush1.bf16.msra.mxu0 0
      %7286 = vmatprep.subr.bf16.mxu0 0
      %7287 = vmatpush1.bf16.msra.mxu0 0
      %7288 = vmatprep.subr.bf16.mxu0 0
      %7289 = vmatpush1.bf16.msra.mxu0 0
      %7290 = vmatprep.subr.bf16.mxu0 0
      %7291 = vmatpush1.bf16.msra.mxu0 0
      %7292 = vmatprep.subr.bf16.mxu0 0
      %7293 = vmatpush1.bf16.msra.mxu0 0
      %7294 = vmatprep.subr.bf16.mxu0 0
      %7295 = vmatpush1.bf16.msra.mxu0 0
      %7296 = vmatprep.subr.bf16.mxu0 0
      %7297 = vmatpush1.bf16.msra.mxu0 0
      %7298 = vmatprep.subr.bf16.mxu0 0
      %7299 = vmatpush1.bf16.msra.mxu0 0
      %7300 = vmatprep.subr.bf16.mxu0 0
      %7301 = vmatpush1.bf16.msra.mxu0 0
      %7302 = vmatprep.mubr.bf16.mxu0 0
      %7303 = vmatmul.mubr.bf16.gmra.mrb[0].mxu0 %v7212
      %v7304 = vpop.f32.mrb[0].mxu0
      %v7305 = vadd.f32 0.0, %v7304
      %v7306 = vpop.f32.mrb[0].mxu0
      %v7307 = vadd.f32 0.0, %v7306
      %v7308 = vpop.f32.mrb[0].mxu0
      %v7309 = vpop.f32.mrb[0].mxu0
      %7310 = vdwg.mxu0
      %7311 = vmatprep.subr.bf16.mxu0 0
      %7312 = vmatpush1.bf16.msra.mxu0 %v7227
      %7313 = vmatprep.subr.bf16.mxu0 0
      %7314 = vmatpush1.bf16.msra.mxu0 0
      %7315 = vmatprep.subr.bf16.mxu0 0
      %7316 = vmatpush1.bf16.msra.mxu0 0
      %7317 = vmatprep.subr.bf16.mxu0 0
      %7318 = vmatpush1.bf16.msra.mxu0 0
      %7319 = vmatprep.subr.bf16.mxu0 0
      %7320 = vmatpush1.bf16.msra.mxu0 0
      %7321 = vmatprep.subr.bf16.mxu0 0
      %7322 = vmatpush1.bf16.msra.mxu0 0
      %7323 = vmatprep.subr.bf16.mxu0 0
      %7324 = vmatpush1.bf16.msra.mxu0 0
      %7325 = vmatprep.subr.bf16.mxu0 0
      %7326 = vmatpush1.bf16.msra.mxu0 0
      %7327 = vmatprep.subr.bf16.mxu0 0
      %7328 = vmatpush1.bf16.msra.mxu0 0
      %7329 = vmatprep.subr.bf16.mxu0 0
      %7330 = vmatpush1.bf16.msra.mxu0 0
      %7331 = vmatprep.subr.bf16.mxu0 0
      %7332 = vmatpush1.bf16.msra.mxu0 0
      %7333 = vmatprep.subr.bf16.mxu0 0
      %7334 = vmatpush1.bf16.msra.mxu0 0
      %7335 = vmatprep.subr.bf16.mxu0 0
      %7336 = vmatpush1.bf16.msra.mxu0 0
      %7337 = vmatprep.subr.bf16.mxu0 0
      %7338 = vmatpush1.bf16.msra.mxu0 0
      %7339 = vmatprep.subr.bf16.mxu0 0
      %7340 = vmatpush1.bf16.msra.mxu0 0
      %7341 = vmatprep.subr.bf16.mxu0 0
      %7342 = vmatpush1.bf16.msra.mxu0 0
      %7343 = vmatprep.mubr.bf16.mxu0 0
      %7344 = vmatmul.mubr.bf16.gmra.mrb[0].mxu0 %v7212
      %v7345 = vpop.f32.mrb[0].mxu0
      %v7346 = vadd.f32 0.0, %v7345
      %v7347 = vpop.f32.mrb[0].mxu0
      %v7348 = vpop.f32.mrb[0].mxu0
      %v7349 = vpop.f32.mrb[0].mxu0
      %7350 = vdwg.mxu0
      %v7351 = vadd.f32 %v7169, %v7264
      %v7352 = vadd.f32 %v7170, %v7266
      %v7353 = vadd.f32 %v7171, %v7305
      %v7354 = vadd.f32 %v7172, %v7307
      %v7355 = vadd.f32 %v7173, %v7346
      %s7356 = scalar_lea.vmem %s2, 60
      %v7357 = vld [vmem:[%s7356] sm:$0xf]
      %7358 = vrot.lane.b32.xlu0 %v7188, 119
      %v7359 = vpop.permute.xlu0 %7358
      %7360 = vrot.lane.b32.xlu0 %v7189, 119
      %v7361 = vpop.permute.xlu0 %7360
      %7362 = vrot.lane.b32.xlu0 %v7190, 119
      %v7363 = vpop.permute.xlu0 %7362
      %7364 = vrot.lane.b32.xlu0 %v7191, 119
      %v7365 = vpop.permute.xlu0 %7364
      %7366 = vrot.lane.b32.xlu0 %v7192, 119
      %v7367 = vpop.permute.xlu0 %7366
      %7368 = vrot.lane.b32.xlu0 %v7193, 119
      %v7369 = vpop.permute.xlu0 %7368
      %v7370 = vsel %vm2821, %v7359, %v7361
      %v7371 = vsel %vm2821, %v7361, %v7363
      %v7372 = vsel %vm2821, %v7363, %v7365
      %v7373 = vsel %vm2821, %v7365, %v7367
      %v7374 = vsel %vm2821, %v7367, %v7369
      %v7376 = vsel %vm346, %v7357, 0
      %v7379 = vsel %vm350, %v7370, 0
      %v7382 = vsel %vm350, %v7371, 0
      %v7385 = vsel %vm350, %v7372, 0
      %v7388 = vsel %vm350, %v7373, 0
      %v7391 = vsel %vm350, %v7374, 0
      %7393 = vmatprep.subr.bf16.mxu0 %v7382
      %7394 = vmatpush1.bf16.msra.mxu0 %v7379
      %7395 = vmatprep.subr.bf16.mxu0 0
      %7396 = vmatpush1.bf16.msra.mxu0 0
      %7397 = vmatprep.subr.bf16.mxu0 0
      %7398 = vmatpush1.bf16.msra.mxu0 0
      %7399 = vmatprep.subr.bf16.mxu0 0
      %7400 = vmatpush1.bf16.msra.mxu0 0
      %7401 = vmatprep.subr.bf16.mxu0 0
      %7402 = vmatpush1.bf16.msra.mxu0 0
      %7403 = vmatprep.subr.bf16.mxu0 0
      %7404 = vmatpush1.bf16.msra.mxu0 0
      %7405 = vmatprep.subr.bf16.mxu0 0
      %7406 = vmatpush1.bf16.msra.mxu0 0
      %7407 = vmatprep.subr.bf16.mxu0 0
      %7408 = vmatpush1.bf16.msra.mxu0 0
      %7409 = vmatprep.subr.bf16.mxu0 0
      %7410 = vmatpush1.bf16.msra.mxu0 0
      %7411 = vmatprep.subr.bf16.mxu0 0
      %7412 = vmatpush1.bf16.msra.mxu0 0
      %7413 = vmatprep.subr.bf16.mxu0 0
      %7414 = vmatpush1.bf16.msra.mxu0 0
      %7415 = vmatprep.subr.bf16.mxu0 0
      %7416 = vmatpush1.bf16.msra.mxu0 0
      %7417 = vmatprep.subr.bf16.mxu0 0
      %7418 = vmatpush1.bf16.msra.mxu0 0
      %7419 = vmatprep.subr.bf16.mxu0 0
      %7420 = vmatpush1.bf16.msra.mxu0 0
      %7421 = vmatprep.subr.bf16.mxu0 0
      %7422 = vmatpush1.bf16.msra.mxu0 0
      %7423 = vmatprep.subr.bf16.mxu0 0
      %7424 = vmatpush1.bf16.msra.mxu0 0
      %7425 = vmatprep.mubr.bf16.mxu0 0
      %7426 = vmatmul.mubr.bf16.gmra.mrb[0].mxu0 %v7376
      %v7427 = vpop.f32.mrb[0].mxu0
      %v7428 = vadd.f32 0.0, %v7427
      %v7429 = vpop.f32.mrb[0].mxu0
      %v7430 = vadd.f32 0.0, %v7429
      %v7431 = vpop.f32.mrb[0].mxu0
      %v7432 = vpop.f32.mrb[0].mxu0
      %7433 = vdwg.mxu0
      %7434 = vmatprep.subr.bf16.mxu0 %v7388
      %7435 = vmatpush1.bf16.msra.mxu0 %v7385
      %7436 = vmatprep.subr.bf16.mxu0 0
      %7437 = vmatpush1.bf16.msra.mxu0 0
      %7438 = vmatprep.subr.bf16.mxu0 0
      %7439 = vmatpush1.bf16.msra.mxu0 0
      %7440 = vmatprep.subr.bf16.mxu0 0
      %7441 = vmatpush1.bf16.msra.mxu0 0
      %7442 = vmatprep.subr.bf16.mxu0 0
      %7443 = vmatpush1.bf16.msra.mxu0 0
      %7444 = vmatprep.subr.bf16.mxu0 0
      %7445 = vmatpush1.bf16.msra.mxu0 0
      %7446 = vmatprep.subr.bf16.mxu0 0
      %7447 = vmatpush1.bf16.msra.mxu0 0
      %7448 = vmatprep.subr.bf16.mxu0 0
      %7449 = vmatpush1.bf16.msra.mxu0 0
      %7450 = vmatprep.subr.bf16.mxu0 0
      %7451 = vmatpush1.bf16.msra.mxu0 0
      %7452 = vmatprep.subr.bf16.mxu0 0
      %7453 = vmatpush1.bf16.msra.mxu0 0
      %7454 = vmatprep.subr.bf16.mxu0 0
      %7455 = vmatpush1.bf16.msra.mxu0 0
      %7456 = vmatprep.subr.bf16.mxu0 0
      %7457 = vmatpush1.bf16.msra.mxu0 0
      %7458 = vmatprep.subr.bf16.mxu0 0
      %7459 = vmatpush1.bf16.msra.mxu0 0
      %7460 = vmatprep.subr.bf16.mxu0 0
      %7461 = vmatpush1.bf16.msra.mxu0 0
      %7462 = vmatprep.subr.bf16.mxu0 0
      %7463 = vmatpush1.bf16.msra.mxu0 0
      %7464 = vmatprep.subr.bf16.mxu0 0
      %7465 = vmatpush1.bf16.msra.mxu0 0
      %7466 = vmatprep.mubr.bf16.mxu0 0
      %7467 = vmatmul.mubr.bf16.gmra.mrb[0].mxu0 %v7376
      %v7468 = vpop.f32.mrb[0].mxu0
      %v7469 = vadd.f32 0.0, %v7468
      %v7470 = vpop.f32.mrb[0].mxu0
      %v7471 = vadd.f32 0.0, %v7470
      %v7472 = vpop.f32.mrb[0].mxu0
      %v7473 = vpop.f32.mrb[0].mxu0
      %7474 = vdwg.mxu0
      %7475 = vmatprep.subr.bf16.mxu0 0
      %7476 = vmatpush1.bf16.msra.mxu0 %v7391
      %7477 = vmatprep.subr.bf16.mxu0 0
      %7478 = vmatpush1.bf16.msra.mxu0 0
      %7479 = vmatprep.subr.bf16.mxu0 0
      %7480 = vmatpush1.bf16.msra.mxu0 0
      %7481 = vmatprep.subr.bf16.mxu0 0
      %7482 = vmatpush1.bf16.msra.mxu0 0
      %7483 = vmatprep.subr.bf16.mxu0 0
      %7484 = vmatpush1.bf16.msra.mxu0 0
      %7485 = vmatprep.subr.bf16.mxu0 0
      %7486 = vmatpush1.bf16.msra.mxu0 0
      %7487 = vmatprep.subr.bf16.mxu0 0
      %7488 = vmatpush1.bf16.msra.mxu0 0
      %7489 = vmatprep.subr.bf16.mxu0 0
      %7490 = vmatpush1.bf16.msra.mxu0 0
      %7491 = vmatprep.subr.bf16.mxu0 0
      %7492 = vmatpush1.bf16.msra.mxu0 0
      %7493 = vmatprep.subr.bf16.mxu0 0
      %7494 = vmatpush1.bf16.msra.mxu0 0
      %7495 = vmatprep.subr.bf16.mxu0 0
      %7496 = vmatpush1.bf16.msra.mxu0 0
      %7497 = vmatprep.subr.bf16.mxu0 0
      %7498 = vmatpush1.bf16.msra.mxu0 0
      %7499 = vmatprep.subr.bf16.mxu0 0
      %7500 = vmatpush1.bf16.msra.mxu0 0
      %7501 = vmatprep.subr.bf16.mxu0 0
      %7502 = vmatpush1.bf16.msra.mxu0 0
      %7503 = vmatprep.subr.bf16.mxu0 0
      %7504 = vmatpush1.bf16.msra.mxu0 0
      %7505 = vmatprep.subr.bf16.mxu0 0
      %7506 = vmatpush1.bf16.msra.mxu0 0
      %7507 = vmatprep.mubr.bf16.mxu0 0
      %7508 = vmatmul.mubr.bf16.gmra.mrb[0].mxu0 %v7376
      %v7509 = vpop.f32.mrb[0].mxu0
      %v7510 = vadd.f32 0.0, %v7509
      %v7511 = vpop.f32.mrb[0].mxu0
      %v7512 = vpop.f32.mrb[0].mxu0
      %v7513 = vpop.f32.mrb[0].mxu0
      %7514 = vdwg.mxu0
      %v7515 = vadd.f32 %v7351, %v7428
      %v7516 = vadd.f32 %v7352, %v7430
      %v7517 = vadd.f32 %v7353, %v7469
      %v7518 = vadd.f32 %v7354, %v7471
      %v7519 = vadd.f32 %v7355, %v7510
      %s7520 = scalar_lea.vmem %s2, 64
      %v7521 = vld [vmem:[%s7520] sm:$0xf]
      %7522 = vrot.lane.b32.xlu0 %v7188, 118
      %v7523 = vpop.permute.xlu0 %7522
      %7524 = vrot.lane.b32.xlu0 %v7189, 118
      %v7525 = vpop.permute.xlu0 %7524
      %7526 = vrot.lane.b32.xlu0 %v7190, 118
      %v7527 = vpop.permute.xlu0 %7526
      %7528 = vrot.lane.b32.xlu0 %v7191, 118
      %v7529 = vpop.permute.xlu0 %7528
      %7530 = vrot.lane.b32.xlu0 %v7192, 118
      %v7531 = vpop.permute.xlu0 %7530
      %7532 = vrot.lane.b32.xlu0 %v7193, 118
      %v7533 = vpop.permute.xlu0 %7532
      %v7534 = vsel %vm2986, %v7523, %v7525
      %v7535 = vsel %vm2986, %v7525, %v7527
      %v7536 = vsel %vm2986, %v7527, %v7529
      %v7537 = vsel %vm2986, %v7529, %v7531
      %v7538 = vsel %vm2986, %v7531, %v7533
      %v7540 = vsel %vm346, %v7521, 0
      %v7543 = vsel %vm350, %v7534, 0
      %v7546 = vsel %vm350, %v7535, 0
      %v7549 = vsel %vm350, %v7536, 0
      %v7552 = vsel %vm350, %v7537, 0
      %v7555 = vsel %vm350, %v7538, 0
      %7557 = vmatprep.subr.bf16.mxu0 %v7546
      %7558 = vmatpush1.bf16.msra.mxu0 %v7543
      %7559 = vmatprep.subr.bf16.mxu0 0
      %7560 = vmatpush1.bf16.msra.mxu0 0
      %7561 = vmatprep.subr.bf16.mxu0 0
      %7562 = vmatpush1.bf16.msra.mxu0 0
      %7563 = vmatprep.subr.bf16.mxu0 0
      %7564 = vmatpush1.bf16.msra.mxu0 0
      %7565 = vmatprep.subr.bf16.mxu0 0
      %7566 = vmatpush1.bf16.msra.mxu0 0
      %7567 = vmatprep.subr.bf16.mxu0 0
      %7568 = vmatpush1.bf16.msra.mxu0 0
      %7569 = vmatprep.subr.bf16.mxu0 0
      %7570 = vmatpush1.bf16.msra.mxu0 0
      %7571 = vmatprep.subr.bf16.mxu0 0
      %7572 = vmatpush1.bf16.msra.mxu0 0
      %7573 = vmatprep.subr.bf16.mxu0 0
      %7574 = vmatpush1.bf16.msra.mxu0 0
      %7575 = vmatprep.subr.bf16.mxu0 0
      %7576 = vmatpush1.bf16.msra.mxu0 0
      %7577 = vmatprep.subr.bf16.mxu0 0
      %7578 = vmatpush1.bf16.msra.mxu0 0
      %7579 = vmatprep.subr.bf16.mxu0 0
      %7580 = vmatpush1.bf16.msra.mxu0 0
      %7581 = vmatprep.subr.bf16.mxu0 0
      %7582 = vmatpush1.bf16.msra.mxu0 0
      %7583 = vmatprep.subr.bf16.mxu0 0
      %7584 = vmatpush1.bf16.msra.mxu0 0
      %7585 = vmatprep.subr.bf16.mxu0 0
      %7586 = vmatpush1.bf16.msra.mxu0 0
      %7587 = vmatprep.subr.bf16.mxu0 0
      %7588 = vmatpush1.bf16.msra.mxu0 0
      %7589 = vmatprep.mubr.bf16.mxu0 0
      %7590 = vmatmul.mubr.bf16.gmra.mrb[0].mxu0 %v7540
      %v7591 = vpop.f32.mrb[0].mxu0
      %v7592 = vadd.f32 0.0, %v7591
      %v7593 = vpop.f32.mrb[0].mxu0
      %v7594 = vadd.f32 0.0, %v7593
      %v7595 = vpop.f32.mrb[0].mxu0
      %v7596 = vpop.f32.mrb[0].mxu0
      %7597 = vdwg.mxu0
      %7598 = vmatprep.subr.bf16.mxu0 %v7552
      %7599 = vmatpush1.bf16.msra.mxu0 %v7549
      %7600 = vmatprep.subr.bf16.mxu0 0
      %7601 = vmatpush1.bf16.msra.mxu0 0
      %7602 = vmatprep.subr.bf16.mxu0 0
      %7603 = vmatpush1.bf16.msra.mxu0 0
      %7604 = vmatprep.subr.bf16.mxu0 0
      %7605 = vmatpush1.bf16.msra.mxu0 0
      %7606 = vmatprep.subr.bf16.mxu0 0
      %7607 = vmatpush1.bf16.msra.mxu0 0
      %7608 = vmatprep.subr.bf16.mxu0 0
      %7609 = vmatpush1.bf16.msra.mxu0 0
      %7610 = vmatprep.subr.bf16.mxu0 0
      %7611 = vmatpush1.bf16.msra.mxu0 0
      %7612 = vmatprep.subr.bf16.mxu0 0
      %7613 = vmatpush1.bf16.msra.mxu0 0
      %7614 = vmatprep.subr.bf16.mxu0 0
      %7615 = vmatpush1.bf16.msra.mxu0 0
      %7616 = vmatprep.subr.bf16.mxu0 0
      %7617 = vmatpush1.bf16.msra.mxu0 0
      %7618 = vmatprep.subr.bf16.mxu0 0
      %7619 = vmatpush1.bf16.msra.mxu0 0
      %7620 = vmatprep.subr.bf16.mxu0 0
      %7621 = vmatpush1.bf16.msra.mxu0 0
      %7622 = vmatprep.subr.bf16.mxu0 0
      %7623 = vmatpush1.bf16.msra.mxu0 0
      %7624 = vmatprep.subr.bf16.mxu0 0
      %7625 = vmatpush1.bf16.msra.mxu0 0
      %7626 = vmatprep.subr.bf16.mxu0 0
      %7627 = vmatpush1.bf16.msra.mxu0 0
      %7628 = vmatprep.subr.bf16.mxu0 0
      %7629 = vmatpush1.bf16.msra.mxu0 0
      %7630 = vmatprep.mubr.bf16.mxu0 0
      %7631 = vmatmul.mubr.bf16.gmra.mrb[0].mxu0 %v7540
      %v7632 = vpop.f32.mrb[0].mxu0
      %v7633 = vadd.f32 0.0, %v7632
      %v7634 = vpop.f32.mrb[0].mxu0
      %v7635 = vadd.f32 0.0, %v7634
      %v7636 = vpop.f32.mrb[0].mxu0
      %v7637 = vpop.f32.mrb[0].mxu0
      %7638 = vdwg.mxu0
      %7639 = vmatprep.subr.bf16.mxu0 0
      %7640 = vmatpush1.bf16.msra.mxu0 %v7555
      %7641 = vmatprep.subr.bf16.mxu0 0
      %7642 = vmatpush1.bf16.msra.mxu0 0
      %7643 = vmatprep.subr.bf16.mxu0 0
      %7644 = vmatpush1.bf16.msra.mxu0 0
      %7645 = vmatprep.subr.bf16.mxu0 0
      %7646 = vmatpush1.bf16.msra.mxu0 0
      %7647 = vmatprep.subr.bf16.mxu0 0
      %7648 = vmatpush1.bf16.msra.mxu0 0
      %7649 = vmatprep.subr.bf16.mxu0 0
      %7650 = vmatpush1.bf16.msra.mxu0 0
      %7651 = vmatprep.subr.bf16.mxu0 0
      %7652 = vmatpush1.bf16.msra.mxu0 0
      %7653 = vmatprep.subr.bf16.mxu0 0
      %7654 = vmatpush1.bf16.msra.mxu0 0
      %7655 = vmatprep.subr.bf16.mxu0 0
      %7656 = vmatpush1.bf16.msra.mxu0 0
      %7657 = vmatprep.subr.bf16.mxu0 0
      %7658 = vmatpush1.bf16.msra.mxu0 0
      %7659 = vmatprep.subr.bf16.mxu0 0
      %7660 = vmatpush1.bf16.msra.mxu0 0
      %7661 = vmatprep.subr.bf16.mxu0 0
      %7662 = vmatpush1.bf16.msra.mxu0 0
      %7663 = vmatprep.subr.bf16.mxu0 0
      %7664 = vmatpush1.bf16.msra.mxu0 0
      %7665 = vmatprep.subr.bf16.mxu0 0
      %7666 = vmatpush1.bf16.msra.mxu0 0
      %7667 = vmatprep.subr.bf16.mxu0 0
      %7668 = vmatpush1.bf16.msra.mxu0 0
      %7669 = vmatprep.subr.bf16.mxu0 0
      %7670 = vmatpush1.bf16.msra.mxu0 0
      %7671 = vmatprep.mubr.bf16.mxu0 0
      %7672 = vmatmul.mubr.bf16.gmra.mrb[0].mxu0 %v7540
      %v7673 = vpop.f32.mrb[0].mxu0
      %v7674 = vadd.f32 0.0, %v7673
      %v7675 = vpop.f32.mrb[0].mxu0
      %v7676 = vpop.f32.mrb[0].mxu0
      %v7677 = vpop.f32.mrb[0].mxu0
      %7678 = vdwg.mxu0
      %v7679 = vadd.f32 %v7515, %v7592
      %v7680 = vadd.f32 %v7516, %v7594
      %v7681 = vadd.f32 %v7517, %v7633
      %v7682 = vadd.f32 %v7518, %v7635
      %v7683 = vadd.f32 %v7519, %v7674
      %s7684 = scalar_lea.vmem %s2, 68
      %v7685 = vld [vmem:[%s7684] sm:$0xf]
      %7686 = vrot.lane.b32.xlu0 %v7188, 117
      %v7687 = vpop.permute.xlu0 %7686
      %7688 = vrot.lane.b32.xlu0 %v7189, 117
      %v7689 = vpop.permute.xlu0 %7688
      %7690 = vrot.lane.b32.xlu0 %v7190, 117
      %v7691 = vpop.permute.xlu0 %7690
      %7692 = vrot.lane.b32.xlu0 %v7191, 117
      %v7693 = vpop.permute.xlu0 %7692
      %7694 = vrot.lane.b32.xlu0 %v7192, 117
      %v7695 = vpop.permute.xlu0 %7694
      %7696 = vrot.lane.b32.xlu0 %v7193, 117
      %v7697 = vpop.permute.xlu0 %7696
      %v7698 = vsel %vm3151, %v7687, %v7689
      %v7699 = vsel %vm3151, %v7689, %v7691
      %v7700 = vsel %vm3151, %v7691, %v7693
      %v7701 = vsel %vm3151, %v7693, %v7695
      %v7702 = vsel %vm3151, %v7695, %v7697
      %v7704 = vsel %vm346, %v7685, 0
      %v7707 = vsel %vm350, %v7698, 0
      %v7710 = vsel %vm350, %v7699, 0
      %v7713 = vsel %vm350, %v7700, 0
      %v7716 = vsel %vm350, %v7701, 0
      %v7719 = vsel %vm350, %v7702, 0
      %7721 = vmatprep.subr.bf16.mxu0 %v7710
      %7722 = vmatpush1.bf16.msra.mxu0 %v7707
      %7723 = vmatprep.subr.bf16.mxu0 0
      %7724 = vmatpush1.bf16.msra.mxu0 0
      %7725 = vmatprep.subr.bf16.mxu0 0
      %7726 = vmatpush1.bf16.msra.mxu0 0
      %7727 = vmatprep.subr.bf16.mxu0 0
      %7728 = vmatpush1.bf16.msra.mxu0 0
      %7729 = vmatprep.subr.bf16.mxu0 0
      %7730 = vmatpush1.bf16.msra.mxu0 0
      %7731 = vmatprep.subr.bf16.mxu0 0
      %7732 = vmatpush1.bf16.msra.mxu0 0
      %7733 = vmatprep.subr.bf16.mxu0 0
      %7734 = vmatpush1.bf16.msra.mxu0 0
      %7735 = vmatprep.subr.bf16.mxu0 0
      %7736 = vmatpush1.bf16.msra.mxu0 0
      %7737 = vmatprep.subr.bf16.mxu0 0
      %7738 = vmatpush1.bf16.msra.mxu0 0
      %7739 = vmatprep.subr.bf16.mxu0 0
      %7740 = vmatpush1.bf16.msra.mxu0 0
      %7741 = vmatprep.subr.bf16.mxu0 0
      %7742 = vmatpush1.bf16.msra.mxu0 0
      %7743 = vmatprep.subr.bf16.mxu0 0
      %7744 = vmatpush1.bf16.msra.mxu0 0
      %7745 = vmatprep.subr.bf16.mxu0 0
      %7746 = vmatpush1.bf16.msra.mxu0 0
      %7747 = vmatprep.subr.bf16.mxu0 0
      %7748 = vmatpush1.bf16.msra.mxu0 0
      %7749 = vmatprep.subr.bf16.mxu0 0
      %7750 = vmatpush1.bf16.msra.mxu0 0
      %7751 = vmatprep.subr.bf16.mxu0 0
      %7752 = vmatpush1.bf16.msra.mxu0 0
      %7753 = vmatprep.mubr.bf16.mxu0 0
      %7754 = vmatmul.mubr.bf16.gmra.mrb[0].mxu0 %v7704
      %v7755 = vpop.f32.mrb[0].mxu0
      %v7756 = vadd.f32 0.0, %v7755
      %v7757 = vpop.f32.mrb[0].mxu0
      %v7758 = vadd.f32 0.0, %v7757
      %v7759 = vpop.f32.mrb[0].mxu0
      %v7760 = vpop.f32.mrb[0].mxu0
      %7761 = vdwg.mxu0
      %7762 = vmatprep.subr.bf16.mxu0 %v7716
      %7763 = vmatpush1.bf16.msra.mxu0 %v7713
      %7764 = vmatprep.subr.bf16.mxu0 0
      %7765 = vmatpush1.bf16.msra.mxu0 0
      %7766 = vmatprep.subr.bf16.mxu0 0
      %7767 = vmatpush1.bf16.msra.mxu0 0
      %7768 = vmatprep.subr.bf16.mxu0 0
      %7769 = vmatpush1.bf16.msra.mxu0 0
      %7770 = vmatprep.subr.bf16.mxu0 0
      %7771 = vmatpush1.bf16.msra.mxu0 0
      %7772 = vmatprep.subr.bf16.mxu0 0
      %7773 = vmatpush1.bf16.msra.mxu0 0
      %7774 = vmatprep.subr.bf16.mxu0 0
      %7775 = vmatpush1.bf16.msra.mxu0 0
      %7776 = vmatprep.subr.bf16.mxu0 0
      %7777 = vmatpush1.bf16.msra.mxu0 0
      %7778 = vmatprep.subr.bf16.mxu0 0
      %7779 = vmatpush1.bf16.msra.mxu0 0
      %7780 = vmatprep.subr.bf16.mxu0 0
      %7781 = vmatpush1.bf16.msra.mxu0 0
      %7782 = vmatprep.subr.bf16.mxu0 0
      %7783 = vmatpush1.bf16.msra.mxu0 0
      %7784 = vmatprep.subr.bf16.mxu0 0
      %7785 = vmatpush1.bf16.msra.mxu0 0
      %7786 = vmatprep.subr.bf16.mxu0 0
      %7787 = vmatpush1.bf16.msra.mxu0 0
      %7788 = vmatprep.subr.bf16.mxu0 0
      %7789 = vmatpush1.bf16.msra.mxu0 0
      %7790 = vmatprep.subr.bf16.mxu0 0
      %7791 = vmatpush1.bf16.msra.mxu0 0
      %7792 = vmatprep.subr.bf16.mxu0 0
      %7793 = vmatpush1.bf16.msra.mxu0 0
      %7794 = vmatprep.mubr.bf16.mxu0 0
      %7795 = vmatmul.mubr.bf16.gmra.mrb[0].mxu0 %v7704
      %v7796 = vpop.f32.mrb[0].mxu0
      %v7797 = vadd.f32 0.0, %v7796
      %v7798 = vpop.f32.mrb[0].mxu0
      %v7799 = vadd.f32 0.0, %v7798
      %v7800 = vpop.f32.mrb[0].mxu0
      %v7801 = vpop.f32.mrb[0].mxu0
      %7802 = vdwg.mxu0
      %7803 = vmatprep.subr.bf16.mxu0 0
      %7804 = vmatpush1.bf16.msra.mxu0 %v7719
      %7805 = vmatprep.subr.bf16.mxu0 0
      %7806 = vmatpush1.bf16.msra.mxu0 0
      %7807 = vmatprep.subr.bf16.mxu0 0
      %7808 = vmatpush1.bf16.msra.mxu0 0
      %7809 = vmatprep.subr.bf16.mxu0 0
      %7810 = vmatpush1.bf16.msra.mxu0 0
      %7811 = vmatprep.subr.bf16.mxu0 0
      %7812 = vmatpush1.bf16.msra.mxu0 0
      %7813 = vmatprep.subr.bf16.mxu0 0
      %7814 = vmatpush1.bf16.msra.mxu0 0
      %7815 = vmatprep.subr.bf16.mxu0 0
      %7816 = vmatpush1.bf16.msra.mxu0 0
      %7817 = vmatprep.subr.bf16.mxu0 0
      %7818 = vmatpush1.bf16.msra.mxu0 0
      %7819 = vmatprep.subr.bf16.mxu0 0
      %7820 = vmatpush1.bf16.msra.mxu0 0
      %7821 = vmatprep.subr.bf16.mxu0 0
      %7822 = vmatpush1.bf16.msra.mxu0 0
      %7823 = vmatprep.subr.bf16.mxu0 0
      %7824 = vmatpush1.bf16.msra.mxu0 0
      %7825 = vmatprep.subr.bf16.mxu0 0
      %7826 = vmatpush1.bf16.msra.mxu0 0
      %7827 = vmatprep.subr.bf16.mxu0 0
      %7828 = vmatpush1.bf16.msra.mxu0 0
      %7829 = vmatprep.subr.bf16.mxu0 0
      %7830 = vmatpush1.bf16.msra.mxu0 0
      %7831 = vmatprep.subr.bf16.mxu0 0
      %7832 = vmatpush1.bf16.msra.mxu0 0
      %7833 = vmatprep.subr.bf16.mxu0 0
      %7834 = vmatpush1.bf16.msra.mxu0 0
      %7835 = vmatprep.mubr.bf16.mxu0 0
      %7836 = vmatmul.mubr.bf16.gmra.mrb[0].mxu0 %v7704
      %v7837 = vpop.f32.mrb[0].mxu0
      %v7838 = vadd.f32 0.0, %v7837
      %v7839 = vpop.f32.mrb[0].mxu0
      %v7840 = vpop.f32.mrb[0].mxu0
      %v7841 = vpop.f32.mrb[0].mxu0
      %7842 = vdwg.mxu0
      %v7843 = vadd.f32 %v7679, %v7756
      %v7844 = vadd.f32 %v7680, %v7758
      %v7845 = vadd.f32 %v7681, %v7797
      %v7846 = vadd.f32 %v7682, %v7799
      %v7847 = vadd.f32 %v7683, %v7838
      %s7848 = scalar_lea.vmem %s2, 72
      %v7849 = vld [vmem:[%s7848] sm:$0xf]
      %7850 = vrot.lane.b32.xlu0 %v7188, 39
      %v7851 = vpop.permute.xlu0 %7850
      %7852 = vrot.lane.b32.xlu0 %v7189, 39
      %v7853 = vpop.permute.xlu0 %7852
      %7854 = vrot.lane.b32.xlu0 %v7190, 39
      %v7855 = vpop.permute.xlu0 %7854
      %7856 = vrot.lane.b32.xlu0 %v7191, 39
      %v7857 = vpop.permute.xlu0 %7856
      %7858 = vrot.lane.b32.xlu0 %v7192, 39
      %v7859 = vpop.permute.xlu0 %7858
      %7860 = vrot.lane.b32.xlu0 %v7193, 39
      %v7861 = vpop.permute.xlu0 %7860
      %v7862 = vsel %vm3316, %v7851, %v7853
      %v7863 = vsel %vm3316, %v7853, %v7855
      %v7864 = vsel %vm3316, %v7855, %v7857
      %v7865 = vsel %vm3316, %v7857, %v7859
      %v7866 = vsel %vm3316, %v7859, %v7861
      %v7868 = vsel %vm346, %v7849, 0
      %v7871 = vsel %vm350, %v7862, 0
      %v7874 = vsel %vm350, %v7863, 0
      %v7877 = vsel %vm350, %v7864, 0
      %v7880 = vsel %vm350, %v7865, 0
      %v7883 = vsel %vm350, %v7866, 0
      %7885 = vmatprep.subr.bf16.mxu0 %v7874
      %7886 = vmatpush1.bf16.msra.mxu0 %v7871
      %7887 = vmatprep.subr.bf16.mxu0 0
      %7888 = vmatpush1.bf16.msra.mxu0 0
      %7889 = vmatprep.subr.bf16.mxu0 0
      %7890 = vmatpush1.bf16.msra.mxu0 0
      %7891 = vmatprep.subr.bf16.mxu0 0
      %7892 = vmatpush1.bf16.msra.mxu0 0
      %7893 = vmatprep.subr.bf16.mxu0 0
      %7894 = vmatpush1.bf16.msra.mxu0 0
      %7895 = vmatprep.subr.bf16.mxu0 0
      %7896 = vmatpush1.bf16.msra.mxu0 0
      %7897 = vmatprep.subr.bf16.mxu0 0
      %7898 = vmatpush1.bf16.msra.mxu0 0
      %7899 = vmatprep.subr.bf16.mxu0 0
      %7900 = vmatpush1.bf16.msra.mxu0 0
      %7901 = vmatprep.subr.bf16.mxu0 0
      %7902 = vmatpush1.bf16.msra.mxu0 0
      %7903 = vmatprep.subr.bf16.mxu0 0
      %7904 = vmatpush1.bf16.msra.mxu0 0
      %7905 = vmatprep.subr.bf16.mxu0 0
      %7906 = vmatpush1.bf16.msra.mxu0 0
      %7907 = vmatprep.subr.bf16.mxu0 0
      %7908 = vmatpush1.bf16.msra.mxu0 0
      %7909 = vmatprep.subr.bf16.mxu0 0
      %7910 = vmatpush1.bf16.msra.mxu0 0
      %7911 = vmatprep.subr.bf16.mxu0 0
      %7912 = vmatpush1.bf16.msra.mxu0 0
      %7913 = vmatprep.subr.bf16.mxu0 0
      %7914 = vmatpush1.bf16.msra.mxu0 0
      %7915 = vmatprep.subr.bf16.mxu0 0
      %7916 = vmatpush1.bf16.msra.mxu0 0
      %7917 = vmatprep.mubr.bf16.mxu0 0
      %7918 = vmatmul.mubr.bf16.gmra.mrb[0].mxu0 %v7868
      %v7919 = vpop.f32.mrb[0].mxu0
      %v7920 = vadd.f32 0.0, %v7919
      %v7921 = vpop.f32.mrb[0].mxu0
      %v7922 = vadd.f32 0.0, %v7921
      %v7923 = vpop.f32.mrb[0].mxu0
      %v7924 = vpop.f32.mrb[0].mxu0
      %7925 = vdwg.mxu0
      %7926 = vmatprep.subr.bf16.mxu0 %v7880
      %7927 = vmatpush1.bf16.msra.mxu0 %v7877
      %7928 = vmatprep.subr.bf16.mxu0 0
      %7929 = vmatpush1.bf16.msra.mxu0 0
      %7930 = vmatprep.subr.bf16.mxu0 0
      %7931 = vmatpush1.bf16.msra.mxu0 0
      %7932 = vmatprep.subr.bf16.mxu0 0
      %7933 = vmatpush1.bf16.msra.mxu0 0
      %7934 = vmatprep.subr.bf16.mxu0 0
      %7935 = vmatpush1.bf16.msra.mxu0 0
      %7936 = vmatprep.subr.bf16.mxu0 0
      %7937 = vmatpush1.bf16.msra.mxu0 0
      %7938 = vmatprep.subr.bf16.mxu0 0
      %7939 = vmatpush1.bf16.msra.mxu0 0
      %7940 = vmatprep.subr.bf16.mxu0 0
      %7941 = vmatpush1.bf16.msra.mxu0 0
      %7942 = vmatprep.subr.bf16.mxu0 0
      %7943 = vmatpush1.bf16.msra.mxu0 0
      %7944 = vmatprep.subr.bf16.mxu0 0
      %7945 = vmatpush1.bf16.msra.mxu0 0
      %7946 = vmatprep.subr.bf16.mxu0 0
      %7947 = vmatpush1.bf16.msra.mxu0 0
      %7948 = vmatprep.subr.bf16.mxu0 0
      %7949 = vmatpush1.bf16.msra.mxu0 0
      %7950 = vmatprep.subr.bf16.mxu0 0
      %7951 = vmatpush1.bf16.msra.mxu0 0
      %7952 = vmatprep.subr.bf16.mxu0 0
      %7953 = vmatpush1.bf16.msra.mxu0 0
      %7954 = vmatprep.subr.bf16.mxu0 0
      %7955 = vmatpush1.bf16.msra.mxu0 0
      %7956 = vmatprep.subr.bf16.mxu0 0
      %7957 = vmatpush1.bf16.msra.mxu0 0
      %7958 = vmatprep.mubr.bf16.mxu0 0
      %7959 = vmatmul.mubr.bf16.gmra.mrb[0].mxu0 %v7868
      %v7960 = vpop.f32.mrb[0].mxu0
      %v7961 = vadd.f32 0.0, %v7960
      %v7962 = vpop.f32.mrb[0].mxu0
      %v7963 = vadd.f32 0.0, %v7962
      %v7964 = vpop.f32.mrb[0].mxu0
      %v7965 = vpop.f32.mrb[0].mxu0
      %7966 = vdwg.mxu0
      %7967 = vmatprep.subr.bf16.mxu0 0
      %7968 = vmatpush1.bf16.msra.mxu0 %v7883
      %7969 = vmatprep.subr.bf16.mxu0 0
      %7970 = vmatpush1.bf16.msra.mxu0 0
      %7971 = vmatprep.subr.bf16.mxu0 0
      %7972 = vmatpush1.bf16.msra.mxu0 0
      %7973 = vmatprep.subr.bf16.mxu0 0
      %7974 = vmatpush1.bf16.msra.mxu0 0
      %7975 = vmatprep.subr.bf16.mxu0 0
      %7976 = vmatpush1.bf16.msra.mxu0 0
      %7977 = vmatprep.subr.bf16.mxu0 0
      %7978 = vmatpush1.bf16.msra.mxu0 0
      %7979 = vmatprep.subr.bf16.mxu0 0
      %7980 = vmatpush1.bf16.msra.mxu0 0
      %7981 = vmatprep.subr.bf16.mxu0 0
      %7982 = vmatpush1.bf16.msra.mxu0 0
      %7983 = vmatprep.subr.bf16.mxu0 0
      %7984 = vmatpush1.bf16.msra.mxu0 0
      %7985 = vmatprep.subr.bf16.mxu0 0
      %7986 = vmatpush1.bf16.msra.mxu0 0
      %7987 = vmatprep.subr.bf16.mxu0 0
      %7988 = vmatpush1.bf16.msra.mxu0 0
      %7989 = vmatprep.subr.bf16.mxu0 0
      %7990 = vmatpush1.bf16.msra.mxu0 0
      %7991 = vmatprep.subr.bf16.mxu0 0
      %7992 = vmatpush1.bf16.msra.mxu0 0
      %7993 = vmatprep.subr.bf16.mxu0 0
      %7994 = vmatpush1.bf16.msra.mxu0 0
      %7995 = vmatprep.subr.bf16.mxu0 0
      %7996 = vmatpush1.bf16.msra.mxu0 0
      %7997 = vmatprep.subr.bf16.mxu0 0
      %7998 = vmatpush1.bf16.msra.mxu0 0
      %7999 = vmatprep.mubr.bf16.mxu0 0
      %8000 = vmatmul.mubr.bf16.gmra.mrb[0].mxu0 %v7868
      %v8001 = vpop.f32.mrb[0].mxu0
      %v8002 = vadd.f32 0.0, %v8001
      %v8003 = vpop.f32.mrb[0].mxu0
      %v8004 = vpop.f32.mrb[0].mxu0
      %v8005 = vpop.f32.mrb[0].mxu0
      %8006 = vdwg.mxu0
      %v8007 = vadd.f32 %v7843, %v7920
      %v8008 = vadd.f32 %v7844, %v7922
      %v8009 = vadd.f32 %v7845, %v7961
      %v8010 = vadd.f32 %v7846, %v7963
      %v8011 = vadd.f32 %v7847, %v8002
      %s8012 = scalar_lea.vmem %s2, 76
      %v8013 = vld [vmem:[%s8012] sm:$0xf]
      %8014 = vrot.lane.b32.xlu0 %v7188, 38
      %v8015 = vpop.permute.xlu0 %8014
      %8016 = vrot.lane.b32.xlu0 %v7189, 38
      %v8017 = vpop.permute.xlu0 %8016
      %8018 = vrot.lane.b32.xlu0 %v7190, 38
      %v8019 = vpop.permute.xlu0 %8018
      %8020 = vrot.lane.b32.xlu0 %v7191, 38
      %v8021 = vpop.permute.xlu0 %8020
      %8022 = vrot.lane.b32.xlu0 %v7192, 38
      %v8023 = vpop.permute.xlu0 %8022
      %8024 = vrot.lane.b32.xlu0 %v7193, 38
      %v8025 = vpop.permute.xlu0 %8024
      %v8026 = vsel %vm3481, %v8015, %v8017
      %v8027 = vsel %vm3481, %v8017, %v8019
      %v8028 = vsel %vm3481, %v8019, %v8021
      %v8029 = vsel %vm3481, %v8021, %v8023
      %v8030 = vsel %vm3481, %v8023, %v8025
      %v8032 = vsel %vm346, %v8013, 0
      %v8035 = vsel %vm350, %v8026, 0
      %v8038 = vsel %vm350, %v8027, 0
      %v8041 = vsel %vm350, %v8028, 0
      %v8044 = vsel %vm350, %v8029, 0
      %v8047 = vsel %vm350, %v8030, 0
      %8049 = vmatprep.subr.bf16.mxu0 %v8038
      %8050 = vmatpush1.bf16.msra.mxu0 %v8035
      %8051 = vmatprep.subr.bf16.mxu0 0
      %8052 = vmatpush1.bf16.msra.mxu0 0
      %8053 = vmatprep.subr.bf16.mxu0 0
      %8054 = vmatpush1.bf16.msra.mxu0 0
      %8055 = vmatprep.subr.bf16.mxu0 0
      %8056 = vmatpush1.bf16.msra.mxu0 0
      %8057 = vmatprep.subr.bf16.mxu0 0
      %8058 = vmatpush1.bf16.msra.mxu0 0
      %8059 = vmatprep.subr.bf16.mxu0 0
      %8060 = vmatpush1.bf16.msra.mxu0 0
      %8061 = vmatprep.subr.bf16.mxu0 0
      %8062 = vmatpush1.bf16.msra.mxu0 0
      %8063 = vmatprep.subr.bf16.mxu0 0
      %8064 = vmatpush1.bf16.msra.mxu0 0
      %8065 = vmatprep.subr.bf16.mxu0 0
      %8066 = vmatpush1.bf16.msra.mxu0 0
      %8067 = vmatprep.subr.bf16.mxu0 0
      %8068 = vmatpush1.bf16.msra.mxu0 0
      %8069 = vmatprep.subr.bf16.mxu0 0
      %8070 = vmatpush1.bf16.msra.mxu0 0
      %8071 = vmatprep.subr.bf16.mxu0 0
      %8072 = vmatpush1.bf16.msra.mxu0 0
      %8073 = vmatprep.subr.bf16.mxu0 0
      %8074 = vmatpush1.bf16.msra.mxu0 0
      %8075 = vmatprep.subr.bf16.mxu0 0
      %8076 = vmatpush1.bf16.msra.mxu0 0
      %8077 = vmatprep.subr.bf16.mxu0 0
      %8078 = vmatpush1.bf16.msra.mxu0 0
      %8079 = vmatprep.subr.bf16.mxu0 0
      %8080 = vmatpush1.bf16.msra.mxu0 0
      %8081 = vmatprep.mubr.bf16.mxu0 0
      %8082 = vmatmul.mubr.bf16.gmra.mrb[0].mxu0 %v8032
      %v8083 = vpop.f32.mrb[0].mxu0
      %v8084 = vadd.f32 0.0, %v8083
      %v8085 = vpop.f32.mrb[0].mxu0
      %v8086 = vadd.f32 0.0, %v8085
      %v8087 = vpop.f32.mrb[0].mxu0
      %v8088 = vpop.f32.mrb[0].mxu0
      %8089 = vdwg.mxu0
      %8090 = vmatprep.subr.bf16.mxu0 %v8044
      %8091 = vmatpush1.bf16.msra.mxu0 %v8041
      %8092 = vmatprep.subr.bf16.mxu0 0
      %8093 = vmatpush1.bf16.msra.mxu0 0
      %8094 = vmatprep.subr.bf16.mxu0 0
      %8095 = vmatpush1.bf16.msra.mxu0 0
      %8096 = vmatprep.subr.bf16.mxu0 0
      %8097 = vmatpush1.bf16.msra.mxu0 0
      %8098 = vmatprep.subr.bf16.mxu0 0
      %8099 = vmatpush1.bf16.msra.mxu0 0
      %8100 = vmatprep.subr.bf16.mxu0 0
      %8101 = vmatpush1.bf16.msra.mxu0 0
      %8102 = vmatprep.subr.bf16.mxu0 0
      %8103 = vmatpush1.bf16.msra.mxu0 0
      %8104 = vmatprep.subr.bf16.mxu0 0
      %8105 = vmatpush1.bf16.msra.mxu0 0
      %8106 = vmatprep.subr.bf16.mxu0 0
      %8107 = vmatpush1.bf16.msra.mxu0 0
      %8108 = vmatprep.subr.bf16.mxu0 0
      %8109 = vmatpush1.bf16.msra.mxu0 0
      %8110 = vmatprep.subr.bf16.mxu0 0
      %8111 = vmatpush1.bf16.msra.mxu0 0
      %8112 = vmatprep.subr.bf16.mxu0 0
      %8113 = vmatpush1.bf16.msra.mxu0 0
      %8114 = vmatprep.subr.bf16.mxu0 0
      %8115 = vmatpush1.bf16.msra.mxu0 0
      %8116 = vmatprep.subr.bf16.mxu0 0
      %8117 = vmatpush1.bf16.msra.mxu0 0
      %8118 = vmatprep.subr.bf16.mxu0 0
      %8119 = vmatpush1.bf16.msra.mxu0 0
      %8120 = vmatprep.subr.bf16.mxu0 0
      %8121 = vmatpush1.bf16.msra.mxu0 0
      %8122 = vmatprep.mubr.bf16.mxu0 0
      %8123 = vmatmul.mubr.bf16.gmra.mrb[0].mxu0 %v8032
      %v8124 = vpop.f32.mrb[0].mxu0
      %v8125 = vadd.f32 0.0, %v8124
      %v8126 = vpop.f32.mrb[0].mxu0
      %v8127 = vadd.f32 0.0, %v8126
      %v8128 = vpop.f32.mrb[0].mxu0
      %v8129 = vpop.f32.mrb[0].mxu0
      %8130 = vdwg.mxu0
      %8131 = vmatprep.subr.bf16.mxu0 0
      %8132 = vmatpush1.bf16.msra.mxu0 %v8047
      %8133 = vmatprep.subr.bf16.mxu0 0
      %8134 = vmatpush1.bf16.msra.mxu0 0
      %8135 = vmatprep.subr.bf16.mxu0 0
      %8136 = vmatpush1.bf16.msra.mxu0 0
      %8137 = vmatprep.subr.bf16.mxu0 0
      %8138 = vmatpush1.bf16.msra.mxu0 0
      %8139 = vmatprep.subr.bf16.mxu0 0
      %8140 = vmatpush1.bf16.msra.mxu0 0
      %8141 = vmatprep.subr.bf16.mxu0 0
      %8142 = vmatpush1.bf16.msra.mxu0 0
      %8143 = vmatprep.subr.bf16.mxu0 0
      %8144 = vmatpush1.bf16.msra.mxu0 0
      %8145 = vmatprep.subr.bf16.mxu0 0
      %8146 = vmatpush1.bf16.msra.mxu0 0
      %8147 = vmatprep.subr.bf16.mxu0 0
      %8148 = vmatpush1.bf16.msra.mxu0 0
      %8149 = vmatprep.subr.bf16.mxu0 0
      %8150 = vmatpush1.bf16.msra.mxu0 0
      %8151 = vmatprep.subr.bf16.mxu0 0
      %8152 = vmatpush1.bf16.msra.mxu0 0
      %8153 = vmatprep.subr.bf16.mxu0 0
      %8154 = vmatpush1.bf16.msra.mxu0 0
      %8155 = vmatprep.subr.bf16.mxu0 0
      %8156 = vmatpush1.bf16.msra.mxu0 0
      %8157 = vmatprep.subr.bf16.mxu0 0
      %8158 = vmatpush1.bf16.msra.mxu0 0
      %8159 = vmatprep.subr.bf16.mxu0 0
      %8160 = vmatpush1.bf16.msra.mxu0 0
      %8161 = vmatprep.subr.bf16.mxu0 0
      %8162 = vmatpush1.bf16.msra.mxu0 0
      %8163 = vmatprep.mubr.bf16.mxu0 0
      %8164 = vmatmul.mubr.bf16.gmra.mrb[0].mxu0 %v8032
      %v8165 = vpop.f32.mrb[0].mxu0
      %v8166 = vadd.f32 0.0, %v8165
      %v8167 = vpop.f32.mrb[0].mxu0
      %v8168 = vpop.f32.mrb[0].mxu0
      %v8169 = vpop.f32.mrb[0].mxu0
      %8170 = vdwg.mxu0
      %v8171 = vadd.f32 %v8007, %v8084
      %v8172 = vadd.f32 %v8008, %v8086
      %v8173 = vadd.f32 %v8009, %v8125
      %v8174 = vadd.f32 %v8010, %v8127
      %v8175 = vadd.f32 %v8011, %v8166
      %s8176 = scalar_lea.vmem %s2, 80
      %v8177 = vld [vmem:[%s8176] sm:$0xf]
      %8178 = vrot.lane.b32.xlu0 %v7188, 37
      %v8179 = vpop.permute.xlu0 %8178
      %8180 = vrot.lane.b32.xlu0 %v7189, 37
      %v8181 = vpop.permute.xlu0 %8180
      %8182 = vrot.lane.b32.xlu0 %v7190, 37
      %v8183 = vpop.permute.xlu0 %8182
      %8184 = vrot.lane.b32.xlu0 %v7191, 37
      %v8185 = vpop.permute.xlu0 %8184
      %8186 = vrot.lane.b32.xlu0 %v7192, 37
      %v8187 = vpop.permute.xlu0 %8186
      %8188 = vrot.lane.b32.xlu0 %v7193, 37
      %v8189 = vpop.permute.xlu0 %8188
      %v8190 = vsel %vm3646, %v8179, %v8181
      %v8191 = vsel %vm3646, %v8181, %v8183
      %v8192 = vsel %vm3646, %v8183, %v8185
      %v8193 = vsel %vm3646, %v8185, %v8187
      %v8194 = vsel %vm3646, %v8187, %v8189
      %v8196 = vsel %vm346, %v8177, 0
      %v8199 = vsel %vm350, %v8190, 0
      %v8202 = vsel %vm350, %v8191, 0
      %v8205 = vsel %vm350, %v8192, 0
      %v8208 = vsel %vm350, %v8193, 0
      %v8211 = vsel %vm350, %v8194, 0
      %8213 = vmatprep.subr.bf16.mxu0 %v8202
      %8214 = vmatpush1.bf16.msra.mxu0 %v8199
      %8215 = vmatprep.subr.bf16.mxu0 0
      %8216 = vmatpush1.bf16.msra.mxu0 0
      %8217 = vmatprep.subr.bf16.mxu0 0
      %8218 = vmatpush1.bf16.msra.mxu0 0
      %8219 = vmatprep.subr.bf16.mxu0 0
      %8220 = vmatpush1.bf16.msra.mxu0 0
      %8221 = vmatprep.subr.bf16.mxu0 0
      %8222 = vmatpush1.bf16.msra.mxu0 0
      %8223 = vmatprep.subr.bf16.mxu0 0
      %8224 = vmatpush1.bf16.msra.mxu0 0
      %8225 = vmatprep.subr.bf16.mxu0 0
      %8226 = vmatpush1.bf16.msra.mxu0 0
      %8227 = vmatprep.subr.bf16.mxu0 0
      %8228 = vmatpush1.bf16.msra.mxu0 0
      %8229 = vmatprep.subr.bf16.mxu0 0
      %8230 = vmatpush1.bf16.msra.mxu0 0
      %8231 = vmatprep.subr.bf16.mxu0 0
      %8232 = vmatpush1.bf16.msra.mxu0 0
      %8233 = vmatprep.subr.bf16.mxu0 0
      %8234 = vmatpush1.bf16.msra.mxu0 0
      %8235 = vmatprep.subr.bf16.mxu0 0
      %8236 = vmatpush1.bf16.msra.mxu0 0
      %8237 = vmatprep.subr.bf16.mxu0 0
      %8238 = vmatpush1.bf16.msra.mxu0 0
      %8239 = vmatprep.subr.bf16.mxu0 0
      %8240 = vmatpush1.bf16.msra.mxu0 0
      %8241 = vmatprep.subr.bf16.mxu0 0
      %8242 = vmatpush1.bf16.msra.mxu0 0
      %8243 = vmatprep.subr.bf16.mxu0 0
      %8244 = vmatpush1.bf16.msra.mxu0 0
      %8245 = vmatprep.mubr.bf16.mxu0 0
      %8246 = vmatmul.mubr.bf16.gmra.mrb[0].mxu0 %v8196
      %v8247 = vpop.f32.mrb[0].mxu0
      %v8248 = vadd.f32 0.0, %v8247
      %v8249 = vpop.f32.mrb[0].mxu0
      %v8250 = vadd.f32 0.0, %v8249
      %v8251 = vpop.f32.mrb[0].mxu0
      %v8252 = vpop.f32.mrb[0].mxu0
      %8253 = vdwg.mxu0
      %8254 = vmatprep.subr.bf16.mxu0 %v8208
      %8255 = vmatpush1.bf16.msra.mxu0 %v8205
      %8256 = vmatprep.subr.bf16.mxu0 0
      %8257 = vmatpush1.bf16.msra.mxu0 0
      %8258 = vmatprep.subr.bf16.mxu0 0
      %8259 = vmatpush1.bf16.msra.mxu0 0
      %8260 = vmatprep.subr.bf16.mxu0 0
      %8261 = vmatpush1.bf16.msra.mxu0 0
      %8262 = vmatprep.subr.bf16.mxu0 0
      %8263 = vmatpush1.bf16.msra.mxu0 0
      %8264 = vmatprep.subr.bf16.mxu0 0
      %8265 = vmatpush1.bf16.msra.mxu0 0
      %8266 = vmatprep.subr.bf16.mxu0 0
      %8267 = vmatpush1.bf16.msra.mxu0 0
      %8268 = vmatprep.subr.bf16.mxu0 0
      %8269 = vmatpush1.bf16.msra.mxu0 0
      %8270 = vmatprep.subr.bf16.mxu0 0
      %8271 = vmatpush1.bf16.msra.mxu0 0
      %8272 = vmatprep.subr.bf16.mxu0 0
      %8273 = vmatpush1.bf16.msra.mxu0 0
      %8274 = vmatprep.subr.bf16.mxu0 0
      %8275 = vmatpush1.bf16.msra.mxu0 0
      %8276 = vmatprep.subr.bf16.mxu0 0
      %8277 = vmatpush1.bf16.msra.mxu0 0
      %8278 = vmatprep.subr.bf16.mxu0 0
      %8279 = vmatpush1.bf16.msra.mxu0 0
      %8280 = vmatprep.subr.bf16.mxu0 0
      %8281 = vmatpush1.bf16.msra.mxu0 0
      %8282 = vmatprep.subr.bf16.mxu0 0
      %8283 = vmatpush1.bf16.msra.mxu0 0
      %8284 = vmatprep.subr.bf16.mxu0 0
      %8285 = vmatpush1.bf16.msra.mxu0 0
      %8286 = vmatprep.mubr.bf16.mxu0 0
      %8287 = vmatmul.mubr.bf16.gmra.mrb[0].mxu0 %v8196
      %v8288 = vpop.f32.mrb[0].mxu0
      %v8289 = vadd.f32 0.0, %v8288
      %v8290 = vpop.f32.mrb[0].mxu0
      %v8291 = vadd.f32 0.0, %v8290
      %v8292 = vpop.f32.mrb[0].mxu0
      %v8293 = vpop.f32.mrb[0].mxu0
      %8294 = vdwg.mxu0
      %8295 = vmatprep.subr.bf16.mxu0 0
      %8296 = vmatpush1.bf16.msra.mxu0 %v8211
      %8297 = vmatprep.subr.bf16.mxu0 0
      %8298 = vmatpush1.bf16.msra.mxu0 0
      %8299 = vmatprep.subr.bf16.mxu0 0
      %8300 = vmatpush1.bf16.msra.mxu0 0
      %8301 = vmatprep.subr.bf16.mxu0 0
      %8302 = vmatpush1.bf16.msra.mxu0 0
      %8303 = vmatprep.subr.bf16.mxu0 0
      %8304 = vmatpush1.bf16.msra.mxu0 0
      %8305 = vmatprep.subr.bf16.mxu0 0
      %8306 = vmatpush1.bf16.msra.mxu0 0
      %8307 = vmatprep.subr.bf16.mxu0 0
      %8308 = vmatpush1.bf16.msra.mxu0 0
      %8309 = vmatprep.subr.bf16.mxu0 0
      %8310 = vmatpush1.bf16.msra.mxu0 0
      %8311 = vmatprep.subr.bf16.mxu0 0
      %8312 = vmatpush1.bf16.msra.mxu0 0
      %8313 = vmatprep.subr.bf16.mxu0 0
      %8314 = vmatpush1.bf16.msra.mxu0 0
      %8315 = vmatprep.subr.bf16.mxu0 0
      %8316 = vmatpush1.bf16.msra.mxu0 0
      %8317 = vmatprep.subr.bf16.mxu0 0
      %8318 = vmatpush1.bf16.msra.mxu0 0
      %8319 = vmatprep.subr.bf16.mxu0 0
      %8320 = vmatpush1.bf16.msra.mxu0 0
      %8321 = vmatprep.subr.bf16.mxu0 0
      %8322 = vmatpush1.bf16.msra.mxu0 0
      %8323 = vmatprep.subr.bf16.mxu0 0
      %8324 = vmatpush1.bf16.msra.mxu0 0
      %8325 = vmatprep.subr.bf16.mxu0 0
      %8326 = vmatpush1.bf16.msra.mxu0 0
      %8327 = vmatprep.mubr.bf16.mxu0 0
      %8328 = vmatmul.mubr.bf16.gmra.mrb[0].mxu0 %v8196
      %v8329 = vpop.f32.mrb[0].mxu0
      %v8330 = vadd.f32 0.0, %v8329
      %v8331 = vpop.f32.mrb[0].mxu0
      %v8332 = vpop.f32.mrb[0].mxu0
      %v8333 = vpop.f32.mrb[0].mxu0
      %8334 = vdwg.mxu0
      %v8335 = vadd.f32 %v8171, %v8248
      %v8336 = vadd.f32 %v8172, %v8250
      %v8337 = vadd.f32 %v8173, %v8289
      %v8338 = vadd.f32 %v8174, %v8291
      %v8339 = vadd.f32 %v8175, %v8330
      %s8340 = scalar_lea.vmem %s2, 84
      %v8341 = vld [vmem:[%s8340] sm:$0xf]
      %8342 = vrot.lane.b32.xlu0 %v7188, 29
      %v8343 = vpop.permute.xlu0 %8342
      %8344 = vrot.lane.b32.xlu0 %v7189, 29
      %v8345 = vpop.permute.xlu0 %8344
      %8346 = vrot.lane.b32.xlu0 %v7190, 29
      %v8347 = vpop.permute.xlu0 %8346
      %8348 = vrot.lane.b32.xlu0 %v7191, 29
      %v8349 = vpop.permute.xlu0 %8348
      %8350 = vrot.lane.b32.xlu0 %v7192, 29
      %v8351 = vpop.permute.xlu0 %8350
      %8352 = vrot.lane.b32.xlu0 %v7193, 29
      %v8353 = vpop.permute.xlu0 %8352
      %v8354 = vsel %vm3811, %v8343, %v8345
      %v8355 = vsel %vm3811, %v8345, %v8347
      %v8356 = vsel %vm3811, %v8347, %v8349
      %v8357 = vsel %vm3811, %v8349, %v8351
      %v8358 = vsel %vm3811, %v8351, %v8353
      %v8360 = vsel %vm346, %v8341, 0
      %v8363 = vsel %vm350, %v8354, 0
      %v8366 = vsel %vm350, %v8355, 0
      %v8369 = vsel %vm350, %v8356, 0
      %v8372 = vsel %vm350, %v8357, 0
      %v8375 = vsel %vm350, %v8358, 0
      %8377 = vmatprep.subr.bf16.mxu0 %v8366
      %8378 = vmatpush1.bf16.msra.mxu0 %v8363
      %8379 = vmatprep.subr.bf16.mxu0 0
      %8380 = vmatpush1.bf16.msra.mxu0 0
      %8381 = vmatprep.subr.bf16.mxu0 0
      %8382 = vmatpush1.bf16.msra.mxu0 0
      %8383 = vmatprep.subr.bf16.mxu0 0
      %8384 = vmatpush1.bf16.msra.mxu0 0
      %8385 = vmatprep.subr.bf16.mxu0 0
      %8386 = vmatpush1.bf16.msra.mxu0 0
      %8387 = vmatprep.subr.bf16.mxu0 0
      %8388 = vmatpush1.bf16.msra.mxu0 0
      %8389 = vmatprep.subr.bf16.mxu0 0
      %8390 = vmatpush1.bf16.msra.mxu0 0
      %8391 = vmatprep.subr.bf16.mxu0 0
      %8392 = vmatpush1.bf16.msra.mxu0 0
      %8393 = vmatprep.subr.bf16.mxu0 0
      %8394 = vmatpush1.bf16.msra.mxu0 0
      %8395 = vmatprep.subr.bf16.mxu0 0
      %8396 = vmatpush1.bf16.msra.mxu0 0
      %8397 = vmatprep.subr.bf16.mxu0 0
      %8398 = vmatpush1.bf16.msra.mxu0 0
      %8399 = vmatprep.subr.bf16.mxu0 0
      %8400 = vmatpush1.bf16.msra.mxu0 0
      %8401 = vmatprep.subr.bf16.mxu0 0
      %8402 = vmatpush1.bf16.msra.mxu0 0
      %8403 = vmatprep.subr.bf16.mxu0 0
      %8404 = vmatpush1.bf16.msra.mxu0 0
      %8405 = vmatprep.subr.bf16.mxu0 0
      %8406 = vmatpush1.bf16.msra.mxu0 0
      %8407 = vmatprep.subr.bf16.mxu0 0
      %8408 = vmatpush1.bf16.msra.mxu0 0
      %8409 = vmatprep.mubr.bf16.mxu0 0
      %8410 = vmatmul.mubr.bf16.gmra.mrb[0].mxu0 %v8360
      %v8411 = vpop.f32.mrb[0].mxu0
      %v8412 = vadd.f32 0.0, %v8411
      %v8413 = vpop.f32.mrb[0].mxu0
      %v8414 = vadd.f32 0.0, %v8413
      %v8415 = vpop.f32.mrb[0].mxu0
      %v8416 = vpop.f32.mrb[0].mxu0
      %8417 = vdwg.mxu0
      %8418 = vmatprep.subr.bf16.mxu0 %v8372
      %8419 = vmatpush1.bf16.msra.mxu0 %v8369
      %8420 = vmatprep.subr.bf16.mxu0 0
      %8421 = vmatpush1.bf16.msra.mxu0 0
      %8422 = vmatprep.subr.bf16.mxu0 0
      %8423 = vmatpush1.bf16.msra.mxu0 0
      %8424 = vmatprep.subr.bf16.mxu0 0
      %8425 = vmatpush1.bf16.msra.mxu0 0
      %8426 = vmatprep.subr.bf16.mxu0 0
      %8427 = vmatpush1.bf16.msra.mxu0 0
      %8428 = vmatprep.subr.bf16.mxu0 0
      %8429 = vmatpush1.bf16.msra.mxu0 0
      %8430 = vmatprep.subr.bf16.mxu0 0
      %8431 = vmatpush1.bf16.msra.mxu0 0
      %8432 = vmatprep.subr.bf16.mxu0 0
      %8433 = vmatpush1.bf16.msra.mxu0 0
      %8434 = vmatprep.subr.bf16.mxu0 0
      %8435 = vmatpush1.bf16.msra.mxu0 0
      %8436 = vmatprep.subr.bf16.mxu0 0
      %8437 = vmatpush1.bf16.msra.mxu0 0
      %8438 = vmatprep.subr.bf16.mxu0 0
      %8439 = vmatpush1.bf16.msra.mxu0 0
      %8440 = vmatprep.subr.bf16.mxu0 0
      %8441 = vmatpush1.bf16.msra.mxu0 0
      %8442 = vmatprep.subr.bf16.mxu0 0
      %8443 = vmatpush1.bf16.msra.mxu0 0
      %8444 = vmatprep.subr.bf16.mxu0 0
      %8445 = vmatpush1.bf16.msra.mxu0 0
      %8446 = vmatprep.subr.bf16.mxu0 0
      %8447 = vmatpush1.bf16.msra.mxu0 0
      %8448 = vmatprep.subr.bf16.mxu0 0
      %8449 = vmatpush1.bf16.msra.mxu0 0
      %8450 = vmatprep.mubr.bf16.mxu0 0
      %8451 = vmatmul.mubr.bf16.gmra.mrb[0].mxu0 %v8360
      %v8452 = vpop.f32.mrb[0].mxu0
      %v8453 = vadd.f32 0.0, %v8452
      %v8454 = vpop.f32.mrb[0].mxu0
      %v8455 = vadd.f32 0.0, %v8454
      %v8456 = vpop.f32.mrb[0].mxu0
      %v8457 = vpop.f32.mrb[0].mxu0
      %8458 = vdwg.mxu0
      %8459 = vmatprep.subr.bf16.mxu0 0
      %8460 = vmatpush1.bf16.msra.mxu0 %v8375
      %8461 = vmatprep.subr.bf16.mxu0 0
      %8462 = vmatpush1.bf16.msra.mxu0 0
      %8463 = vmatprep.subr.bf16.mxu0 0
      %8464 = vmatpush1.bf16.msra.mxu0 0
      %8465 = vmatprep.subr.bf16.mxu0 0
      %8466 = vmatpush1.bf16.msra.mxu0 0
      %8467 = vmatprep.subr.bf16.mxu0 0
      %8468 = vmatpush1.bf16.msra.mxu0 0
      %8469 = vmatprep.subr.bf16.mxu0 0
      %8470 = vmatpush1.bf16.msra.mxu0 0
      %8471 = vmatprep.subr.bf16.mxu0 0
      %8472 = vmatpush1.bf16.msra.mxu0 0
      %8473 = vmatprep.subr.bf16.mxu0 0
      %8474 = vmatpush1.bf16.msra.mxu0 0
      %8475 = vmatprep.subr.bf16.mxu0 0
      %8476 = vmatpush1.bf16.msra.mxu0 0
      %8477 = vmatprep.subr.bf16.mxu0 0
      %8478 = vmatpush1.bf16.msra.mxu0 0
      %8479 = vmatprep.subr.bf16.mxu0 0
      %8480 = vmatpush1.bf16.msra.mxu0 0
      %8481 = vmatprep.subr.bf16.mxu0 0
      %8482 = vmatpush1.bf16.msra.mxu0 0
      %8483 = vmatprep.subr.bf16.mxu0 0
      %8484 = vmatpush1.bf16.msra.mxu0 0
      %8485 = vmatprep.subr.bf16.mxu0 0
      %8486 = vmatpush1.bf16.msra.mxu0 0
      %8487 = vmatprep.subr.bf16.mxu0 0
      %8488 = vmatpush1.bf16.msra.mxu0 0
      %8489 = vmatprep.subr.bf16.mxu0 0
      %8490 = vmatpush1.bf16.msra.mxu0 0
      %8491 = vmatprep.mubr.bf16.mxu0 0
      %8492 = vmatmul.mubr.bf16.gmra.mrb[0].mxu0 %v8360
      %v8493 = vpop.f32.mrb[0].mxu0
      %v8494 = vadd.f32 0.0, %v8493
      %v8495 = vpop.f32.mrb[0].mxu0
      %v8496 = vpop.f32.mrb[0].mxu0
      %v8497 = vpop.f32.mrb[0].mxu0
      %8498 = vdwg.mxu0
      %v8499 = vadd.f32 %v8335, %v8412
      %v8500 = vadd.f32 %v8336, %v8414
      %v8501 = vadd.f32 %v8337, %v8453
      %v8502 = vadd.f32 %v8338, %v8455
      %v8503 = vadd.f32 %v8339, %v8494
      %s8504 = scalar_lea.vmem %s2, 88
      %v8505 = vld [vmem:[%s8504] sm:$0xf]
      %8506 = vrot.lane.b32.xlu0 %v7188, 28
      %v8507 = vpop.permute.xlu0 %8506
      %8508 = vrot.lane.b32.xlu0 %v7189, 28
      %v8509 = vpop.permute.xlu0 %8508
      %8510 = vrot.lane.b32.xlu0 %v7190, 28
      %v8511 = vpop.permute.xlu0 %8510
      %8512 = vrot.lane.b32.xlu0 %v7191, 28
      %v8513 = vpop.permute.xlu0 %8512
      %8514 = vrot.lane.b32.xlu0 %v7192, 28
      %v8515 = vpop.permute.xlu0 %8514
      %8516 = vrot.lane.b32.xlu0 %v7193, 28
      %v8517 = vpop.permute.xlu0 %8516
      %v8518 = vsel %vm3976, %v8507, %v8509
      %v8519 = vsel %vm3976, %v8509, %v8511
      %v8520 = vsel %vm3976, %v8511, %v8513
      %v8521 = vsel %vm3976, %v8513, %v8515
      %v8522 = vsel %vm3976, %v8515, %v8517
      %v8524 = vsel %vm346, %v8505, 0
      %v8527 = vsel %vm350, %v8518, 0
      %v8530 = vsel %vm350, %v8519, 0
      %v8533 = vsel %vm350, %v8520, 0
      %v8536 = vsel %vm350, %v8521, 0
      %v8539 = vsel %vm350, %v8522, 0
      %8541 = vmatprep.subr.bf16.mxu0 %v8530
      %8542 = vmatpush1.bf16.msra.mxu0 %v8527
      %8543 = vmatprep.subr.bf16.mxu0 0
      %8544 = vmatpush1.bf16.msra.mxu0 0
      %8545 = vmatprep.subr.bf16.mxu0 0
      %8546 = vmatpush1.bf16.msra.mxu0 0
      %8547 = vmatprep.subr.bf16.mxu0 0
      %8548 = vmatpush1.bf16.msra.mxu0 0
      %8549 = vmatprep.subr.bf16.mxu0 0
      %8550 = vmatpush1.bf16.msra.mxu0 0
      %8551 = vmatprep.subr.bf16.mxu0 0
      %8552 = vmatpush1.bf16.msra.mxu0 0
      %8553 = vmatprep.subr.bf16.mxu0 0
      %8554 = vmatpush1.bf16.msra.mxu0 0
      %8555 = vmatprep.subr.bf16.mxu0 0
      %8556 = vmatpush1.bf16.msra.mxu0 0
      %8557 = vmatprep.subr.bf16.mxu0 0
      %8558 = vmatpush1.bf16.msra.mxu0 0
      %8559 = vmatprep.subr.bf16.mxu0 0
      %8560 = vmatpush1.bf16.msra.mxu0 0
      %8561 = vmatprep.subr.bf16.mxu0 0
      %8562 = vmatpush1.bf16.msra.mxu0 0
      %8563 = vmatprep.subr.bf16.mxu0 0
      %8564 = vmatpush1.bf16.msra.mxu0 0
      %8565 = vmatprep.subr.bf16.mxu0 0
      %8566 = vmatpush1.bf16.msra.mxu0 0
      %8567 = vmatprep.subr.bf16.mxu0 0
      %8568 = vmatpush1.bf16.msra.mxu0 0
      %8569 = vmatprep.subr.bf16.mxu0 0
      %8570 = vmatpush1.bf16.msra.mxu0 0
      %8571 = vmatprep.subr.bf16.mxu0 0
      %8572 = vmatpush1.bf16.msra.mxu0 0
      %8573 = vmatprep.mubr.bf16.mxu0 0
      %8574 = vmatmul.mubr.bf16.gmra.mrb[0].mxu0 %v8524
      %v8575 = vpop.f32.mrb[0].mxu0
      %v8576 = vadd.f32 0.0, %v8575
      %v8577 = vpop.f32.mrb[0].mxu0
      %v8578 = vadd.f32 0.0, %v8577
      %v8579 = vpop.f32.mrb[0].mxu0
      %v8580 = vpop.f32.mrb[0].mxu0
      %8581 = vdwg.mxu0
      %8582 = vmatprep.subr.bf16.mxu0 %v8536
      %8583 = vmatpush1.bf16.msra.mxu0 %v8533
      %8584 = vmatprep.subr.bf16.mxu0 0
      %8585 = vmatpush1.bf16.msra.mxu0 0
      %8586 = vmatprep.subr.bf16.mxu0 0
      %8587 = vmatpush1.bf16.msra.mxu0 0
      %8588 = vmatprep.subr.bf16.mxu0 0
      %8589 = vmatpush1.bf16.msra.mxu0 0
      %8590 = vmatprep.subr.bf16.mxu0 0
      %8591 = vmatpush1.bf16.msra.mxu0 0
      %8592 = vmatprep.subr.bf16.mxu0 0
      %8593 = vmatpush1.bf16.msra.mxu0 0
      %8594 = vmatprep.subr.bf16.mxu0 0
      %8595 = vmatpush1.bf16.msra.mxu0 0
      %8596 = vmatprep.subr.bf16.mxu0 0
      %8597 = vmatpush1.bf16.msra.mxu0 0
      %8598 = vmatprep.subr.bf16.mxu0 0
      %8599 = vmatpush1.bf16.msra.mxu0 0
      %8600 = vmatprep.subr.bf16.mxu0 0
      %8601 = vmatpush1.bf16.msra.mxu0 0
      %8602 = vmatprep.subr.bf16.mxu0 0
      %8603 = vmatpush1.bf16.msra.mxu0 0
      %8604 = vmatprep.subr.bf16.mxu0 0
      %8605 = vmatpush1.bf16.msra.mxu0 0
      %8606 = vmatprep.subr.bf16.mxu0 0
      %8607 = vmatpush1.bf16.msra.mxu0 0
      %8608 = vmatprep.subr.bf16.mxu0 0
      %8609 = vmatpush1.bf16.msra.mxu0 0
      %8610 = vmatprep.subr.bf16.mxu0 0
      %8611 = vmatpush1.bf16.msra.mxu0 0
      %8612 = vmatprep.subr.bf16.mxu0 0
      %8613 = vmatpush1.bf16.msra.mxu0 0
      %8614 = vmatprep.mubr.bf16.mxu0 0
      %8615 = vmatmul.mubr.bf16.gmra.mrb[0].mxu0 %v8524
      %v8616 = vpop.f32.mrb[0].mxu0
      %v8617 = vadd.f32 0.0, %v8616
      %v8618 = vpop.f32.mrb[0].mxu0
      %v8619 = vadd.f32 0.0, %v8618
      %v8620 = vpop.f32.mrb[0].mxu0
      %v8621 = vpop.f32.mrb[0].mxu0
      %8622 = vdwg.mxu0
      %8623 = vmatprep.subr.bf16.mxu0 0
      %8624 = vmatpush1.bf16.msra.mxu0 %v8539
      %8625 = vmatprep.subr.bf16.mxu0 0
      %8626 = vmatpush1.bf16.msra.mxu0 0
      %8627 = vmatprep.subr.bf16.mxu0 0
      %8628 = vmatpush1.bf16.msra.mxu0 0
      %8629 = vmatprep.subr.bf16.mxu0 0
      %8630 = vmatpush1.bf16.msra.mxu0 0
      %8631 = vmatprep.subr.bf16.mxu0 0
      %8632 = vmatpush1.bf16.msra.mxu0 0
      %8633 = vmatprep.subr.bf16.mxu0 0
      %8634 = vmatpush1.bf16.msra.mxu0 0
      %8635 = vmatprep.subr.bf16.mxu0 0
      %8636 = vmatpush1.bf16.msra.mxu0 0
      %8637 = vmatprep.subr.bf16.mxu0 0
      %8638 = vmatpush1.bf16.msra.mxu0 0
      %8639 = vmatprep.subr.bf16.mxu0 0
      %8640 = vmatpush1.bf16.msra.mxu0 0
      %8641 = vmatprep.subr.bf16.mxu0 0
      %8642 = vmatpush1.bf16.msra.mxu0 0
      %8643 = vmatprep.subr.bf16.mxu0 0
      %8644 = vmatpush1.bf16.msra.mxu0 0
      %8645 = vmatprep.subr.bf16.mxu0 0
      %8646 = vmatpush1.bf16.msra.mxu0 0
      %8647 = vmatprep.subr.bf16.mxu0 0
      %8648 = vmatpush1.bf16.msra.mxu0 0
      %8649 = vmatprep.subr.bf16.mxu0 0
      %8650 = vmatpush1.bf16.msra.mxu0 0
      %8651 = vmatprep.subr.bf16.mxu0 0
      %8652 = vmatpush1.bf16.msra.mxu0 0
      %8653 = vmatprep.subr.bf16.mxu0 0
      %8654 = vmatpush1.bf16.msra.mxu0 0
      %8655 = vmatprep.mubr.bf16.mxu0 0
      %8656 = vmatmul.mubr.bf16.gmra.mrb[0].mxu0 %v8524
      %v8657 = vpop.f32.mrb[0].mxu0
      %v8658 = vadd.f32 0.0, %v8657
      %v8659 = vpop.f32.mrb[0].mxu0
      %v8660 = vpop.f32.mrb[0].mxu0
      %v8661 = vpop.f32.mrb[0].mxu0
      %8662 = vdwg.mxu0
      %v8663 = vadd.f32 %v8499, %v8576
      %v8664 = vadd.f32 %v8500, %v8578
      %v8665 = vadd.f32 %v8501, %v8617
      %v8666 = vadd.f32 %v8502, %v8619
      %v8667 = vadd.f32 %v8503, %v8658
      %s8668 = scalar_lea.vmem %s2, 92
      %v8669 = vld [vmem:[%s8668] sm:$0xf]
      %8670 = vrot.lane.b32.xlu0 %v7188, 27
      %v8671 = vpop.permute.xlu0 %8670
      %8672 = vrot.lane.b32.xlu0 %v7189, 27
      %v8673 = vpop.permute.xlu0 %8672
      %8674 = vrot.lane.b32.xlu0 %v7190, 27
      %v8675 = vpop.permute.xlu0 %8674
      %8676 = vrot.lane.b32.xlu0 %v7191, 27
      %v8677 = vpop.permute.xlu0 %8676
      %8678 = vrot.lane.b32.xlu0 %v7192, 27
      %v8679 = vpop.permute.xlu0 %8678
      %8680 = vrot.lane.b32.xlu0 %v7193, 27
      %v8681 = vpop.permute.xlu0 %8680
      %v8682 = vsel %vm4141, %v8671, %v8673
      %v8683 = vsel %vm4141, %v8673, %v8675
      %v8684 = vsel %vm4141, %v8675, %v8677
      %v8685 = vsel %vm4141, %v8677, %v8679
      %v8686 = vsel %vm4141, %v8679, %v8681
      %v8688 = vsel %vm346, %v8669, 0
      %v8691 = vsel %vm350, %v8682, 0
      %v8694 = vsel %vm350, %v8683, 0
      %v8697 = vsel %vm350, %v8684, 0
      %v8700 = vsel %vm350, %v8685, 0
      %v8703 = vsel %vm350, %v8686, 0
      %8705 = vmatprep.subr.bf16.mxu0 %v8694
      %8706 = vmatpush1.bf16.msra.mxu0 %v8691
      %8707 = vmatprep.subr.bf16.mxu0 0
      %8708 = vmatpush1.bf16.msra.mxu0 0
      %8709 = vmatprep.subr.bf16.mxu0 0
      %8710 = vmatpush1.bf16.msra.mxu0 0
      %8711 = vmatprep.subr.bf16.mxu0 0
      %8712 = vmatpush1.bf16.msra.mxu0 0
      %8713 = vmatprep.subr.bf16.mxu0 0
      %8714 = vmatpush1.bf16.msra.mxu0 0
      %8715 = vmatprep.subr.bf16.mxu0 0
      %8716 = vmatpush1.bf16.msra.mxu0 0
      %8717 = vmatprep.subr.bf16.mxu0 0
      %8718 = vmatpush1.bf16.msra.mxu0 0
      %8719 = vmatprep.subr.bf16.mxu0 0
      %8720 = vmatpush1.bf16.msra.mxu0 0
      %8721 = vmatprep.subr.bf16.mxu0 0
      %8722 = vmatpush1.bf16.msra.mxu0 0
      %8723 = vmatprep.subr.bf16.mxu0 0
      %8724 = vmatpush1.bf16.msra.mxu0 0
      %8725 = vmatprep.subr.bf16.mxu0 0
      %8726 = vmatpush1.bf16.msra.mxu0 0
      %8727 = vmatprep.subr.bf16.mxu0 0
      %8728 = vmatpush1.bf16.msra.mxu0 0
      %8729 = vmatprep.subr.bf16.mxu0 0
      %8730 = vmatpush1.bf16.msra.mxu0 0
      %8731 = vmatprep.subr.bf16.mxu0 0
      %8732 = vmatpush1.bf16.msra.mxu0 0
      %8733 = vmatprep.subr.bf16.mxu0 0
      %8734 = vmatpush1.bf16.msra.mxu0 0
      %8735 = vmatprep.subr.bf16.mxu0 0
      %8736 = vmatpush1.bf16.msra.mxu0 0
      %8737 = vmatprep.mubr.bf16.mxu0 0
      %8738 = vmatmul.mubr.bf16.gmra.mrb[0].mxu0 %v8688
      %v8739 = vpop.f32.mrb[0].mxu0
      %v8740 = vadd.f32 0.0, %v8739
      %v8741 = vpop.f32.mrb[0].mxu0
      %v8742 = vadd.f32 0.0, %v8741
      %v8743 = vpop.f32.mrb[0].mxu0
      %v8744 = vpop.f32.mrb[0].mxu0
      %8745 = vdwg.mxu0
      %8746 = vmatprep.subr.bf16.mxu0 %v8700
      %8747 = vmatpush1.bf16.msra.mxu0 %v8697
      %8748 = vmatprep.subr.bf16.mxu0 0
      %8749 = vmatpush1.bf16.msra.mxu0 0
      %8750 = vmatprep.subr.bf16.mxu0 0
      %8751 = vmatpush1.bf16.msra.mxu0 0
      %8752 = vmatprep.subr.bf16.mxu0 0
      %8753 = vmatpush1.bf16.msra.mxu0 0
      %8754 = vmatprep.subr.bf16.mxu0 0
      %8755 = vmatpush1.bf16.msra.mxu0 0
      %8756 = vmatprep.subr.bf16.mxu0 0
      %8757 = vmatpush1.bf16.msra.mxu0 0
      %8758 = vmatprep.subr.bf16.mxu0 0
      %8759 = vmatpush1.bf16.msra.mxu0 0
      %8760 = vmatprep.subr.bf16.mxu0 0
      %8761 = vmatpush1.bf16.msra.mxu0 0
      %8762 = vmatprep.subr.bf16.mxu0 0
      %8763 = vmatpush1.bf16.msra.mxu0 0
      %8764 = vmatprep.subr.bf16.mxu0 0
      %8765 = vmatpush1.bf16.msra.mxu0 0
      %8766 = vmatprep.subr.bf16.mxu0 0
      %8767 = vmatpush1.bf16.msra.mxu0 0
      %8768 = vmatprep.subr.bf16.mxu0 0
      %8769 = vmatpush1.bf16.msra.mxu0 0
      %8770 = vmatprep.subr.bf16.mxu0 0
      %8771 = vmatpush1.bf16.msra.mxu0 0
      %8772 = vmatprep.subr.bf16.mxu0 0
      %8773 = vmatpush1.bf16.msra.mxu0 0
      %8774 = vmatprep.subr.bf16.mxu0 0
      %8775 = vmatpush1.bf16.msra.mxu0 0
      %8776 = vmatprep.subr.bf16.mxu0 0
      %8777 = vmatpush1.bf16.msra.mxu0 0
      %8778 = vmatprep.mubr.bf16.mxu0 0
      %8779 = vmatmul.mubr.bf16.gmra.mrb[0].mxu0 %v8688
      %v8780 = vpop.f32.mrb[0].mxu0
      %v8781 = vadd.f32 0.0, %v8780
      %v8782 = vpop.f32.mrb[0].mxu0
      %v8783 = vadd.f32 0.0, %v8782
      %v8784 = vpop.f32.mrb[0].mxu0
      %v8785 = vpop.f32.mrb[0].mxu0
      %8786 = vdwg.mxu0
      %8787 = vmatprep.subr.bf16.mxu0 0
      %8788 = vmatpush1.bf16.msra.mxu0 %v8703
      %8789 = vmatprep.subr.bf16.mxu0 0
      %8790 = vmatpush1.bf16.msra.mxu0 0
      %8791 = vmatprep.subr.bf16.mxu0 0
      %8792 = vmatpush1.bf16.msra.mxu0 0
      %8793 = vmatprep.subr.bf16.mxu0 0
      %8794 = vmatpush1.bf16.msra.mxu0 0
      %8795 = vmatprep.subr.bf16.mxu0 0
      %8796 = vmatpush1.bf16.msra.mxu0 0
      %8797 = vmatprep.subr.bf16.mxu0 0
      %8798 = vmatpush1.bf16.msra.mxu0 0
      %8799 = vmatprep.subr.bf16.mxu0 0
      %8800 = vmatpush1.bf16.msra.mxu0 0
      %8801 = vmatprep.subr.bf16.mxu0 0
      %8802 = vmatpush1.bf16.msra.mxu0 0
      %8803 = vmatprep.subr.bf16.mxu0 0
      %8804 = vmatpush1.bf16.msra.mxu0 0
      %8805 = vmatprep.subr.bf16.mxu0 0
      %8806 = vmatpush1.bf16.msra.mxu0 0
      %8807 = vmatprep.subr.bf16.mxu0 0
      %8808 = vmatpush1.bf16.msra.mxu0 0
      %8809 = vmatprep.subr.bf16.mxu0 0
      %8810 = vmatpush1.bf16.msra.mxu0 0
      %8811 = vmatprep.subr.bf16.mxu0 0
      %8812 = vmatpush1.bf16.msra.mxu0 0
      %8813 = vmatprep.subr.bf16.mxu0 0
      %8814 = vmatpush1.bf16.msra.mxu0 0
      %8815 = vmatprep.subr.bf16.mxu0 0
      %8816 = vmatpush1.bf16.msra.mxu0 0
      %8817 = vmatprep.subr.bf16.mxu0 0
      %8818 = vmatpush1.bf16.msra.mxu0 0
      %8819 = vmatprep.mubr.bf16.mxu0 0
      %8820 = vmatmul.mubr.bf16.gmra.mrb[0].mxu0 %v8688
      %v8821 = vpop.f32.mrb[0].mxu0
      %v8822 = vadd.f32 0.0, %v8821
      %v8823 = vpop.f32.mrb[0].mxu0
      %v8824 = vpop.f32.mrb[0].mxu0
      %v8825 = vpop.f32.mrb[0].mxu0
      %8826 = vdwg.mxu0
      %v8827 = vadd.f32 %v8663, %v8740
      %v8828 = vadd.f32 %v8664, %v8742
      %v8829 = vadd.f32 %v8665, %v8781
      %v8830 = vadd.f32 %v8666, %v8783
      %v8831 = vadd.f32 %v8667, %v8822
      %s8832 = scalar_lea.vmem %s2, 96
      %v8833 = vld [vmem:[%s8832] sm:$0xf]
      %8834 = vrot.lane.b32.xlu0 %v7188, 19
      %v8835 = vpop.permute.xlu0 %8834
      %8836 = vrot.lane.b32.xlu0 %v7189, 19
      %v8837 = vpop.permute.xlu0 %8836
      %8838 = vrot.lane.b32.xlu0 %v7190, 19
      %v8839 = vpop.permute.xlu0 %8838
      %8840 = vrot.lane.b32.xlu0 %v7191, 19
      %v8841 = vpop.permute.xlu0 %8840
      %8842 = vrot.lane.b32.xlu0 %v7192, 19
      %v8843 = vpop.permute.xlu0 %8842
      %8844 = vrot.lane.b32.xlu0 %v7193, 19
      %v8845 = vpop.permute.xlu0 %8844
      %v8846 = vsel %vm4306, %v8835, %v8837
      %v8847 = vsel %vm4306, %v8837, %v8839
      %v8848 = vsel %vm4306, %v8839, %v8841
      %v8849 = vsel %vm4306, %v8841, %v8843
      %v8850 = vsel %vm4306, %v8843, %v8845
      %v8852 = vsel %vm346, %v8833, 0
      %v8855 = vsel %vm350, %v8846, 0
      %v8858 = vsel %vm350, %v8847, 0
      %v8861 = vsel %vm350, %v8848, 0
      %v8864 = vsel %vm350, %v8849, 0
      %v8867 = vsel %vm350, %v8850, 0
      %8869 = vmatprep.subr.bf16.mxu0 %v8858
      %8870 = vmatpush1.bf16.msra.mxu0 %v8855
      %8871 = vmatprep.subr.bf16.mxu0 0
      %8872 = vmatpush1.bf16.msra.mxu0 0
      %8873 = vmatprep.subr.bf16.mxu0 0
      %8874 = vmatpush1.bf16.msra.mxu0 0
      %8875 = vmatprep.subr.bf16.mxu0 0
      %8876 = vmatpush1.bf16.msra.mxu0 0
      %8877 = vmatprep.subr.bf16.mxu0 0
      %8878 = vmatpush1.bf16.msra.mxu0 0
      %8879 = vmatprep.subr.bf16.mxu0 0
      %8880 = vmatpush1.bf16.msra.mxu0 0
      %8881 = vmatprep.subr.bf16.mxu0 0
      %8882 = vmatpush1.bf16.msra.mxu0 0
      %8883 = vmatprep.subr.bf16.mxu0 0
      %8884 = vmatpush1.bf16.msra.mxu0 0
      %8885 = vmatprep.subr.bf16.mxu0 0
      %8886 = vmatpush1.bf16.msra.mxu0 0
      %8887 = vmatprep.subr.bf16.mxu0 0
      %8888 = vmatpush1.bf16.msra.mxu0 0
      %8889 = vmatprep.subr.bf16.mxu0 0
      %8890 = vmatpush1.bf16.msra.mxu0 0
      %8891 = vmatprep.subr.bf16.mxu0 0
      %8892 = vmatpush1.bf16.msra.mxu0 0
      %8893 = vmatprep.subr.bf16.mxu0 0
      %8894 = vmatpush1.bf16.msra.mxu0 0
      %8895 = vmatprep.subr.bf16.mxu0 0
      %8896 = vmatpush1.bf16.msra.mxu0 0
      %8897 = vmatprep.subr.bf16.mxu0 0
      %8898 = vmatpush1.bf16.msra.mxu0 0
      %8899 = vmatprep.subr.bf16.mxu0 0
      %8900 = vmatpush1.bf16.msra.mxu0 0
      %8901 = vmatprep.mubr.bf16.mxu0 0
      %8902 = vmatmul.mubr.bf16.gmra.mrb[0].mxu0 %v8852
      %v8903 = vpop.f32.mrb[0].mxu0
      %v8904 = vadd.f32 0.0, %v8903
      %v8905 = vpop.f32.mrb[0].mxu0
      %v8906 = vadd.f32 0.0, %v8905
      %v8907 = vpop.f32.mrb[0].mxu0
      %v8908 = vpop.f32.mrb[0].mxu0
      %8909 = vdwg.mxu0
      %8910 = vmatprep.subr.bf16.mxu0 %v8864
      %8911 = vmatpush1.bf16.msra.mxu0 %v8861
      %8912 = vmatprep.subr.bf16.mxu0 0
      %8913 = vmatpush1.bf16.msra.mxu0 0
      %8914 = vmatprep.subr.bf16.mxu0 0
      %8915 = vmatpush1.bf16.msra.mxu0 0
      %8916 = vmatprep.subr.bf16.mxu0 0
      %8917 = vmatpush1.bf16.msra.mxu0 0
      %8918 = vmatprep.subr.bf16.mxu0 0
      %8919 = vmatpush1.bf16.msra.mxu0 0
      %8920 = vmatprep.subr.bf16.mxu0 0
      %8921 = vmatpush1.bf16.msra.mxu0 0
      %8922 = vmatprep.subr.bf16.mxu0 0
      %8923 = vmatpush1.bf16.msra.mxu0 0
      %8924 = vmatprep.subr.bf16.mxu0 0
      %8925 = vmatpush1.bf16.msra.mxu0 0
      %8926 = vmatprep.subr.bf16.mxu0 0
      %8927 = vmatpush1.bf16.msra.mxu0 0
      %8928 = vmatprep.subr.bf16.mxu0 0
      %8929 = vmatpush1.bf16.msra.mxu0 0
      %8930 = vmatprep.subr.bf16.mxu0 0
      %8931 = vmatpush1.bf16.msra.mxu0 0
      %8932 = vmatprep.subr.bf16.mxu0 0
      %8933 = vmatpush1.bf16.msra.mxu0 0
      %8934 = vmatprep.subr.bf16.mxu0 0
      %8935 = vmatpush1.bf16.msra.mxu0 0
      %8936 = vmatprep.subr.bf16.mxu0 0
      %8937 = vmatpush1.bf16.msra.mxu0 0
      %8938 = vmatprep.subr.bf16.mxu0 0
      %8939 = vmatpush1.bf16.msra.mxu0 0
      %8940 = vmatprep.subr.bf16.mxu0 0
      %8941 = vmatpush1.bf16.msra.mxu0 0
      %8942 = vmatprep.mubr.bf16.mxu0 0
      %8943 = vmatmul.mubr.bf16.gmra.mrb[0].mxu0 %v8852
      %v8944 = vpop.f32.mrb[0].mxu0
      %v8945 = vadd.f32 0.0, %v8944
      %v8946 = vpop.f32.mrb[0].mxu0
      %v8947 = vadd.f32 0.0, %v8946
      %v8948 = vpop.f32.mrb[0].mxu0
      %v8949 = vpop.f32.mrb[0].mxu0
      %8950 = vdwg.mxu0
      %8951 = vmatprep.subr.bf16.mxu0 0
      %8952 = vmatpush1.bf16.msra.mxu0 %v8867
      %8953 = vmatprep.subr.bf16.mxu0 0
      %8954 = vmatpush1.bf16.msra.mxu0 0
      %8955 = vmatprep.subr.bf16.mxu0 0
      %8956 = vmatpush1.bf16.msra.mxu0 0
      %8957 = vmatprep.subr.bf16.mxu0 0
      %8958 = vmatpush1.bf16.msra.mxu0 0
      %8959 = vmatprep.subr.bf16.mxu0 0
      %8960 = vmatpush1.bf16.msra.mxu0 0
      %8961 = vmatprep.subr.bf16.mxu0 0
      %8962 = vmatpush1.bf16.msra.mxu0 0
      %8963 = vmatprep.subr.bf16.mxu0 0
      %8964 = vmatpush1.bf16.msra.mxu0 0
      %8965 = vmatprep.subr.bf16.mxu0 0
      %8966 = vmatpush1.bf16.msra.mxu0 0
      %8967 = vmatprep.subr.bf16.mxu0 0
      %8968 = vmatpush1.bf16.msra.mxu0 0
      %8969 = vmatprep.subr.bf16.mxu0 0
      %8970 = vmatpush1.bf16.msra.mxu0 0
      %8971 = vmatprep.subr.bf16.mxu0 0
      %8972 = vmatpush1.bf16.msra.mxu0 0
      %8973 = vmatprep.subr.bf16.mxu0 0
      %8974 = vmatpush1.bf16.msra.mxu0 0
      %8975 = vmatprep.subr.bf16.mxu0 0
      %8976 = vmatpush1.bf16.msra.mxu0 0
      %8977 = vmatprep.subr.bf16.mxu0 0
      %8978 = vmatpush1.bf16.msra.mxu0 0
      %8979 = vmatprep.subr.bf16.mxu0 0
      %8980 = vmatpush1.bf16.msra.mxu0 0
      %8981 = vmatprep.subr.bf16.mxu0 0
      %8982 = vmatpush1.bf16.msra.mxu0 0
      %8983 = vmatprep.mubr.bf16.mxu0 0
      %8984 = vmatmul.mubr.bf16.gmra.mrb[0].mxu0 %v8852
      %v8985 = vpop.f32.mrb[0].mxu0
      %v8986 = vadd.f32 0.0, %v8985
      %v8987 = vpop.f32.mrb[0].mxu0
      %v8988 = vpop.f32.mrb[0].mxu0
      %v8989 = vpop.f32.mrb[0].mxu0
      %8990 = vdwg.mxu0
      %v8991 = vadd.f32 %v8827, %v8904
      %v8992 = vadd.f32 %v8828, %v8906
      %v8993 = vadd.f32 %v8829, %v8945
      %v8994 = vadd.f32 %v8830, %v8947
      %v8995 = vadd.f32 %v8831, %v8986
      %s8996 = scalar_lea.vmem %s2, 100
      %v8997 = vld [vmem:[%s8996] sm:$0xf]
      %8998 = vrot.lane.b32.xlu0 %v7188, 18
      %v8999 = vpop.permute.xlu0 %8998
      %9000 = vrot.lane.b32.xlu0 %v7189, 18
      %v9001 = vpop.permute.xlu0 %9000
      %9002 = vrot.lane.b32.xlu0 %v7190, 18
      %v9003 = vpop.permute.xlu0 %9002
      %9004 = vrot.lane.b32.xlu0 %v7191, 18
      %v9005 = vpop.permute.xlu0 %9004
      %9006 = vrot.lane.b32.xlu0 %v7192, 18
      %v9007 = vpop.permute.xlu0 %9006
      %9008 = vrot.lane.b32.xlu0 %v7193, 18
      %v9009 = vpop.permute.xlu0 %9008
      %v9010 = vsel %vm4471, %v8999, %v9001
      %v9011 = vsel %vm4471, %v9001, %v9003
      %v9012 = vsel %vm4471, %v9003, %v9005
      %v9013 = vsel %vm4471, %v9005, %v9007
      %v9014 = vsel %vm4471, %v9007, %v9009
      %v9016 = vsel %vm346, %v8997, 0
      %v9019 = vsel %vm350, %v9010, 0
      %v9022 = vsel %vm350, %v9011, 0
      %v9025 = vsel %vm350, %v9012, 0
      %v9028 = vsel %vm350, %v9013, 0
      %v9031 = vsel %vm350, %v9014, 0
      %9033 = vmatprep.subr.bf16.mxu0 %v9022
      %9034 = vmatpush1.bf16.msra.mxu0 %v9019
      %9035 = vmatprep.subr.bf16.mxu0 0
      %9036 = vmatpush1.bf16.msra.mxu0 0
      %9037 = vmatprep.subr.bf16.mxu0 0
      %9038 = vmatpush1.bf16.msra.mxu0 0
      %9039 = vmatprep.subr.bf16.mxu0 0
      %9040 = vmatpush1.bf16.msra.mxu0 0
      %9041 = vmatprep.subr.bf16.mxu0 0
      %9042 = vmatpush1.bf16.msra.mxu0 0
      %9043 = vmatprep.subr.bf16.mxu0 0
      %9044 = vmatpush1.bf16.msra.mxu0 0
      %9045 = vmatprep.subr.bf16.mxu0 0
      %9046 = vmatpush1.bf16.msra.mxu0 0
      %9047 = vmatprep.subr.bf16.mxu0 0
      %9048 = vmatpush1.bf16.msra.mxu0 0
      %9049 = vmatprep.subr.bf16.mxu0 0
      %9050 = vmatpush1.bf16.msra.mxu0 0
      %9051 = vmatprep.subr.bf16.mxu0 0
      %9052 = vmatpush1.bf16.msra.mxu0 0
      %9053 = vmatprep.subr.bf16.mxu0 0
      %9054 = vmatpush1.bf16.msra.mxu0 0
      %9055 = vmatprep.subr.bf16.mxu0 0
      %9056 = vmatpush1.bf16.msra.mxu0 0
      %9057 = vmatprep.subr.bf16.mxu0 0
      %9058 = vmatpush1.bf16.msra.mxu0 0
      %9059 = vmatprep.subr.bf16.mxu0 0
      %9060 = vmatpush1.bf16.msra.mxu0 0
      %9061 = vmatprep.subr.bf16.mxu0 0
      %9062 = vmatpush1.bf16.msra.mxu0 0
      %9063 = vmatprep.subr.bf16.mxu0 0
      %9064 = vmatpush1.bf16.msra.mxu0 0
      %9065 = vmatprep.mubr.bf16.mxu0 0
      %9066 = vmatmul.mubr.bf16.gmra.mrb[0].mxu0 %v9016
      %v9067 = vpop.f32.mrb[0].mxu0
      %v9068 = vadd.f32 0.0, %v9067
      %v9069 = vpop.f32.mrb[0].mxu0
      %v9070 = vadd.f32 0.0, %v9069
      %v9071 = vpop.f32.mrb[0].mxu0
      %v9072 = vpop.f32.mrb[0].mxu0
      %9073 = vdwg.mxu0
      %9074 = vmatprep.subr.bf16.mxu0 %v9028
      %9075 = vmatpush1.bf16.msra.mxu0 %v9025
      %9076 = vmatprep.subr.bf16.mxu0 0
      %9077 = vmatpush1.bf16.msra.mxu0 0
      %9078 = vmatprep.subr.bf16.mxu0 0
      %9079 = vmatpush1.bf16.msra.mxu0 0
      %9080 = vmatprep.subr.bf16.mxu0 0
      %9081 = vmatpush1.bf16.msra.mxu0 0
      %9082 = vmatprep.subr.bf16.mxu0 0
      %9083 = vmatpush1.bf16.msra.mxu0 0
      %9084 = vmatprep.subr.bf16.mxu0 0
      %9085 = vmatpush1.bf16.msra.mxu0 0
      %9086 = vmatprep.subr.bf16.mxu0 0
      %9087 = vmatpush1.bf16.msra.mxu0 0
      %9088 = vmatprep.subr.bf16.mxu0 0
      %9089 = vmatpush1.bf16.msra.mxu0 0
      %9090 = vmatprep.subr.bf16.mxu0 0
      %9091 = vmatpush1.bf16.msra.mxu0 0
      %9092 = vmatprep.subr.bf16.mxu0 0
      %9093 = vmatpush1.bf16.msra.mxu0 0
      %9094 = vmatprep.subr.bf16.mxu0 0
      %9095 = vmatpush1.bf16.msra.mxu0 0
      %9096 = vmatprep.subr.bf16.mxu0 0
      %9097 = vmatpush1.bf16.msra.mxu0 0
      %9098 = vmatprep.subr.bf16.mxu0 0
      %9099 = vmatpush1.bf16.msra.mxu0 0
      %9100 = vmatprep.subr.bf16.mxu0 0
      %9101 = vmatpush1.bf16.msra.mxu0 0
      %9102 = vmatprep.subr.bf16.mxu0 0
      %9103 = vmatpush1.bf16.msra.mxu0 0
      %9104 = vmatprep.subr.bf16.mxu0 0
      %9105 = vmatpush1.bf16.msra.mxu0 0
      %9106 = vmatprep.mubr.bf16.mxu0 0
      %9107 = vmatmul.mubr.bf16.gmra.mrb[0].mxu0 %v9016
      %v9108 = vpop.f32.mrb[0].mxu0
      %v9109 = vadd.f32 0.0, %v9108
      %v9110 = vpop.f32.mrb[0].mxu0
      %v9111 = vadd.f32 0.0, %v9110
      %v9112 = vpop.f32.mrb[0].mxu0
      %v9113 = vpop.f32.mrb[0].mxu0
      %9114 = vdwg.mxu0
      %9115 = vmatprep.subr.bf16.mxu0 0
      %9116 = vmatpush1.bf16.msra.mxu0 %v9031
      %9117 = vmatprep.subr.bf16.mxu0 0
      %9118 = vmatpush1.bf16.msra.mxu0 0
      %9119 = vmatprep.subr.bf16.mxu0 0
      %9120 = vmatpush1.bf16.msra.mxu0 0
      %9121 = vmatprep.subr.bf16.mxu0 0
      %9122 = vmatpush1.bf16.msra.mxu0 0
      %9123 = vmatprep.subr.bf16.mxu0 0
      %9124 = vmatpush1.bf16.msra.mxu0 0
      %9125 = vmatprep.subr.bf16.mxu0 0
      %9126 = vmatpush1.bf16.msra.mxu0 0
      %9127 = vmatprep.subr.bf16.mxu0 0
      %9128 = vmatpush1.bf16.msra.mxu0 0
      %9129 = vmatprep.subr.bf16.mxu0 0
      %9130 = vmatpush1.bf16.msra.mxu0 0
      %9131 = vmatprep.subr.bf16.mxu0 0
      %9132 = vmatpush1.bf16.msra.mxu0 0
      %9133 = vmatprep.subr.bf16.mxu0 0
      %9134 = vmatpush1.bf16.msra.mxu0 0
      %9135 = vmatprep.subr.bf16.mxu0 0
      %9136 = vmatpush1.bf16.msra.mxu0 0
      %9137 = vmatprep.subr.bf16.mxu0 0
      %9138 = vmatpush1.bf16.msra.mxu0 0
      %9139 = vmatprep.subr.bf16.mxu0 0
      %9140 = vmatpush1.bf16.msra.mxu0 0
      %9141 = vmatprep.subr.bf16.mxu0 0
      %9142 = vmatpush1.bf16.msra.mxu0 0
      %9143 = vmatprep.subr.bf16.mxu0 0
      %9144 = vmatpush1.bf16.msra.mxu0 0
      %9145 = vmatprep.subr.bf16.mxu0 0
      %9146 = vmatpush1.bf16.msra.mxu0 0
      %9147 = vmatprep.mubr.bf16.mxu0 0
      %9148 = vmatmul.mubr.bf16.gmra.mrb[0].mxu0 %v9016
      %v9149 = vpop.f32.mrb[0].mxu0
      %v9150 = vadd.f32 0.0, %v9149
      %v9151 = vpop.f32.mrb[0].mxu0
      %v9152 = vpop.f32.mrb[0].mxu0
      %v9153 = vpop.f32.mrb[0].mxu0
      %9154 = vdwg.mxu0
      %v9155 = vadd.f32 %v8991, %v9068
      %v9156 = vadd.f32 %v8992, %v9070
      %v9157 = vadd.f32 %v8993, %v9109
      %v9158 = vadd.f32 %v8994, %v9111
      %v9159 = vadd.f32 %v8995, %v9150
      %s9160 = scalar_lea.vmem %s2, 104
      %v9161 = vld [vmem:[%s9160] sm:$0xf]
      %9162 = vrot.lane.b32.xlu0 %v7188, 17
      %v9163 = vpop.permute.xlu0 %9162
      %9164 = vrot.lane.b32.xlu0 %v7189, 17
      %v9165 = vpop.permute.xlu0 %9164
      %9166 = vrot.lane.b32.xlu0 %v7190, 17
      %v9167 = vpop.permute.xlu0 %9166
      %9168 = vrot.lane.b32.xlu0 %v7191, 17
      %v9169 = vpop.permute.xlu0 %9168
      %9170 = vrot.lane.b32.xlu0 %v7192, 17
      %v9171 = vpop.permute.xlu0 %9170
      %9172 = vrot.lane.b32.xlu0 %v7193, 17
      %v9173 = vpop.permute.xlu0 %9172
      %v9174 = vsel %vm4636, %v9163, %v9165
      %v9175 = vsel %vm4636, %v9165, %v9167
      %v9176 = vsel %vm4636, %v9167, %v9169
      %v9177 = vsel %vm4636, %v9169, %v9171
      %v9178 = vsel %vm4636, %v9171, %v9173
      %v9180 = vsel %vm346, %v9161, 0
      %v9183 = vsel %vm350, %v9174, 0
      %v9186 = vsel %vm350, %v9175, 0
      %v9189 = vsel %vm350, %v9176, 0
      %v9192 = vsel %vm350, %v9177, 0
      %v9195 = vsel %vm350, %v9178, 0
      %9197 = vmatprep.subr.bf16.mxu0 %v9186
      %9198 = vmatpush1.bf16.msra.mxu0 %v9183
      %9199 = vmatprep.subr.bf16.mxu0 0
      %9200 = vmatpush1.bf16.msra.mxu0 0
      %9201 = vmatprep.subr.bf16.mxu0 0
      %9202 = vmatpush1.bf16.msra.mxu0 0
      %9203 = vmatprep.subr.bf16.mxu0 0
      %9204 = vmatpush1.bf16.msra.mxu0 0
      %9205 = vmatprep.subr.bf16.mxu0 0
      %9206 = vmatpush1.bf16.msra.mxu0 0
      %9207 = vmatprep.subr.bf16.mxu0 0
      %9208 = vmatpush1.bf16.msra.mxu0 0
      %9209 = vmatprep.subr.bf16.mxu0 0
      %9210 = vmatpush1.bf16.msra.mxu0 0
      %9211 = vmatprep.subr.bf16.mxu0 0
      %9212 = vmatpush1.bf16.msra.mxu0 0
      %9213 = vmatprep.subr.bf16.mxu0 0
      %9214 = vmatpush1.bf16.msra.mxu0 0
      %9215 = vmatprep.subr.bf16.mxu0 0
      %9216 = vmatpush1.bf16.msra.mxu0 0
      %9217 = vmatprep.subr.bf16.mxu0 0
      %9218 = vmatpush1.bf16.msra.mxu0 0
      %9219 = vmatprep.subr.bf16.mxu0 0
      %9220 = vmatpush1.bf16.msra.mxu0 0
      %9221 = vmatprep.subr.bf16.mxu0 0
      %9222 = vmatpush1.bf16.msra.mxu0 0
      %9223 = vmatprep.subr.bf16.mxu0 0
      %9224 = vmatpush1.bf16.msra.mxu0 0
      %9225 = vmatprep.subr.bf16.mxu0 0
      %9226 = vmatpush1.bf16.msra.mxu0 0
      %9227 = vmatprep.subr.bf16.mxu0 0
      %9228 = vmatpush1.bf16.msra.mxu0 0
      %9229 = vmatprep.mubr.bf16.mxu0 0
      %9230 = vmatmul.mubr.bf16.gmra.mrb[0].mxu0 %v9180
      %v9231 = vpop.f32.mrb[0].mxu0
      %v9232 = vadd.f32 0.0, %v9231
      %v9233 = vpop.f32.mrb[0].mxu0
      %v9234 = vadd.f32 0.0, %v9233
      %v9235 = vpop.f32.mrb[0].mxu0
      %v9236 = vpop.f32.mrb[0].mxu0
      %9237 = vdwg.mxu0
      %9238 = vmatprep.subr.bf16.mxu0 %v9192
      %9239 = vmatpush1.bf16.msra.mxu0 %v9189
      %9240 = vmatprep.subr.bf16.mxu0 0
      %9241 = vmatpush1.bf16.msra.mxu0 0
      %9242 = vmatprep.subr.bf16.mxu0 0
      %9243 = vmatpush1.bf16.msra.mxu0 0
      %9244 = vmatprep.subr.bf16.mxu0 0
      %9245 = vmatpush1.bf16.msra.mxu0 0
      %9246 = vmatprep.subr.bf16.mxu0 0
      %9247 = vmatpush1.bf16.msra.mxu0 0
      %9248 = vmatprep.subr.bf16.mxu0 0
      %9249 = vmatpush1.bf16.msra.mxu0 0
      %9250 = vmatprep.subr.bf16.mxu0 0
      %9251 = vmatpush1.bf16.msra.mxu0 0
      %9252 = vmatprep.subr.bf16.mxu0 0
      %9253 = vmatpush1.bf16.msra.mxu0 0
      %9254 = vmatprep.subr.bf16.mxu0 0
      %9255 = vmatpush1.bf16.msra.mxu0 0
      %9256 = vmatprep.subr.bf16.mxu0 0
      %9257 = vmatpush1.bf16.msra.mxu0 0
      %9258 = vmatprep.subr.bf16.mxu0 0
      %9259 = vmatpush1.bf16.msra.mxu0 0
      %9260 = vmatprep.subr.bf16.mxu0 0
      %9261 = vmatpush1.bf16.msra.mxu0 0
      %9262 = vmatprep.subr.bf16.mxu0 0
      %9263 = vmatpush1.bf16.msra.mxu0 0
      %9264 = vmatprep.subr.bf16.mxu0 0
      %9265 = vmatpush1.bf16.msra.mxu0 0
      %9266 = vmatprep.subr.bf16.mxu0 0
      %9267 = vmatpush1.bf16.msra.mxu0 0
      %9268 = vmatprep.subr.bf16.mxu0 0
      %9269 = vmatpush1.bf16.msra.mxu0 0
      %9270 = vmatprep.mubr.bf16.mxu0 0
      %9271 = vmatmul.mubr.bf16.gmra.mrb[0].mxu0 %v9180
      %v9272 = vpop.f32.mrb[0].mxu0
      %v9273 = vadd.f32 0.0, %v9272
      %v9274 = vpop.f32.mrb[0].mxu0
      %v9275 = vadd.f32 0.0, %v9274
      %v9276 = vpop.f32.mrb[0].mxu0
      %v9277 = vpop.f32.mrb[0].mxu0
      %9278 = vdwg.mxu0
      %9279 = vmatprep.subr.bf16.mxu0 0
      %9280 = vmatpush1.bf16.msra.mxu0 %v9195
      %9281 = vmatprep.subr.bf16.mxu0 0
      %9282 = vmatpush1.bf16.msra.mxu0 0
      %9283 = vmatprep.subr.bf16.mxu0 0
      %9284 = vmatpush1.bf16.msra.mxu0 0
      %9285 = vmatprep.subr.bf16.mxu0 0
      %9286 = vmatpush1.bf16.msra.mxu0 0
      %9287 = vmatprep.subr.bf16.mxu0 0
      %9288 = vmatpush1.bf16.msra.mxu0 0
      %9289 = vmatprep.subr.bf16.mxu0 0
      %9290 = vmatpush1.bf16.msra.mxu0 0
      %9291 = vmatprep.subr.bf16.mxu0 0
      %9292 = vmatpush1.bf16.msra.mxu0 0
      %9293 = vmatprep.subr.bf16.mxu0 0
      %9294 = vmatpush1.bf16.msra.mxu0 0
      %9295 = vmatprep.subr.bf16.mxu0 0
      %9296 = vmatpush1.bf16.msra.mxu0 0
      %9297 = vmatprep.subr.bf16.mxu0 0
      %9298 = vmatpush1.bf16.msra.mxu0 0
      %9299 = vmatprep.subr.bf16.mxu0 0
      %9300 = vmatpush1.bf16.msra.mxu0 0
      %9301 = vmatprep.subr.bf16.mxu0 0
      %9302 = vmatpush1.bf16.msra.mxu0 0
      %9303 = vmatprep.subr.bf16.mxu0 0
      %9304 = vmatpush1.bf16.msra.mxu0 0
      %9305 = vmatprep.subr.bf16.mxu0 0
      %9306 = vmatpush1.bf16.msra.mxu0 0
      %9307 = vmatprep.subr.bf16.mxu0 0
      %9308 = vmatpush1.bf16.msra.mxu0 0
      %9309 = vmatprep.subr.bf16.mxu0 0
      %9310 = vmatpush1.bf16.msra.mxu0 0
      %9311 = vmatprep.mubr.bf16.mxu0 0
      %9312 = vmatmul.mubr.bf16.gmra.mrb[0].mxu0 %v9180
      %v9313 = vpop.f32.mrb[0].mxu0
      %v9314 = vadd.f32 0.0, %v9313
      %v9315 = vpop.f32.mrb[0].mxu0
      %v9316 = vpop.f32.mrb[0].mxu0
      %v9317 = vpop.f32.mrb[0].mxu0
      %9318 = vdwg.mxu0
      %v9319 = vadd.f32 %v9155, %v9232
      %v9320 = vadd.f32 %v9156, %v9234
      %v9321 = vadd.f32 %v9157, %v9273
      %v9322 = vadd.f32 %v9158, %v9275
      %v9323 = vadd.f32 %v9159, %v9314
      %v9324 = vld [vmem:[%s5] sm:$0xff]
      %9326 = vset.pattern.permute.xlu0 0
      %9327 = vperm.xlu0 %9326, %v9324
      %v9328 = vpop.permute.xlu0 %9327
      %v9330 = vmul.f32 %v9319, %v9328
      %v9331 = vmul.f32 %v9320, %v9328
      %v9332 = vmul.f32 %v9321, %v9328
      %v9333 = vmul.f32 %v9322, %v9328
      %v9334 = vmul.f32 %v9323, %v9328
      %v9335 = vld [vmem:[%s6] sm:$0xff]
      %9337 = vset.pattern.permute.xlu0 0
      %9338 = vperm.xlu0 %9337, %v9335
      %v9339 = vpop.permute.xlu0 %9338
      %v9341 = vadd.f32 %v9330, %v9339
      %v9342 = vadd.f32 %v9331, %v9339
      %v9343 = vadd.f32 %v9332, %v9339
      %v9344 = vadd.f32 %v9333, %v9339
      %v9345 = vadd.f32 %v9334, %v9339
      %v9346 = vld [vmem:[%s300 + $0x4] sm:$0xff]
      %v9347 = vld [vmem:[%s300 + $0xc] sm:$0xff]
      %v9348 = vld [vmem:[%s300 + $0x14] sm:$0xf]
      %v9349 = vunpack.c.l.bf16 %v9346
      %v9350 = vunpack.c.h.bf16 %v9346
      %v9351 = vunpack.c.l.bf16 %v9347
      %v9352 = vunpack.c.h.bf16 %v9347
      %v9353 = vunpack.c.l.bf16 %v9348
      %v9354 = vadd.f32 %v9341, %v9349
      %v9355 = vadd.f32 %v9342, %v9350
      %v9356 = vadd.f32 %v9343, %v9351
      %v9357 = vadd.f32 %v9344, %v9352
      %v9358 = vadd.f32 %v9345, %v9353
      %v9359 = vmax.f32 %v9354, 0.0
      %v9360 = vmax.f32 %v9355, 0.0
      %v9361 = vmax.f32 %v9356, 0.0
      %v9362 = vmax.f32 %v9357, 0.0
      %v9363 = vmax.f32 %v9358, 0.0
      %9364 = vst [vmem:[%s305] sm:$0xff] %v9359
      %9365 = vst [vmem:[%s305 + $0x8] sm:$0xff] %v9360
      %9366 = vst [vmem:[%s305 + $0x10] sm:$0xff] %v9361
      %9367 = vst [vmem:[%s305 + $0x18] sm:$0xff] %v9362
      %9368 = vst [vmem:[%s305 + $0x20] sm:$0xff] %v9363
      %p9369 = scmp.lt.s32.totalorder %s19, 1
      %s9370 = scalar_select %p9369, %s19, 1
      %s9371 = smul.addr %s9370, 5
      %s9372 = smul.addr %s9371, 8
      %s9373 = scalar_lea.vmem %s8, %s9372
      // Predicated region
      $region53: #{basic_block_forward.1} parent=51 // pred_check
        %p9374 = pneg %p210
      $region54: #{basic_block_forward.1} parent=51 // pred_check_branch
        %9376 = sbr.rel (%p9374) target = $region56
      $region55: #{basic_block_forward.1} parent=51 // pred_region
        _
      $region56: #{basic_block_forward.1} parent=51 // pred_fallthru
        _
    $region52: #{basic_block_forward.1} parent=5 // pred_fallthru
      _
    %p9377 = scmp.le.s32.totalorder 2, %s14
    // Predicated region
    $region57: #{basic_block_forward.1} parent=5 // pred_check
      %p9378 = pneg %p9377
    $region58: #{basic_block_forward.1} parent=5 // pred_check_branch
      %9380 = sbr.rel (%p9378) target = $region60
    $region59: #{basic_block_forward.1} parent=5 // pred_region
      %s9381 = ssub.s32 %s14, 2
      // Predicated region
      $region61: #{basic_block_forward.1} parent=59 // pred_check
        %p9382 = pneg %p216
      $region62: #{basic_block_forward.1} parent=59 // pred_check_branch
        %9384 = sbr.rel (%p9382) target = $region64
      $region63: #{basic_block_forward.1} parent=59 // pred_region
        %p9385 = scmp.lt.s32.totalorder %s20, 1
        %s9386 = scalar_select %p9385, %s20, 1
        %s9387 = smul.addr %s9386, 5
        %s9388 = smul.addr %s9387, 8
        %s9389 = scalar_lea.vmem %s8, %s9388
      $region64: #{basic_block_forward.1} parent=59 // pred_fallthru
        _
    $region60: #{basic_block_forward.1} parent=5 // pred_fallthru
      _
  $region6: #{basic_block_forward.1} parent=0 // loop_footer
    %s18 = sadd.s32 1, %s14
  $region7: #{basic_block_forward.1} parent=0 // loop_footer_branch
    %13 = sbr.rel target = $region3
  $region8: #{basic_block_forward.1} parent=0 // loop_exit
    _

</llo_original>
